<compile_context>
chip_gen: v7x
topology: tpu7x:2x2x1
jax: 0.10.0
libtpu: 0.0.40
codegen_flags: <defaults>
</compile_context>

<pallas_src>
import jax
import jax.numpy as jnp
from jax.experimental import pallas as pl
from jax.experimental.pallas import tpu as pltpu

D = 200            # spatial size hard-coded inside E2E / e2n in the PyTorch module
C_MID = 8          # E2E out_channel
K = 3              # number of dynamic-conv experts
TEMPERATURE = 34.0
NEG_SLOPE = 0.33


def _leaky(v):
    # LeakyReLU with 0 < slope < 1 is exactly max(v, slope*v): mul+max (2 VPU ops)
    # instead of cmp+mul+select.
    return jnp.maximum(v, NEG_SLOPE * v)


def brain_cnn_kernel(x_ref, xt_ref,
                     w1a_ref, w2a_ref, b2a_ref, wa_ref, biasa_ref,
                     w1b_ref, w2b_ref, b2b_ref, wb_ref, biasb_ref,
                     w2c_ref, b2c_ref,
                     out_ref):
    bt = out_ref.shape[0]                  # batch samples per grid step (static)
    w2c = w2c_ref[...]                     # (f, C_MID*D) bf16, shared across samples
    b2c = b2c_ref[...]                     # (f, 1) f32

    def attention(m, w1_ref, w2_ref, b2_ref):
        # fc1: Conv2d(1, 1, 1, bias=False) on a (1,1) map -> scalar, then ReLU
        h = jnp.maximum(m * w1_ref[0, 0], 0.0)
        # fc2: Conv2d(1, K, 1, bias=True) -> (1, K), softmax(logits / T)
        logits = h * w2_ref[...] + b2_ref[...]
        s = logits * (1.0 / TEMPERATURE)
        s = s - jnp.max(s)
        e = jnp.exp(s)
        return e / jnp.sum(e)              # (1, K) f32

    for b in range(bt):                    # static unroll over the batch tile
        x = x_ref[b]                       # (D, D) bf16, [h, w]
        xt = xt_ref[b]                     # (D, D) bf16, [w, h]  (pre-transposed x)

        # AdaptiveAvgPool2d(1), accumulated in f32
        m = jnp.sum(x.astype(jnp.float32)) * (1.0 / (D * D))

        attn_a = attention(m, w1a_ref, w2a_ref, b2a_ref)   # conv1xd attention
        attn_b = attention(m, w1b_ref, w2b_ref, b2b_ref)   # convdx1 attention

        # aggregate expert weights (torch.mm(softmax_attention, weight.view(K,-1)))
        wa = (attn_a[0, 0] * wa_ref[0] + attn_a[0, 1] * wa_ref[1]
              + attn_a[0, 2] * wa_ref[2])                  # (C_MID, D) over h
        wb = (attn_b[0, 0] * wb_ref[0] + attn_b[0, 1] * wb_ref[1]
              + attn_b[0, 2] * wb_ref[2])                  # (C_MID, D) over w
        # both dynamic-conv biases folded together once, shaped (C_MID, 1)
        bias_ab = (attn_a[0, 0] * biasa_ref[:, 0:1] + attn_a[0, 1] * biasa_ref[:, 1:2]
                   + attn_a[0, 2] * biasa_ref[:, 2:3]
                   + attn_b[0, 0] * biasb_ref[:, 0:1] + attn_b[0, 1] * biasb_ref[:, 1:2]
                   + attn_b[0, 2] * biasb_ref[:, 2:3])

        # conv1xd, kernel (200,1):  out_a[o, j] = sum_h wa[o, h] * x[h, j]
        out_a = jnp.dot(wa.astype(jnp.bfloat16), x,
                        preferred_element_type=jnp.float32)   # (C_MID, D_j)
        # convdx1, kernel (1,200):  out_b[o, i] = sum_w wb[o, w] * x[i, w] = wb @ x^T
        out_b = jnp.dot(wb.astype(jnp.bfloat16), xt,
                        preferred_element_type=jnp.float32)   # (C_MID, D_i)

        # E2E: concat1 + concat2 -> e2e[o, j, i] = out_a[o, j] + out_b[o, i] (+ biases)
        v = (out_a + bias_ab)[:, :, None] + out_b[:, None, :]    # (C_MID, D, D) f32
        # LeakyReLU in f32, then flatten (o, j) into the contraction axis (200 % 8 == 0
        # so the merge is layout-trivial in f32) and cast to bf16 for the MXU.
        e2e = _leaky(v).reshape(C_MID * D, D).astype(jnp.bfloat16)

        # e2n Conv2d(8, f, (1,200)): a single (f, 1600) @ (1600, 200) MXU matmul
        r = jnp.dot(w2c, e2e, preferred_element_type=jnp.float32) + b2c   # (f, D_i)
        out_ref[b] = _leaky(r)


def brain_cnn_forward(x, params, block_b=4):
    """x: (B, 1, D, D) float32 (NCHW, as in the PyTorch module)."""
    B = x.shape[0]
    f_length = params["w2c"].shape[0]
    bt = max(1, min(block_b, B))           # samples per grid step (<=8: v7x VMEM cap)
    n_tiles = pl.cdiv(B, bt)
    Bp = n_tiles * bt

    x2 = x.reshape(B, D, D).astype(jnp.bfloat16)   # bf16 halves input DMA
    if Bp != B:
        x2 = jnp.pad(x2, ((0, Bp - B), (0, 0), (0, 0)))
    xt = jnp.swapaxes(x2, 1, 2)            # pre-transposed copy -> canonical MXU matmuls

    w2c_flat = params["w2c"].reshape(f_length, C_MID * D).astype(jnp.bfloat16)

    kernel_args = (
        x2, xt,
        params["w1a"], params["w2a"], params["b2a"],
        params["Wa"], params["biasA"].T,          # (C_MID, K)
        params["w1b"], params["w2b"], params["b2b"],
        params["Wb"], params["biasB"].T,          # (C_MID, K)
        w2c_flat, params["b2c"].reshape(f_length, 1),
    )

    def full(shape):
        n = len(shape)
        return pl.BlockSpec(shape, lambda b, _n=n: (0,) * _n)

    grid_spec = pltpu.PrefetchScalarGridSpec(
        num_scalar_prefetch=0,
        grid=(n_tiles,),
        in_specs=[
            pl.BlockSpec((bt, D, D), lambda b: (b, 0, 0)),
            pl.BlockSpec((bt, D, D), lambda b: (b, 0, 0)),
            full((1, 1)), full((1, K)), full((1, K)),
            full((K, C_MID, D)), full((C_MID, K)),
            full((1, 1)), full((1, K)), full((1, K)),
            full((K, C_MID, D)), full((C_MID, K)),
            full((f_length, C_MID * D)), full((f_length, 1)),
        ],
        out_specs=pl.BlockSpec((bt, f_length, D), lambda b: (b, 0, 0)),
    )

    out = pl.pallas_call(
        brain_cnn_kernel,
        out_shape=jax.ShapeDtypeStruct((Bp, f_length, D), jnp.float32),
        grid_spec=grid_spec,
        compiler_params=pltpu.CompilerParams(
            dimension_semantics=("parallel",),
            vmem_limit_bytes=32 * 1024 * 1024,
        ),
    )(*kernel_args)

    out = out[:B]
    # PyTorch: x.view(B, 200, -1) on a contiguous (B, f, 200, 1) NCHW tensor
    # == raw row-major reshape, identical in JAX:
    return out.reshape(B, D, f_length)


def init_params(key, f_length):
    ks = jax.random.split(key, 12)
    p = {}
    # attention2d of conv1xd: fc1 (1,1,1,1), fc2 weight (3,1,1,1) + bias (3,)
    p["w1a"] = jax.random.normal(ks[0], (1, 1), jnp.float32)
    p["w2a"] = jax.random.normal(ks[1], (1, K), jnp.float32) * 0.8
    p["b2a"] = jax.random.normal(ks[2], (1, K), jnp.float32) * 0.05
    # conv1xd expert weights (K, 8, 1, 200, 1) -> (K, 8, 200) ; bias (K, 8)
    p["Wa"] = jax.random.normal(ks[3], (K, C_MID, D), jnp.float32) * 0.1
    p["biasA"] = jax.random.normal(ks[4], (K, C_MID), jnp.float32) * 0.05
    # attention2d of convdx1
    p["w1b"] = jax.random.normal(ks[5], (1, 1), jnp.float32)
    p["w2b"] = jax.random.normal(ks[6], (1, K), jnp.float32) * 0.8
    p["b2b"] = jax.random.normal(ks[7], (1, K), jnp.float32) * 0.05
    # convdx1 expert weights (K, 8, 1, 1, 200) -> (K, 8, 200) ; bias (K, 8)
    p["Wb"] = jax.random.normal(ks[8], (K, C_MID, D), jnp.float32) * 0.1
    p["biasB"] = jax.random.normal(ks[9], (K, C_MID), jnp.float32) * 0.05
    # e2n Conv2d(8, f_length, (1, 200)) weight (f, 8, 1, 200) -> (f, 8, 200), bias (f,)
    p["w2c"] = jax.random.normal(ks[10], (f_length, C_MID, D), jnp.float32) * 0.025
    p["b2c"] = jax.random.normal(ks[11], (f_length,), jnp.float32) * 0.01
    return p


def reference_forward(x, params, f_length):
    """Pure-JAX f32 mirror of BrainCNN.forward for correctness checking."""
    B = x.shape[0]
    x2 = x.reshape(B, D, D)
    m = jnp.mean(x2, axis=(1, 2))                       # (B,)

    def attn(w1, w2, b2):
        h = jnp.maximum(m * w1[0, 0], 0.0)              # (B,)
        logits = h[:, None] * w2[0] + b2[0]             # (B, K)
        return jax.nn.softmax(logits / TEMPERATURE, axis=1)

    aa = attn(params["w1a"], params["w2a"], params["b2a"])
    ab = attn(params["w1b"], params["w2b"], params["b2b"])

    wa = jnp.einsum('bk,koh->boh', aa, params["Wa"])
    wb = jnp.einsum('bk,kow->bow', ab, params["Wb"])
    ba = aa @ params["biasA"]                           # (B, C_MID)
    bb = ab @ params["biasB"]

    out_a = jnp.einsum('boh,bhj->boj', wa, x2) + ba[:, :, None]   # (B, 8, 200)
    out_b = jnp.einsum('bow,biw->boi', wb, x2) + bb[:, :, None]   # (B, 8, 200)
    e2e = _leaky(out_a[:, :, None, :] + out_b[:, :, :, None])     # (B, 8, i, j)
    e2n = jnp.einsum('boij,foj->bfi', e2e, params["w2c"]) + params["b2c"][None, :, None]
    e2n = _leaky(e2n)                                   # (B, f, 200)
    return e2n.reshape(B, D, f_length)


if __name__ == "__main__":
    key = jax.random.PRNGKey(0)
    kx, kp = jax.random.split(key)
    B = 2
    f_length = 16   # small f_length; spatial 200 is hard-coded by the module

    x = jax.random.normal(kx, (B, 1, D, D), jnp.float32)
    params = init_params(kp, f_length)

    fwd = jax.jit(brain_cnn_forward, static_argnames=("block_b",))
    out = fwd(x, params)
    out = jax.block_until_ready(out)

    ref = reference_forward(x, params, f_length)
    assert out.shape == (B, D, f_length)
    err = float(jnp.max(jnp.abs(out - ref)))
    assert jnp.allclose(out, ref, atol=5e-2, rtol=5e-2), err

    print("KERNEL_OK")
</pallas_src>

<mosaic_0001>
module attributes {stable_mosaic.version = 11 : i64} {
  func.func @brain_cnn_kernel(%arg0: i32, %arg1: memref<2x200x200xbf16, #tpu.memory_space<vmem>>, %arg2: memref<2x200x200xbf16, #tpu.memory_space<vmem>>, %arg3: memref<1x1xf32, #tpu.memory_space<vmem>>, %arg4: memref<1x3xf32, #tpu.memory_space<vmem>>, %arg5: memref<1x3xf32, #tpu.memory_space<vmem>>, %arg6: memref<3x8x200xf32, #tpu.memory_space<vmem>>, %arg7: memref<8x3xf32, #tpu.memory_space<vmem>>, %arg8: memref<1x1xf32, #tpu.memory_space<vmem>>, %arg9: memref<1x3xf32, #tpu.memory_space<vmem>>, %arg10: memref<1x3xf32, #tpu.memory_space<vmem>>, %arg11: memref<3x8x200xf32, #tpu.memory_space<vmem>>, %arg12: memref<8x3xf32, #tpu.memory_space<vmem>>, %arg13: memref<16x1600xbf16, #tpu.memory_space<vmem>>, %arg14: memref<16x1xf32, #tpu.memory_space<vmem>>, %arg15: memref<2x16x200xf32, #tpu.memory_space<vmem>>) attributes {dimension_semantics = [#tpu.dimension_semantics<parallel>], iteration_bounds = array<i64: 1>, scalar_prefetch = 0 : i64, scratch_operands = 0 : i64, tpu.core_type = #tpu.core_type<tc>, window_params = [{transform_indices = @transform_0, window_bounds = array<i64: 2, 200, 200>}, {transform_indices = @transform_1, window_bounds = array<i64: 2, 200, 200>}, {pipeline_mode = #tpu.pipeline_mode<synchronous>, transform_indices = @transform_2, window_bounds = array<i64: 1, 1>}, {pipeline_mode = #tpu.pipeline_mode<synchronous>, transform_indices = @transform_3, window_bounds = array<i64: 1, 3>}, {pipeline_mode = #tpu.pipeline_mode<synchronous>, transform_indices = @transform_4, window_bounds = array<i64: 1, 3>}, {pipeline_mode = #tpu.pipeline_mode<synchronous>, transform_indices = @transform_5, window_bounds = array<i64: 3, 8, 200>}, {pipeline_mode = #tpu.pipeline_mode<synchronous>, transform_indices = @transform_6, window_bounds = array<i64: 8, 3>}, {pipeline_mode = #tpu.pipeline_mode<synchronous>, transform_indices = @transform_7, window_bounds = array<i64: 1, 1>}, {pipeline_mode = #tpu.pipeline_mode<synchronous>, transform_indices = @transform_8, window_bounds = array<i64: 1, 3>}, {pipeline_mode = #tpu.pipeline_mode<synchronous>, transform_indices = @transform_9, window_bounds = array<i64: 1, 3>}, {pipeline_mode = #tpu.pipeline_mode<synchronous>, transform_indices = @transform_10, window_bounds = array<i64: 3, 8, 200>}, {pipeline_mode = #tpu.pipeline_mode<synchronous>, transform_indices = @transform_11, window_bounds = array<i64: 8, 3>}, {pipeline_mode = #tpu.pipeline_mode<synchronous>, transform_indices = @transform_12, window_bounds = array<i64: 16, 1600>}, {pipeline_mode = #tpu.pipeline_mode<synchronous>, transform_indices = @transform_13, window_bounds = array<i64: 16, 1>}, {transform_indices = @transform_14, window_bounds = array<i64: 2, 16, 200>}]} {
    %c0 = arith.constant 0 : index
    %c0_0 = arith.constant 0 : index
    %0 = vector.load %arg13[%c0, %c0_0] : memref<16x1600xbf16, #tpu.memory_space<vmem>>, vector<16x1600xbf16>
    %c0_1 = arith.constant 0 : index
    %c0_2 = arith.constant 0 : index
    %1 = vector.load %arg14[%c0_1, %c0_2] : memref<16x1xf32, #tpu.memory_space<vmem>>, vector<16x1xf32>
    %c0_3 = arith.constant 0 : index
    %c0_4 = arith.constant 0 : index
    %c0_5 = arith.constant 0 : index
    %2 = vector.load %arg1[%c0_3, %c0_4, %c0_5] : memref<2x200x200xbf16, #tpu.memory_space<vmem>>, vector<1x200x200xbf16>
    %3 = vector.shape_cast %2 : vector<1x200x200xbf16> to vector<200x200xbf16>
    %c0_6 = arith.constant 0 : index
    %c0_7 = arith.constant 0 : index
    %c0_8 = arith.constant 0 : index
    %4 = vector.load %arg2[%c0_6, %c0_7, %c0_8] : memref<2x200x200xbf16, #tpu.memory_space<vmem>>, vector<1x200x200xbf16>
    %5 = vector.shape_cast %4 : vector<1x200x200xbf16> to vector<200x200xbf16>
    %6 = arith.extf %3 : vector<200x200xbf16> to vector<200x200xf32>
    %7 = vector.shape_cast %6 : vector<200x200xf32> to vector<1x200x200xf32>
    %cst = arith.constant dense<0.000000e+00> : vector<1xf32>
    %8 = vector.multi_reduction <add>, %7, %cst [1, 2] : vector<1x200x200xf32> to vector<1xf32>
    %9 = vector.shape_cast %8 : vector<1xf32> to vector<1x1x1xf32>
    %10 = vector.extract %9[0, 0, 0] : f32 from vector<1x1x1xf32>
    %cst_9 = arith.constant 2.500000e-05 : f32
    %11 = arith.mulf %10, %cst_9 : f32
    %c0_10 = arith.constant 0 : index
    %c0_11 = arith.constant 0 : index
    %12 = vector.load %arg3[%c0_10, %c0_11] : memref<1x1xf32, #tpu.memory_space<vmem>>, vector<1x1xf32>
    %13 = vector.extract %12[0, 0] : f32 from vector<1x1xf32>
    %14 = arith.mulf %11, %13 : f32
    %cst_12 = arith.constant 0.000000e+00 : f32
    %15 = arith.maximumf %14, %cst_12 : f32
    %c0_13 = arith.constant 0 : index
    %c0_14 = arith.constant 0 : index
    %16 = vector.load %arg4[%c0_13, %c0_14] : memref<1x3xf32, #tpu.memory_space<vmem>>, vector<1x3xf32>
    %17 = vector.broadcast %15 : f32 to vector<1x3xf32>
    %18 = arith.mulf %17, %16 : vector<1x3xf32>
    %c0_15 = arith.constant 0 : index
    %c0_16 = arith.constant 0 : index
    %19 = vector.load %arg5[%c0_15, %c0_16] : memref<1x3xf32, #tpu.memory_space<vmem>>, vector<1x3xf32>
    %20 = arith.addf %18, %19 : vector<1x3xf32>
    %cst_17 = arith.constant 0.0294117648 : f32
    %21 = vector.broadcast %cst_17 : f32 to vector<1x3xf32>
    %22 = arith.mulf %20, %21 : vector<1x3xf32>
    %23 = vector.shape_cast %22 : vector<1x3xf32> to vector<1x1x3xf32>
    %cst_18 = arith.constant dense<0xFF800000> : vector<1xf32>
    %24 = vector.multi_reduction <maximumf>, %23, %cst_18 [1, 2] : vector<1x1x3xf32> to vector<1xf32>
    %25 = vector.shape_cast %24 : vector<1xf32> to vector<1x1x1xf32>
    %26 = vector.extract %25[0, 0, 0] : f32 from vector<1x1x1xf32>
    %27 = vector.broadcast %26 : f32 to vector<1x3xf32>
    %28 = arith.subf %22, %27 : vector<1x3xf32>
    %29 = math.exp %28 : vector<1x3xf32>
    %30 = vector.shape_cast %29 : vector<1x3xf32> to vector<1x1x3xf32>
    %cst_19 = arith.constant dense<0.000000e+00> : vector<1xf32>
    %31 = vector.multi_reduction <add>, %30, %cst_19 [1, 2] : vector<1x1x3xf32> to vector<1xf32>
    %32 = vector.shape_cast %31 : vector<1xf32> to vector<1x1x1xf32>
    %33 = vector.extract %32[0, 0, 0] : f32 from vector<1x1x1xf32>
    %34 = vector.broadcast %33 : f32 to vector<1x3xf32>
    %35 = arith.divf %29, %34 : vector<1x3xf32>
    %c0_20 = arith.constant 0 : index
    %c0_21 = arith.constant 0 : index
    %36 = vector.load %arg8[%c0_20, %c0_21] : memref<1x1xf32, #tpu.memory_space<vmem>>, vector<1x1xf32>
    %37 = vector.extract %36[0, 0] : f32 from vector<1x1xf32>
    %38 = arith.mulf %11, %37 : f32
    %cst_22 = arith.constant 0.000000e+00 : f32
    %39 = arith.maximumf %38, %cst_22 : f32
    %c0_23 = arith.constant 0 : index
    %c0_24 = arith.constant 0 : index
    %40 = vector.load %arg9[%c0_23, %c0_24] : memref<1x3xf32, #tpu.memory_space<vmem>>, vector<1x3xf32>
    %41 = vector.broadcast %39 : f32 to vector<1x3xf32>
    %42 = arith.mulf %41, %40 : vector<1x3xf32>
    %c0_25 = arith.constant 0 : index
    %c0_26 = arith.constant 0 : index
    %43 = vector.load %arg10[%c0_25, %c0_26] : memref<1x3xf32, #tpu.memory_space<vmem>>, vector<1x3xf32>
    %44 = arith.addf %42, %43 : vector<1x3xf32>
    %cst_27 = arith.constant 0.0294117648 : f32
    %45 = vector.broadcast %cst_27 : f32 to vector<1x3xf32>
    %46 = arith.mulf %44, %45 : vector<1x3xf32>
    %47 = vector.shape_cast %46 : vector<1x3xf32> to vector<1x1x3xf32>
    %cst_28 = arith.constant dense<0xFF800000> : vector<1xf32>
    %48 = vector.multi_reduction <maximumf>, %47, %cst_28 [1, 2] : vector<1x1x3xf32> to vector<1xf32>
    %49 = vector.shape_cast %48 : vector<1xf32> to vector<1x1x1xf32>
    %50 = vector.extract %49[0, 0, 0] : f32 from vector<1x1x1xf32>
    %51 = vector.broadcast %50 : f32 to vector<1x3xf32>
    %52 = arith.subf %46, %51 : vector<1x3xf32>
    %53 = math.exp %52 : vector<1x3xf32>
    %54 = vector.shape_cast %53 : vector<1x3xf32> to vector<1x1x3xf32>
    %cst_29 = arith.constant dense<0.000000e+00> : vector<1xf32>
    %55 = vector.multi_reduction <add>, %54, %cst_29 [1, 2] : vector<1x1x3xf32> to vector<1xf32>
    %56 = vector.shape_cast %55 : vector<1xf32> to vector<1x1x1xf32>
    %57 = vector.extract %56[0, 0, 0] : f32 from vector<1x1x1xf32>
    %58 = vector.broadcast %57 : f32 to vector<1x3xf32>
    %59 = arith.divf %53, %58 : vector<1x3xf32>
    %60 = vector.extract_strided_slice %35 {offsets = [0, 0], sizes = [1, 1], strides = [1, 1]} : vector<1x3xf32> to vector<1x1xf32>
    %61 = vector.extract %60[0, 0] : f32 from vector<1x1xf32>
    %c0_30 = arith.constant 0 : index
    %c0_31 = arith.constant 0 : index
    %c0_32 = arith.constant 0 : index
    %62 = vector.load %arg6[%c0_30, %c0_31, %c0_32] : memref<3x8x200xf32, #tpu.memory_space<vmem>>, vector<1x8x200xf32>
    %63 = vector.shape_cast %62 : vector<1x8x200xf32> to vector<8x200xf32>
    %64 = vector.broadcast %61 : f32 to vector<8x200xf32>
    %65 = arith.mulf %64, %63 : vector<8x200xf32>
    %66 = vector.extract_strided_slice %35 {offsets = [0, 1], sizes = [1, 1], strides = [1, 1]} : vector<1x3xf32> to vector<1x1xf32>
    %67 = vector.extract %66[0, 0] : f32 from vector<1x1xf32>
    %c1 = arith.constant 1 : index
    %c0_33 = arith.constant 0 : index
    %c0_34 = arith.constant 0 : index
    %68 = vector.load %arg6[%c1, %c0_33, %c0_34] : memref<3x8x200xf32, #tpu.memory_space<vmem>>, vector<1x8x200xf32>
    %69 = vector.shape_cast %68 : vector<1x8x200xf32> to vector<8x200xf32>
    %70 = vector.broadcast %67 : f32 to vector<8x200xf32>
    %71 = arith.mulf %70, %69 : vector<8x200xf32>
    %72 = arith.addf %65, %71 : vector<8x200xf32>
    %73 = vector.extract_strided_slice %35 {offsets = [0, 2], sizes = [1, 1], strides = [1, 1]} : vector<1x3xf32> to vector<1x1xf32>
    %74 = vector.extract %73[0, 0] : f32 from vector<1x1xf32>
    %c2 = arith.constant 2 : index
    %c0_35 = arith.constant 0 : index
    %c0_36 = arith.constant 0 : index
    %75 = vector.load %arg6[%c2, %c0_35, %c0_36] : memref<3x8x200xf32, #tpu.memory_space<vmem>>, vector<1x8x200xf32>
    %76 = vector.shape_cast %75 : vector<1x8x200xf32> to vector<8x200xf32>
    %77 = vector.broadcast %74 : f32 to vector<8x200xf32>
    %78 = arith.mulf %77, %76 : vector<8x200xf32>
    %79 = arith.addf %72, %78 : vector<8x200xf32>
    %80 = vector.extract_strided_slice %59 {offsets = [0, 0], sizes = [1, 1], strides = [1, 1]} : vector<1x3xf32> to vector<1x1xf32>
    %81 = vector.extract %80[0, 0] : f32 from vector<1x1xf32>
    %c0_37 = arith.constant 0 : index
    %c0_38 = arith.constant 0 : index
    %c0_39 = arith.constant 0 : index
    %82 = vector.load %arg11[%c0_37, %c0_38, %c0_39] : memref<3x8x200xf32, #tpu.memory_space<vmem>>, vector<1x8x200xf32>
    %83 = vector.shape_cast %82 : vector<1x8x200xf32> to vector<8x200xf32>
    %84 = vector.broadcast %81 : f32 to vector<8x200xf32>
    %85 = arith.mulf %84, %83 : vector<8x200xf32>
    %86 = vector.extract_strided_slice %59 {offsets = [0, 1], sizes = [1, 1], strides = [1, 1]} : vector<1x3xf32> to vector<1x1xf32>
    %87 = vector.extract %86[0, 0] : f32 from vector<1x1xf32>
    %c1_40 = arith.constant 1 : index
    %c0_41 = arith.constant 0 : index
    %c0_42 = arith.constant 0 : index
    %88 = vector.load %arg11[%c1_40, %c0_41, %c0_42] : memref<3x8x200xf32, #tpu.memory_space<vmem>>, vector<1x8x200xf32>
    %89 = vector.shape_cast %88 : vector<1x8x200xf32> to vector<8x200xf32>
    %90 = vector.broadcast %87 : f32 to vector<8x200xf32>
    %91 = arith.mulf %90, %89 : vector<8x200xf32>
    %92 = arith.addf %85, %91 : vector<8x200xf32>
    %93 = vector.extract_strided_slice %59 {offsets = [0, 2], sizes = [1, 1], strides = [1, 1]} : vector<1x3xf32> to vector<1x1xf32>
    %94 = vector.extract %93[0, 0] : f32 from vector<1x1xf32>
    %c2_43 = arith.constant 2 : index
    %c0_44 = arith.constant 0 : index
    %c0_45 = arith.constant 0 : index
    %95 = vector.load %arg11[%c2_43, %c0_44, %c0_45] : memref<3x8x200xf32, #tpu.memory_space<vmem>>, vector<1x8x200xf32>
    %96 = vector.shape_cast %95 : vector<1x8x200xf32> to vector<8x200xf32>
    %97 = vector.broadcast %94 : f32 to vector<8x200xf32>
    %98 = arith.mulf %97, %96 : vector<8x200xf32>
    %99 = arith.addf %92, %98 : vector<8x200xf32>
    %100 = vector.extract_strided_slice %35 {offsets = [0, 0], sizes = [1, 1], strides = [1, 1]} : vector<1x3xf32> to vector<1x1xf32>
    %101 = vector.extract %100[0, 0] : f32 from vector<1x1xf32>
    %c0_46 = arith.constant 0 : index
    %c0_47 = arith.constant 0 : index
    %102 = vector.load %arg7[%c0_46, %c0_47] : memref<8x3xf32, #tpu.memory_space<vmem>>, vector<8x1xf32>
    %103 = vector.broadcast %101 : f32 to vector<8x1xf32>
    %104 = arith.mulf %103, %102 : vector<8x1xf32>
    %105 = vector.extract_strided_slice %35 {offsets = [0, 1], sizes = [1, 1], strides = [1, 1]} : vector<1x3xf32> to vector<1x1xf32>
    %106 = vector.extract %105[0, 0] : f32 from vector<1x1xf32>
    %c0_48 = arith.constant 0 : index
    %c1_49 = arith.constant 1 : index
    %107 = vector.load %arg7[%c0_48, %c1_49] : memref<8x3xf32, #tpu.memory_space<vmem>>, vector<8x1xf32>
    %108 = vector.broadcast %106 : f32 to vector<8x1xf32>
    %109 = arith.mulf %108, %107 : vector<8x1xf32>
    %110 = arith.addf %104, %109 : vector<8x1xf32>
    %111 = vector.extract_strided_slice %35 {offsets = [0, 2], sizes = [1, 1], strides = [1, 1]} : vector<1x3xf32> to vector<1x1xf32>
    %112 = vector.extract %111[0, 0] : f32 from vector<1x1xf32>
    %c0_50 = arith.constant 0 : index
    %c2_51 = arith.constant 2 : index
    %113 = vector.load %arg7[%c0_50, %c2_51] : memref<8x3xf32, #tpu.memory_space<vmem>>, vector<8x1xf32>
    %114 = vector.broadcast %112 : f32 to vector<8x1xf32>
    %115 = arith.mulf %114, %113 : vector<8x1xf32>
    %116 = arith.addf %110, %115 : vector<8x1xf32>
    %117 = vector.extract_strided_slice %59 {offsets = [0, 0], sizes = [1, 1], strides = [1, 1]} : vector<1x3xf32> to vector<1x1xf32>
    %118 = vector.extract %117[0, 0] : f32 from vector<1x1xf32>
    %c0_52 = arith.constant 0 : index
    %c0_53 = arith.constant 0 : index
    %119 = vector.load %arg12[%c0_52, %c0_53] : memref<8x3xf32, #tpu.memory_space<vmem>>, vector<8x1xf32>
    %120 = vector.broadcast %118 : f32 to vector<8x1xf32>
    %121 = arith.mulf %120, %119 : vector<8x1xf32>
    %122 = arith.addf %116, %121 : vector<8x1xf32>
    %123 = vector.extract_strided_slice %59 {offsets = [0, 1], sizes = [1, 1], strides = [1, 1]} : vector<1x3xf32> to vector<1x1xf32>
    %124 = vector.extract %123[0, 0] : f32 from vector<1x1xf32>
    %c0_54 = arith.constant 0 : index
    %c1_55 = arith.constant 1 : index
    %125 = vector.load %arg12[%c0_54, %c1_55] : memref<8x3xf32, #tpu.memory_space<vmem>>, vector<8x1xf32>
    %126 = vector.broadcast %124 : f32 to vector<8x1xf32>
    %127 = arith.mulf %126, %125 : vector<8x1xf32>
    %128 = arith.addf %122, %127 : vector<8x1xf32>
    %129 = vector.extract_strided_slice %59 {offsets = [0, 2], sizes = [1, 1], strides = [1, 1]} : vector<1x3xf32> to vector<1x1xf32>
    %130 = vector.extract %129[0, 0] : f32 from vector<1x1xf32>
    %c0_56 = arith.constant 0 : index
    %c2_57 = arith.constant 2 : index
    %131 = vector.load %arg12[%c0_56, %c2_57] : memref<8x3xf32, #tpu.memory_space<vmem>>, vector<8x1xf32>
    %132 = vector.broadcast %130 : f32 to vector<8x1xf32>
    %133 = arith.mulf %132, %131 : vector<8x1xf32>
    %134 = arith.addf %128, %133 : vector<8x1xf32>
    %135 = arith.truncf %79 : vector<8x200xf32> to vector<8x200xbf16>
    %cst_58 = arith.constant dense<0.000000e+00> : vector<8x200xf32>
    %136 = tpu.matmul %135, %3, %cst_58 {dimension_numbers = #tpu.dot_dimension_numbers<[1], [0], [0], [1], [0, 0, 1, 1], [], []>} : vector<8x200xbf16>, vector<200x200xbf16>, vector<8x200xf32> -> vector<8x200xf32>
    %137 = arith.truncf %99 : vector<8x200xf32> to vector<8x200xbf16>
    %cst_59 = arith.constant dense<0.000000e+00> : vector<8x200xf32>
    %138 = tpu.matmul %137, %5, %cst_59 {dimension_numbers = #tpu.dot_dimension_numbers<[1], [0], [0], [1], [0, 0, 1, 1], [], []>} : vector<8x200xbf16>, vector<200x200xbf16>, vector<8x200xf32> -> vector<8x200xf32>
    %139 = vector.broadcast %134 : vector<8x1xf32> to vector<8x200xf32>
    %140 = arith.addf %136, %139 : vector<8x200xf32>
    %141 = vector.shape_cast %140 : vector<8x200xf32> to vector<8x200x1xf32>
    %142 = vector.shape_cast %138 : vector<8x200xf32> to vector<8x1x200xf32>
    %143 = vector.broadcast %141 : vector<8x200x1xf32> to vector<8x200x200xf32>
    %144 = vector.broadcast %142 : vector<8x1x200xf32> to vector<8x200x200xf32>
    %145 = arith.addf %143, %144 : vector<8x200x200xf32>
    %cst_60 = arith.constant 3.300000e-01 : f32
    %146 = vector.broadcast %cst_60 : f32 to vector<8x200x200xf32>
    %147 = arith.mulf %146, %145 : vector<8x200x200xf32>
    %148 = arith.maximumf %145, %147 : vector<8x200x200xf32>
    %149 = vector.shape_cast %148 : vector<8x200x200xf32> to vector<1600x200xf32>
    %150 = arith.truncf %149 : vector<1600x200xf32> to vector<1600x200xbf16>
    %cst_61 = arith.constant dense<0.000000e+00> : vector<16x200xf32>
    %151 = tpu.matmul %0, %150, %cst_61 {dimension_numbers = #tpu.dot_dimension_numbers<[1], [0], [0], [1], [0, 0, 1, 1], [], []>} : vector<16x1600xbf16>, vector<1600x200xbf16>, vector<16x200xf32> -> vector<16x200xf32>
    %152 = vector.broadcast %1 : vector<16x1xf32> to vector<16x200xf32>
    %153 = arith.addf %151, %152 : vector<16x200xf32>
    %cst_62 = arith.constant 3.300000e-01 : f32
    %154 = vector.broadcast %cst_62 : f32 to vector<16x200xf32>
    %155 = arith.mulf %154, %153 : vector<16x200xf32>
    %156 = arith.maximumf %153, %155 : vector<16x200xf32>
    %c0_63 = arith.constant 0 : index
    %c0_64 = arith.constant 0 : index
    %c0_65 = arith.constant 0 : index
    %157 = vector.load %arg15[%c0_63, %c0_64, %c0_65] : memref<2x16x200xf32, #tpu.memory_space<vmem>>, vector<1x16x200xf32>
    %158 = vector.shape_cast %157 : vector<1x16x200xf32> to vector<16x200xf32>
    %159 = vector.shape_cast %156 : vector<16x200xf32> to vector<1x16x200xf32>
    tpu.vector_store %arg15[%c0_63, %c0_64, %c0_65], %159 {strides = array<i32>} : memref<2x16x200xf32, #tpu.memory_space<vmem>>, vector<1x16x200xf32>,
    %c1_66 = arith.constant 1 : index
    %c0_67 = arith.constant 0 : index
    %c0_68 = arith.constant 0 : index
    %160 = vector.load %arg1[%c1_66, %c0_67, %c0_68] : memref<2x200x200xbf16, #tpu.memory_space<vmem>>, vector<1x200x200xbf16>
    %161 = vector.shape_cast %160 : vector<1x200x200xbf16> to vector<200x200xbf16>
    %c1_69 = arith.constant 1 : index
    %c0_70 = arith.constant 0 : index
    %c0_71 = arith.constant 0 : index
    %162 = vector.load %arg2[%c1_69, %c0_70, %c0_71] : memref<2x200x200xbf16, #tpu.memory_space<vmem>>, vector<1x200x200xbf16>
    %163 = vector.shape_cast %162 : vector<1x200x200xbf16> to vector<200x200xbf16>
    %164 = arith.extf %161 : vector<200x200xbf16> to vector<200x200xf32>
    %165 = vector.shape_cast %164 : vector<200x200xf32> to vector<1x200x200xf32>
    %cst_72 = arith.constant dense<0.000000e+00> : vector<1xf32>
    %166 = vector.multi_reduction <add>, %165, %cst_72 [1, 2] : vector<1x200x200xf32> to vector<1xf32>
    %167 = vector.shape_cast %166 : vector<1xf32> to vector<1x1x1xf32>
    %168 = vector.extract %167[0, 0, 0] : f32 from vector<1x1x1xf32>
    %cst_73 = arith.constant 2.500000e-05 : f32
    %169 = arith.mulf %168, %cst_73 : f32
    %c0_74 = arith.constant 0 : index
    %c0_75 = arith.constant 0 : index
    %170 = vector.load %arg3[%c0_74, %c0_75] : memref<1x1xf32, #tpu.memory_space<vmem>>, vector<1x1xf32>
    %171 = vector.extract %170[0, 0] : f32 from vector<1x1xf32>
    %172 = arith.mulf %169, %171 : f32
    %cst_76 = arith.constant 0.000000e+00 : f32
    %173 = arith.maximumf %172, %cst_76 : f32
    %c0_77 = arith.constant 0 : index
    %c0_78 = arith.constant 0 : index
    %174 = vector.load %arg4[%c0_77, %c0_78] : memref<1x3xf32, #tpu.memory_space<vmem>>, vector<1x3xf32>
    %175 = vector.broadcast %173 : f32 to vector<1x3xf32>
    %176 = arith.mulf %175, %174 : vector<1x3xf32>
    %c0_79 = arith.constant 0 : index
    %c0_80 = arith.constant 0 : index
    %177 = vector.load %arg5[%c0_79, %c0_80] : memref<1x3xf32, #tpu.memory_space<vmem>>, vector<1x3xf32>
    %178 = arith.addf %176, %177 : vector<1x3xf32>
    %cst_81 = arith.constant 0.0294117648 : f32
    %179 = vector.broadcast %cst_81 : f32 to vector<1x3xf32>
    %180 = arith.mulf %178, %179 : vector<1x3xf32>
    %181 = vector.shape_cast %180 : vector<1x3xf32> to vector<1x1x3xf32>
    %cst_82 = arith.constant dense<0xFF800000> : vector<1xf32>
    %182 = vector.multi_reduction <maximumf>, %181, %cst_82 [1, 2] : vector<1x1x3xf32> to vector<1xf32>
    %183 = vector.shape_cast %182 : vector<1xf32> to vector<1x1x1xf32>
    %184 = vector.extract %183[0, 0, 0] : f32 from vector<1x1x1xf32>
    %185 = vector.broadcast %184 : f32 to vector<1x3xf32>
    %186 = arith.subf %180, %185 : vector<1x3xf32>
    %187 = math.exp %186 : vector<1x3xf32>
    %188 = vector.shape_cast %187 : vector<1x3xf32> to vector<1x1x3xf32>
    %cst_83 = arith.constant dense<0.000000e+00> : vector<1xf32>
    %189 = vector.multi_reduction <add>, %188, %cst_83 [1, 2] : vector<1x1x3xf32> to vector<1xf32>
    %190 = vector.shape_cast %189 : vector<1xf32> to vector<1x1x1xf32>
    %191 = vector.extract %190[0, 0, 0] : f32 from vector<1x1x1xf32>
    %192 = vector.broadcast %191 : f32 to vector<1x3xf32>
    %193 = arith.divf %187, %192 : vector<1x3xf32>
    %c0_84 = arith.constant 0 : index
    %c0_85 = arith.constant 0 : index
    %194 = vector.load %arg8[%c0_84, %c0_85] : memref<1x1xf32, #tpu.memory_space<vmem>>, vector<1x1xf32>
    %195 = vector.extract %194[0, 0] : f32 from vector<1x1xf32>
    %196 = arith.mulf %169, %195 : f32
    %cst_86 = arith.constant 0.000000e+00 : f32
    %197 = arith.maximumf %196, %cst_86 : f32
    %c0_87 = arith.constant 0 : index
    %c0_88 = arith.constant 0 : index
    %198 = vector.load %arg9[%c0_87, %c0_88] : memref<1x3xf32, #tpu.memory_space<vmem>>, vector<1x3xf32>
    %199 = vector.broadcast %197 : f32 to vector<1x3xf32>
    %200 = arith.mulf %199, %198 : vector<1x3xf32>
    %c0_89 = arith.constant 0 : index
    %c0_90 = arith.constant 0 : index
    %201 = vector.load %arg10[%c0_89, %c0_90] : memref<1x3xf32, #tpu.memory_space<vmem>>, vector<1x3xf32>
    %202 = arith.addf %200, %201 : vector<1x3xf32>
    %cst_91 = arith.constant 0.0294117648 : f32
    %203 = vector.broadcast %cst_91 : f32 to vector<1x3xf32>
    %204 = arith.mulf %202, %203 : vector<1x3xf32>
    %205 = vector.shape_cast %204 : vector<1x3xf32> to vector<1x1x3xf32>
    %cst_92 = arith.constant dense<0xFF800000> : vector<1xf32>
    %206 = vector.multi_reduction <maximumf>, %205, %cst_92 [1, 2] : vector<1x1x3xf32> to vector<1xf32>
    %207 = vector.shape_cast %206 : vector<1xf32> to vector<1x1x1xf32>
    %208 = vector.extract %207[0, 0, 0] : f32 from vector<1x1x1xf32>
    %209 = vector.broadcast %208 : f32 to vector<1x3xf32>
    %210 = arith.subf %204, %209 : vector<1x3xf32>
    %211 = math.exp %210 : vector<1x3xf32>
    %212 = vector.shape_cast %211 : vector<1x3xf32> to vector<1x1x3xf32>
    %cst_93 = arith.constant dense<0.000000e+00> : vector<1xf32>
    %213 = vector.multi_reduction <add>, %212, %cst_93 [1, 2] : vector<1x1x3xf32> to vector<1xf32>
    %214 = vector.shape_cast %213 : vector<1xf32> to vector<1x1x1xf32>
    %215 = vector.extract %214[0, 0, 0] : f32 from vector<1x1x1xf32>
    %216 = vector.broadcast %215 : f32 to vector<1x3xf32>
    %217 = arith.divf %211, %216 : vector<1x3xf32>
    %218 = vector.extract_strided_slice %193 {offsets = [0, 0], sizes = [1, 1], strides = [1, 1]} : vector<1x3xf32> to vector<1x1xf32>
    %219 = vector.extract %218[0, 0] : f32 from vector<1x1xf32>
    %c0_94 = arith.constant 0 : index
    %c0_95 = arith.constant 0 : index
    %c0_96 = arith.constant 0 : index
    %220 = vector.load %arg6[%c0_94, %c0_95, %c0_96] : memref<3x8x200xf32, #tpu.memory_space<vmem>>, vector<1x8x200xf32>
    %221 = vector.shape_cast %220 : vector<1x8x200xf32> to vector<8x200xf32>
    %222 = vector.broadcast %219 : f32 to vector<8x200xf32>
    %223 = arith.mulf %222, %221 : vector<8x200xf32>
    %224 = vector.extract_strided_slice %193 {offsets = [0, 1], sizes = [1, 1], strides = [1, 1]} : vector<1x3xf32> to vector<1x1xf32>
    %225 = vector.extract %224[0, 0] : f32 from vector<1x1xf32>
    %c1_97 = arith.constant 1 : index
    %c0_98 = arith.constant 0 : index
    %c0_99 = arith.constant 0 : index
    %226 = vector.load %arg6[%c1_97, %c0_98, %c0_99] : memref<3x8x200xf32, #tpu.memory_space<vmem>>, vector<1x8x200xf32>
    %227 = vector.shape_cast %226 : vector<1x8x200xf32> to vector<8x200xf32>
    %228 = vector.broadcast %225 : f32 to vector<8x200xf32>
    %229 = arith.mulf %228, %227 : vector<8x200xf32>
    %230 = arith.addf %223, %229 : vector<8x200xf32>
    %231 = vector.extract_strided_slice %193 {offsets = [0, 2], sizes = [1, 1], strides = [1, 1]} : vector<1x3xf32> to vector<1x1xf32>
    %232 = vector.extract %231[0, 0] : f32 from vector<1x1xf32>
    %c2_100 = arith.constant 2 : index
    %c0_101 = arith.constant 0 : index
    %c0_102 = arith.constant 0 : index
    %233 = vector.load %arg6[%c2_100, %c0_101, %c0_102] : memref<3x8x200xf32, #tpu.memory_space<vmem>>, vector<1x8x200xf32>
    %234 = vector.shape_cast %233 : vector<1x8x200xf32> to vector<8x200xf32>
    %235 = vector.broadcast %232 : f32 to vector<8x200xf32>
    %236 = arith.mulf %235, %234 : vector<8x200xf32>
    %237 = arith.addf %230, %236 : vector<8x200xf32>
    %238 = vector.extract_strided_slice %217 {offsets = [0, 0], sizes = [1, 1], strides = [1, 1]} : vector<1x3xf32> to vector<1x1xf32>
    %239 = vector.extract %238[0, 0] : f32 from vector<1x1xf32>
    %c0_103 = arith.constant 0 : index
    %c0_104 = arith.constant 0 : index
    %c0_105 = arith.constant 0 : index
    %240 = vector.load %arg11[%c0_103, %c0_104, %c0_105] : memref<3x8x200xf32, #tpu.memory_space<vmem>>, vector<1x8x200xf32>
    %241 = vector.shape_cast %240 : vector<1x8x200xf32> to vector<8x200xf32>
    %242 = vector.broadcast %239 : f32 to vector<8x200xf32>
    %243 = arith.mulf %242, %241 : vector<8x200xf32>
    %244 = vector.extract_strided_slice %217 {offsets = [0, 1], sizes = [1, 1], strides = [1, 1]} : vector<1x3xf32> to vector<1x1xf32>
    %245 = vector.extract %244[0, 0] : f32 from vector<1x1xf32>
    %c1_106 = arith.constant 1 : index
    %c0_107 = arith.constant 0 : index
    %c0_108 = arith.constant 0 : index
    %246 = vector.load %arg11[%c1_106, %c0_107, %c0_108] : memref<3x8x200xf32, #tpu.memory_space<vmem>>, vector<1x8x200xf32>
    %247 = vector.shape_cast %246 : vector<1x8x200xf32> to vector<8x200xf32>
    %248 = vector.broadcast %245 : f32 to vector<8x200xf32>
    %249 = arith.mulf %248, %247 : vector<8x200xf32>
    %250 = arith.addf %243, %249 : vector<8x200xf32>
    %251 = vector.extract_strided_slice %217 {offsets = [0, 2], sizes = [1, 1], strides = [1, 1]} : vector<1x3xf32> to vector<1x1xf32>
    %252 = vector.extract %251[0, 0] : f32 from vector<1x1xf32>
    %c2_109 = arith.constant 2 : index
    %c0_110 = arith.constant 0 : index
    %c0_111 = arith.constant 0 : index
    %253 = vector.load %arg11[%c2_109, %c0_110, %c0_111] : memref<3x8x200xf32, #tpu.memory_space<vmem>>, vector<1x8x200xf32>
    %254 = vector.shape_cast %253 : vector<1x8x200xf32> to vector<8x200xf32>
    %255 = vector.broadcast %252 : f32 to vector<8x200xf32>
    %256 = arith.mulf %255, %254 : vector<8x200xf32>
    %257 = arith.addf %250, %256 : vector<8x200xf32>
    %258 = vector.extract_strided_slice %193 {offsets = [0, 0], sizes = [1, 1], strides = [1, 1]} : vector<1x3xf32> to vector<1x1xf32>
    %259 = vector.extract %258[0, 0] : f32 from vector<1x1xf32>
    %c0_112 = arith.constant 0 : index
    %c0_113 = arith.constant 0 : index
    %260 = vector.load %arg7[%c0_112, %c0_113] : memref<8x3xf32, #tpu.memory_space<vmem>>, vector<8x1xf32>
    %261 = vector.broadcast %259 : f32 to vector<8x1xf32>
    %262 = arith.mulf %261, %260 : vector<8x1xf32>
    %263 = vector.extract_strided_slice %193 {offsets = [0, 1], sizes = [1, 1], strides = [1, 1]} : vector<1x3xf32> to vector<1x1xf32>
    %264 = vector.extract %263[0, 0] : f32 from vector<1x1xf32>
    %c0_114 = arith.constant 0 : index
    %c1_115 = arith.constant 1 : index
    %265 = vector.load %arg7[%c0_114, %c1_115] : memref<8x3xf32, #tpu.memory_space<vmem>>, vector<8x1xf32>
    %266 = vector.broadcast %264 : f32 to vector<8x1xf32>
    %267 = arith.mulf %266, %265 : vector<8x1xf32>
    %268 = arith.addf %262, %267 : vector<8x1xf32>
    %269 = vector.extract_strided_slice %193 {offsets = [0, 2], sizes = [1, 1], strides = [1, 1]} : vector<1x3xf32> to vector<1x1xf32>
    %270 = vector.extract %269[0, 0] : f32 from vector<1x1xf32>
    %c0_116 = arith.constant 0 : index
    %c2_117 = arith.constant 2 : index
    %271 = vector.load %arg7[%c0_116, %c2_117] : memref<8x3xf32, #tpu.memory_space<vmem>>, vector<8x1xf32>
    %272 = vector.broadcast %270 : f32 to vector<8x1xf32>
    %273 = arith.mulf %272, %271 : vector<8x1xf32>
    %274 = arith.addf %268, %273 : vector<8x1xf32>
    %275 = vector.extract_strided_slice %217 {offsets = [0, 0], sizes = [1, 1], strides = [1, 1]} : vector<1x3xf32> to vector<1x1xf32>
    %276 = vector.extract %275[0, 0] : f32 from vector<1x1xf32>
    %c0_118 = arith.constant 0 : index
    %c0_119 = arith.constant 0 : index
    %277 = vector.load %arg12[%c0_118, %c0_119] : memref<8x3xf32, #tpu.memory_space<vmem>>, vector<8x1xf32>
    %278 = vector.broadcast %276 : f32 to vector<8x1xf32>
    %279 = arith.mulf %278, %277 : vector<8x1xf32>
    %280 = arith.addf %274, %279 : vector<8x1xf32>
    %281 = vector.extract_strided_slice %217 {offsets = [0, 1], sizes = [1, 1], strides = [1, 1]} : vector<1x3xf32> to vector<1x1xf32>
    %282 = vector.extract %281[0, 0] : f32 from vector<1x1xf32>
    %c0_120 = arith.constant 0 : index
    %c1_121 = arith.constant 1 : index
    %283 = vector.load %arg12[%c0_120, %c1_121] : memref<8x3xf32, #tpu.memory_space<vmem>>, vector<8x1xf32>
    %284 = vector.broadcast %282 : f32 to vector<8x1xf32>
    %285 = arith.mulf %284, %283 : vector<8x1xf32>
    %286 = arith.addf %280, %285 : vector<8x1xf32>
    %287 = vector.extract_strided_slice %217 {offsets = [0, 2], sizes = [1, 1], strides = [1, 1]} : vector<1x3xf32> to vector<1x1xf32>
    %288 = vector.extract %287[0, 0] : f32 from vector<1x1xf32>
    %c0_122 = arith.constant 0 : index
    %c2_123 = arith.constant 2 : index
    %289 = vector.load %arg12[%c0_122, %c2_123] : memref<8x3xf32, #tpu.memory_space<vmem>>, vector<8x1xf32>
    %290 = vector.broadcast %288 : f32 to vector<8x1xf32>
    %291 = arith.mulf %290, %289 : vector<8x1xf32>
    %292 = arith.addf %286, %291 : vector<8x1xf32>
    %293 = arith.truncf %237 : vector<8x200xf32> to vector<8x200xbf16>
    %cst_124 = arith.constant dense<0.000000e+00> : vector<8x200xf32>
    %294 = tpu.matmul %293, %161, %cst_124 {dimension_numbers = #tpu.dot_dimension_numbers<[1], [0], [0], [1], [0, 0, 1, 1], [], []>} : vector<8x200xbf16>, vector<200x200xbf16>, vector<8x200xf32> -> vector<8x200xf32>
    %295 = arith.truncf %257 : vector<8x200xf32> to vector<8x200xbf16>
    %cst_125 = arith.constant dense<0.000000e+00> : vector<8x200xf32>
    %296 = tpu.matmul %295, %163, %cst_125 {dimension_numbers = #tpu.dot_dimension_numbers<[1], [0], [0], [1], [0, 0, 1, 1], [], []>} : vector<8x200xbf16>, vector<200x200xbf16>, vector<8x200xf32> -> vector<8x200xf32>
    %297 = vector.broadcast %292 : vector<8x1xf32> to vector<8x200xf32>
    %298 = arith.addf %294, %297 : vector<8x200xf32>
    %299 = vector.shape_cast %298 : vector<8x200xf32> to vector<8x200x1xf32>
    %300 = vector.shape_cast %296 : vector<8x200xf32> to vector<8x1x200xf32>
    %301 = vector.broadcast %299 : vector<8x200x1xf32> to vector<8x200x200xf32>
    %302 = vector.broadcast %300 : vector<8x1x200xf32> to vector<8x200x200xf32>
    %303 = arith.addf %301, %302 : vector<8x200x200xf32>
    %cst_126 = arith.constant 3.300000e-01 : f32
    %304 = vector.broadcast %cst_126 : f32 to vector<8x200x200xf32>
    %305 = arith.mulf %304, %303 : vector<8x200x200xf32>
    %306 = arith.maximumf %303, %305 : vector<8x200x200xf32>
    %307 = vector.shape_cast %306 : vector<8x200x200xf32> to vector<1600x200xf32>
    %308 = arith.truncf %307 : vector<1600x200xf32> to vector<1600x200xbf16>
    %cst_127 = arith.constant dense<0.000000e+00> : vector<16x200xf32>
    %309 = tpu.matmul %0, %308, %cst_127 {dimension_numbers = #tpu.dot_dimension_numbers<[1], [0], [0], [1], [0, 0, 1, 1], [], []>} : vector<16x1600xbf16>, vector<1600x200xbf16>, vector<16x200xf32> -> vector<16x200xf32>
    %310 = vector.broadcast %1 : vector<16x1xf32> to vector<16x200xf32>
    %311 = arith.addf %309, %310 : vector<16x200xf32>
    %cst_128 = arith.constant 3.300000e-01 : f32
    %312 = vector.broadcast %cst_128 : f32 to vector<16x200xf32>
    %313 = arith.mulf %312, %311 : vector<16x200xf32>
    %314 = arith.maximumf %311, %313 : vector<16x200xf32>
    %c1_129 = arith.constant 1 : index
    %c0_130 = arith.constant 0 : index
    %c0_131 = arith.constant 0 : index
    %315 = vector.load %arg15[%c1_129, %c0_130, %c0_131] : memref<2x16x200xf32, #tpu.memory_space<vmem>>, vector<1x16x200xf32>
    %316 = vector.shape_cast %315 : vector<1x16x200xf32> to vector<16x200xf32>
    %317 = vector.shape_cast %314 : vector<16x200xf32> to vector<1x16x200xf32>
    tpu.vector_store %arg15[%c1_129, %c0_130, %c0_131], %317 {strides = array<i32>} : memref<2x16x200xf32, #tpu.memory_space<vmem>>, vector<1x16x200xf32>,
    return
  }
  func.func @transform_0(%arg0: i32) -> (i32, i32, i32) {
    %c0_i32 = arith.constant 0 : i32
    %c0_i32_0 = arith.constant 0 : i32
    %c0_i32_1 = arith.constant 0 : i32
    return %arg0, %c0_i32, %c0_i32_0 : i32, i32, i32
  }
  func.func @transform_1(%arg0: i32) -> (i32, i32, i32) {
    %c0_i32 = arith.constant 0 : i32
    %c0_i32_0 = arith.constant 0 : i32
    %c0_i32_1 = arith.constant 0 : i32
    return %arg0, %c0_i32, %c0_i32_0 : i32, i32, i32
  }
  func.func @transform_2(%arg0: i32) -> (i32, i32) {
    %c0_i32 = arith.constant 0 : i32
    %c0_i32_0 = arith.constant 0 : i32
    %c0_i32_1 = arith.constant 0 : i32
    return %c0_i32, %c0_i32_0 : i32, i32
  }
  func.func @transform_3(%arg0: i32) -> (i32, i32) {
    %c0_i32 = arith.constant 0 : i32
    %c0_i32_0 = arith.constant 0 : i32
    %c0_i32_1 = arith.constant 0 : i32
    return %c0_i32, %c0_i32_0 : i32, i32
  }
  func.func @transform_4(%arg0: i32) -> (i32, i32) {
    %c0_i32 = arith.constant 0 : i32
    %c0_i32_0 = arith.constant 0 : i32
    %c0_i32_1 = arith.constant 0 : i32
    return %c0_i32, %c0_i32_0 : i32, i32
  }
  func.func @transform_5(%arg0: i32) -> (i32, i32, i32) {
    %c0_i32 = arith.constant 0 : i32
    %c0_i32_0 = arith.constant 0 : i32
    %c0_i32_1 = arith.constant 0 : i32
    %c0_i32_2 = arith.constant 0 : i32
    return %c0_i32, %c0_i32_0, %c0_i32_1 : i32, i32, i32
  }
  func.func @transform_6(%arg0: i32) -> (i32, i32) {
    %c0_i32 = arith.constant 0 : i32
    %c0_i32_0 = arith.constant 0 : i32
    %c0_i32_1 = arith.constant 0 : i32
    return %c0_i32, %c0_i32_0 : i32, i32
  }
  func.func @transform_7(%arg0: i32) -> (i32, i32) {
    %c0_i32 = arith.constant 0 : i32
    %c0_i32_0 = arith.constant 0 : i32
    %c0_i32_1 = arith.constant 0 : i32
    return %c0_i32, %c0_i32_0 : i32, i32
  }
  func.func @transform_8(%arg0: i32) -> (i32, i32) {
    %c0_i32 = arith.constant 0 : i32
    %c0_i32_0 = arith.constant 0 : i32
    %c0_i32_1 = arith.constant 0 : i32
    return %c0_i32, %c0_i32_0 : i32, i32
  }
  func.func @transform_9(%arg0: i32) -> (i32, i32) {
    %c0_i32 = arith.constant 0 : i32
    %c0_i32_0 = arith.constant 0 : i32
    %c0_i32_1 = arith.constant 0 : i32
    return %c0_i32, %c0_i32_0 : i32, i32
  }
  func.func @transform_10(%arg0: i32) -> (i32, i32, i32) {
    %c0_i32 = arith.constant 0 : i32
    %c0_i32_0 = arith.constant 0 : i32
    %c0_i32_1 = arith.constant 0 : i32
    %c0_i32_2 = arith.constant 0 : i32
    return %c0_i32, %c0_i32_0, %c0_i32_1 : i32, i32, i32
  }
  func.func @transform_11(%arg0: i32) -> (i32, i32) {
    %c0_i32 = arith.constant 0 : i32
    %c0_i32_0 = arith.constant 0 : i32
    %c0_i32_1 = arith.constant 0 : i32
    return %c0_i32, %c0_i32_0 : i32, i32
  }
  func.func @transform_12(%arg0: i32) -> (i32, i32) {
    %c0_i32 = arith.constant 0 : i32
    %c0_i32_0 = arith.constant 0 : i32
    %c0_i32_1 = arith.constant 0 : i32
    return %c0_i32, %c0_i32_0 : i32, i32
  }
  func.func @transform_13(%arg0: i32) -> (i32, i32) {
    %c0_i32 = arith.constant 0 : i32
    %c0_i32_0 = arith.constant 0 : i32
    %c0_i32_1 = arith.constant 0 : i32
    return %c0_i32, %c0_i32_0 : i32, i32
  }
  func.func @transform_14(%arg0: i32) -> (i32, i32, i32) {
    %c0_i32 = arith.constant 0 : i32
    %c0_i32_0 = arith.constant 0 : i32
    %c0_i32_1 = arith.constant 0 : i32
    return %arg0, %c0_i32, %c0_i32_0 : i32, i32, i32
  }
}

</mosaic_0001>

<llo_original>
// kernel: brain_cnn_forward.1
$region0: #{brain_cnn_forward.1}
  #allocation0 [shape = 'u32[]', space=smem, size = 0x4, offset = 0x4, fixed_abs, tag = 'smem constant byte address 0x4 - core index']
  #allocation1 [shape = 'u32[144,128]{1,0:T(1,128)}', space=vmem, size = 0x12000, scoped, tag = 'internal scratch']
  #allocation2 [shape = 'f32[1,1]{1,0:T(1,128)S(1)}', space=vmem, size = 0x200, scoped, tag = 'scoped memory for brain_cnn_forward.1']
  #allocation3 [shape = 'f32[1,1]{1,0:T(1,128)S(1)}', space=vmem, size = 0x200, scoped, tag = 'scoped memory for brain_cnn_forward.1']
  %s0 = inlined_call_operand.vmem [shape: bf16[2,200,200], index: 0, kind: input, shape index: {}]
  %s1 = inlined_call_operand.vmem [shape: bf16[2,200,200], index: 1, kind: input, shape index: {}]
  %s2 = inlined_call_operand.<no memory space> [shape: f32[1,1], index: 2, kind: input, shape index: {}]
  %s3 = inlined_call_operand.vmem [shape: f32[1,3], index: 3, kind: input, shape index: {}]
  %s4 = inlined_call_operand.vmem [shape: f32[1,3], index: 4, kind: input, shape index: {}]
  %s5 = inlined_call_operand.vmem [shape: f32[3,8,200], index: 5, kind: input, shape index: {}]
  %s6 = inlined_call_operand.vmem [shape: f32[8,3], index: 6, kind: input, shape index: {}]
  %s7 = inlined_call_operand.<no memory space> [shape: f32[1,1], index: 7, kind: input, shape index: {}]
  %s8 = inlined_call_operand.vmem [shape: f32[1,3], index: 8, kind: input, shape index: {}]
  %s9 = inlined_call_operand.vmem [shape: f32[1,3], index: 9, kind: input, shape index: {}]
  %s10 = inlined_call_operand.vmem [shape: f32[3,8,200], index: 10, kind: input, shape index: {}]
  %s11 = inlined_call_operand.vmem [shape: f32[8,3], index: 11, kind: input, shape index: {}]
  %s12 = inlined_call_operand.vmem [shape: bf16[16,1600], index: 12, kind: input, shape index: {}]
  %s13 = inlined_call_operand.vmem [shape: f32[16,1], index: 13, kind: input, shape index: {}]
  %s14 = inlined_call_operand.vmem [shape: f32[2,16,200], index: 14, kind: output, shape index: {}]
  %s15 = sld [smem:[#allocation0]]
  $region66: #{brain_cnn_forward.1} parent=0
    _
  %s17 = ssub.s32 1, %s15
  %s18 = scalar_select 0, %s17, %s15
  %v19 = vstv %s2
  %20 = vst [vmem:[#allocation2] sm:$0x1] %v19
  %v21 = vstv %s7
  %22 = vst [vmem:[#allocation3] sm:$0x1] %v21
  // Predicated region
  $region2: #{brain_cnn_forward.1} parent=0 // pred_check
    _
  $region3: #{brain_cnn_forward.1} parent=0 // pred_check_branch
    %24 = sbr.rel (0) target = $region5
  $region4: #{brain_cnn_forward.1} parent=0 // pred_region
    _
  $region5: #{brain_cnn_forward.1} parent=0 // pred_fallthru
    _
  // Predicated region
  $region6: #{brain_cnn_forward.1} parent=0 // pred_check
    _
  $region7: #{brain_cnn_forward.1} parent=0 // pred_check_branch
    %26 = sbr.rel (0) target = $region9
  $region8: #{brain_cnn_forward.1} parent=0 // pred_region
    _
  $region9: #{brain_cnn_forward.1} parent=0 // pred_fallthru
    _
  // Predicated region
  $region10: #{brain_cnn_forward.1} parent=0 // pred_check
    _
  $region11: #{brain_cnn_forward.1} parent=0 // pred_check_branch
    %28 = sbr.rel (0) target = $region13
  $region12: #{brain_cnn_forward.1} parent=0 // pred_region
    _
  $region13: #{brain_cnn_forward.1} parent=0 // pred_fallthru
    _
  // Predicated region
  $region14: #{brain_cnn_forward.1} parent=0 // pred_check
    _
  $region15: #{brain_cnn_forward.1} parent=0 // pred_check_branch
    %30 = sbr.rel (0) target = $region17
  $region16: #{brain_cnn_forward.1} parent=0 // pred_region
    _
  $region17: #{brain_cnn_forward.1} parent=0 // pred_fallthru
    _
  // Predicated region
  $region18: #{brain_cnn_forward.1} parent=0 // pred_check
    _
  $region19: #{brain_cnn_forward.1} parent=0 // pred_check_branch
    %32 = sbr.rel (0) target = $region21
  $region20: #{brain_cnn_forward.1} parent=0 // pred_region
    _
  $region21: #{brain_cnn_forward.1} parent=0 // pred_fallthru
    _
  // Predicated region
  $region22: #{brain_cnn_forward.1} parent=0 // pred_check
    _
  $region23: #{brain_cnn_forward.1} parent=0 // pred_check_branch
    %34 = sbr.rel (0) target = $region25
  $region24: #{brain_cnn_forward.1} parent=0 // pred_region
    _
  $region25: #{brain_cnn_forward.1} parent=0 // pred_fallthru
    _
  // Predicated region
  $region26: #{brain_cnn_forward.1} parent=0 // pred_check
    _
  $region27: #{brain_cnn_forward.1} parent=0 // pred_check_branch
    %36 = sbr.rel (0) target = $region29
  $region28: #{brain_cnn_forward.1} parent=0 // pred_region
    _
  $region29: #{brain_cnn_forward.1} parent=0 // pred_fallthru
    _
  // Predicated region
  $region30: #{brain_cnn_forward.1} parent=0 // pred_check
    _
  $region31: #{brain_cnn_forward.1} parent=0 // pred_check_branch
    %38 = sbr.rel (0) target = $region33
  $region32: #{brain_cnn_forward.1} parent=0 // pred_region
    _
  $region33: #{brain_cnn_forward.1} parent=0 // pred_fallthru
    _
  // Predicated region
  $region34: #{brain_cnn_forward.1} parent=0 // pred_check
    _
  $region35: #{brain_cnn_forward.1} parent=0 // pred_check_branch
    %40 = sbr.rel (0) target = $region37
  $region36: #{brain_cnn_forward.1} parent=0 // pred_region
    _
  $region37: #{brain_cnn_forward.1} parent=0 // pred_fallthru
    _
  // Predicated region
  $region38: #{brain_cnn_forward.1} parent=0 // pred_check
    _
  $region39: #{brain_cnn_forward.1} parent=0 // pred_check_branch
    %42 = sbr.rel (0) target = $region41
  $region40: #{brain_cnn_forward.1} parent=0 // pred_region
    _
  $region41: #{brain_cnn_forward.1} parent=0 // pred_fallthru
    _
  // Predicated region
  $region42: #{brain_cnn_forward.1} parent=0 // pred_check
    _
  $region43: #{brain_cnn_forward.1} parent=0 // pred_check_branch
    %44 = sbr.rel (0) target = $region45
  $region44: #{brain_cnn_forward.1} parent=0 // pred_region
    _
  $region45: #{brain_cnn_forward.1} parent=0 // pred_fallthru
    _
  // Predicated region
  $region46: #{brain_cnn_forward.1} parent=0 // pred_check
    _
  $region47: #{brain_cnn_forward.1} parent=0 // pred_check_branch
    %46 = sbr.rel (0) target = $region49
  $region48: #{brain_cnn_forward.1} parent=0 // pred_region
    _
  $region49: #{brain_cnn_forward.1} parent=0 // pred_fallthru
    _
  // Predicated region
  $region50: #{brain_cnn_forward.1} parent=0 // pred_check
    _
  $region51: #{brain_cnn_forward.1} parent=0 // pred_check_branch
    %48 = sbr.rel (0) target = $region53
  $region52: #{brain_cnn_forward.1} parent=0 // pred_region
    _
  $region53: #{brain_cnn_forward.1} parent=0 // pred_fallthru
    _
  // Predicated region
  $region54: #{brain_cnn_forward.1} parent=0 // pred_check
    _
  $region55: #{brain_cnn_forward.1} parent=0 // pred_check_branch
    %50 = sbr.rel (0) target = $region57
  $region56: #{brain_cnn_forward.1} parent=0 // pred_region
    _
  $region57: #{brain_cnn_forward.1} parent=0 // pred_fallthru
    _
  %v52 = vld [vmem:[%s12] sm:$0xff]
  %v53 = vld [vmem:[%s12 + $0x8] sm:$0xff]
  %v54 = vld [vmem:[%s12 + $0x10] sm:$0xff]
  %v55 = vld [vmem:[%s12 + $0x18] sm:$0xff]
  %v56 = vld [vmem:[%s12 + $0x20] sm:$0xff]
  %v57 = vld [vmem:[%s12 + $0x28] sm:$0xff]
  %v58 = vld [vmem:[%s12 + $0x30] sm:$0xf]
  %v59 = vld [vmem:[%s12 + $0x34] sm:$0xff]
  %v60 = vld [vmem:[%s12 + $0x3c] sm:$0xff]
  %v61 = vld [vmem:[%s12 + $0x44] sm:$0xff]
  %v62 = vld [vmem:[%s12 + $0x4c] sm:$0xff]
  %v63 = vld [vmem:[%s12 + $0x54] sm:$0xff]
  %v64 = vld [vmem:[%s12 + $0x5c] sm:$0xff]
  %v65 = vld [vmem:[%s12 + $0x64] sm:$0xf]
  %v66 = vld [vmem:[%s13] sm:$0xff]
  %v67 = vld [vmem:[%s13 + $0x8] sm:$0xff]
  %v68 = vld [vmem:[%s0] sm:$0xff]
  %v69 = vld [vmem:[%s0 + $0x8] sm:$0xff]
  %v70 = vld [vmem:[%s0 + $0x10] sm:$0xff]
  %v71 = vld [vmem:[%s0 + $0x18] sm:$0xff]
  %v72 = vld [vmem:[%s0 + $0x20] sm:$0xff]
  %v73 = vld [vmem:[%s0 + $0x28] sm:$0xff]
  %v74 = vld [vmem:[%s0 + $0x30] sm:$0xff]
  %v75 = vld [vmem:[%s0 + $0x38] sm:$0xff]
  %v76 = vld [vmem:[%s0 + $0x40] sm:$0xff]
  %v77 = vld [vmem:[%s0 + $0x48] sm:$0xff]
  %v78 = vld [vmem:[%s0 + $0x50] sm:$0xff]
  %v79 = vld [vmem:[%s0 + $0x58] sm:$0xff]
  %v80 = vld [vmem:[%s0 + $0x60] sm:$0xff]
  %v81 = vld [vmem:[%s0 + $0x68] sm:$0xff]
  %v82 = vld [vmem:[%s0 + $0x70] sm:$0xff]
  %v83 = vld [vmem:[%s0 + $0x78] sm:$0xff]
  %v84 = vld [vmem:[%s0 + $0x80] sm:$0xff]
  %v85 = vld [vmem:[%s0 + $0x88] sm:$0xff]
  %v86 = vld [vmem:[%s0 + $0x90] sm:$0xff]
  %v87 = vld [vmem:[%s0 + $0x98] sm:$0xff]
  %v88 = vld [vmem:[%s0 + $0xa0] sm:$0xff]
  %v89 = vld [vmem:[%s0 + $0xa8] sm:$0xff]
  %v90 = vld [vmem:[%s0 + $0xb0] sm:$0xff]
  %v91 = vld [vmem:[%s0 + $0xb8] sm:$0xff]
  %v92 = vld [vmem:[%s0 + $0xc0] sm:$0xff]
  %v93 = vld [vmem:[%s1] sm:$0xff]
  %v94 = vld [vmem:[%s1 + $0x8] sm:$0xff]
  %v95 = vld [vmem:[%s1 + $0x10] sm:$0xff]
  %v96 = vld [vmem:[%s1 + $0x18] sm:$0xff]
  %v97 = vld [vmem:[%s1 + $0x20] sm:$0xff]
  %v98 = vld [vmem:[%s1 + $0x28] sm:$0xff]
  %v99 = vld [vmem:[%s1 + $0x30] sm:$0xff]
  %v100 = vld [vmem:[%s1 + $0x38] sm:$0xff]
  %v101 = vld [vmem:[%s1 + $0x40] sm:$0xff]
  %v102 = vld [vmem:[%s1 + $0x48] sm:$0xff]
  %v103 = vld [vmem:[%s1 + $0x50] sm:$0xff]
  %v104 = vld [vmem:[%s1 + $0x58] sm:$0xff]
  %v105 = vld [vmem:[%s1 + $0x60] sm:$0xff]
  %v106 = vld [vmem:[%s1 + $0x68] sm:$0xff]
  %v107 = vld [vmem:[%s1 + $0x70] sm:$0xff]
  %v108 = vld [vmem:[%s1 + $0x78] sm:$0xff]
  %v109 = vld [vmem:[%s1 + $0x80] sm:$0xff]
  %v110 = vld [vmem:[%s1 + $0x88] sm:$0xff]
  %v111 = vld [vmem:[%s1 + $0x90] sm:$0xff]
  %v112 = vld [vmem:[%s1 + $0x98] sm:$0xff]
  %v113 = vld [vmem:[%s1 + $0xa0] sm:$0xff]
  %v114 = vld [vmem:[%s1 + $0xa8] sm:$0xff]
  %v115 = vld [vmem:[%s1 + $0xb0] sm:$0xff]
  %v116 = vld [vmem:[%s1 + $0xb8] sm:$0xff]
  %v117 = vld [vmem:[%s1 + $0xc0] sm:$0xff]
  %v118 = vunpack.c.l.bf16 %v68
  %v119 = vunpack.c.h.bf16 %v68
  %v120 = vunpack.c.l.bf16 %v69
  %v121 = vunpack.c.h.bf16 %v69
  %v122 = vunpack.c.l.bf16 %v70
  %v123 = vunpack.c.h.bf16 %v70
  %v124 = vunpack.c.l.bf16 %v71
  %v125 = vunpack.c.h.bf16 %v71
  %v126 = vunpack.c.l.bf16 %v72
  %v127 = vunpack.c.h.bf16 %v72
  %v128 = vunpack.c.l.bf16 %v73
  %v129 = vunpack.c.h.bf16 %v73
  %v130 = vunpack.c.l.bf16 %v74
  %v131 = vunpack.c.h.bf16 %v74
  %v132 = vunpack.c.l.bf16 %v75
  %v133 = vunpack.c.h.bf16 %v75
  %v134 = vunpack.c.l.bf16 %v76
  %v135 = vunpack.c.h.bf16 %v76
  %v136 = vunpack.c.l.bf16 %v77
  %v137 = vunpack.c.h.bf16 %v77
  %v138 = vunpack.c.l.bf16 %v78
  %v139 = vunpack.c.h.bf16 %v78
  %v140 = vunpack.c.l.bf16 %v79
  %v141 = vunpack.c.h.bf16 %v79
  %v142 = vunpack.c.l.bf16 %v80
  %v143 = vunpack.c.h.bf16 %v80
  %v144 = vunpack.c.l.bf16 %v81
  %v145 = vunpack.c.h.bf16 %v81
  %v146 = vunpack.c.l.bf16 %v82
  %v147 = vunpack.c.h.bf16 %v82
  %v148 = vunpack.c.l.bf16 %v83
  %v149 = vunpack.c.h.bf16 %v83
  %v150 = vunpack.c.l.bf16 %v84
  %v151 = vunpack.c.h.bf16 %v84
  %v152 = vunpack.c.l.bf16 %v85
  %v153 = vunpack.c.h.bf16 %v85
  %v154 = vunpack.c.l.bf16 %v86
  %v155 = vunpack.c.h.bf16 %v86
  %v156 = vunpack.c.l.bf16 %v87
  %v157 = vunpack.c.h.bf16 %v87
  %v158 = vunpack.c.l.bf16 %v88
  %v159 = vunpack.c.h.bf16 %v88
  %v160 = vunpack.c.l.bf16 %v89
  %v161 = vunpack.c.h.bf16 %v89
  %v162 = vunpack.c.l.bf16 %v90
  %v163 = vunpack.c.h.bf16 %v90
  %v164 = vunpack.c.l.bf16 %v91
  %v165 = vunpack.c.h.bf16 %v91
  %v166 = vunpack.c.l.bf16 %v92
  %v167 = vunpack.c.h.bf16 %v92
  %vm168 = vcmask 588800
  %v169 = vsel %vm168, %v119, 0.0
  %v170 = vadd.f32 %v118, %v169
  %v171 = vadd.f32 %v170, %v120
  %v172 = vsel %vm168, %v121, 0.0
  %v173 = vadd.f32 %v171, %v172
  %v174 = vadd.f32 %v173, %v122
  %v175 = vsel %vm168, %v123, 0.0
  %v176 = vadd.f32 %v174, %v175
  %v177 = vadd.f32 %v176, %v124
  %v178 = vsel %vm168, %v125, 0.0
  %v179 = vadd.f32 %v177, %v178
  %v180 = vadd.f32 %v179, %v126
  %v181 = vsel %vm168, %v127, 0.0
  %v182 = vadd.f32 %v180, %v181
  %v183 = vadd.f32 %v182, %v128
  %v184 = vsel %vm168, %v129, 0.0
  %v185 = vadd.f32 %v183, %v184
  %v186 = vadd.f32 %v185, %v130
  %v187 = vsel %vm168, %v131, 0.0
  %v188 = vadd.f32 %v186, %v187
  %v189 = vadd.f32 %v188, %v132
  %v190 = vsel %vm168, %v133, 0.0
  %v191 = vadd.f32 %v189, %v190
  %v192 = vadd.f32 %v191, %v134
  %v193 = vsel %vm168, %v135, 0.0
  %v194 = vadd.f32 %v192, %v193
  %v195 = vadd.f32 %v194, %v136
  %v196 = vsel %vm168, %v137, 0.0
  %v197 = vadd.f32 %v195, %v196
  %v198 = vadd.f32 %v197, %v138
  %v199 = vsel %vm168, %v139, 0.0
  %v200 = vadd.f32 %v198, %v199
  %v201 = vadd.f32 %v200, %v140
  %v202 = vsel %vm168, %v141, 0.0
  %v203 = vadd.f32 %v201, %v202
  %v204 = vadd.f32 %v203, %v142
  %v205 = vsel %vm168, %v143, 0.0
  %v206 = vadd.f32 %v204, %v205
  %v207 = vadd.f32 %v206, %v144
  %v208 = vsel %vm168, %v145, 0.0
  %v209 = vadd.f32 %v207, %v208
  %v210 = vadd.f32 %v209, %v146
  %v211 = vsel %vm168, %v147, 0.0
  %v212 = vadd.f32 %v210, %v211
  %v213 = vadd.f32 %v212, %v148
  %v214 = vsel %vm168, %v149, 0.0
  %v215 = vadd.f32 %v213, %v214
  %v216 = vadd.f32 %v215, %v150
  %v217 = vsel %vm168, %v151, 0.0
  %v218 = vadd.f32 %v216, %v217
  %v219 = vadd.f32 %v218, %v152
  %v220 = vsel %vm168, %v153, 0.0
  %v221 = vadd.f32 %v219, %v220
  %v222 = vadd.f32 %v221, %v154
  %v223 = vsel %vm168, %v155, 0.0
  %v224 = vadd.f32 %v222, %v223
  %v225 = vadd.f32 %v224, %v156
  %v226 = vsel %vm168, %v157, 0.0
  %v227 = vadd.f32 %v225, %v226
  %v228 = vadd.f32 %v227, %v158
  %v229 = vsel %vm168, %v159, 0.0
  %v230 = vadd.f32 %v228, %v229
  %v231 = vadd.f32 %v230, %v160
  %v232 = vsel %vm168, %v161, 0.0
  %v233 = vadd.f32 %v231, %v232
  %v234 = vadd.f32 %v233, %v162
  %v235 = vsel %vm168, %v163, 0.0
  %v236 = vadd.f32 %v234, %v235
  %v237 = vadd.f32 %v236, %v164
  %v238 = vsel %vm168, %v165, 0.0
  %v239 = vadd.f32 %v237, %v238
  %v240 = vadd.f32 %v239, %v166
  %v241 = vsel %vm168, %v167, 0.0
  %v242 = vadd.f32 %v240, %v241
  %243 = vadd.xlane.f32.xlu0 %v242
  %v244 = vpop.xlane.xlu0 %243
  %v245 = vrot.slane %v244, 4
  %v246 = vadd.f32 %v244, %v245
  %v247 = vrot.slane %v246, 2
  %v248 = vadd.f32 %v246, %v247
  %v249 = vrot.slane %v248, 1
  %v250 = vadd.f32 %v248, %v249
  %s251 = vtos %v250
  %s252 = smul.f32 %s251, 2.5e-05
  %v253 = vld [vmem:[#allocation2] sm:$0x1]
  %s254 = vtos %v253
  %s255 = smul.f32 %s252, %s254
  %s256 = smax.f32 %s255, 0.0
  %v257 = vld [vmem:[%s3] sm:$0x1]
  %v258 = vstv %s256
  %v259 = vmul.f32 %v258, %v257
  %v260 = vld [vmem:[%s4] sm:$0x1]
  %v261 = vadd.f32 %v259, %v260
  %v262 = vmul.f32 %v261, 0.029411765
  %vm263 = vcmask 16384
  %v264 = vsel %vm263, %v262, -inf
  %265 = vmax.xlane.f32.xlu0 %v264
  %v266 = vpop.xlane.xlu0 %265
  %v267 = vrot.slane %v266, 4
  %v268 = vmax.f32 %v266, %v267
  %v269 = vrot.slane %v268, 2
  %v270 = vmax.f32 %v268, %v269
  %v271 = vrot.slane %v270, 1
  %v272 = vmax.f32 %v270, %v271
  %s273 = vtos %v272
  %v274 = vstv %s273
  %v275 = vsub.f32 %v262, %v274
  %v276 = vmul.f32 %v275, 1.442695
  %v277 = vpow.pop %v276
  %v278 = vsel %vm263, %v277, 0.0
  %279 = vadd.xlane.f32.xlu0 %v278
  %v280 = vpop.xlane.xlu0 %279
  %v281 = vrot.slane %v280, 4
  %v282 = vadd.f32 %v280, %v281
  %v283 = vrot.slane %v282, 2
  %v284 = vadd.f32 %v282, %v283
  %v285 = vrot.slane %v284, 1
  %v286 = vadd.f32 %v284, %v285
  %s287 = vtos %v286
  %v288 = vstv %s287
  %v289 = vrcp.pop %v288
  %v290 = vmul.f32 %v277, %v289
  %v291 = vld [vmem:[#allocation3] sm:$0x1]
  %s292 = vtos %v291
  %s293 = smul.f32 %s252, %s292
  %s294 = smax.f32 %s293, 0.0
  %v295 = vld [vmem:[%s8] sm:$0x1]
  %v296 = vstv %s294
  %v297 = vmul.f32 %v296, %v295
  %v298 = vld [vmem:[%s9] sm:$0x1]
  %v299 = vadd.f32 %v297, %v298
  %v300 = vmul.f32 %v299, 0.029411765
  %v301 = vsel %vm263, %v300, -inf
  %302 = vmax.xlane.f32.xlu0 %v301
  %v303 = vpop.xlane.xlu0 %302
  %v304 = vrot.slane %v303, 4
  %v305 = vmax.f32 %v303, %v304
  %v306 = vrot.slane %v305, 2
  %v307 = vmax.f32 %v305, %v306
  %v308 = vrot.slane %v307, 1
  %v309 = vmax.f32 %v307, %v308
  %s310 = vtos %v309
  %v311 = vstv %s310
  %v312 = vsub.f32 %v300, %v311
  %v313 = vmul.f32 %v312, 1.442695
  %v314 = vpow.pop %v313
  %v315 = vsel %vm263, %v314, 0.0
  %316 = vadd.xlane.f32.xlu0 %v315
  %v317 = vpop.xlane.xlu0 %316
  %v318 = vrot.slane %v317, 4
  %v319 = vadd.f32 %v317, %v318
  %v320 = vrot.slane %v319, 2
  %v321 = vadd.f32 %v319, %v320
  %v322 = vrot.slane %v321, 1
  %v323 = vadd.f32 %v321, %v322
  %s324 = vtos %v323
  %v325 = vstv %s324
  %v326 = vrcp.pop %v325
  %v327 = vmul.f32 %v314, %v326
  %s328 = vtos %v290
  %v329 = vld [vmem:[%s5] sm:$0xff]
  %v330 = vld [vmem:[%s5 + $0x8] sm:$0xff]
  %v331 = vstv %s328
  %v332 = vmul.f32 %v331, %v329
  %v333 = vmul.f32 %v331, %v330
  %334 = vrot.lane.b32.xlu0 %v290, 127
  %v335 = vpop.permute.xlu0 %334
  %s336 = vtos %v335
  %s337 = scalar_lea.vmem %s5, 16
  %v338 = vld [vmem:[%s337] sm:$0xff]
  %v339 = vld [vmem:[%s337 + $0x8] sm:$0xff]
  %v340 = vstv %s336
  %v341 = vmul.f32 %v340, %v338
  %v342 = vmul.f32 %v340, %v339
  %v343 = vadd.f32 %v332, %v341
  %v344 = vadd.f32 %v333, %v342
  %345 = vrot.lane.b32.xlu0 %v290, 126
  %v346 = vpop.permute.xlu0 %345
  %s347 = vtos %v346
  %s348 = scalar_lea.vmem %s5, 32
  %v349 = vld [vmem:[%s348] sm:$0xff]
  %v350 = vld [vmem:[%s348 + $0x8] sm:$0xff]
  %v351 = vstv %s347
  %v352 = vmul.f32 %v351, %v349
  %v353 = vmul.f32 %v351, %v350
  %v354 = vadd.f32 %v343, %v352
  %v355 = vadd.f32 %v344, %v353
  %s356 = vtos %v327
  %v357 = vld [vmem:[%s10] sm:$0xff]
  %v358 = vld [vmem:[%s10 + $0x8] sm:$0xff]
  %v359 = vstv %s356
  %v360 = vmul.f32 %v359, %v357
  %v361 = vmul.f32 %v359, %v358
  %362 = vrot.lane.b32.xlu0 %v327, 127
  %v363 = vpop.permute.xlu0 %362
  %s364 = vtos %v363
  %s365 = scalar_lea.vmem %s10, 16
  %v366 = vld [vmem:[%s365] sm:$0xff]
  %v367 = vld [vmem:[%s365 + $0x8] sm:$0xff]
  %v368 = vstv %s364
  %v369 = vmul.f32 %v368, %v366
  %v370 = vmul.f32 %v368, %v367
  %v371 = vadd.f32 %v360, %v369
  %v372 = vadd.f32 %v361, %v370
  %373 = vrot.lane.b32.xlu0 %v327, 126
  %v374 = vpop.permute.xlu0 %373
  %s375 = vtos %v374
  %s376 = scalar_lea.vmem %s10, 32
  %v377 = vld [vmem:[%s376] sm:$0xff]
  %v378 = vld [vmem:[%s376 + $0x8] sm:$0xff]
  %v379 = vstv %s375
  %v380 = vmul.f32 %v379, %v377
  %v381 = vmul.f32 %v379, %v378
  %v382 = vadd.f32 %v371, %v380
  %v383 = vadd.f32 %v372, %v381
  %v384 = vld [vmem:[%s6] sm:$0xff]
  %v385 = vmul.f32 %v331, %v384
  %v386 = vmul.f32 %v340, %v384
  %388 = vrot.lane.b32.xlu0 %v386, 127
  %v389 = vpop.permute.xlu0 %388
  %v391 = vadd.f32 %v385, %v389
  %v392 = vmul.f32 %v351, %v384
  %394 = vrot.lane.b32.xlu0 %v392, 126
  %v395 = vpop.permute.xlu0 %394
  %v397 = vadd.f32 %v391, %v395
  %v398 = vld [vmem:[%s11] sm:$0xff]
  %v399 = vmul.f32 %v359, %v398
  %v400 = vadd.f32 %v397, %v399
  %v401 = vmul.f32 %v368, %v398
  %403 = vrot.lane.b32.xlu0 %v401, 127
  %v404 = vpop.permute.xlu0 %403
  %v406 = vadd.f32 %v400, %v404
  %v407 = vmul.f32 %v379, %v398
  %409 = vrot.lane.b32.xlu0 %v407, 126
  %v410 = vpop.permute.xlu0 %409
  %v412 = vadd.f32 %v406, %v410
  %v413 = vpack.c.bf16 %v354, %v354
  %v414 = vpack.c.bf16 %v355, %v355
  %v415 = vpack.c.bf16 %v382, %v382
  %v416 = vpack.c.bf16 %v383, %v383
  %v442 = vunpack.c.l.b16 %v93
  %v443 = vunpack.c.h.b16 %v93
  %v444 = vunpack.c.l.b16 %v94
  %v445 = vunpack.c.h.b16 %v94
  %v446 = vunpack.c.l.b16 %v95
  %v447 = vunpack.c.h.b16 %v95
  %v448 = vunpack.c.l.b16 %v96
  %v449 = vunpack.c.h.b16 %v96
  %v450 = vunpack.c.l.b16 %v97
  %v451 = vunpack.c.h.b16 %v97
  %v452 = vunpack.c.l.b16 %v98
  %v453 = vunpack.c.h.b16 %v98
  %v454 = vunpack.c.l.b16 %v99
  %v455 = vunpack.c.h.b16 %v99
  %v456 = vunpack.c.l.b16 %v100
  %v457 = vunpack.c.h.b16 %v100
  %v458 = vunpack.c.l.b16 %v101
  %v459 = vunpack.c.h.b16 %v101
  %v460 = vunpack.c.l.b16 %v102
  %v461 = vunpack.c.h.b16 %v102
  %v462 = vunpack.c.l.b16 %v103
  %v463 = vunpack.c.h.b16 %v103
  %v464 = vunpack.c.l.b16 %v104
  %v465 = vunpack.c.h.b16 %v104
  %v466 = vunpack.c.l.b16 %v105
  %v467 = vunpack.c.h.b16 %v105
  %v468 = vunpack.c.l.b16 %v106
  %v469 = vunpack.c.h.b16 %v106
  %v470 = vunpack.c.l.b16 %v107
  %v471 = vunpack.c.h.b16 %v107
  %v472 = vunpack.c.l.b16 %v108
  %v473 = vunpack.c.h.b16 %v108
  %v474 = vunpack.c.l.b16 %v109
  %v475 = vunpack.c.h.b16 %v109
  %v476 = vunpack.c.l.b16 %v110
  %v477 = vunpack.c.h.b16 %v110
  %v478 = vunpack.c.l.b16 %v111
  %v479 = vunpack.c.h.b16 %v111
  %v480 = vunpack.c.l.b16 %v112
  %v481 = vunpack.c.h.b16 %v112
  %v482 = vunpack.c.l.b16 %v113
  %v483 = vunpack.c.h.b16 %v113
  %v484 = vunpack.c.l.b16 %v114
  %v485 = vunpack.c.h.b16 %v114
  %v486 = vunpack.c.l.b16 %v115
  %v487 = vunpack.c.h.b16 %v115
  %v488 = vunpack.c.l.b16 %v116
  %v489 = vunpack.c.h.b16 %v116
  %v490 = vunpack.c.l.b16 %v117
  %v491 = vunpack.c.h.b16 %v117
  %v492 = vpack.c.b16 %v444, %v442
  %v493 = vpack.c.b16 %v445, %v443
  %v494 = vpack.c.b16 %v448, %v446
  %v495 = vpack.c.b16 %v449, %v447
  %v496 = vpack.c.b16 %v452, %v450
  %v497 = vpack.c.b16 %v453, %v451
  %v498 = vpack.c.b16 %v456, %v454
  %v499 = vpack.c.b16 %v457, %v455
  %v500 = vpack.c.b16 %v460, %v458
  %v501 = vpack.c.b16 %v461, %v459
  %v502 = vpack.c.b16 %v464, %v462
  %v503 = vpack.c.b16 %v465, %v463
  %v504 = vpack.c.b16 %v468, %v466
  %v505 = vpack.c.b16 %v469, %v467
  %v506 = vpack.c.b16 %v472, %v470
  %v507 = vpack.c.b16 %v473, %v471
  %v508 = vpack.c.b16 %v476, %v474
  %v509 = vpack.c.b16 %v477, %v475
  %v510 = vpack.c.b16 %v480, %v478
  %v511 = vpack.c.b16 %v481, %v479
  %v512 = vpack.c.b16 %v484, %v482
  %v513 = vpack.c.b16 %v485, %v483
  %v514 = vpack.c.b16 %v488, %v486
  %v515 = vpack.c.b16 %v489, %v487
  %v516 = vpack.c.b16 %v490, %v490
  %v517 = vpack.c.b16 %v491, %v491
  %v543 = vsel %vm168, %v416, 0
  %vm545 = vcmask 1043456
  %v547 = vsel %vm545, %v516, 0
  %v550 = vsel %vm545, %v517, 0
  %552 = vmatprep.subr.bf16.mxu0 %v493
  %553 = vmatpush1.bf16.msra.mxu0 %v492
  %554 = vmatprep.subr.bf16.mxu0 %v495
  %555 = vmatpush1.bf16.msra.mxu0 %v494
  %556 = vmatprep.subr.bf16.mxu0 %v497
  %557 = vmatpush1.bf16.msra.mxu0 %v496
  %558 = vmatprep.subr.bf16.mxu0 %v499
  %559 = vmatpush1.bf16.msra.mxu0 %v498
  %560 = vmatprep.subr.bf16.mxu0 %v501
  %561 = vmatpush1.bf16.msra.mxu0 %v500
  %562 = vmatprep.subr.bf16.mxu0 %v503
  %563 = vmatpush1.bf16.msra.mxu0 %v502
  %564 = vmatprep.subr.bf16.mxu0 %v505
  %565 = vmatpush1.bf16.msra.mxu0 %v504
  %566 = vmatprep.subr.bf16.mxu0 %v507
  %567 = vmatpush1.bf16.msra.mxu0 %v506
  %568 = vmatprep.subr.bf16.mxu0 %v509
  %569 = vmatpush1.bf16.msra.mxu0 %v508
  %570 = vmatprep.subr.bf16.mxu0 %v511
  %571 = vmatpush1.bf16.msra.mxu0 %v510
  %572 = vmatprep.subr.bf16.mxu0 %v513
  %573 = vmatpush1.bf16.msra.mxu0 %v512
  %574 = vmatprep.subr.bf16.mxu0 %v515
  %575 = vmatpush1.bf16.msra.mxu0 %v514
  %576 = vmatprep.subr.bf16.mxu0 %v550
  %577 = vmatpush1.bf16.msra.mxu0 %v547
  %578 = vmatprep.subr.bf16.mxu0 0
  %579 = vmatpush1.bf16.msra.mxu0 0
  %580 = vmatprep.subr.bf16.mxu0 0
  %581 = vmatpush1.bf16.msra.mxu0 0
  %582 = vmatprep.subr.bf16.mxu0 0
  %583 = vmatpush1.bf16.msra.mxu0 0
  %584 = vmatprep.mubr.bf16.mxu0 %v543
  %585 = vmatmul.mubr.bf16.gmra.mrb[0].mxu0 %v415
  %v586 = vpop.f32.mrb[0].mxu0
  %v587 = vadd.f32 0.0, %v586
  %v588 = vpop.f32.mrb[0].mxu0
  %v589 = vadd.f32 0.0, %v588
  %v590 = vpop.f32.mrb[0].mxu0
  %v591 = vpop.f32.mrb[0].mxu0
  %592 = vdwg.mxu0
  %594 = vset.pattern.permute.xlu0 0
  %595 = vperm.xlu0 %594, %v412
  %v596 = vpop.permute.xlu0 %595
  %v623 = vunpack.c.l.b16 %v68
  %v624 = vunpack.c.h.b16 %v68
  %v625 = vunpack.c.l.b16 %v69
  %v626 = vunpack.c.h.b16 %v69
  %v627 = vunpack.c.l.b16 %v70
  %v628 = vunpack.c.h.b16 %v70
  %v629 = vunpack.c.l.b16 %v71
  %v630 = vunpack.c.h.b16 %v71
  %v631 = vunpack.c.l.b16 %v72
  %v632 = vunpack.c.h.b16 %v72
  %v633 = vunpack.c.l.b16 %v73
  %v634 = vunpack.c.h.b16 %v73
  %v635 = vunpack.c.l.b16 %v74
  %v636 = vunpack.c.h.b16 %v74
  %v637 = vunpack.c.l.b16 %v75
  %v638 = vunpack.c.h.b16 %v75
  %v639 = vunpack.c.l.b16 %v76
  %v640 = vunpack.c.h.b16 %v76
  %v641 = vunpack.c.l.b16 %v77
  %v642 = vunpack.c.h.b16 %v77
  %v643 = vunpack.c.l.b16 %v78
  %v644 = vunpack.c.h.b16 %v78
  %v645 = vunpack.c.l.b16 %v79
  %v646 = vunpack.c.h.b16 %v79
  %v647 = vunpack.c.l.b16 %v80
  %v648 = vunpack.c.h.b16 %v80
  %v649 = vunpack.c.l.b16 %v81
  %v650 = vunpack.c.h.b16 %v81
  %v651 = vunpack.c.l.b16 %v82
  %v652 = vunpack.c.h.b16 %v82
  %v653 = vunpack.c.l.b16 %v83
  %v654 = vunpack.c.h.b16 %v83
  %v655 = vunpack.c.l.b16 %v84
  %v656 = vunpack.c.h.b16 %v84
  %v657 = vunpack.c.l.b16 %v85
  %v658 = vunpack.c.h.b16 %v85
  %v659 = vunpack.c.l.b16 %v86
  %v660 = vunpack.c.h.b16 %v86
  %v661 = vunpack.c.l.b16 %v87
  %v662 = vunpack.c.h.b16 %v87
  %v663 = vunpack.c.l.b16 %v88
  %v664 = vunpack.c.h.b16 %v88
  %v665 = vunpack.c.l.b16 %v89
  %v666 = vunpack.c.h.b16 %v89
  %v667 = vunpack.c.l.b16 %v90
  %v668 = vunpack.c.h.b16 %v90
  %v669 = vunpack.c.l.b16 %v91
  %v670 = vunpack.c.h.b16 %v91
  %v671 = vunpack.c.l.b16 %v92
  %v672 = vunpack.c.h.b16 %v92
  %v673 = vpack.c.b16 %v625, %v623
  %v674 = vpack.c.b16 %v626, %v624
  %v675 = vpack.c.b16 %v629, %v627
  %v676 = vpack.c.b16 %v630, %v628
  %v677 = vpack.c.b16 %v633, %v631
  %v678 = vpack.c.b16 %v634, %v632
  %v679 = vpack.c.b16 %v637, %v635
  %v680 = vpack.c.b16 %v638, %v636
  %v681 = vpack.c.b16 %v641, %v639
  %v682 = vpack.c.b16 %v642, %v640
  %v683 = vpack.c.b16 %v645, %v643
  %v684 = vpack.c.b16 %v646, %v644
  %v685 = vpack.c.b16 %v649, %v647
  %v686 = vpack.c.b16 %v650, %v648
  %v687 = vpack.c.b16 %v653, %v651
  %v688 = vpack.c.b16 %v654, %v652
  %v689 = vpack.c.b16 %v657, %v655
  %v690 = vpack.c.b16 %v658, %v656
  %v691 = vpack.c.b16 %v661, %v659
  %v692 = vpack.c.b16 %v662, %v660
  %v693 = vpack.c.b16 %v665, %v663
  %v694 = vpack.c.b16 %v666, %v664
  %v695 = vpack.c.b16 %v669, %v667
  %v696 = vpack.c.b16 %v670, %v668
  %v697 = vpack.c.b16 %v671, %v671
  %v698 = vpack.c.b16 %v672, %v672
  %v724 = vsel %vm168, %v414, 0
  %v727 = vsel %vm545, %v697, 0
  %v730 = vsel %vm545, %v698, 0
  %732 = vmatprep.subr.bf16.mxu0 %v674
  %733 = vmatpush1.bf16.msra.mxu0 %v673
  %734 = vmatprep.subr.bf16.mxu0 %v676
  %735 = vmatpush1.bf16.msra.mxu0 %v675
  %736 = vmatprep.subr.bf16.mxu0 %v678
  %737 = vmatpush1.bf16.msra.mxu0 %v677
  %738 = vmatprep.subr.bf16.mxu0 %v680
  %739 = vmatpush1.bf16.msra.mxu0 %v679
  %740 = vmatprep.subr.bf16.mxu0 %v682
  %741 = vmatpush1.bf16.msra.mxu0 %v681
  %742 = vmatprep.subr.bf16.mxu0 %v684
  %743 = vmatpush1.bf16.msra.mxu0 %v683
  %744 = vmatprep.subr.bf16.mxu0 %v686
  %745 = vmatpush1.bf16.msra.mxu0 %v685
  %746 = vmatprep.subr.bf16.mxu0 %v688
  %747 = vmatpush1.bf16.msra.mxu0 %v687
  %748 = vmatprep.subr.bf16.mxu0 %v690
  %749 = vmatpush1.bf16.msra.mxu0 %v689
  %750 = vmatprep.subr.bf16.mxu0 %v692
  %751 = vmatpush1.bf16.msra.mxu0 %v691
  %752 = vmatprep.subr.bf16.mxu0 %v694
  %753 = vmatpush1.bf16.msra.mxu0 %v693
  %754 = vmatprep.subr.bf16.mxu0 %v696
  %755 = vmatpush1.bf16.msra.mxu0 %v695
  %756 = vmatprep.subr.bf16.mxu0 %v730
  %757 = vmatpush1.bf16.msra.mxu0 %v727
  %758 = vmatprep.subr.bf16.mxu0 0
  %759 = vmatpush1.bf16.msra.mxu0 0
  %760 = vmatprep.subr.bf16.mxu0 0
  %761 = vmatpush1.bf16.msra.mxu0 0
  %762 = vmatprep.subr.bf16.mxu0 0
  %763 = vmatpush1.bf16.msra.mxu0 0
  %764 = vmatprep.mubr.bf16.mxu0 %v724
  %765 = vmatmul.mubr.bf16.gmra.mrb[0].mxu0 %v413
  %v766 = vpop.f32.mrb[0].mxu0
  %v767 = vadd.f32 %v596, %v766
  %v768 = vpop.f32.mrb[0].mxu0
  %v769 = vadd.f32 %v596, %v768
  %v770 = vpop.f32.mrb[0].mxu0
  %v771 = vpop.f32.mrb[0].mxu0
  %772 = vdwg.mxu0
  %v773 = vlaneseq
  %v774 = vshrl.u32 %v773, 7
  %v775 = vsub.s32 0, %v774
  %v776 = vrot.slane %v767, %v775
  %778 = vbcast.lane.b32.xlu0 %v776, 256
  %v779 = vpop.permute.xlu0 %778
  %s781 = sor.u32 256, 8
  %782 = vbcast.lane.b32.xlu0 %v776, %s781
  %v783 = vpop.permute.xlu0 %782
  %s785 = sor.u32 256, 16
  %786 = vbcast.lane.b32.xlu0 %v776, %s785
  %v787 = vpop.permute.xlu0 %786
  %s789 = sor.u32 256, 24
  %790 = vbcast.lane.b32.xlu0 %v776, %s789
  %v791 = vpop.permute.xlu0 %790
  %s793 = sor.u32 256, 32
  %794 = vbcast.lane.b32.xlu0 %v776, %s793
  %v795 = vpop.permute.xlu0 %794
  %s797 = sor.u32 256, 40
  %798 = vbcast.lane.b32.xlu0 %v776, %s797
  %v799 = vpop.permute.xlu0 %798
  %s801 = sor.u32 256, 48
  %802 = vbcast.lane.b32.xlu0 %v776, %s801
  %v803 = vpop.permute.xlu0 %802
  %s805 = sor.u32 256, 56
  %806 = vbcast.lane.b32.xlu0 %v776, %s805
  %v807 = vpop.permute.xlu0 %806
  %s809 = sor.u32 256, 64
  %810 = vbcast.lane.b32.xlu0 %v776, %s809
  %v811 = vpop.permute.xlu0 %810
  %s813 = sor.u32 256, 72
  %814 = vbcast.lane.b32.xlu0 %v776, %s813
  %v815 = vpop.permute.xlu0 %814
  %s817 = sor.u32 256, 80
  %818 = vbcast.lane.b32.xlu0 %v776, %s817
  %v819 = vpop.permute.xlu0 %818
  %s821 = sor.u32 256, 88
  %822 = vbcast.lane.b32.xlu0 %v776, %s821
  %v823 = vpop.permute.xlu0 %822
  %s825 = sor.u32 256, 96
  %826 = vbcast.lane.b32.xlu0 %v776, %s825
  %v827 = vpop.permute.xlu0 %826
  %s829 = sor.u32 256, 104
  %830 = vbcast.lane.b32.xlu0 %v776, %s829
  %v831 = vpop.permute.xlu0 %830
  %s833 = sor.u32 256, 112
  %834 = vbcast.lane.b32.xlu0 %v776, %s833
  %v835 = vpop.permute.xlu0 %834
  %s837 = sor.u32 256, 120
  %838 = vbcast.lane.b32.xlu0 %v776, %s837
  %v839 = vpop.permute.xlu0 %838
  %v840 = vlaneseq
  %v841 = vshrl.u32 %v840, 7
  %v842 = vsub.s32 0, %v841
  %v843 = vrot.slane %v769, %v842
  %845 = vbcast.lane.b32.xlu0 %v843, 256
  %v846 = vpop.permute.xlu0 %845
  %s848 = sor.u32 256, 8
  %849 = vbcast.lane.b32.xlu0 %v843, %s848
  %v850 = vpop.permute.xlu0 %849
  %s852 = sor.u32 256, 16
  %853 = vbcast.lane.b32.xlu0 %v843, %s852
  %v854 = vpop.permute.xlu0 %853
  %s856 = sor.u32 256, 24
  %857 = vbcast.lane.b32.xlu0 %v843, %s856
  %v858 = vpop.permute.xlu0 %857
  %s860 = sor.u32 256, 32
  %861 = vbcast.lane.b32.xlu0 %v843, %s860
  %v862 = vpop.permute.xlu0 %861
  %s864 = sor.u32 256, 40
  %865 = vbcast.lane.b32.xlu0 %v843, %s864
  %v866 = vpop.permute.xlu0 %865
  %s868 = sor.u32 256, 48
  %869 = vbcast.lane.b32.xlu0 %v843, %s868
  %v870 = vpop.permute.xlu0 %869
  %s872 = sor.u32 256, 56
  %873 = vbcast.lane.b32.xlu0 %v843, %s872
  %v874 = vpop.permute.xlu0 %873
  %s876 = sor.u32 256, 64
  %877 = vbcast.lane.b32.xlu0 %v843, %s876
  %v878 = vpop.permute.xlu0 %877
  %v879 = vlaneseq
  %v880 = vshrl.u32 %v879, 7
  %v881 = vsub.s32 1, %v880
  %v882 = vrot.slane %v767, %v881
  %884 = vbcast.lane.b32.xlu0 %v882, 256
  %v885 = vpop.permute.xlu0 %884
  %s887 = sor.u32 256, 8
  %888 = vbcast.lane.b32.xlu0 %v882, %s887
  %v889 = vpop.permute.xlu0 %888
  %s891 = sor.u32 256, 16
  %892 = vbcast.lane.b32.xlu0 %v882, %s891
  %v893 = vpop.permute.xlu0 %892
  %s895 = sor.u32 256, 24
  %896 = vbcast.lane.b32.xlu0 %v882, %s895
  %v897 = vpop.permute.xlu0 %896
  %s899 = sor.u32 256, 32
  %900 = vbcast.lane.b32.xlu0 %v882, %s899
  %v901 = vpop.permute.xlu0 %900
  %s903 = sor.u32 256, 40
  %904 = vbcast.lane.b32.xlu0 %v882, %s903
  %v905 = vpop.permute.xlu0 %904
  %s907 = sor.u32 256, 48
  %908 = vbcast.lane.b32.xlu0 %v882, %s907
  %v909 = vpop.permute.xlu0 %908
  %s911 = sor.u32 256, 56
  %912 = vbcast.lane.b32.xlu0 %v882, %s911
  %v913 = vpop.permute.xlu0 %912
  %s915 = sor.u32 256, 64
  %916 = vbcast.lane.b32.xlu0 %v882, %s915
  %v917 = vpop.permute.xlu0 %916
  %s919 = sor.u32 256, 72
  %920 = vbcast.lane.b32.xlu0 %v882, %s919
  %v921 = vpop.permute.xlu0 %920
  %s923 = sor.u32 256, 80
  %924 = vbcast.lane.b32.xlu0 %v882, %s923
  %v925 = vpop.permute.xlu0 %924
  %s927 = sor.u32 256, 88
  %928 = vbcast.lane.b32.xlu0 %v882, %s927
  %v929 = vpop.permute.xlu0 %928
  %s931 = sor.u32 256, 96
  %932 = vbcast.lane.b32.xlu0 %v882, %s931
  %v933 = vpop.permute.xlu0 %932
  %s935 = sor.u32 256, 104
  %936 = vbcast.lane.b32.xlu0 %v882, %s935
  %v937 = vpop.permute.xlu0 %936
  %s939 = sor.u32 256, 112
  %940 = vbcast.lane.b32.xlu0 %v882, %s939
  %v941 = vpop.permute.xlu0 %940
  %s943 = sor.u32 256, 120
  %944 = vbcast.lane.b32.xlu0 %v882, %s943
  %v945 = vpop.permute.xlu0 %944
  %v946 = vlaneseq
  %v947 = vshrl.u32 %v946, 7
  %v948 = vsub.s32 1, %v947
  %v949 = vrot.slane %v769, %v948
  %951 = vbcast.lane.b32.xlu0 %v949, 256
  %v952 = vpop.permute.xlu0 %951
  %s954 = sor.u32 256, 8
  %955 = vbcast.lane.b32.xlu0 %v949, %s954
  %v956 = vpop.permute.xlu0 %955
  %s958 = sor.u32 256, 16
  %959 = vbcast.lane.b32.xlu0 %v949, %s958
  %v960 = vpop.permute.xlu0 %959
  %s962 = sor.u32 256, 24
  %963 = vbcast.lane.b32.xlu0 %v949, %s962
  %v964 = vpop.permute.xlu0 %963
  %s966 = sor.u32 256, 32
  %967 = vbcast.lane.b32.xlu0 %v949, %s966
  %v968 = vpop.permute.xlu0 %967
  %s970 = sor.u32 256, 40
  %971 = vbcast.lane.b32.xlu0 %v949, %s970
  %v972 = vpop.permute.xlu0 %971
  %s974 = sor.u32 256, 48
  %975 = vbcast.lane.b32.xlu0 %v949, %s974
  %v976 = vpop.permute.xlu0 %975
  %s978 = sor.u32 256, 56
  %979 = vbcast.lane.b32.xlu0 %v949, %s978
  %v980 = vpop.permute.xlu0 %979
  %s982 = sor.u32 256, 64
  %983 = vbcast.lane.b32.xlu0 %v949, %s982
  %v984 = vpop.permute.xlu0 %983
  %v985 = vlaneseq
  %v986 = vshrl.u32 %v985, 7
  %v987 = vsub.s32 2, %v986
  %v988 = vrot.slane %v767, %v987
  %990 = vbcast.lane.b32.xlu0 %v988, 256
  %v991 = vpop.permute.xlu0 %990
  %s993 = sor.u32 256, 8
  %994 = vbcast.lane.b32.xlu0 %v988, %s993
  %v995 = vpop.permute.xlu0 %994
  %s997 = sor.u32 256, 16
  %998 = vbcast.lane.b32.xlu0 %v988, %s997
  %v999 = vpop.permute.xlu0 %998
  %s1001 = sor.u32 256, 24
  %1002 = vbcast.lane.b32.xlu0 %v988, %s1001
  %v1003 = vpop.permute.xlu0 %1002
  %s1005 = sor.u32 256, 32
  %1006 = vbcast.lane.b32.xlu0 %v988, %s1005
  %v1007 = vpop.permute.xlu0 %1006
  %s1009 = sor.u32 256, 40
  %1010 = vbcast.lane.b32.xlu0 %v988, %s1009
  %v1011 = vpop.permute.xlu0 %1010
  %s1013 = sor.u32 256, 48
  %1014 = vbcast.lane.b32.xlu0 %v988, %s1013
  %v1015 = vpop.permute.xlu0 %1014
  %s1017 = sor.u32 256, 56
  %1018 = vbcast.lane.b32.xlu0 %v988, %s1017
  %v1019 = vpop.permute.xlu0 %1018
  %s1021 = sor.u32 256, 64
  %1022 = vbcast.lane.b32.xlu0 %v988, %s1021
  %v1023 = vpop.permute.xlu0 %1022
  %s1025 = sor.u32 256, 72
  %1026 = vbcast.lane.b32.xlu0 %v988, %s1025
  %v1027 = vpop.permute.xlu0 %1026
  %s1029 = sor.u32 256, 80
  %1030 = vbcast.lane.b32.xlu0 %v988, %s1029
  %v1031 = vpop.permute.xlu0 %1030
  %s1033 = sor.u32 256, 88
  %1034 = vbcast.lane.b32.xlu0 %v988, %s1033
  %v1035 = vpop.permute.xlu0 %1034
  %s1037 = sor.u32 256, 96
  %1038 = vbcast.lane.b32.xlu0 %v988, %s1037
  %v1039 = vpop.permute.xlu0 %1038
  %s1041 = sor.u32 256, 104
  %1042 = vbcast.lane.b32.xlu0 %v988, %s1041
  %v1043 = vpop.permute.xlu0 %1042
  %s1045 = sor.u32 256, 112
  %1046 = vbcast.lane.b32.xlu0 %v988, %s1045
  %v1047 = vpop.permute.xlu0 %1046
  %s1049 = sor.u32 256, 120
  %1050 = vbcast.lane.b32.xlu0 %v988, %s1049
  %v1051 = vpop.permute.xlu0 %1050
  %v1052 = vlaneseq
  %v1053 = vshrl.u32 %v1052, 7
  %v1054 = vsub.s32 2, %v1053
  %v1055 = vrot.slane %v769, %v1054
  %1057 = vbcast.lane.b32.xlu0 %v1055, 256
  %v1058 = vpop.permute.xlu0 %1057
  %s1060 = sor.u32 256, 8
  %1061 = vbcast.lane.b32.xlu0 %v1055, %s1060
  %v1062 = vpop.permute.xlu0 %1061
  %s1064 = sor.u32 256, 16
  %1065 = vbcast.lane.b32.xlu0 %v1055, %s1064
  %v1066 = vpop.permute.xlu0 %1065
  %s1068 = sor.u32 256, 24
  %1069 = vbcast.lane.b32.xlu0 %v1055, %s1068
  %v1070 = vpop.permute.xlu0 %1069
  %s1072 = sor.u32 256, 32
  %1073 = vbcast.lane.b32.xlu0 %v1055, %s1072
  %v1074 = vpop.permute.xlu0 %1073
  %s1076 = sor.u32 256, 40
  %1077 = vbcast.lane.b32.xlu0 %v1055, %s1076
  %v1078 = vpop.permute.xlu0 %1077
  %s1080 = sor.u32 256, 48
  %1081 = vbcast.lane.b32.xlu0 %v1055, %s1080
  %v1082 = vpop.permute.xlu0 %1081
  %s1084 = sor.u32 256, 56
  %1085 = vbcast.lane.b32.xlu0 %v1055, %s1084
  %v1086 = vpop.permute.xlu0 %1085
  %s1088 = sor.u32 256, 64
  %1089 = vbcast.lane.b32.xlu0 %v1055, %s1088
  %v1090 = vpop.permute.xlu0 %1089
  %v1091 = vlaneseq
  %v1092 = vshrl.u32 %v1091, 7
  %v1093 = vsub.s32 3, %v1092
  %v1094 = vrot.slane %v767, %v1093
  %1096 = vbcast.lane.b32.xlu0 %v1094, 256
  %v1097 = vpop.permute.xlu0 %1096
  %s1099 = sor.u32 256, 8
  %1100 = vbcast.lane.b32.xlu0 %v1094, %s1099
  %v1101 = vpop.permute.xlu0 %1100
  %s1103 = sor.u32 256, 16
  %1104 = vbcast.lane.b32.xlu0 %v1094, %s1103
  %v1105 = vpop.permute.xlu0 %1104
  %s1107 = sor.u32 256, 24
  %1108 = vbcast.lane.b32.xlu0 %v1094, %s1107
  %v1109 = vpop.permute.xlu0 %1108
  %s1111 = sor.u32 256, 32
  %1112 = vbcast.lane.b32.xlu0 %v1094, %s1111
  %v1113 = vpop.permute.xlu0 %1112
  %s1115 = sor.u32 256, 40
  %1116 = vbcast.lane.b32.xlu0 %v1094, %s1115
  %v1117 = vpop.permute.xlu0 %1116
  %s1119 = sor.u32 256, 48
  %1120 = vbcast.lane.b32.xlu0 %v1094, %s1119
  %v1121 = vpop.permute.xlu0 %1120
  %s1123 = sor.u32 256, 56
  %1124 = vbcast.lane.b32.xlu0 %v1094, %s1123
  %v1125 = vpop.permute.xlu0 %1124
  %s1127 = sor.u32 256, 64
  %1128 = vbcast.lane.b32.xlu0 %v1094, %s1127
  %v1129 = vpop.permute.xlu0 %1128
  %s1131 = sor.u32 256, 72
  %1132 = vbcast.lane.b32.xlu0 %v1094, %s1131
  %v1133 = vpop.permute.xlu0 %1132
  %s1135 = sor.u32 256, 80
  %1136 = vbcast.lane.b32.xlu0 %v1094, %s1135
  %v1137 = vpop.permute.xlu0 %1136
  %s1139 = sor.u32 256, 88
  %1140 = vbcast.lane.b32.xlu0 %v1094, %s1139
  %v1141 = vpop.permute.xlu0 %1140
  %s1143 = sor.u32 256, 96
  %1144 = vbcast.lane.b32.xlu0 %v1094, %s1143
  %v1145 = vpop.permute.xlu0 %1144
  %s1147 = sor.u32 256, 104
  %1148 = vbcast.lane.b32.xlu0 %v1094, %s1147
  %v1149 = vpop.permute.xlu0 %1148
  %s1151 = sor.u32 256, 112
  %1152 = vbcast.lane.b32.xlu0 %v1094, %s1151
  %v1153 = vpop.permute.xlu0 %1152
  %s1155 = sor.u32 256, 120
  %1156 = vbcast.lane.b32.xlu0 %v1094, %s1155
  %v1157 = vpop.permute.xlu0 %1156
  %v1158 = vlaneseq
  %v1159 = vshrl.u32 %v1158, 7
  %v1160 = vsub.s32 3, %v1159
  %v1161 = vrot.slane %v769, %v1160
  %1163 = vbcast.lane.b32.xlu0 %v1161, 256
  %v1164 = vpop.permute.xlu0 %1163
  %s1166 = sor.u32 256, 8
  %1167 = vbcast.lane.b32.xlu0 %v1161, %s1166
  %v1168 = vpop.permute.xlu0 %1167
  %s1170 = sor.u32 256, 16
  %1171 = vbcast.lane.b32.xlu0 %v1161, %s1170
  %v1172 = vpop.permute.xlu0 %1171
  %s1174 = sor.u32 256, 24
  %1175 = vbcast.lane.b32.xlu0 %v1161, %s1174
  %v1176 = vpop.permute.xlu0 %1175
  %s1178 = sor.u32 256, 32
  %1179 = vbcast.lane.b32.xlu0 %v1161, %s1178
  %v1180 = vpop.permute.xlu0 %1179
  %s1182 = sor.u32 256, 40
  %1183 = vbcast.lane.b32.xlu0 %v1161, %s1182
  %v1184 = vpop.permute.xlu0 %1183
  %s1186 = sor.u32 256, 48
  %1187 = vbcast.lane.b32.xlu0 %v1161, %s1186
  %v1188 = vpop.permute.xlu0 %1187
  %s1190 = sor.u32 256, 56
  %1191 = vbcast.lane.b32.xlu0 %v1161, %s1190
  %v1192 = vpop.permute.xlu0 %1191
  %s1194 = sor.u32 256, 64
  %1195 = vbcast.lane.b32.xlu0 %v1161, %s1194
  %v1196 = vpop.permute.xlu0 %1195
  %v1197 = vlaneseq
  %v1198 = vshrl.u32 %v1197, 7
  %v1199 = vsub.s32 4, %v1198
  %v1200 = vrot.slane %v767, %v1199
  %1202 = vbcast.lane.b32.xlu0 %v1200, 256
  %v1203 = vpop.permute.xlu0 %1202
  %s1205 = sor.u32 256, 8
  %1206 = vbcast.lane.b32.xlu0 %v1200, %s1205
  %v1207 = vpop.permute.xlu0 %1206
  %s1209 = sor.u32 256, 16
  %1210 = vbcast.lane.b32.xlu0 %v1200, %s1209
  %v1211 = vpop.permute.xlu0 %1210
  %s1213 = sor.u32 256, 24
  %1214 = vbcast.lane.b32.xlu0 %v1200, %s1213
  %v1215 = vpop.permute.xlu0 %1214
  %s1217 = sor.u32 256, 32
  %1218 = vbcast.lane.b32.xlu0 %v1200, %s1217
  %v1219 = vpop.permute.xlu0 %1218
  %s1221 = sor.u32 256, 40
  %1222 = vbcast.lane.b32.xlu0 %v1200, %s1221
  %v1223 = vpop.permute.xlu0 %1222
  %s1225 = sor.u32 256, 48
  %1226 = vbcast.lane.b32.xlu0 %v1200, %s1225
  %v1227 = vpop.permute.xlu0 %1226
  %s1229 = sor.u32 256, 56
  %1230 = vbcast.lane.b32.xlu0 %v1200, %s1229
  %v1231 = vpop.permute.xlu0 %1230
  %s1233 = sor.u32 256, 64
  %1234 = vbcast.lane.b32.xlu0 %v1200, %s1233
  %v1235 = vpop.permute.xlu0 %1234
  %s1237 = sor.u32 256, 72
  %1238 = vbcast.lane.b32.xlu0 %v1200, %s1237
  %v1239 = vpop.permute.xlu0 %1238
  %s1241 = sor.u32 256, 80
  %1242 = vbcast.lane.b32.xlu0 %v1200, %s1241
  %v1243 = vpop.permute.xlu0 %1242
  %s1245 = sor.u32 256, 88
  %1246 = vbcast.lane.b32.xlu0 %v1200, %s1245
  %v1247 = vpop.permute.xlu0 %1246
  %s1249 = sor.u32 256, 96
  %1250 = vbcast.lane.b32.xlu0 %v1200, %s1249
  %v1251 = vpop.permute.xlu0 %1250
  %s1253 = sor.u32 256, 104
  %1254 = vbcast.lane.b32.xlu0 %v1200, %s1253
  %v1255 = vpop.permute.xlu0 %1254
  %s1257 = sor.u32 256, 112
  %1258 = vbcast.lane.b32.xlu0 %v1200, %s1257
  %v1259 = vpop.permute.xlu0 %1258
  %s1261 = sor.u32 256, 120
  %1262 = vbcast.lane.b32.xlu0 %v1200, %s1261
  %v1263 = vpop.permute.xlu0 %1262
  %v1264 = vlaneseq
  %v1265 = vshrl.u32 %v1264, 7
  %v1266 = vsub.s32 4, %v1265
  %v1267 = vrot.slane %v769, %v1266
  %1269 = vbcast.lane.b32.xlu0 %v1267, 256
  %v1270 = vpop.permute.xlu0 %1269
  %s1272 = sor.u32 256, 8
  %1273 = vbcast.lane.b32.xlu0 %v1267, %s1272
  %v1274 = vpop.permute.xlu0 %1273
  %s1276 = sor.u32 256, 16
  %1277 = vbcast.lane.b32.xlu0 %v1267, %s1276
  %v1278 = vpop.permute.xlu0 %1277
  %s1280 = sor.u32 256, 24
  %1281 = vbcast.lane.b32.xlu0 %v1267, %s1280
  %v1282 = vpop.permute.xlu0 %1281
  %s1284 = sor.u32 256, 32
  %1285 = vbcast.lane.b32.xlu0 %v1267, %s1284
  %v1286 = vpop.permute.xlu0 %1285
  %s1288 = sor.u32 256, 40
  %1289 = vbcast.lane.b32.xlu0 %v1267, %s1288
  %v1290 = vpop.permute.xlu0 %1289
  %s1292 = sor.u32 256, 48
  %1293 = vbcast.lane.b32.xlu0 %v1267, %s1292
  %v1294 = vpop.permute.xlu0 %1293
  %s1296 = sor.u32 256, 56
  %1297 = vbcast.lane.b32.xlu0 %v1267, %s1296
  %v1298 = vpop.permute.xlu0 %1297
  %s1300 = sor.u32 256, 64
  %1301 = vbcast.lane.b32.xlu0 %v1267, %s1300
  %v1302 = vpop.permute.xlu0 %1301
  %v1303 = vlaneseq
  %v1304 = vshrl.u32 %v1303, 7
  %v1305 = vsub.s32 5, %v1304
  %v1306 = vrot.slane %v767, %v1305
  %1308 = vbcast.lane.b32.xlu0 %v1306, 256
  %v1309 = vpop.permute.xlu0 %1308
  %s1311 = sor.u32 256, 8
  %1312 = vbcast.lane.b32.xlu0 %v1306, %s1311
  %v1313 = vpop.permute.xlu0 %1312
  %s1315 = sor.u32 256, 16
  %1316 = vbcast.lane.b32.xlu0 %v1306, %s1315
  %v1317 = vpop.permute.xlu0 %1316
  %s1319 = sor.u32 256, 24
  %1320 = vbcast.lane.b32.xlu0 %v1306, %s1319
  %v1321 = vpop.permute.xlu0 %1320
  %s1323 = sor.u32 256, 32
  %1324 = vbcast.lane.b32.xlu0 %v1306, %s1323
  %v1325 = vpop.permute.xlu0 %1324
  %s1327 = sor.u32 256, 40
  %1328 = vbcast.lane.b32.xlu0 %v1306, %s1327
  %v1329 = vpop.permute.xlu0 %1328
  %s1331 = sor.u32 256, 48
  %1332 = vbcast.lane.b32.xlu0 %v1306, %s1331
  %v1333 = vpop.permute.xlu0 %1332
  %s1335 = sor.u32 256, 56
  %1336 = vbcast.lane.b32.xlu0 %v1306, %s1335
  %v1337 = vpop.permute.xlu0 %1336
  %s1339 = sor.u32 256, 64
  %1340 = vbcast.lane.b32.xlu0 %v1306, %s1339
  %v1341 = vpop.permute.xlu0 %1340
  %s1343 = sor.u32 256, 72
  %1344 = vbcast.lane.b32.xlu0 %v1306, %s1343
  %v1345 = vpop.permute.xlu0 %1344
  %s1347 = sor.u32 256, 80
  %1348 = vbcast.lane.b32.xlu0 %v1306, %s1347
  %v1349 = vpop.permute.xlu0 %1348
  %s1351 = sor.u32 256, 88
  %1352 = vbcast.lane.b32.xlu0 %v1306, %s1351
  %v1353 = vpop.permute.xlu0 %1352
  %s1355 = sor.u32 256, 96
  %1356 = vbcast.lane.b32.xlu0 %v1306, %s1355
  %v1357 = vpop.permute.xlu0 %1356
  %s1359 = sor.u32 256, 104
  %1360 = vbcast.lane.b32.xlu0 %v1306, %s1359
  %v1361 = vpop.permute.xlu0 %1360
  %s1363 = sor.u32 256, 112
  %1364 = vbcast.lane.b32.xlu0 %v1306, %s1363
  %v1365 = vpop.permute.xlu0 %1364
  %s1367 = sor.u32 256, 120
  %1368 = vbcast.lane.b32.xlu0 %v1306, %s1367
  %v1369 = vpop.permute.xlu0 %1368
  %v1370 = vlaneseq
  %v1371 = vshrl.u32 %v1370, 7
  %v1372 = vsub.s32 5, %v1371
  %v1373 = vrot.slane %v769, %v1372
  %1375 = vbcast.lane.b32.xlu0 %v1373, 256
  %v1376 = vpop.permute.xlu0 %1375
  %s1378 = sor.u32 256, 8
  %1379 = vbcast.lane.b32.xlu0 %v1373, %s1378
  %v1380 = vpop.permute.xlu0 %1379
  %s1382 = sor.u32 256, 16
  %1383 = vbcast.lane.b32.xlu0 %v1373, %s1382
  %v1384 = vpop.permute.xlu0 %1383
  %s1386 = sor.u32 256, 24
  %1387 = vbcast.lane.b32.xlu0 %v1373, %s1386
  %v1388 = vpop.permute.xlu0 %1387
  %s1390 = sor.u32 256, 32
  %1391 = vbcast.lane.b32.xlu0 %v1373, %s1390
  %v1392 = vpop.permute.xlu0 %1391
  %s1394 = sor.u32 256, 40
  %1395 = vbcast.lane.b32.xlu0 %v1373, %s1394
  %v1396 = vpop.permute.xlu0 %1395
  %s1398 = sor.u32 256, 48
  %1399 = vbcast.lane.b32.xlu0 %v1373, %s1398
  %v1400 = vpop.permute.xlu0 %1399
  %s1402 = sor.u32 256, 56
  %1403 = vbcast.lane.b32.xlu0 %v1373, %s1402
  %v1404 = vpop.permute.xlu0 %1403
  %s1406 = sor.u32 256, 64
  %1407 = vbcast.lane.b32.xlu0 %v1373, %s1406
  %v1408 = vpop.permute.xlu0 %1407
  %v1409 = vlaneseq
  %v1410 = vshrl.u32 %v1409, 7
  %v1411 = vsub.s32 6, %v1410
  %v1412 = vrot.slane %v767, %v1411
  %1414 = vbcast.lane.b32.xlu0 %v1412, 256
  %v1415 = vpop.permute.xlu0 %1414
  %s1417 = sor.u32 256, 8
  %1418 = vbcast.lane.b32.xlu0 %v1412, %s1417
  %v1419 = vpop.permute.xlu0 %1418
  %s1421 = sor.u32 256, 16
  %1422 = vbcast.lane.b32.xlu0 %v1412, %s1421
  %v1423 = vpop.permute.xlu0 %1422
  %s1425 = sor.u32 256, 24
  %1426 = vbcast.lane.b32.xlu0 %v1412, %s1425
  %v1427 = vpop.permute.xlu0 %1426
  %s1429 = sor.u32 256, 32
  %1430 = vbcast.lane.b32.xlu0 %v1412, %s1429
  %v1431 = vpop.permute.xlu0 %1430
  %s1433 = sor.u32 256, 40
  %1434 = vbcast.lane.b32.xlu0 %v1412, %s1433
  %v1435 = vpop.permute.xlu0 %1434
  %s1437 = sor.u32 256, 48
  %1438 = vbcast.lane.b32.xlu0 %v1412, %s1437
  %v1439 = vpop.permute.xlu0 %1438
  %s1441 = sor.u32 256, 56
  %1442 = vbcast.lane.b32.xlu0 %v1412, %s1441
  %v1443 = vpop.permute.xlu0 %1442
  %s1445 = sor.u32 256, 64
  %1446 = vbcast.lane.b32.xlu0 %v1412, %s1445
  %v1447 = vpop.permute.xlu0 %1446
  %s1449 = sor.u32 256, 72
  %1450 = vbcast.lane.b32.xlu0 %v1412, %s1449
  %v1451 = vpop.permute.xlu0 %1450
  %s1453 = sor.u32 256, 80
  %1454 = vbcast.lane.b32.xlu0 %v1412, %s1453
  %v1455 = vpop.permute.xlu0 %1454
  %s1457 = sor.u32 256, 88
  %1458 = vbcast.lane.b32.xlu0 %v1412, %s1457
  %v1459 = vpop.permute.xlu0 %1458
  %s1461 = sor.u32 256, 96
  %1462 = vbcast.lane.b32.xlu0 %v1412, %s1461
  %v1463 = vpop.permute.xlu0 %1462
  %s1465 = sor.u32 256, 104
  %1466 = vbcast.lane.b32.xlu0 %v1412, %s1465
  %v1467 = vpop.permute.xlu0 %1466
  %s1469 = sor.u32 256, 112
  %1470 = vbcast.lane.b32.xlu0 %v1412, %s1469
  %v1471 = vpop.permute.xlu0 %1470
  %s1473 = sor.u32 256, 120
  %1474 = vbcast.lane.b32.xlu0 %v1412, %s1473
  %v1475 = vpop.permute.xlu0 %1474
  %v1476 = vlaneseq
  %v1477 = vshrl.u32 %v1476, 7
  %v1478 = vsub.s32 6, %v1477
  %v1479 = vrot.slane %v769, %v1478
  %1481 = vbcast.lane.b32.xlu0 %v1479, 256
  %v1482 = vpop.permute.xlu0 %1481
  %s1484 = sor.u32 256, 8
  %1485 = vbcast.lane.b32.xlu0 %v1479, %s1484
  %v1486 = vpop.permute.xlu0 %1485
  %s1488 = sor.u32 256, 16
  %1489 = vbcast.lane.b32.xlu0 %v1479, %s1488
  %v1490 = vpop.permute.xlu0 %1489
  %s1492 = sor.u32 256, 24
  %1493 = vbcast.lane.b32.xlu0 %v1479, %s1492
  %v1494 = vpop.permute.xlu0 %1493
  %s1496 = sor.u32 256, 32
  %1497 = vbcast.lane.b32.xlu0 %v1479, %s1496
  %v1498 = vpop.permute.xlu0 %1497
  %s1500 = sor.u32 256, 40
  %1501 = vbcast.lane.b32.xlu0 %v1479, %s1500
  %v1502 = vpop.permute.xlu0 %1501
  %s1504 = sor.u32 256, 48
  %1505 = vbcast.lane.b32.xlu0 %v1479, %s1504
  %v1506 = vpop.permute.xlu0 %1505
  %s1508 = sor.u32 256, 56
  %1509 = vbcast.lane.b32.xlu0 %v1479, %s1508
  %v1510 = vpop.permute.xlu0 %1509
  %s1512 = sor.u32 256, 64
  %1513 = vbcast.lane.b32.xlu0 %v1479, %s1512
  %v1514 = vpop.permute.xlu0 %1513
  %v1515 = vlaneseq
  %v1516 = vshrl.u32 %v1515, 7
  %v1517 = vsub.s32 7, %v1516
  %v1518 = vrot.slane %v767, %v1517
  %1520 = vbcast.lane.b32.xlu0 %v1518, 256
  %v1521 = vpop.permute.xlu0 %1520
  %s1523 = sor.u32 256, 8
  %1524 = vbcast.lane.b32.xlu0 %v1518, %s1523
  %v1525 = vpop.permute.xlu0 %1524
  %s1527 = sor.u32 256, 16
  %1528 = vbcast.lane.b32.xlu0 %v1518, %s1527
  %v1529 = vpop.permute.xlu0 %1528
  %s1531 = sor.u32 256, 24
  %1532 = vbcast.lane.b32.xlu0 %v1518, %s1531
  %v1533 = vpop.permute.xlu0 %1532
  %s1535 = sor.u32 256, 32
  %1536 = vbcast.lane.b32.xlu0 %v1518, %s1535
  %v1537 = vpop.permute.xlu0 %1536
  %s1539 = sor.u32 256, 40
  %1540 = vbcast.lane.b32.xlu0 %v1518, %s1539
  %v1541 = vpop.permute.xlu0 %1540
  %s1543 = sor.u32 256, 48
  %1544 = vbcast.lane.b32.xlu0 %v1518, %s1543
  %v1545 = vpop.permute.xlu0 %1544
  %s1547 = sor.u32 256, 56
  %1548 = vbcast.lane.b32.xlu0 %v1518, %s1547
  %v1549 = vpop.permute.xlu0 %1548
  %s1551 = sor.u32 256, 64
  %1552 = vbcast.lane.b32.xlu0 %v1518, %s1551
  %v1553 = vpop.permute.xlu0 %1552
  %s1555 = sor.u32 256, 72
  %1556 = vbcast.lane.b32.xlu0 %v1518, %s1555
  %v1557 = vpop.permute.xlu0 %1556
  %s1559 = sor.u32 256, 80
  %1560 = vbcast.lane.b32.xlu0 %v1518, %s1559
  %v1561 = vpop.permute.xlu0 %1560
  %s1563 = sor.u32 256, 88
  %1564 = vbcast.lane.b32.xlu0 %v1518, %s1563
  %v1565 = vpop.permute.xlu0 %1564
  %s1567 = sor.u32 256, 96
  %1568 = vbcast.lane.b32.xlu0 %v1518, %s1567
  %v1569 = vpop.permute.xlu0 %1568
  %s1571 = sor.u32 256, 104
  %1572 = vbcast.lane.b32.xlu0 %v1518, %s1571
  %v1573 = vpop.permute.xlu0 %1572
  %s1575 = sor.u32 256, 112
  %1576 = vbcast.lane.b32.xlu0 %v1518, %s1575
  %v1577 = vpop.permute.xlu0 %1576
  %s1579 = sor.u32 256, 120
  %1580 = vbcast.lane.b32.xlu0 %v1518, %s1579
  %v1581 = vpop.permute.xlu0 %1580
  %v1582 = vlaneseq
  %v1583 = vshrl.u32 %v1582, 7
  %v1584 = vsub.s32 7, %v1583
  %v1585 = vrot.slane %v769, %v1584
  %1587 = vbcast.lane.b32.xlu0 %v1585, 256
  %v1588 = vpop.permute.xlu0 %1587
  %s1590 = sor.u32 256, 8
  %1591 = vbcast.lane.b32.xlu0 %v1585, %s1590
  %v1592 = vpop.permute.xlu0 %1591
  %s1594 = sor.u32 256, 16
  %1595 = vbcast.lane.b32.xlu0 %v1585, %s1594
  %v1596 = vpop.permute.xlu0 %1595
  %s1598 = sor.u32 256, 24
  %1599 = vbcast.lane.b32.xlu0 %v1585, %s1598
  %v1600 = vpop.permute.xlu0 %1599
  %s1602 = sor.u32 256, 32
  %1603 = vbcast.lane.b32.xlu0 %v1585, %s1602
  %v1604 = vpop.permute.xlu0 %1603
  %s1606 = sor.u32 256, 40
  %1607 = vbcast.lane.b32.xlu0 %v1585, %s1606
  %v1608 = vpop.permute.xlu0 %1607
  %s1610 = sor.u32 256, 48
  %1611 = vbcast.lane.b32.xlu0 %v1585, %s1610
  %v1612 = vpop.permute.xlu0 %1611
  %s1614 = sor.u32 256, 56
  %1615 = vbcast.lane.b32.xlu0 %v1585, %s1614
  %v1616 = vpop.permute.xlu0 %1615
  %s1618 = sor.u32 256, 64
  %1619 = vbcast.lane.b32.xlu0 %v1585, %s1618
  %v1620 = vpop.permute.xlu0 %1619
  %v1623 = vcombine.low %v587, %v589
  %v1624 = vcombine.high %v587, %v589
  %v1626 = vunpack.c.l.s4 1966171168
  %v1627 = vunpack.c.0.s8 %v1626
  %v1628 = vlaneseq
  %v1629 = vshrl.u32 %v1628, 7
  %v1630 = vsub.s32 %v1627, %v1629
  %v1631 = vrot.slane %v1623, %v1630
  %v1633 = vunpack.c.l.s4 1966171168
  %v1634 = vunpack.c.0.s8 %v1633
  %v1635 = vlaneseq
  %v1636 = vshrl.u32 %v1635, 7
  %v1637 = vsub.s32 %v1634, %v1636
  %v1638 = vrot.slane %v1624, %v1637
  %v1639 = vcombine.high %v1631, %v1631
  %v1640 = vcombine.high %v1638, %v1638
  %v1642 = vunpack.c.l.s4 1966171168
  %v1643 = vunpack.c.0.s8 %v1642
  %v1644 = vlaneseq
  %v1645 = vshrl.u32 %v1644, 7
  %v1646 = vsub.s32 %v1643, %v1645
  %v1647 = vrot.slane %v1631, %v1646
  %v1649 = vunpack.c.l.s4 1966171168
  %v1650 = vunpack.c.0.s8 %v1649
  %v1651 = vlaneseq
  %v1652 = vshrl.u32 %v1651, 7
  %v1653 = vsub.s32 %v1650, %v1652
  %v1654 = vrot.slane %v1638, %v1653
  %v1656 = vunpack.c.l.s4 1966171168
  %v1657 = vunpack.c.0.s8 %v1656
  %v1658 = vlaneseq
  %v1659 = vshrl.u32 %v1658, 7
  %v1660 = vsub.s32 %v1657, %v1659
  %v1661 = vrot.slane %v1639, %v1660
  %v1663 = vunpack.c.l.s4 1966171168
  %v1664 = vunpack.c.0.s8 %v1663
  %v1665 = vlaneseq
  %v1666 = vshrl.u32 %v1665, 7
  %v1667 = vsub.s32 %v1664, %v1666
  %v1668 = vrot.slane %v1640, %v1667
  %v1669 = vcombine.high %v1647, %v1647
  %v1670 = vcombine.high %v1654, %v1654
  %v1671 = vcombine.high %v1661, %v1661
  %v1672 = vcombine.high %v1668, %v1668
  %v1673 = vlaneseq
  %v1674 = vshrl.u32 %v1673, 7
  %v1675 = vsub.s32 0, %v1674
  %v1676 = vrot.slane %v1647, %v1675
  %v1677 = vlaneseq
  %v1678 = vshrl.u32 %v1677, 7
  %v1679 = vsub.s32 1, %v1678
  %v1680 = vrot.slane %v1647, %v1679
  %v1681 = vlaneseq
  %v1682 = vshrl.u32 %v1681, 7
  %v1683 = vsub.s32 0, %v1682
  %v1684 = vrot.slane %v1661, %v1683
  %v1685 = vlaneseq
  %v1686 = vshrl.u32 %v1685, 7
  %v1687 = vsub.s32 1, %v1686
  %v1688 = vrot.slane %v1661, %v1687
  %v1689 = vlaneseq
  %v1690 = vshrl.u32 %v1689, 7
  %v1691 = vsub.s32 0, %v1690
  %v1692 = vrot.slane %v1669, %v1691
  %v1693 = vlaneseq
  %v1694 = vshrl.u32 %v1693, 7
  %v1695 = vsub.s32 1, %v1694
  %v1696 = vrot.slane %v1669, %v1695
  %v1697 = vlaneseq
  %v1698 = vshrl.u32 %v1697, 7
  %v1699 = vsub.s32 0, %v1698
  %v1700 = vrot.slane %v1671, %v1699
  %v1701 = vlaneseq
  %v1702 = vshrl.u32 %v1701, 7
  %v1703 = vsub.s32 1, %v1702
  %v1704 = vrot.slane %v1671, %v1703
  %v1705 = vlaneseq
  %v1706 = vshrl.u32 %v1705, 7
  %v1707 = vsub.s32 0, %v1706
  %v1708 = vrot.slane %v1654, %v1707
  %v1709 = vlaneseq
  %v1710 = vshrl.u32 %v1709, 7
  %v1711 = vsub.s32 1, %v1710
  %v1712 = vrot.slane %v1654, %v1711
  %v1713 = vlaneseq
  %v1714 = vshrl.u32 %v1713, 7
  %v1715 = vsub.s32 0, %v1714
  %v1716 = vrot.slane %v1668, %v1715
  %v1717 = vlaneseq
  %v1718 = vshrl.u32 %v1717, 7
  %v1719 = vsub.s32 1, %v1718
  %v1720 = vrot.slane %v1668, %v1719
  %v1721 = vlaneseq
  %v1722 = vshrl.u32 %v1721, 7
  %v1723 = vsub.s32 0, %v1722
  %v1724 = vrot.slane %v1670, %v1723
  %v1725 = vlaneseq
  %v1726 = vshrl.u32 %v1725, 7
  %v1727 = vsub.s32 1, %v1726
  %v1728 = vrot.slane %v1670, %v1727
  %v1729 = vlaneseq
  %v1730 = vshrl.u32 %v1729, 7
  %v1731 = vsub.s32 0, %v1730
  %v1732 = vrot.slane %v1672, %v1731
  %v1733 = vlaneseq
  %v1734 = vshrl.u32 %v1733, 7
  %v1735 = vsub.s32 1, %v1734
  %v1736 = vrot.slane %v1672, %v1735
  %v1753 = vadd.f32 %v779, %v1676
  %v1754 = vadd.f32 %v779, %v1680
  %v1755 = vadd.f32 %v783, %v1676
  %v1756 = vadd.f32 %v783, %v1680
  %v1757 = vadd.f32 %v787, %v1676
  %v1758 = vadd.f32 %v787, %v1680
  %v1759 = vadd.f32 %v791, %v1676
  %v1760 = vadd.f32 %v791, %v1680
  %v1761 = vadd.f32 %v795, %v1676
  %v1762 = vadd.f32 %v795, %v1680
  %v1763 = vadd.f32 %v799, %v1676
  %v1764 = vadd.f32 %v799, %v1680
  %v1765 = vadd.f32 %v803, %v1676
  %v1766 = vadd.f32 %v803, %v1680
  %v1767 = vadd.f32 %v807, %v1676
  %v1768 = vadd.f32 %v807, %v1680
  %v1769 = vadd.f32 %v811, %v1676
  %v1770 = vadd.f32 %v811, %v1680
  %v1771 = vadd.f32 %v815, %v1676
  %v1772 = vadd.f32 %v815, %v1680
  %v1773 = vadd.f32 %v819, %v1676
  %v1774 = vadd.f32 %v819, %v1680
  %v1775 = vadd.f32 %v823, %v1676
  %v1776 = vadd.f32 %v823, %v1680
  %v1777 = vadd.f32 %v827, %v1676
  %v1778 = vadd.f32 %v827, %v1680
  %v1779 = vadd.f32 %v831, %v1676
  %v1780 = vadd.f32 %v831, %v1680
  %v1781 = vadd.f32 %v835, %v1676
  %v1782 = vadd.f32 %v835, %v1680
  %v1783 = vadd.f32 %v839, %v1676
  %v1784 = vadd.f32 %v839, %v1680
  %v1785 = vadd.f32 %v846, %v1676
  %v1786 = vadd.f32 %v846, %v1680
  %v1787 = vadd.f32 %v850, %v1676
  %v1788 = vadd.f32 %v850, %v1680
  %v1789 = vadd.f32 %v854, %v1676
  %v1790 = vadd.f32 %v854, %v1680
  %v1791 = vadd.f32 %v858, %v1676
  %v1792 = vadd.f32 %v858, %v1680
  %v1793 = vadd.f32 %v862, %v1676
  %v1794 = vadd.f32 %v862, %v1680
  %v1795 = vadd.f32 %v866, %v1676
  %v1796 = vadd.f32 %v866, %v1680
  %v1797 = vadd.f32 %v870, %v1676
  %v1798 = vadd.f32 %v870, %v1680
  %v1799 = vadd.f32 %v874, %v1676
  %v1800 = vadd.f32 %v874, %v1680
  %v1801 = vadd.f32 %v878, %v1676
  %v1802 = vadd.f32 %v878, %v1680
  %v1803 = vadd.f32 %v885, %v1684
  %v1804 = vadd.f32 %v885, %v1688
  %v1805 = vadd.f32 %v889, %v1684
  %v1806 = vadd.f32 %v889, %v1688
  %v1807 = vadd.f32 %v893, %v1684
  %v1808 = vadd.f32 %v893, %v1688
  %v1809 = vadd.f32 %v897, %v1684
  %v1810 = vadd.f32 %v897, %v1688
  %v1811 = vadd.f32 %v901, %v1684
  %v1812 = vadd.f32 %v901, %v1688
  %v1813 = vadd.f32 %v905, %v1684
  %v1814 = vadd.f32 %v905, %v1688
  %v1815 = vadd.f32 %v909, %v1684
  %v1816 = vadd.f32 %v909, %v1688
  %v1817 = vadd.f32 %v913, %v1684
  %v1818 = vadd.f32 %v913, %v1688
  %v1819 = vadd.f32 %v917, %v1684
  %v1820 = vadd.f32 %v917, %v1688
  %v1821 = vadd.f32 %v921, %v1684
  %v1822 = vadd.f32 %v921, %v1688
  %v1823 = vadd.f32 %v925, %v1684
  %v1824 = vadd.f32 %v925, %v1688
  %v1825 = vadd.f32 %v929, %v1684
  %v1826 = vadd.f32 %v929, %v1688
  %v1827 = vadd.f32 %v933, %v1684
  %v1828 = vadd.f32 %v933, %v1688
  %v1829 = vadd.f32 %v937, %v1684
  %v1830 = vadd.f32 %v937, %v1688
  %v1831 = vadd.f32 %v941, %v1684
  %v1832 = vadd.f32 %v941, %v1688
  %v1833 = vadd.f32 %v945, %v1684
  %v1834 = vadd.f32 %v945, %v1688
  %v1835 = vadd.f32 %v952, %v1684
  %v1836 = vadd.f32 %v952, %v1688
  %v1837 = vadd.f32 %v956, %v1684
  %v1838 = vadd.f32 %v956, %v1688
  %v1839 = vadd.f32 %v960, %v1684
  %v1840 = vadd.f32 %v960, %v1688
  %v1841 = vadd.f32 %v964, %v1684
  %v1842 = vadd.f32 %v964, %v1688
  %v1843 = vadd.f32 %v968, %v1684
  %v1844 = vadd.f32 %v968, %v1688
  %v1845 = vadd.f32 %v972, %v1684
  %v1846 = vadd.f32 %v972, %v1688
  %v1847 = vadd.f32 %v976, %v1684
  %v1848 = vadd.f32 %v976, %v1688
  %v1849 = vadd.f32 %v980, %v1684
  %v1850 = vadd.f32 %v980, %v1688
  %v1851 = vadd.f32 %v984, %v1684
  %v1852 = vadd.f32 %v984, %v1688
  %v1853 = vadd.f32 %v991, %v1692
  %v1854 = vadd.f32 %v991, %v1696
  %v1855 = vadd.f32 %v995, %v1692
  %v1856 = vadd.f32 %v995, %v1696
  %v1857 = vadd.f32 %v999, %v1692
  %v1858 = vadd.f32 %v999, %v1696
  %v1859 = vadd.f32 %v1003, %v1692
  %v1860 = vadd.f32 %v1003, %v1696
  %v1861 = vadd.f32 %v1007, %v1692
  %v1862 = vadd.f32 %v1007, %v1696
  %v1863 = vadd.f32 %v1011, %v1692
  %v1864 = vadd.f32 %v1011, %v1696
  %v1865 = vadd.f32 %v1015, %v1692
  %v1866 = vadd.f32 %v1015, %v1696
  %v1867 = vadd.f32 %v1019, %v1692
  %v1868 = vadd.f32 %v1019, %v1696
  %v1869 = vadd.f32 %v1023, %v1692
  %v1870 = vadd.f32 %v1023, %v1696
  %v1871 = vadd.f32 %v1027, %v1692
  %v1872 = vadd.f32 %v1027, %v1696
  %v1873 = vadd.f32 %v1031, %v1692
  %v1874 = vadd.f32 %v1031, %v1696
  %v1875 = vadd.f32 %v1035, %v1692
  %v1876 = vadd.f32 %v1035, %v1696
  %v1877 = vadd.f32 %v1039, %v1692
  %v1878 = vadd.f32 %v1039, %v1696
  %v1879 = vadd.f32 %v1043, %v1692
  %v1880 = vadd.f32 %v1043, %v1696
  %v1881 = vadd.f32 %v1047, %v1692
  %v1882 = vadd.f32 %v1047, %v1696
  %v1883 = vadd.f32 %v1051, %v1692
  %v1884 = vadd.f32 %v1051, %v1696
  %v1885 = vadd.f32 %v1058, %v1692
  %v1886 = vadd.f32 %v1058, %v1696
  %v1887 = vadd.f32 %v1062, %v1692
  %v1888 = vadd.f32 %v1062, %v1696
  %v1889 = vadd.f32 %v1066, %v1692
  %v1890 = vadd.f32 %v1066, %v1696
  %v1891 = vadd.f32 %v1070, %v1692
  %v1892 = vadd.f32 %v1070, %v1696
  %v1893 = vadd.f32 %v1074, %v1692
  %v1894 = vadd.f32 %v1074, %v1696
  %v1895 = vadd.f32 %v1078, %v1692
  %v1896 = vadd.f32 %v1078, %v1696
  %v1897 = vadd.f32 %v1082, %v1692
  %v1898 = vadd.f32 %v1082, %v1696
  %v1899 = vadd.f32 %v1086, %v1692
  %v1900 = vadd.f32 %v1086, %v1696
  %v1901 = vadd.f32 %v1090, %v1692
  %v1902 = vadd.f32 %v1090, %v1696
  %v1903 = vadd.f32 %v1097, %v1700
  %v1904 = vadd.f32 %v1097, %v1704
  %v1905 = vadd.f32 %v1101, %v1700
  %v1906 = vadd.f32 %v1101, %v1704
  %v1907 = vadd.f32 %v1105, %v1700
  %v1908 = vadd.f32 %v1105, %v1704
  %v1909 = vadd.f32 %v1109, %v1700
  %v1910 = vadd.f32 %v1109, %v1704
  %v1911 = vadd.f32 %v1113, %v1700
  %v1912 = vadd.f32 %v1113, %v1704
  %v1913 = vadd.f32 %v1117, %v1700
  %v1914 = vadd.f32 %v1117, %v1704
  %v1915 = vadd.f32 %v1121, %v1700
  %v1916 = vadd.f32 %v1121, %v1704
  %v1917 = vadd.f32 %v1125, %v1700
  %v1918 = vadd.f32 %v1125, %v1704
  %v1919 = vadd.f32 %v1129, %v1700
  %v1920 = vadd.f32 %v1129, %v1704
  %v1921 = vadd.f32 %v1133, %v1700
  %v1922 = vadd.f32 %v1133, %v1704
  %v1923 = vadd.f32 %v1137, %v1700
  %v1924 = vadd.f32 %v1137, %v1704
  %v1925 = vadd.f32 %v1141, %v1700
  %v1926 = vadd.f32 %v1141, %v1704
  %v1927 = vadd.f32 %v1145, %v1700
  %v1928 = vadd.f32 %v1145, %v1704
  %v1929 = vadd.f32 %v1149, %v1700
  %v1930 = vadd.f32 %v1149, %v1704
  %v1931 = vadd.f32 %v1153, %v1700
  %v1932 = vadd.f32 %v1153, %v1704
  %v1933 = vadd.f32 %v1157, %v1700
  %v1934 = vadd.f32 %v1157, %v1704
  %v1935 = vadd.f32 %v1164, %v1700
  %v1936 = vadd.f32 %v1164, %v1704
  %v1937 = vadd.f32 %v1168, %v1700
  %v1938 = vadd.f32 %v1168, %v1704
  %v1939 = vadd.f32 %v1172, %v1700
  %v1940 = vadd.f32 %v1172, %v1704
  %v1941 = vadd.f32 %v1176, %v1700
  %v1942 = vadd.f32 %v1176, %v1704
  %v1943 = vadd.f32 %v1180, %v1700
  %v1944 = vadd.f32 %v1180, %v1704
  %v1945 = vadd.f32 %v1184, %v1700
  %v1946 = vadd.f32 %v1184, %v1704
  %v1947 = vadd.f32 %v1188, %v1700
  %v1948 = vadd.f32 %v1188, %v1704
  %v1949 = vadd.f32 %v1192, %v1700
  %v1950 = vadd.f32 %v1192, %v1704
  %v1951 = vadd.f32 %v1196, %v1700
  %v1952 = vadd.f32 %v1196, %v1704
  %v1953 = vadd.f32 %v1203, %v1708
  %v1954 = vadd.f32 %v1203, %v1712
  %v1955 = vadd.f32 %v1207, %v1708
  %v1956 = vadd.f32 %v1207, %v1712
  %v1957 = vadd.f32 %v1211, %v1708
  %v1958 = vadd.f32 %v1211, %v1712
  %v1959 = vadd.f32 %v1215, %v1708
  %v1960 = vadd.f32 %v1215, %v1712
  %v1961 = vadd.f32 %v1219, %v1708
  %v1962 = vadd.f32 %v1219, %v1712
  %v1963 = vadd.f32 %v1223, %v1708
  %v1964 = vadd.f32 %v1223, %v1712
  %v1965 = vadd.f32 %v1227, %v1708
  %v1966 = vadd.f32 %v1227, %v1712
  %v1967 = vadd.f32 %v1231, %v1708
  %v1968 = vadd.f32 %v1231, %v1712
  %v1969 = vadd.f32 %v1235, %v1708
  %v1970 = vadd.f32 %v1235, %v1712
  %v1971 = vadd.f32 %v1239, %v1708
  %v1972 = vadd.f32 %v1239, %v1712
  %v1973 = vadd.f32 %v1243, %v1708
  %v1974 = vadd.f32 %v1243, %v1712
  %v1975 = vadd.f32 %v1247, %v1708
  %v1976 = vadd.f32 %v1247, %v1712
  %v1977 = vadd.f32 %v1251, %v1708
  %v1978 = vadd.f32 %v1251, %v1712
  %v1979 = vadd.f32 %v1255, %v1708
  %v1980 = vadd.f32 %v1255, %v1712
  %v1981 = vadd.f32 %v1259, %v1708
  %v1982 = vadd.f32 %v1259, %v1712
  %v1983 = vadd.f32 %v1263, %v1708
  %v1984 = vadd.f32 %v1263, %v1712
  %v1985 = vadd.f32 %v1270, %v1708
  %v1986 = vadd.f32 %v1270, %v1712
  %v1987 = vadd.f32 %v1274, %v1708
  %v1988 = vadd.f32 %v1274, %v1712
  %v1989 = vadd.f32 %v1278, %v1708
  %v1990 = vadd.f32 %v1278, %v1712
  %v1991 = vadd.f32 %v1282, %v1708
  %v1992 = vadd.f32 %v1282, %v1712
  %v1993 = vadd.f32 %v1286, %v1708
  %v1994 = vadd.f32 %v1286, %v1712
  %v1995 = vadd.f32 %v1290, %v1708
  %v1996 = vadd.f32 %v1290, %v1712
  %v1997 = vadd.f32 %v1294, %v1708
  %v1998 = vadd.f32 %v1294, %v1712
  %v1999 = vadd.f32 %v1298, %v1708
  %v2000 = vadd.f32 %v1298, %v1712
  %v2001 = vadd.f32 %v1302, %v1708
  %v2002 = vadd.f32 %v1302, %v1712
  %v2003 = vadd.f32 %v1309, %v1716
  %v2004 = vadd.f32 %v1309, %v1720
  %v2005 = vadd.f32 %v1313, %v1716
  %v2006 = vadd.f32 %v1313, %v1720
  %v2007 = vadd.f32 %v1317, %v1716
  %v2008 = vadd.f32 %v1317, %v1720
  %v2009 = vadd.f32 %v1321, %v1716
  %v2010 = vadd.f32 %v1321, %v1720
  %v2011 = vadd.f32 %v1325, %v1716
  %v2012 = vadd.f32 %v1325, %v1720
  %v2013 = vadd.f32 %v1329, %v1716
  %v2014 = vadd.f32 %v1329, %v1720
  %v2015 = vadd.f32 %v1333, %v1716
  %v2016 = vadd.f32 %v1333, %v1720
  %v2017 = vadd.f32 %v1337, %v1716
  %v2018 = vadd.f32 %v1337, %v1720
  %v2019 = vadd.f32 %v1341, %v1716
  %v2020 = vadd.f32 %v1341, %v1720
  %v2021 = vadd.f32 %v1345, %v1716
  %v2022 = vadd.f32 %v1345, %v1720
  %v2023 = vadd.f32 %v1349, %v1716
  %v2024 = vadd.f32 %v1349, %v1720
  %v2025 = vadd.f32 %v1353, %v1716
  %v2026 = vadd.f32 %v1353, %v1720
  %v2027 = vadd.f32 %v1357, %v1716
  %v2028 = vadd.f32 %v1357, %v1720
  %v2029 = vadd.f32 %v1361, %v1716
  %v2030 = vadd.f32 %v1361, %v1720
  %v2031 = vadd.f32 %v1365, %v1716
  %v2032 = vadd.f32 %v1365, %v1720
  %v2033 = vadd.f32 %v1369, %v1716
  %v2034 = vadd.f32 %v1369, %v1720
  %v2035 = vadd.f32 %v1376, %v1716
  %v2036 = vadd.f32 %v1376, %v1720
  %v2037 = vadd.f32 %v1380, %v1716
  %v2038 = vadd.f32 %v1380, %v1720
  %v2039 = vadd.f32 %v1384, %v1716
  %v2040 = vadd.f32 %v1384, %v1720
  %v2041 = vadd.f32 %v1388, %v1716
  %v2042 = vadd.f32 %v1388, %v1720
  %v2043 = vadd.f32 %v1392, %v1716
  %v2044 = vadd.f32 %v1392, %v1720
  %v2045 = vadd.f32 %v1396, %v1716
  %v2046 = vadd.f32 %v1396, %v1720
  %v2047 = vadd.f32 %v1400, %v1716
  %v2048 = vadd.f32 %v1400, %v1720
  %v2049 = vadd.f32 %v1404, %v1716
  %v2050 = vadd.f32 %v1404, %v1720
  %v2051 = vadd.f32 %v1408, %v1716
  %v2052 = vadd.f32 %v1408, %v1720
  %v2053 = vadd.f32 %v1415, %v1724
  %v2054 = vadd.f32 %v1415, %v1728
  %v2055 = vadd.f32 %v1419, %v1724
  %v2056 = vadd.f32 %v1419, %v1728
  %v2057 = vadd.f32 %v1423, %v1724
  %v2058 = vadd.f32 %v1423, %v1728
  %v2059 = vadd.f32 %v1427, %v1724
  %v2060 = vadd.f32 %v1427, %v1728
  %v2061 = vadd.f32 %v1431, %v1724
  %v2062 = vadd.f32 %v1431, %v1728
  %v2063 = vadd.f32 %v1435, %v1724
  %v2064 = vadd.f32 %v1435, %v1728
  %v2065 = vadd.f32 %v1439, %v1724
  %v2066 = vadd.f32 %v1439, %v1728
  %v2067 = vadd.f32 %v1443, %v1724
  %v2068 = vadd.f32 %v1443, %v1728
  %v2069 = vadd.f32 %v1447, %v1724
  %v2070 = vadd.f32 %v1447, %v1728
  %v2071 = vadd.f32 %v1451, %v1724
  %v2072 = vadd.f32 %v1451, %v1728
  %v2073 = vadd.f32 %v1455, %v1724
  %v2074 = vadd.f32 %v1455, %v1728
  %v2075 = vadd.f32 %v1459, %v1724
  %v2076 = vadd.f32 %v1459, %v1728
  %v2077 = vadd.f32 %v1463, %v1724
  %v2078 = vadd.f32 %v1463, %v1728
  %v2079 = vadd.f32 %v1467, %v1724
  %v2080 = vadd.f32 %v1467, %v1728
  %v2081 = vadd.f32 %v1471, %v1724
  %v2082 = vadd.f32 %v1471, %v1728
  %v2083 = vadd.f32 %v1475, %v1724
  %v2084 = vadd.f32 %v1475, %v1728
  %v2085 = vadd.f32 %v1482, %v1724
  %v2086 = vadd.f32 %v1482, %v1728
  %v2087 = vadd.f32 %v1486, %v1724
  %v2088 = vadd.f32 %v1486, %v1728
  %v2089 = vadd.f32 %v1490, %v1724
  %v2090 = vadd.f32 %v1490, %v1728
  %v2091 = vadd.f32 %v1494, %v1724
  %v2092 = vadd.f32 %v1494, %v1728
  %v2093 = vadd.f32 %v1498, %v1724
  %v2094 = vadd.f32 %v1498, %v1728
  %v2095 = vadd.f32 %v1502, %v1724
  %v2096 = vadd.f32 %v1502, %v1728
  %v2097 = vadd.f32 %v1506, %v1724
  %v2098 = vadd.f32 %v1506, %v1728
  %v2099 = vadd.f32 %v1510, %v1724
  %v2100 = vadd.f32 %v1510, %v1728
  %v2101 = vadd.f32 %v1514, %v1724
  %v2102 = vadd.f32 %v1514, %v1728
  %v2103 = vadd.f32 %v1521, %v1732
  %v2104 = vadd.f32 %v1521, %v1736
  %v2105 = vadd.f32 %v1525, %v1732
  %v2106 = vadd.f32 %v1525, %v1736
  %v2107 = vadd.f32 %v1529, %v1732
  %v2108 = vadd.f32 %v1529, %v1736
  %v2109 = vadd.f32 %v1533, %v1732
  %v2110 = vadd.f32 %v1533, %v1736
  %v2111 = vadd.f32 %v1537, %v1732
  %v2112 = vadd.f32 %v1537, %v1736
  %v2113 = vadd.f32 %v1541, %v1732
  %v2114 = vadd.f32 %v1541, %v1736
  %v2115 = vadd.f32 %v1545, %v1732
  %v2116 = vadd.f32 %v1545, %v1736
  %v2117 = vadd.f32 %v1549, %v1732
  %v2118 = vadd.f32 %v1549, %v1736
  %v2119 = vadd.f32 %v1553, %v1732
  %v2120 = vadd.f32 %v1553, %v1736
  %v2121 = vadd.f32 %v1557, %v1732
  %v2122 = vadd.f32 %v1557, %v1736
  %v2123 = vadd.f32 %v1561, %v1732
  %v2124 = vadd.f32 %v1561, %v1736
  %v2125 = vadd.f32 %v1565, %v1732
  %v2126 = vadd.f32 %v1565, %v1736
  %v2127 = vadd.f32 %v1569, %v1732
  %v2128 = vadd.f32 %v1569, %v1736
  %v2129 = vadd.f32 %v1573, %v1732
  %v2130 = vadd.f32 %v1573, %v1736
  %v2131 = vadd.f32 %v1577, %v1732
  %v2132 = vadd.f32 %v1577, %v1736
  %v2133 = vadd.f32 %v1581, %v1732
  %v2134 = vadd.f32 %v1581, %v1736
  %v2135 = vadd.f32 %v1588, %v1732
  %v2136 = vadd.f32 %v1588, %v1736
  %v2137 = vadd.f32 %v1592, %v1732
  %v2138 = vadd.f32 %v1592, %v1736
  %v2139 = vadd.f32 %v1596, %v1732
  %v2140 = vadd.f32 %v1596, %v1736
  %v2141 = vadd.f32 %v1600, %v1732
  %v2142 = vadd.f32 %v1600, %v1736
  %v2143 = vadd.f32 %v1604, %v1732
  %v2144 = vadd.f32 %v1604, %v1736
  %v2145 = vadd.f32 %v1608, %v1732
  %v2146 = vadd.f32 %v1608, %v1736
  %v2147 = vadd.f32 %v1612, %v1732
  %v2148 = vadd.f32 %v1612, %v1736
  %v2149 = vadd.f32 %v1616, %v1732
  %v2150 = vadd.f32 %v1616, %v1736
  %v2151 = vadd.f32 %v1620, %v1732
  %v2152 = vadd.f32 %v1620, %v1736
  %v2153 = vmul.f32 %v1753, 0.33
  %v2154 = vmul.f32 %v1754, 0.33
  %v2155 = vmul.f32 %v1755, 0.33
  %v2156 = vmul.f32 %v1756, 0.33
  %v2157 = vmul.f32 %v1757, 0.33
  %v2158 = vmul.f32 %v1758, 0.33
  %v2159 = vmul.f32 %v1759, 0.33
  %v2160 = vmul.f32 %v1760, 0.33
  %v2161 = vmul.f32 %v1761, 0.33
  %v2162 = vmul.f32 %v1762, 0.33
  %v2163 = vmul.f32 %v1763, 0.33
  %v2164 = vmul.f32 %v1764, 0.33
  %v2165 = vmul.f32 %v1765, 0.33
  %v2166 = vmul.f32 %v1766, 0.33
  %v2167 = vmul.f32 %v1767, 0.33
  %v2168 = vmul.f32 %v1768, 0.33
  %v2169 = vmul.f32 %v1769, 0.33
  %v2170 = vmul.f32 %v1770, 0.33
  %v2171 = vmul.f32 %v1771, 0.33
  %v2172 = vmul.f32 %v1772, 0.33
  %v2173 = vmul.f32 %v1773, 0.33
  %v2174 = vmul.f32 %v1774, 0.33
  %v2175 = vmul.f32 %v1775, 0.33
  %v2176 = vmul.f32 %v1776, 0.33
  %v2177 = vmul.f32 %v1777, 0.33
  %v2178 = vmul.f32 %v1778, 0.33
  %v2179 = vmul.f32 %v1779, 0.33
  %v2180 = vmul.f32 %v1780, 0.33
  %v2181 = vmul.f32 %v1781, 0.33
  %v2182 = vmul.f32 %v1782, 0.33
  %v2183 = vmul.f32 %v1783, 0.33
  %v2184 = vmul.f32 %v1784, 0.33
  %v2185 = vmul.f32 %v1785, 0.33
  %v2186 = vmul.f32 %v1786, 0.33
  %v2187 = vmul.f32 %v1787, 0.33
  %v2188 = vmul.f32 %v1788, 0.33
  %v2189 = vmul.f32 %v1789, 0.33
  %v2190 = vmul.f32 %v1790, 0.33
  %v2191 = vmul.f32 %v1791, 0.33
  %v2192 = vmul.f32 %v1792, 0.33
  %v2193 = vmul.f32 %v1793, 0.33
  %v2194 = vmul.f32 %v1794, 0.33
  %v2195 = vmul.f32 %v1795, 0.33
  %v2196 = vmul.f32 %v1796, 0.33
  %v2197 = vmul.f32 %v1797, 0.33
  %v2198 = vmul.f32 %v1798, 0.33
  %v2199 = vmul.f32 %v1799, 0.33
  %v2200 = vmul.f32 %v1800, 0.33
  %v2201 = vmul.f32 %v1801, 0.33
  %v2202 = vmul.f32 %v1802, 0.33
  %v2203 = vmul.f32 %v1803, 0.33
  %v2204 = vmul.f32 %v1804, 0.33
  %v2205 = vmul.f32 %v1805, 0.33
  %v2206 = vmul.f32 %v1806, 0.33
  %v2207 = vmul.f32 %v1807, 0.33
  %v2208 = vmul.f32 %v1808, 0.33
  %v2209 = vmul.f32 %v1809, 0.33
  %v2210 = vmul.f32 %v1810, 0.33
  %v2211 = vmul.f32 %v1811, 0.33
  %v2212 = vmul.f32 %v1812, 0.33
  %v2213 = vmul.f32 %v1813, 0.33
  %v2214 = vmul.f32 %v1814, 0.33
  %v2215 = vmul.f32 %v1815, 0.33
  %v2216 = vmul.f32 %v1816, 0.33
  %v2217 = vmul.f32 %v1817, 0.33
  %v2218 = vmul.f32 %v1818, 0.33
  %v2219 = vmul.f32 %v1819, 0.33
  %v2220 = vmul.f32 %v1820, 0.33
  %v2221 = vmul.f32 %v1821, 0.33
  %v2222 = vmul.f32 %v1822, 0.33
  %v2223 = vmul.f32 %v1823, 0.33
  %v2224 = vmul.f32 %v1824, 0.33
  %v2225 = vmul.f32 %v1825, 0.33
  %v2226 = vmul.f32 %v1826, 0.33
  %v2227 = vmul.f32 %v1827, 0.33
  %v2228 = vmul.f32 %v1828, 0.33
  %v2229 = vmul.f32 %v1829, 0.33
  %v2230 = vmul.f32 %v1830, 0.33
  %v2231 = vmul.f32 %v1831, 0.33
  %v2232 = vmul.f32 %v1832, 0.33
  %v2233 = vmul.f32 %v1833, 0.33
  %v2234 = vmul.f32 %v1834, 0.33
  %v2235 = vmul.f32 %v1835, 0.33
  %v2236 = vmul.f32 %v1836, 0.33
  %v2237 = vmul.f32 %v1837, 0.33
  %v2238 = vmul.f32 %v1838, 0.33
  %v2239 = vmul.f32 %v1839, 0.33
  %v2240 = vmul.f32 %v1840, 0.33
  %v2241 = vmul.f32 %v1841, 0.33
  %v2242 = vmul.f32 %v1842, 0.33
  %v2243 = vmul.f32 %v1843, 0.33
  %v2244 = vmul.f32 %v1844, 0.33
  %v2245 = vmul.f32 %v1845, 0.33
  %v2246 = vmul.f32 %v1846, 0.33
  %v2247 = vmul.f32 %v1847, 0.33
  %v2248 = vmul.f32 %v1848, 0.33
  %v2249 = vmul.f32 %v1849, 0.33
  %v2250 = vmul.f32 %v1850, 0.33
  %v2251 = vmul.f32 %v1851, 0.33
  %v2252 = vmul.f32 %v1852, 0.33
  %v2253 = vmul.f32 %v1853, 0.33
  %v2254 = vmul.f32 %v1854, 0.33
  %v2255 = vmul.f32 %v1855, 0.33
  %v2256 = vmul.f32 %v1856, 0.33
  %v2257 = vmul.f32 %v1857, 0.33
  %v2258 = vmul.f32 %v1858, 0.33
  %v2259 = vmul.f32 %v1859, 0.33
  %v2260 = vmul.f32 %v1860, 0.33
  %v2261 = vmul.f32 %v1861, 0.33
  %v2262 = vmul.f32 %v1862, 0.33
  %v2263 = vmul.f32 %v1863, 0.33
  %v2264 = vmul.f32 %v1864, 0.33
  %v2265 = vmul.f32 %v1865, 0.33
  %v2266 = vmul.f32 %v1866, 0.33
  %v2267 = vmul.f32 %v1867, 0.33
  %v2268 = vmul.f32 %v1868, 0.33
  %v2269 = vmul.f32 %v1869, 0.33
  %v2270 = vmul.f32 %v1870, 0.33
  %v2271 = vmul.f32 %v1871, 0.33
  %v2272 = vmul.f32 %v1872, 0.33
  %v2273 = vmul.f32 %v1873, 0.33
  %v2274 = vmul.f32 %v1874, 0.33
  %v2275 = vmul.f32 %v1875, 0.33
  %v2276 = vmul.f32 %v1876, 0.33
  %v2277 = vmul.f32 %v1877, 0.33
  %v2278 = vmul.f32 %v1878, 0.33
  %v2279 = vmul.f32 %v1879, 0.33
  %v2280 = vmul.f32 %v1880, 0.33
  %v2281 = vmul.f32 %v1881, 0.33
  %v2282 = vmul.f32 %v1882, 0.33
  %v2283 = vmul.f32 %v1883, 0.33
  %v2284 = vmul.f32 %v1884, 0.33
  %v2285 = vmul.f32 %v1885, 0.33
  %v2286 = vmul.f32 %v1886, 0.33
  %v2287 = vmul.f32 %v1887, 0.33
  %v2288 = vmul.f32 %v1888, 0.33
  %v2289 = vmul.f32 %v1889, 0.33
  %v2290 = vmul.f32 %v1890, 0.33
  %v2291 = vmul.f32 %v1891, 0.33
  %v2292 = vmul.f32 %v1892, 0.33
  %v2293 = vmul.f32 %v1893, 0.33
  %v2294 = vmul.f32 %v1894, 0.33
  %v2295 = vmul.f32 %v1895, 0.33
  %v2296 = vmul.f32 %v1896, 0.33
  %v2297 = vmul.f32 %v1897, 0.33
  %v2298 = vmul.f32 %v1898, 0.33
  %v2299 = vmul.f32 %v1899, 0.33
  %v2300 = vmul.f32 %v1900, 0.33
  %v2301 = vmul.f32 %v1901, 0.33
  %v2302 = vmul.f32 %v1902, 0.33
  %v2303 = vmul.f32 %v1903, 0.33
  %v2304 = vmul.f32 %v1904, 0.33
  %v2305 = vmul.f32 %v1905, 0.33
  %v2306 = vmul.f32 %v1906, 0.33
  %v2307 = vmul.f32 %v1907, 0.33
  %v2308 = vmul.f32 %v1908, 0.33
  %v2309 = vmul.f32 %v1909, 0.33
  %v2310 = vmul.f32 %v1910, 0.33
  %v2311 = vmul.f32 %v1911, 0.33
  %v2312 = vmul.f32 %v1912, 0.33
  %v2313 = vmul.f32 %v1913, 0.33
  %v2314 = vmul.f32 %v1914, 0.33
  %v2315 = vmul.f32 %v1915, 0.33
  %v2316 = vmul.f32 %v1916, 0.33
  %v2317 = vmul.f32 %v1917, 0.33
  %v2318 = vmul.f32 %v1918, 0.33
  %v2319 = vmul.f32 %v1919, 0.33
  %v2320 = vmul.f32 %v1920, 0.33
  %v2321 = vmul.f32 %v1921, 0.33
  %v2322 = vmul.f32 %v1922, 0.33
  %v2323 = vmul.f32 %v1923, 0.33
  %v2324 = vmul.f32 %v1924, 0.33
  %v2325 = vmul.f32 %v1925, 0.33
  %v2326 = vmul.f32 %v1926, 0.33
  %v2327 = vmul.f32 %v1927, 0.33
  %v2328 = vmul.f32 %v1928, 0.33
  %v2329 = vmul.f32 %v1929, 0.33
  %v2330 = vmul.f32 %v1930, 0.33
  %v2331 = vmul.f32 %v1931, 0.33
  %v2332 = vmul.f32 %v1932, 0.33
  %v2333 = vmul.f32 %v1933, 0.33
  %v2334 = vmul.f32 %v1934, 0.33
  %v2335 = vmul.f32 %v1935, 0.33
  %v2336 = vmul.f32 %v1936, 0.33
  %v2337 = vmul.f32 %v1937, 0.33
  %v2338 = vmul.f32 %v1938, 0.33
  %v2339 = vmul.f32 %v1939, 0.33
  %v2340 = vmul.f32 %v1940, 0.33
  %v2341 = vmul.f32 %v1941, 0.33
  %v2342 = vmul.f32 %v1942, 0.33
  %v2343 = vmul.f32 %v1943, 0.33
  %v2344 = vmul.f32 %v1944, 0.33
  %v2345 = vmul.f32 %v1945, 0.33
  %v2346 = vmul.f32 %v1946, 0.33
  %v2347 = vmul.f32 %v1947, 0.33
  %v2348 = vmul.f32 %v1948, 0.33
  %v2349 = vmul.f32 %v1949, 0.33
  %v2350 = vmul.f32 %v1950, 0.33
  %v2351 = vmul.f32 %v1951, 0.33
  %v2352 = vmul.f32 %v1952, 0.33
  %v2353 = vmul.f32 %v1953, 0.33
  %v2354 = vmul.f32 %v1954, 0.33
  %v2355 = vmul.f32 %v1955, 0.33
  %v2356 = vmul.f32 %v1956, 0.33
  %v2357 = vmul.f32 %v1957, 0.33
  %v2358 = vmul.f32 %v1958, 0.33
  %v2359 = vmul.f32 %v1959, 0.33
  %v2360 = vmul.f32 %v1960, 0.33
  %v2361 = vmul.f32 %v1961, 0.33
  %v2362 = vmul.f32 %v1962, 0.33
  %v2363 = vmul.f32 %v1963, 0.33
  %v2364 = vmul.f32 %v1964, 0.33
  %v2365 = vmul.f32 %v1965, 0.33
  %v2366 = vmul.f32 %v1966, 0.33
  %v2367 = vmul.f32 %v1967, 0.33
  %v2368 = vmul.f32 %v1968, 0.33
  %v2369 = vmul.f32 %v1969, 0.33
  %v2370 = vmul.f32 %v1970, 0.33
  %v2371 = vmul.f32 %v1971, 0.33
  %v2372 = vmul.f32 %v1972, 0.33
  %v2373 = vmul.f32 %v1973, 0.33
  %v2374 = vmul.f32 %v1974, 0.33
  %v2375 = vmul.f32 %v1975, 0.33
  %v2376 = vmul.f32 %v1976, 0.33
  %v2377 = vmul.f32 %v1977, 0.33
  %v2378 = vmul.f32 %v1978, 0.33
  %v2379 = vmul.f32 %v1979, 0.33
  %v2380 = vmul.f32 %v1980, 0.33
  %v2381 = vmul.f32 %v1981, 0.33
  %v2382 = vmul.f32 %v1982, 0.33
  %v2383 = vmul.f32 %v1983, 0.33
  %v2384 = vmul.f32 %v1984, 0.33
  %v2385 = vmul.f32 %v1985, 0.33
  %v2386 = vmul.f32 %v1986, 0.33
  %v2387 = vmul.f32 %v1987, 0.33
  %v2388 = vmul.f32 %v1988, 0.33
  %v2389 = vmul.f32 %v1989, 0.33
  %v2390 = vmul.f32 %v1990, 0.33
  %v2391 = vmul.f32 %v1991, 0.33
  %v2392 = vmul.f32 %v1992, 0.33
  %v2393 = vmul.f32 %v1993, 0.33
  %v2394 = vmul.f32 %v1994, 0.33
  %v2395 = vmul.f32 %v1995, 0.33
  %v2396 = vmul.f32 %v1996, 0.33
  %v2397 = vmul.f32 %v1997, 0.33
  %v2398 = vmul.f32 %v1998, 0.33
  %v2399 = vmul.f32 %v1999, 0.33
  %v2400 = vmul.f32 %v2000, 0.33
  %v2401 = vmul.f32 %v2001, 0.33
  %v2402 = vmul.f32 %v2002, 0.33
  %v2403 = vmul.f32 %v2003, 0.33
  %v2404 = vmul.f32 %v2004, 0.33
  %v2405 = vmul.f32 %v2005, 0.33
  %v2406 = vmul.f32 %v2006, 0.33
  %v2407 = vmul.f32 %v2007, 0.33
  %v2408 = vmul.f32 %v2008, 0.33
  %v2409 = vmul.f32 %v2009, 0.33
  %v2410 = vmul.f32 %v2010, 0.33
  %v2411 = vmul.f32 %v2011, 0.33
  %v2412 = vmul.f32 %v2012, 0.33
  %v2413 = vmul.f32 %v2013, 0.33
  %v2414 = vmul.f32 %v2014, 0.33
  %v2415 = vmul.f32 %v2015, 0.33
  %v2416 = vmul.f32 %v2016, 0.33
  %v2417 = vmul.f32 %v2017, 0.33
  %v2418 = vmul.f32 %v2018, 0.33
  %v2419 = vmul.f32 %v2019, 0.33
  %v2420 = vmul.f32 %v2020, 0.33
  %v2421 = vmul.f32 %v2021, 0.33
  %v2422 = vmul.f32 %v2022, 0.33
  %v2423 = vmul.f32 %v2023, 0.33
  %v2424 = vmul.f32 %v2024, 0.33
  %v2425 = vmul.f32 %v2025, 0.33
  %v2426 = vmul.f32 %v2026, 0.33
  %v2427 = vmul.f32 %v2027, 0.33
  %v2428 = vmul.f32 %v2028, 0.33
  %v2429 = vmul.f32 %v2029, 0.33
  %v2430 = vmul.f32 %v2030, 0.33
  %v2431 = vmul.f32 %v2031, 0.33
  %v2432 = vmul.f32 %v2032, 0.33
  %v2433 = vmul.f32 %v2033, 0.33
  %v2434 = vmul.f32 %v2034, 0.33
  %v2435 = vmul.f32 %v2035, 0.33
  %v2436 = vmul.f32 %v2036, 0.33
  %v2437 = vmul.f32 %v2037, 0.33
  %v2438 = vmul.f32 %v2038, 0.33
  %v2439 = vmul.f32 %v2039, 0.33
  %v2440 = vmul.f32 %v2040, 0.33
  %v2441 = vmul.f32 %v2041, 0.33
  %v2442 = vmul.f32 %v2042, 0.33
  %v2443 = vmul.f32 %v2043, 0.33
  %v2444 = vmul.f32 %v2044, 0.33
  %v2445 = vmul.f32 %v2045, 0.33
  %v2446 = vmul.f32 %v2046, 0.33
  %v2447 = vmul.f32 %v2047, 0.33
  %v2448 = vmul.f32 %v2048, 0.33
  %v2449 = vmul.f32 %v2049, 0.33
  %v2450 = vmul.f32 %v2050, 0.33
  %v2451 = vmul.f32 %v2051, 0.33
  %v2452 = vmul.f32 %v2052, 0.33
  %v2453 = vmul.f32 %v2053, 0.33
  %v2454 = vmul.f32 %v2054, 0.33
  %v2455 = vmul.f32 %v2055, 0.33
  %v2456 = vmul.f32 %v2056, 0.33
  %v2457 = vmul.f32 %v2057, 0.33
  %v2458 = vmul.f32 %v2058, 0.33
  %v2459 = vmul.f32 %v2059, 0.33
  %v2460 = vmul.f32 %v2060, 0.33
  %v2461 = vmul.f32 %v2061, 0.33
  %v2462 = vmul.f32 %v2062, 0.33
  %v2463 = vmul.f32 %v2063, 0.33
  %v2464 = vmul.f32 %v2064, 0.33
  %v2465 = vmul.f32 %v2065, 0.33
  %v2466 = vmul.f32 %v2066, 0.33
  %v2467 = vmul.f32 %v2067, 0.33
  %v2468 = vmul.f32 %v2068, 0.33
  %v2469 = vmul.f32 %v2069, 0.33
  %v2470 = vmul.f32 %v2070, 0.33
  %v2471 = vmul.f32 %v2071, 0.33
  %v2472 = vmul.f32 %v2072, 0.33
  %v2473 = vmul.f32 %v2073, 0.33
  %v2474 = vmul.f32 %v2074, 0.33
  %v2475 = vmul.f32 %v2075, 0.33
  %v2476 = vmul.f32 %v2076, 0.33
  %v2477 = vmul.f32 %v2077, 0.33
  %v2478 = vmul.f32 %v2078, 0.33
  %v2479 = vmul.f32 %v2079, 0.33
  %v2480 = vmul.f32 %v2080, 0.33
  %v2481 = vmul.f32 %v2081, 0.33
  %v2482 = vmul.f32 %v2082, 0.33
  %v2483 = vmul.f32 %v2083, 0.33
  %v2484 = vmul.f32 %v2084, 0.33
  %v2485 = vmul.f32 %v2085, 0.33
  %v2486 = vmul.f32 %v2086, 0.33
  %v2487 = vmul.f32 %v2087, 0.33
  %v2488 = vmul.f32 %v2088, 0.33
  %v2489 = vmul.f32 %v2089, 0.33
  %v2490 = vmul.f32 %v2090, 0.33
  %v2491 = vmul.f32 %v2091, 0.33
  %v2492 = vmul.f32 %v2092, 0.33
  %v2493 = vmul.f32 %v2093, 0.33
  %v2494 = vmul.f32 %v2094, 0.33
  %v2495 = vmul.f32 %v2095, 0.33
  %v2496 = vmul.f32 %v2096, 0.33
  %v2497 = vmul.f32 %v2097, 0.33
  %v2498 = vmul.f32 %v2098, 0.33
  %v2499 = vmul.f32 %v2099, 0.33
  %v2500 = vmul.f32 %v2100, 0.33
  %v2501 = vmul.f32 %v2101, 0.33
  %v2502 = vmul.f32 %v2102, 0.33
  %v2503 = vmul.f32 %v2103, 0.33
  %v2504 = vmul.f32 %v2104, 0.33
  %v2505 = vmul.f32 %v2105, 0.33
  %v2506 = vmul.f32 %v2106, 0.33
  %v2507 = vmul.f32 %v2107, 0.33
  %v2508 = vmul.f32 %v2108, 0.33
  %v2509 = vmul.f32 %v2109, 0.33
  %v2510 = vmul.f32 %v2110, 0.33
  %v2511 = vmul.f32 %v2111, 0.33
  %v2512 = vmul.f32 %v2112, 0.33
  %v2513 = vmul.f32 %v2113, 0.33
  %v2514 = vmul.f32 %v2114, 0.33
  %v2515 = vmul.f32 %v2115, 0.33
  %v2516 = vmul.f32 %v2116, 0.33
  %v2517 = vmul.f32 %v2117, 0.33
  %v2518 = vmul.f32 %v2118, 0.33
  %v2519 = vmul.f32 %v2119, 0.33
  %v2520 = vmul.f32 %v2120, 0.33
  %v2521 = vmul.f32 %v2121, 0.33
  %v2522 = vmul.f32 %v2122, 0.33
  %v2523 = vmul.f32 %v2123, 0.33
  %v2524 = vmul.f32 %v2124, 0.33
  %v2525 = vmul.f32 %v2125, 0.33
  %v2526 = vmul.f32 %v2126, 0.33
  %v2527 = vmul.f32 %v2127, 0.33
  %v2528 = vmul.f32 %v2128, 0.33
  %v2529 = vmul.f32 %v2129, 0.33
  %v2530 = vmul.f32 %v2130, 0.33
  %v2531 = vmul.f32 %v2131, 0.33
  %v2532 = vmul.f32 %v2132, 0.33
  %v2533 = vmul.f32 %v2133, 0.33
  %v2534 = vmul.f32 %v2134, 0.33
  %v2535 = vmul.f32 %v2135, 0.33
  %v2536 = vmul.f32 %v2136, 0.33
  %v2537 = vmul.f32 %v2137, 0.33
  %v2538 = vmul.f32 %v2138, 0.33
  %v2539 = vmul.f32 %v2139, 0.33
  %v2540 = vmul.f32 %v2140, 0.33
  %v2541 = vmul.f32 %v2141, 0.33
  %v2542 = vmul.f32 %v2142, 0.33
  %v2543 = vmul.f32 %v2143, 0.33
  %v2544 = vmul.f32 %v2144, 0.33
  %v2545 = vmul.f32 %v2145, 0.33
  %v2546 = vmul.f32 %v2146, 0.33
  %v2547 = vmul.f32 %v2147, 0.33
  %v2548 = vmul.f32 %v2148, 0.33
  %v2549 = vmul.f32 %v2149, 0.33
  %v2550 = vmul.f32 %v2150, 0.33
  %v2551 = vmul.f32 %v2151, 0.33
  %v2552 = vmul.f32 %v2152, 0.33
  %v2553 = vmax.f32 %v1753, %v2153
  %v2554 = vmax.f32 %v1754, %v2154
  %v2555 = vmax.f32 %v1755, %v2155
  %v2556 = vmax.f32 %v1756, %v2156
  %v2557 = vmax.f32 %v1757, %v2157
  %v2558 = vmax.f32 %v1758, %v2158
  %v2559 = vmax.f32 %v1759, %v2159
  %v2560 = vmax.f32 %v1760, %v2160
  %v2561 = vmax.f32 %v1761, %v2161
  %v2562 = vmax.f32 %v1762, %v2162
  %v2563 = vmax.f32 %v1763, %v2163
  %v2564 = vmax.f32 %v1764, %v2164
  %v2565 = vmax.f32 %v1765, %v2165
  %v2566 = vmax.f32 %v1766, %v2166
  %v2567 = vmax.f32 %v1767, %v2167
  %v2568 = vmax.f32 %v1768, %v2168
  %v2569 = vmax.f32 %v1769, %v2169
  %v2570 = vmax.f32 %v1770, %v2170
  %v2571 = vmax.f32 %v1771, %v2171
  %v2572 = vmax.f32 %v1772, %v2172
  %v2573 = vmax.f32 %v1773, %v2173
  %v2574 = vmax.f32 %v1774, %v2174
  %v2575 = vmax.f32 %v1775, %v2175
  %v2576 = vmax.f32 %v1776, %v2176
  %v2577 = vmax.f32 %v1777, %v2177
  %v2578 = vmax.f32 %v1778, %v2178
  %v2579 = vmax.f32 %v1779, %v2179
  %v2580 = vmax.f32 %v1780, %v2180
  %v2581 = vmax.f32 %v1781, %v2181
  %v2582 = vmax.f32 %v1782, %v2182
  %v2583 = vmax.f32 %v1783, %v2183
  %v2584 = vmax.f32 %v1784, %v2184
  %v2585 = vmax.f32 %v1785, %v2185
  %v2586 = vmax.f32 %v1786, %v2186
  %v2587 = vmax.f32 %v1787, %v2187
  %v2588 = vmax.f32 %v1788, %v2188
  %v2589 = vmax.f32 %v1789, %v2189
  %v2590 = vmax.f32 %v1790, %v2190
  %v2591 = vmax.f32 %v1791, %v2191
  %v2592 = vmax.f32 %v1792, %v2192
  %v2593 = vmax.f32 %v1793, %v2193
  %v2594 = vmax.f32 %v1794, %v2194
  %v2595 = vmax.f32 %v1795, %v2195
  %v2596 = vmax.f32 %v1796, %v2196
  %v2597 = vmax.f32 %v1797, %v2197
  %v2598 = vmax.f32 %v1798, %v2198
  %v2599 = vmax.f32 %v1799, %v2199
  %v2600 = vmax.f32 %v1800, %v2200
  %v2601 = vmax.f32 %v1801, %v2201
  %v2602 = vmax.f32 %v1802, %v2202
  %v2603 = vmax.f32 %v1803, %v2203
  %v2604 = vmax.f32 %v1804, %v2204
  %v2605 = vmax.f32 %v1805, %v2205
  %v2606 = vmax.f32 %v1806, %v2206
  %v2607 = vmax.f32 %v1807, %v2207
  %v2608 = vmax.f32 %v1808, %v2208
  %v2609 = vmax.f32 %v1809, %v2209
  %v2610 = vmax.f32 %v1810, %v2210
  %v2611 = vmax.f32 %v1811, %v2211
  %v2612 = vmax.f32 %v1812, %v2212
  %v2613 = vmax.f32 %v1813, %v2213
  %v2614 = vmax.f32 %v1814, %v2214
  %v2615 = vmax.f32 %v1815, %v2215
  %v2616 = vmax.f32 %v1816, %v2216
  %v2617 = vmax.f32 %v1817, %v2217
  %v2618 = vmax.f32 %v1818, %v2218
  %v2619 = vmax.f32 %v1819, %v2219
  %v2620 = vmax.f32 %v1820, %v2220
  %v2621 = vmax.f32 %v1821, %v2221
  %v2622 = vmax.f32 %v1822, %v2222
  %v2623 = vmax.f32 %v1823, %v2223
  %v2624 = vmax.f32 %v1824, %v2224
  %v2625 = vmax.f32 %v1825, %v2225
  %v2626 = vmax.f32 %v1826, %v2226
  %v2627 = vmax.f32 %v1827, %v2227
  %v2628 = vmax.f32 %v1828, %v2228
  %v2629 = vmax.f32 %v1829, %v2229
  %v2630 = vmax.f32 %v1830, %v2230
  %v2631 = vmax.f32 %v1831, %v2231
  %v2632 = vmax.f32 %v1832, %v2232
  %v2633 = vmax.f32 %v1833, %v2233
  %v2634 = vmax.f32 %v1834, %v2234
  %v2635 = vmax.f32 %v1835, %v2235
  %v2636 = vmax.f32 %v1836, %v2236
  %v2637 = vmax.f32 %v1837, %v2237
  %v2638 = vmax.f32 %v1838, %v2238
  %v2639 = vmax.f32 %v1839, %v2239
  %v2640 = vmax.f32 %v1840, %v2240
  %v2641 = vmax.f32 %v1841, %v2241
  %v2642 = vmax.f32 %v1842, %v2242
  %v2643 = vmax.f32 %v1843, %v2243
  %v2644 = vmax.f32 %v1844, %v2244
  %v2645 = vmax.f32 %v1845, %v2245
  %v2646 = vmax.f32 %v1846, %v2246
  %v2647 = vmax.f32 %v1847, %v2247
  %v2648 = vmax.f32 %v1848, %v2248
  %v2649 = vmax.f32 %v1849, %v2249
  %v2650 = vmax.f32 %v1850, %v2250
  %v2651 = vmax.f32 %v1851, %v2251
  %v2652 = vmax.f32 %v1852, %v2252
  %v2653 = vmax.f32 %v1853, %v2253
  %v2654 = vmax.f32 %v1854, %v2254
  %v2655 = vmax.f32 %v1855, %v2255
  %v2656 = vmax.f32 %v1856, %v2256
  %v2657 = vmax.f32 %v1857, %v2257
  %v2658 = vmax.f32 %v1858, %v2258
  %v2659 = vmax.f32 %v1859, %v2259
  %v2660 = vmax.f32 %v1860, %v2260
  %v2661 = vmax.f32 %v1861, %v2261
  %v2662 = vmax.f32 %v1862, %v2262
  %v2663 = vmax.f32 %v1863, %v2263
  %v2664 = vmax.f32 %v1864, %v2264
  %v2665 = vmax.f32 %v1865, %v2265
  %v2666 = vmax.f32 %v1866, %v2266
  %v2667 = vmax.f32 %v1867, %v2267
  %v2668 = vmax.f32 %v1868, %v2268
  %v2669 = vmax.f32 %v1869, %v2269
  %v2670 = vmax.f32 %v1870, %v2270
  %v2671 = vmax.f32 %v1871, %v2271
  %v2672 = vmax.f32 %v1872, %v2272
  %v2673 = vmax.f32 %v1873, %v2273
  %v2674 = vmax.f32 %v1874, %v2274
  %v2675 = vmax.f32 %v1875, %v2275
  %v2676 = vmax.f32 %v1876, %v2276
  %v2677 = vmax.f32 %v1877, %v2277
  %v2678 = vmax.f32 %v1878, %v2278
  %v2679 = vmax.f32 %v1879, %v2279
  %v2680 = vmax.f32 %v1880, %v2280
  %v2681 = vmax.f32 %v1881, %v2281
  %v2682 = vmax.f32 %v1882, %v2282
  %v2683 = vmax.f32 %v1883, %v2283
  %v2684 = vmax.f32 %v1884, %v2284
  %v2685 = vmax.f32 %v1885, %v2285
  %v2686 = vmax.f32 %v1886, %v2286
  %v2687 = vmax.f32 %v1887, %v2287
  %v2688 = vmax.f32 %v1888, %v2288
  %v2689 = vmax.f32 %v1889, %v2289
  %v2690 = vmax.f32 %v1890, %v2290
  %v2691 = vmax.f32 %v1891, %v2291
  %v2692 = vmax.f32 %v1892, %v2292
  %v2693 = vmax.f32 %v1893, %v2293
  %v2694 = vmax.f32 %v1894, %v2294
  %v2695 = vmax.f32 %v1895, %v2295
  %v2696 = vmax.f32 %v1896, %v2296
  %v2697 = vmax.f32 %v1897, %v2297
  %v2698 = vmax.f32 %v1898, %v2298
  %v2699 = vmax.f32 %v1899, %v2299
  %v2700 = vmax.f32 %v1900, %v2300
  %v2701 = vmax.f32 %v1901, %v2301
  %v2702 = vmax.f32 %v1902, %v2302
  %v2703 = vmax.f32 %v1903, %v2303
  %v2704 = vmax.f32 %v1904, %v2304
  %v2705 = vmax.f32 %v1905, %v2305
  %v2706 = vmax.f32 %v1906, %v2306
  %v2707 = vmax.f32 %v1907, %v2307
  %v2708 = vmax.f32 %v1908, %v2308
  %v2709 = vmax.f32 %v1909, %v2309
  %v2710 = vmax.f32 %v1910, %v2310
  %v2711 = vmax.f32 %v1911, %v2311
  %v2712 = vmax.f32 %v1912, %v2312
  %v2713 = vmax.f32 %v1913, %v2313
  %v2714 = vmax.f32 %v1914, %v2314
  %v2715 = vmax.f32 %v1915, %v2315
  %v2716 = vmax.f32 %v1916, %v2316
  %v2717 = vmax.f32 %v1917, %v2317
  %v2718 = vmax.f32 %v1918, %v2318
  %v2719 = vmax.f32 %v1919, %v2319
  %v2720 = vmax.f32 %v1920, %v2320
  %v2721 = vmax.f32 %v1921, %v2321
  %v2722 = vmax.f32 %v1922, %v2322
  %v2723 = vmax.f32 %v1923, %v2323
  %v2724 = vmax.f32 %v1924, %v2324
  %v2725 = vmax.f32 %v1925, %v2325
  %v2726 = vmax.f32 %v1926, %v2326
  %v2727 = vmax.f32 %v1927, %v2327
  %v2728 = vmax.f32 %v1928, %v2328
  %v2729 = vmax.f32 %v1929, %v2329
  %v2730 = vmax.f32 %v1930, %v2330
  %v2731 = vmax.f32 %v1931, %v2331
  %v2732 = vmax.f32 %v1932, %v2332
  %v2733 = vmax.f32 %v1933, %v2333
  %v2734 = vmax.f32 %v1934, %v2334
  %v2735 = vmax.f32 %v1935, %v2335
  %v2736 = vmax.f32 %v1936, %v2336
  %v2737 = vmax.f32 %v1937, %v2337
  %v2738 = vmax.f32 %v1938, %v2338
  %v2739 = vmax.f32 %v1939, %v2339
  %v2740 = vmax.f32 %v1940, %v2340
  %v2741 = vmax.f32 %v1941, %v2341
  %v2742 = vmax.f32 %v1942, %v2342
  %v2743 = vmax.f32 %v1943, %v2343
  %v2744 = vmax.f32 %v1944, %v2344
  %v2745 = vmax.f32 %v1945, %v2345
  %v2746 = vmax.f32 %v1946, %v2346
  %v2747 = vmax.f32 %v1947, %v2347
  %v2748 = vmax.f32 %v1948, %v2348
  %v2749 = vmax.f32 %v1949, %v2349
  %v2750 = vmax.f32 %v1950, %v2350
  %v2751 = vmax.f32 %v1951, %v2351
  %v2752 = vmax.f32 %v1952, %v2352
  %v2753 = vmax.f32 %v1953, %v2353
  %v2754 = vmax.f32 %v1954, %v2354
  %v2755 = vmax.f32 %v1955, %v2355
  %v2756 = vmax.f32 %v1956, %v2356
  %v2757 = vmax.f32 %v1957, %v2357
  %v2758 = vmax.f32 %v1958, %v2358
  %v2759 = vmax.f32 %v1959, %v2359
  %v2760 = vmax.f32 %v1960, %v2360
  %v2761 = vmax.f32 %v1961, %v2361
  %v2762 = vmax.f32 %v1962, %v2362
  %v2763 = vmax.f32 %v1963, %v2363
  %v2764 = vmax.f32 %v1964, %v2364
  %v2765 = vmax.f32 %v1965, %v2365
  %v2766 = vmax.f32 %v1966, %v2366
  %v2767 = vmax.f32 %v1967, %v2367
  %v2768 = vmax.f32 %v1968, %v2368
  %v2769 = vmax.f32 %v1969, %v2369
  %v2770 = vmax.f32 %v1970, %v2370
  %v2771 = vmax.f32 %v1971, %v2371
  %v2772 = vmax.f32 %v1972, %v2372
  %v2773 = vmax.f32 %v1973, %v2373
  %v2774 = vmax.f32 %v1974, %v2374
  %v2775 = vmax.f32 %v1975, %v2375
  %v2776 = vmax.f32 %v1976, %v2376
  %v2777 = vmax.f32 %v1977, %v2377
  %v2778 = vmax.f32 %v1978, %v2378
  %v2779 = vmax.f32 %v1979, %v2379
  %v2780 = vmax.f32 %v1980, %v2380
  %v2781 = vmax.f32 %v1981, %v2381
  %v2782 = vmax.f32 %v1982, %v2382
  %v2783 = vmax.f32 %v1983, %v2383
  %v2784 = vmax.f32 %v1984, %v2384
  %v2785 = vmax.f32 %v1985, %v2385
  %v2786 = vmax.f32 %v1986, %v2386
  %v2787 = vmax.f32 %v1987, %v2387
  %v2788 = vmax.f32 %v1988, %v2388
  %v2789 = vmax.f32 %v1989, %v2389
  %v2790 = vmax.f32 %v1990, %v2390
  %v2791 = vmax.f32 %v1991, %v2391
  %v2792 = vmax.f32 %v1992, %v2392
  %v2793 = vmax.f32 %v1993, %v2393
  %v2794 = vmax.f32 %v1994, %v2394
  %v2795 = vmax.f32 %v1995, %v2395
  %v2796 = vmax.f32 %v1996, %v2396
  %v2797 = vmax.f32 %v1997, %v2397
  %v2798 = vmax.f32 %v1998, %v2398
  %v2799 = vmax.f32 %v1999, %v2399
  %v2800 = vmax.f32 %v2000, %v2400
  %v2801 = vmax.f32 %v2001, %v2401
  %v2802 = vmax.f32 %v2002, %v2402
  %v2803 = vmax.f32 %v2003, %v2403
  %v2804 = vmax.f32 %v2004, %v2404
  %v2805 = vmax.f32 %v2005, %v2405
  %v2806 = vmax.f32 %v2006, %v2406
  %v2807 = vmax.f32 %v2007, %v2407
  %v2808 = vmax.f32 %v2008, %v2408
  %v2809 = vmax.f32 %v2009, %v2409
  %v2810 = vmax.f32 %v2010, %v2410
  %v2811 = vmax.f32 %v2011, %v2411
  %v2812 = vmax.f32 %v2012, %v2412
  %v2813 = vmax.f32 %v2013, %v2413
  %v2814 = vmax.f32 %v2014, %v2414
  %v2815 = vmax.f32 %v2015, %v2415
  %v2816 = vmax.f32 %v2016, %v2416
  %v2817 = vmax.f32 %v2017, %v2417
  %v2818 = vmax.f32 %v2018, %v2418
  %v2819 = vmax.f32 %v2019, %v2419
  %v2820 = vmax.f32 %v2020, %v2420
  %v2821 = vmax.f32 %v2021, %v2421
  %v2822 = vmax.f32 %v2022, %v2422
  %v2823 = vmax.f32 %v2023, %v2423
  %v2824 = vmax.f32 %v2024, %v2424
  %v2825 = vmax.f32 %v2025, %v2425
  %v2826 = vmax.f32 %v2026, %v2426
  %v2827 = vmax.f32 %v2027, %v2427
  %v2828 = vmax.f32 %v2028, %v2428
  %v2829 = vmax.f32 %v2029, %v2429
  %v2830 = vmax.f32 %v2030, %v2430
  %v2831 = vmax.f32 %v2031, %v2431
  %v2832 = vmax.f32 %v2032, %v2432
  %v2833 = vmax.f32 %v2033, %v2433
  %v2834 = vmax.f32 %v2034, %v2434
  %v2835 = vmax.f32 %v2035, %v2435
  %v2836 = vmax.f32 %v2036, %v2436
  %v2837 = vmax.f32 %v2037, %v2437
  %v2838 = vmax.f32 %v2038, %v2438
  %v2839 = vmax.f32 %v2039, %v2439
  %v2840 = vmax.f32 %v2040, %v2440
  %v2841 = vmax.f32 %v2041, %v2441
  %v2842 = vmax.f32 %v2042, %v2442
  %v2843 = vmax.f32 %v2043, %v2443
  %v2844 = vmax.f32 %v2044, %v2444
  %v2845 = vmax.f32 %v2045, %v2445
  %v2846 = vmax.f32 %v2046, %v2446
  %v2847 = vmax.f32 %v2047, %v2447
  %v2848 = vmax.f32 %v2048, %v2448
  %v2849 = vmax.f32 %v2049, %v2449
  %v2850 = vmax.f32 %v2050, %v2450
  %v2851 = vmax.f32 %v2051, %v2451
  %v2852 = vmax.f32 %v2052, %v2452
  %v2853 = vmax.f32 %v2053, %v2453
  %v2854 = vmax.f32 %v2054, %v2454
  %v2855 = vmax.f32 %v2055, %v2455
  %v2856 = vmax.f32 %v2056, %v2456
  %v2857 = vmax.f32 %v2057, %v2457
  %v2858 = vmax.f32 %v2058, %v2458
  %v2859 = vmax.f32 %v2059, %v2459
  %v2860 = vmax.f32 %v2060, %v2460
  %v2861 = vmax.f32 %v2061, %v2461
  %v2862 = vmax.f32 %v2062, %v2462
  %v2863 = vmax.f32 %v2063, %v2463
  %v2864 = vmax.f32 %v2064, %v2464
  %v2865 = vmax.f32 %v2065, %v2465
  %v2866 = vmax.f32 %v2066, %v2466
  %v2867 = vmax.f32 %v2067, %v2467
  %v2868 = vmax.f32 %v2068, %v2468
  %v2869 = vmax.f32 %v2069, %v2469
  %v2870 = vmax.f32 %v2070, %v2470
  %v2871 = vmax.f32 %v2071, %v2471
  %v2872 = vmax.f32 %v2072, %v2472
  %v2873 = vmax.f32 %v2073, %v2473
  %v2874 = vmax.f32 %v2074, %v2474
  %v2875 = vmax.f32 %v2075, %v2475
  %v2876 = vmax.f32 %v2076, %v2476
  %v2877 = vmax.f32 %v2077, %v2477
  %v2878 = vmax.f32 %v2078, %v2478
  %v2879 = vmax.f32 %v2079, %v2479
  %v2880 = vmax.f32 %v2080, %v2480
  %v2881 = vmax.f32 %v2081, %v2481
  %v2882 = vmax.f32 %v2082, %v2482
  %v2883 = vmax.f32 %v2083, %v2483
  %v2884 = vmax.f32 %v2084, %v2484
  %v2885 = vmax.f32 %v2085, %v2485
  %v2886 = vmax.f32 %v2086, %v2486
  %v2887 = vmax.f32 %v2087, %v2487
  %v2888 = vmax.f32 %v2088, %v2488
  %v2889 = vmax.f32 %v2089, %v2489
  %v2890 = vmax.f32 %v2090, %v2490
  %v2891 = vmax.f32 %v2091, %v2491
  %v2892 = vmax.f32 %v2092, %v2492
  %v2893 = vmax.f32 %v2093, %v2493
  %v2894 = vmax.f32 %v2094, %v2494
  %v2895 = vmax.f32 %v2095, %v2495
  %v2896 = vmax.f32 %v2096, %v2496
  %v2897 = vmax.f32 %v2097, %v2497
  %v2898 = vmax.f32 %v2098, %v2498
  %v2899 = vmax.f32 %v2099, %v2499
  %v2900 = vmax.f32 %v2100, %v2500
  %v2901 = vmax.f32 %v2101, %v2501
  %v2902 = vmax.f32 %v2102, %v2502
  %v2903 = vmax.f32 %v2103, %v2503
  %v2904 = vmax.f32 %v2104, %v2504
  %v2905 = vmax.f32 %v2105, %v2505
  %v2906 = vmax.f32 %v2106, %v2506
  %v2907 = vmax.f32 %v2107, %v2507
  %v2908 = vmax.f32 %v2108, %v2508
  %v2909 = vmax.f32 %v2109, %v2509
  %v2910 = vmax.f32 %v2110, %v2510
  %v2911 = vmax.f32 %v2111, %v2511
  %v2912 = vmax.f32 %v2112, %v2512
  %v2913 = vmax.f32 %v2113, %v2513
  %v2914 = vmax.f32 %v2114, %v2514
  %v2915 = vmax.f32 %v2115, %v2515
  %v2916 = vmax.f32 %v2116, %v2516
  %v2917 = vmax.f32 %v2117, %v2517
  %v2918 = vmax.f32 %v2118, %v2518
  %v2919 = vmax.f32 %v2119, %v2519
  %v2920 = vmax.f32 %v2120, %v2520
  %v2921 = vmax.f32 %v2121, %v2521
  %v2922 = vmax.f32 %v2122, %v2522
  %v2923 = vmax.f32 %v2123, %v2523
  %v2924 = vmax.f32 %v2124, %v2524
  %v2925 = vmax.f32 %v2125, %v2525
  %v2926 = vmax.f32 %v2126, %v2526
  %v2927 = vmax.f32 %v2127, %v2527
  %v2928 = vmax.f32 %v2128, %v2528
  %v2929 = vmax.f32 %v2129, %v2529
  %v2930 = vmax.f32 %v2130, %v2530
  %v2931 = vmax.f32 %v2131, %v2531
  %v2932 = vmax.f32 %v2132, %v2532
  %v2933 = vmax.f32 %v2133, %v2533
  %v2934 = vmax.f32 %v2134, %v2534
  %v2935 = vmax.f32 %v2135, %v2535
  %v2936 = vmax.f32 %v2136, %v2536
  %v2937 = vmax.f32 %v2137, %v2537
  %v2938 = vmax.f32 %v2138, %v2538
  %v2939 = vmax.f32 %v2139, %v2539
  %v2940 = vmax.f32 %v2140, %v2540
  %v2941 = vmax.f32 %v2141, %v2541
  %v2942 = vmax.f32 %v2142, %v2542
  %v2943 = vmax.f32 %v2143, %v2543
  %v2944 = vmax.f32 %v2144, %v2544
  %v2945 = vmax.f32 %v2145, %v2545
  %v2946 = vmax.f32 %v2146, %v2546
  %v2947 = vmax.f32 %v2147, %v2547
  %v2948 = vmax.f32 %v2148, %v2548
  %v2949 = vmax.f32 %v2149, %v2549
  %v2950 = vmax.f32 %v2150, %v2550
  %v2951 = vmax.f32 %v2151, %v2551
  %v2952 = vmax.f32 %v2152, %v2552
  %v2953 = vpack.c.bf16 %v2555, %v2553
  %v2954 = vpack.c.bf16 %v2556, %v2554
  %v2955 = vpack.c.bf16 %v2559, %v2557
  %v2956 = vpack.c.bf16 %v2560, %v2558
  %v2957 = vpack.c.bf16 %v2563, %v2561
  %v2958 = vpack.c.bf16 %v2564, %v2562
  %v2959 = vpack.c.bf16 %v2567, %v2565
  %v2960 = vpack.c.bf16 %v2568, %v2566
  %v2961 = vpack.c.bf16 %v2571, %v2569
  %v2962 = vpack.c.bf16 %v2572, %v2570
  %v2963 = vpack.c.bf16 %v2575, %v2573
  %v2964 = vpack.c.bf16 %v2576, %v2574
  %v2965 = vpack.c.bf16 %v2579, %v2577
  %v2966 = vpack.c.bf16 %v2580, %v2578
  %v2967 = vpack.c.bf16 %v2583, %v2581
  %v2968 = vpack.c.bf16 %v2584, %v2582
  %v2969 = vpack.c.bf16 %v2587, %v2585
  %v2970 = vpack.c.bf16 %v2588, %v2586
  %v2971 = vpack.c.bf16 %v2591, %v2589
  %v2972 = vpack.c.bf16 %v2592, %v2590
  %v2973 = vpack.c.bf16 %v2595, %v2593
  %v2974 = vpack.c.bf16 %v2596, %v2594
  %v2975 = vpack.c.bf16 %v2599, %v2597
  %v2976 = vpack.c.bf16 %v2600, %v2598
  %v2977 = vpack.c.bf16 %v2603, %v2601
  %v2978 = vpack.c.bf16 %v2604, %v2602
  %v2979 = vpack.c.bf16 %v2607, %v2605
  %v2980 = vpack.c.bf16 %v2608, %v2606
  %v2981 = vpack.c.bf16 %v2611, %v2609
  %v2982 = vpack.c.bf16 %v2612, %v2610
  %v2983 = vpack.c.bf16 %v2615, %v2613
  %v2984 = vpack.c.bf16 %v2616, %v2614
  %v2985 = vpack.c.bf16 %v2619, %v2617
  %v2986 = vpack.c.bf16 %v2620, %v2618
  %v2987 = vpack.c.bf16 %v2623, %v2621
  %v2988 = vpack.c.bf16 %v2624, %v2622
  %v2989 = vpack.c.bf16 %v2627, %v2625
  %v2990 = vpack.c.bf16 %v2628, %v2626
  %v2991 = vpack.c.bf16 %v2631, %v2629
  %v2992 = vpack.c.bf16 %v2632, %v2630
  %v2993 = vpack.c.bf16 %v2635, %v2633
  %v2994 = vpack.c.bf16 %v2636, %v2634
  %v2995 = vpack.c.bf16 %v2639, %v2637
  %v2996 = vpack.c.bf16 %v2640, %v2638
  %v2997 = vpack.c.bf16 %v2643, %v2641
  %v2998 = vpack.c.bf16 %v2644, %v2642
  %v2999 = vpack.c.bf16 %v2647, %v2645
  %v3000 = vpack.c.bf16 %v2648, %v2646
  %v3001 = vpack.c.bf16 %v2651, %v2649
  %v3002 = vpack.c.bf16 %v2652, %v2650
  %v3003 = vpack.c.bf16 %v2655, %v2653
  %v3004 = vpack.c.bf16 %v2656, %v2654
  %v3005 = vpack.c.bf16 %v2659, %v2657
  %v3006 = vpack.c.bf16 %v2660, %v2658
  %v3007 = vpack.c.bf16 %v2663, %v2661
  %v3008 = vpack.c.bf16 %v2664, %v2662
  %v3009 = vpack.c.bf16 %v2667, %v2665
  %v3010 = vpack.c.bf16 %v2668, %v2666
  %v3011 = vpack.c.bf16 %v2671, %v2669
  %v3012 = vpack.c.bf16 %v2672, %v2670
  %v3013 = vpack.c.bf16 %v2675, %v2673
  %v3014 = vpack.c.bf16 %v2676, %v2674
  %v3015 = vpack.c.bf16 %v2679, %v2677
  %v3016 = vpack.c.bf16 %v2680, %v2678
  %v3017 = vpack.c.bf16 %v2683, %v2681
  %v3018 = vpack.c.bf16 %v2684, %v2682
  %v3019 = vpack.c.bf16 %v2687, %v2685
  %v3020 = vpack.c.bf16 %v2688, %v2686
  %v3021 = vpack.c.bf16 %v2691, %v2689
  %v3022 = vpack.c.bf16 %v2692, %v2690
  %v3023 = vpack.c.bf16 %v2695, %v2693
  %v3024 = vpack.c.bf16 %v2696, %v2694
  %v3025 = vpack.c.bf16 %v2699, %v2697
  %v3026 = vpack.c.bf16 %v2700, %v2698
  %v3027 = vpack.c.bf16 %v2703, %v2701
  %v3028 = vpack.c.bf16 %v2704, %v2702
  %v3029 = vpack.c.bf16 %v2707, %v2705
  %v3030 = vpack.c.bf16 %v2708, %v2706
  %v3031 = vpack.c.bf16 %v2711, %v2709
  %v3032 = vpack.c.bf16 %v2712, %v2710
  %v3033 = vpack.c.bf16 %v2715, %v2713
  %v3034 = vpack.c.bf16 %v2716, %v2714
  %v3035 = vpack.c.bf16 %v2719, %v2717
  %v3036 = vpack.c.bf16 %v2720, %v2718
  %v3037 = vpack.c.bf16 %v2723, %v2721
  %v3038 = vpack.c.bf16 %v2724, %v2722
  %v3039 = vpack.c.bf16 %v2727, %v2725
  %v3040 = vpack.c.bf16 %v2728, %v2726
  %v3041 = vpack.c.bf16 %v2731, %v2729
  %v3042 = vpack.c.bf16 %v2732, %v2730
  %v3043 = vpack.c.bf16 %v2735, %v2733
  %v3044 = vpack.c.bf16 %v2736, %v2734
  %v3045 = vpack.c.bf16 %v2739, %v2737
  %v3046 = vpack.c.bf16 %v2740, %v2738
  %v3047 = vpack.c.bf16 %v2743, %v2741
  %v3048 = vpack.c.bf16 %v2744, %v2742
  %v3049 = vpack.c.bf16 %v2747, %v2745
  %v3050 = vpack.c.bf16 %v2748, %v2746
  %v3051 = vpack.c.bf16 %v2751, %v2749
  %v3052 = vpack.c.bf16 %v2752, %v2750
  %v3053 = vpack.c.bf16 %v2755, %v2753
  %v3054 = vpack.c.bf16 %v2756, %v2754
  %v3055 = vpack.c.bf16 %v2759, %v2757
  %v3056 = vpack.c.bf16 %v2760, %v2758
  %v3057 = vpack.c.bf16 %v2763, %v2761
  %v3058 = vpack.c.bf16 %v2764, %v2762
  %v3059 = vpack.c.bf16 %v2767, %v2765
  %v3060 = vpack.c.bf16 %v2768, %v2766
  %v3061 = vpack.c.bf16 %v2771, %v2769
  %v3062 = vpack.c.bf16 %v2772, %v2770
  %v3063 = vpack.c.bf16 %v2775, %v2773
  %v3064 = vpack.c.bf16 %v2776, %v2774
  %v3065 = vpack.c.bf16 %v2779, %v2777
  %v3066 = vpack.c.bf16 %v2780, %v2778
  %v3067 = vpack.c.bf16 %v2783, %v2781
  %v3068 = vpack.c.bf16 %v2784, %v2782
  %v3069 = vpack.c.bf16 %v2787, %v2785
  %v3070 = vpack.c.bf16 %v2788, %v2786
  %v3071 = vpack.c.bf16 %v2791, %v2789
  %v3072 = vpack.c.bf16 %v2792, %v2790
  %v3073 = vpack.c.bf16 %v2795, %v2793
  %v3074 = vpack.c.bf16 %v2796, %v2794
  %v3075 = vpack.c.bf16 %v2799, %v2797
  %v3076 = vpack.c.bf16 %v2800, %v2798
  %v3077 = vpack.c.bf16 %v2803, %v2801
  %v3078 = vpack.c.bf16 %v2804, %v2802
  %v3079 = vpack.c.bf16 %v2807, %v2805
  %v3080 = vpack.c.bf16 %v2808, %v2806
  %v3081 = vpack.c.bf16 %v2811, %v2809
  %v3082 = vpack.c.bf16 %v2812, %v2810
  %v3083 = vpack.c.bf16 %v2815, %v2813
  %v3084 = vpack.c.bf16 %v2816, %v2814
  %v3085 = vpack.c.bf16 %v2819, %v2817
  %v3086 = vpack.c.bf16 %v2820, %v2818
  %v3087 = vpack.c.bf16 %v2823, %v2821
  %v3088 = vpack.c.bf16 %v2824, %v2822
  %v3089 = vpack.c.bf16 %v2827, %v2825
  %v3090 = vpack.c.bf16 %v2828, %v2826
  %v3091 = vpack.c.bf16 %v2831, %v2829
  %v3092 = vpack.c.bf16 %v2832, %v2830
  %v3093 = vpack.c.bf16 %v2835, %v2833
  %v3094 = vpack.c.bf16 %v2836, %v2834
  %v3095 = vpack.c.bf16 %v2839, %v2837
  %v3096 = vpack.c.bf16 %v2840, %v2838
  %v3097 = vpack.c.bf16 %v2843, %v2841
  %v3098 = vpack.c.bf16 %v2844, %v2842
  %v3099 = vpack.c.bf16 %v2847, %v2845
  %v3100 = vpack.c.bf16 %v2848, %v2846
  %v3101 = vpack.c.bf16 %v2851, %v2849
  %v3102 = vpack.c.bf16 %v2852, %v2850
  %v3103 = vpack.c.bf16 %v2855, %v2853
  %v3104 = vpack.c.bf16 %v2856, %v2854
  %v3105 = vpack.c.bf16 %v2859, %v2857
  %v3106 = vpack.c.bf16 %v2860, %v2858
  %v3107 = vpack.c.bf16 %v2863, %v2861
  %v3108 = vpack.c.bf16 %v2864, %v2862
  %v3109 = vpack.c.bf16 %v2867, %v2865
  %v3110 = vpack.c.bf16 %v2868, %v2866
  %v3111 = vpack.c.bf16 %v2871, %v2869
  %v3112 = vpack.c.bf16 %v2872, %v2870
  %v3113 = vpack.c.bf16 %v2875, %v2873
  %v3114 = vpack.c.bf16 %v2876, %v2874
  %v3115 = vpack.c.bf16 %v2879, %v2877
  %v3116 = vpack.c.bf16 %v2880, %v2878
  %v3117 = vpack.c.bf16 %v2883, %v2881
  %v3118 = vpack.c.bf16 %v2884, %v2882
  %v3119 = vpack.c.bf16 %v2887, %v2885
  %v3120 = vpack.c.bf16 %v2888, %v2886
  %v3121 = vpack.c.bf16 %v2891, %v2889
  %v3122 = vpack.c.bf16 %v2892, %v2890
  %v3123 = vpack.c.bf16 %v2895, %v2893
  %v3124 = vpack.c.bf16 %v2896, %v2894
  %v3125 = vpack.c.bf16 %v2899, %v2897
  %v3126 = vpack.c.bf16 %v2900, %v2898
  %v3127 = vpack.c.bf16 %v2903, %v2901
  %v3128 = vpack.c.bf16 %v2904, %v2902
  %v3129 = vpack.c.bf16 %v2907, %v2905
  %v3130 = vpack.c.bf16 %v2908, %v2906
  %v3131 = vpack.c.bf16 %v2911, %v2909
  %v3132 = vpack.c.bf16 %v2912, %v2910
  %v3133 = vpack.c.bf16 %v2915, %v2913
  %v3134 = vpack.c.bf16 %v2916, %v2914
  %v3135 = vpack.c.bf16 %v2919, %v2917
  %v3136 = vpack.c.bf16 %v2920, %v2918
  %v3137 = vpack.c.bf16 %v2923, %v2921
  %v3138 = vpack.c.bf16 %v2924, %v2922
  %v3139 = vpack.c.bf16 %v2927, %v2925
  %v3140 = vpack.c.bf16 %v2928, %v2926
  %v3141 = vpack.c.bf16 %v2931, %v2929
  %v3142 = vpack.c.bf16 %v2932, %v2930
  %v3143 = vpack.c.bf16 %v2935, %v2933
  %v3144 = vpack.c.bf16 %v2936, %v2934
  %v3145 = vpack.c.bf16 %v2939, %v2937
  %v3146 = vpack.c.bf16 %v2940, %v2938
  %v3147 = vpack.c.bf16 %v2943, %v2941
  %v3148 = vpack.c.bf16 %v2944, %v2942
  %v3149 = vpack.c.bf16 %v2947, %v2945
  %v3150 = vpack.c.bf16 %v2948, %v2946
  %v3151 = vpack.c.bf16 %v2951, %v2949
  %v3152 = vpack.c.bf16 %v2952, %v2950
  %3154 = vset.pattern.permute.xlu0 0
  %3155 = vperm.xlu0 %3154, %v66
  %v3156 = vpop.permute.xlu0 %3155
  %3159 = vset.pattern.permute.xlu0 0
  %3160 = vperm.xlu0 %3159, %v67
  %v3161 = vpop.permute.xlu0 %3160
  %v3177 = vunpack.c.l.b16 %v52
  %v3178 = vunpack.c.h.b16 %v52
  %v3179 = vunpack.c.l.b16 %v53
  %v3180 = vunpack.c.h.b16 %v53
  %v3181 = vunpack.c.l.b16 %v54
  %v3182 = vunpack.c.h.b16 %v54
  %v3183 = vunpack.c.l.b16 %v55
  %v3184 = vunpack.c.h.b16 %v55
  %v3185 = vunpack.c.l.b16 %v56
  %v3186 = vunpack.c.h.b16 %v56
  %v3187 = vunpack.c.l.b16 %v57
  %v3188 = vunpack.c.h.b16 %v57
  %v3189 = vunpack.c.l.b16 %v58
  %v3190 = vunpack.c.l.b16 %v59
  %v3191 = vunpack.c.h.b16 %v59
  %v3192 = vunpack.c.l.b16 %v60
  %v3193 = vunpack.c.h.b16 %v60
  %v3194 = vunpack.c.l.b16 %v61
  %v3195 = vunpack.c.h.b16 %v61
  %v3196 = vunpack.c.l.b16 %v62
  %v3197 = vunpack.c.h.b16 %v62
  %v3198 = vunpack.c.l.b16 %v63
  %v3199 = vunpack.c.h.b16 %v63
  %v3200 = vunpack.c.l.b16 %v64
  %v3201 = vunpack.c.h.b16 %v64
  %v3202 = vunpack.c.l.b16 %v65
  %v3203 = vpack.c.b16 %v3190, %v3177
  %v3204 = vpack.c.b16 %v3191, %v3178
  %v3205 = vpack.c.b16 %v3192, %v3179
  %v3206 = vpack.c.b16 %v3193, %v3180
  %v3207 = vpack.c.b16 %v3194, %v3181
  %v3208 = vpack.c.b16 %v3195, %v3182
  %v3209 = vpack.c.b16 %v3196, %v3183
  %v3210 = vpack.c.b16 %v3197, %v3184
  %v3211 = vpack.c.b16 %v3198, %v3185
  %v3212 = vpack.c.b16 %v3199, %v3186
  %v3213 = vpack.c.b16 %v3200, %v3187
  %v3214 = vpack.c.b16 %v3201, %v3188
  %v3215 = vpack.c.b16 %v3202, %v3189
  %vm3228 = vcmask 523264
  %v3230 = vsel %vm3228, %v3215, 0
  %3232 = vmatprep.subr.bf16.mxu0 %v2954
  %3233 = vmatpush1.bf16.msra.mxu0 %v2953
  %3234 = vmatprep.subr.bf16.mxu0 %v2956
  %3235 = vmatpush1.bf16.msra.mxu0 %v2955
  %3236 = vmatprep.subr.bf16.mxu0 %v2958
  %3237 = vmatpush1.bf16.msra.mxu0 %v2957
  %3238 = vmatprep.subr.bf16.mxu0 %v2960
  %3239 = vmatpush1.bf16.msra.mxu0 %v2959
  %3240 = vmatprep.subr.bf16.mxu0 %v2962
  %3241 = vmatpush1.bf16.msra.mxu0 %v2961
  %3242 = vmatprep.subr.bf16.mxu0 %v2964
  %3243 = vmatpush1.bf16.msra.mxu0 %v2963
  %3244 = vmatprep.subr.bf16.mxu0 %v2966
  %3245 = vmatpush1.bf16.msra.mxu0 %v2965
  %3246 = vmatprep.subr.bf16.mxu0 %v2968
  %3247 = vmatpush1.bf16.msra.mxu0 %v2967
  %3248 = vmatprep.subr.bf16.mxu0 %v2970
  %3249 = vmatpush1.bf16.msra.mxu0 %v2969
  %3250 = vmatprep.subr.bf16.mxu0 %v2972
  %3251 = vmatpush1.bf16.msra.mxu0 %v2971
  %3252 = vmatprep.subr.bf16.mxu0 %v2974
  %3253 = vmatpush1.bf16.msra.mxu0 %v2973
  %3254 = vmatprep.subr.bf16.mxu0 %v2976
  %3255 = vmatpush1.bf16.msra.mxu0 %v2975
  %3256 = vmatprep.subr.bf16.mxu0 %v2978
  %3257 = vmatpush1.bf16.msra.mxu0 %v2977
  %3258 = vmatprep.subr.bf16.mxu0 %v2980
  %3259 = vmatpush1.bf16.msra.mxu0 %v2979
  %3260 = vmatprep.subr.bf16.mxu0 %v2982
  %3261 = vmatpush1.bf16.msra.mxu0 %v2981
  %3262 = vmatprep.subr.bf16.mxu0 %v2984
  %3263 = vmatpush1.bf16.msra.mxu0 %v2983
  %3264 = vmatprep.mubr.bf16.mxu0 %v3204
  %3265 = vmatmul.mubr.bf16.gmra.mrb[0].mxu0 %v3203
  %v3266 = vpop.f32.mrb[0].mxu0
  %v3267 = vadd.f32 %v3156, %v3266
  %v3268 = vpop.f32.mrb[0].mxu0
  %v3269 = vadd.f32 %v3156, %v3268
  %v3270 = vpop.f32.mrb[0].mxu0
  %v3271 = vadd.f32 %v3161, %v3270
  %v3272 = vpop.f32.mrb[0].mxu0
  %v3273 = vadd.f32 %v3161, %v3272
  %3274 = vdwg.mxu0
  %3275 = vmatprep.subr.bf16.mxu0 %v2986
  %3276 = vmatpush1.bf16.msra.mxu0 %v2985
  %3277 = vmatprep.subr.bf16.mxu0 %v2988
  %3278 = vmatpush1.bf16.msra.mxu0 %v2987
  %3279 = vmatprep.subr.bf16.mxu0 %v2990
  %3280 = vmatpush1.bf16.msra.mxu0 %v2989
  %3281 = vmatprep.subr.bf16.mxu0 %v2992
  %3282 = vmatpush1.bf16.msra.mxu0 %v2991
  %3283 = vmatprep.subr.bf16.mxu0 %v2994
  %3284 = vmatpush1.bf16.msra.mxu0 %v2993
  %3285 = vmatprep.subr.bf16.mxu0 %v2996
  %3286 = vmatpush1.bf16.msra.mxu0 %v2995
  %3287 = vmatprep.subr.bf16.mxu0 %v2998
  %3288 = vmatpush1.bf16.msra.mxu0 %v2997
  %3289 = vmatprep.subr.bf16.mxu0 %v3000
  %3290 = vmatpush1.bf16.msra.mxu0 %v2999
  %3291 = vmatprep.subr.bf16.mxu0 %v3002
  %3292 = vmatpush1.bf16.msra.mxu0 %v3001
  %3293 = vmatprep.subr.bf16.mxu0 %v3004
  %3294 = vmatpush1.bf16.msra.mxu0 %v3003
  %3295 = vmatprep.subr.bf16.mxu0 %v3006
  %3296 = vmatpush1.bf16.msra.mxu0 %v3005
  %3297 = vmatprep.subr.bf16.mxu0 %v3008
  %3298 = vmatpush1.bf16.msra.mxu0 %v3007
  %3299 = vmatprep.subr.bf16.mxu0 %v3010
  %3300 = vmatpush1.bf16.msra.mxu0 %v3009
  %3301 = vmatprep.subr.bf16.mxu0 %v3012
  %3302 = vmatpush1.bf16.msra.mxu0 %v3011
  %3303 = vmatprep.subr.bf16.mxu0 %v3014
  %3304 = vmatpush1.bf16.msra.mxu0 %v3013
  %3305 = vmatprep.subr.bf16.mxu0 %v3016
  %3306 = vmatpush1.bf16.msra.mxu0 %v3015
  %3307 = vmatprep.mubr.bf16.mxu0 %v3206
  %3308 = vmatmul.mubr.bf16.gmra.mrb[0].mxu0 %v3205
  %v3309 = vpop.f32.mrb[0].mxu0
  %v3310 = vadd.f32 %v3267, %v3309
  %v3311 = vpop.f32.mrb[0].mxu0
  %v3312 = vadd.f32 %v3269, %v3311
  %v3313 = vpop.f32.mrb[0].mxu0
  %v3314 = vadd.f32 %v3271, %v3313
  %v3315 = vpop.f32.mrb[0].mxu0
  %v3316 = vadd.f32 %v3273, %v3315
  %3317 = vdwg.mxu0
  %3318 = vmatprep.subr.bf16.mxu0 %v3018
  %3319 = vmatpush1.bf16.msra.mxu0 %v3017
  %3320 = vmatprep.subr.bf16.mxu0 %v3020
  %3321 = vmatpush1.bf16.msra.mxu0 %v3019
  %3322 = vmatprep.subr.bf16.mxu0 %v3022
  %3323 = vmatpush1.bf16.msra.mxu0 %v3021
  %3324 = vmatprep.subr.bf16.mxu0 %v3024
  %3325 = vmatpush1.bf16.msra.mxu0 %v3023
  %3326 = vmatprep.subr.bf16.mxu0 %v3026
  %3327 = vmatpush1.bf16.msra.mxu0 %v3025
  %3328 = vmatprep.subr.bf16.mxu0 %v3028
  %3329 = vmatpush1.bf16.msra.mxu0 %v3027
  %3330 = vmatprep.subr.bf16.mxu0 %v3030
  %3331 = vmatpush1.bf16.msra.mxu0 %v3029
  %3332 = vmatprep.subr.bf16.mxu0 %v3032
  %3333 = vmatpush1.bf16.msra.mxu0 %v3031
  %3334 = vmatprep.subr.bf16.mxu0 %v3034
  %3335 = vmatpush1.bf16.msra.mxu0 %v3033
  %3336 = vmatprep.subr.bf16.mxu0 %v3036
  %3337 = vmatpush1.bf16.msra.mxu0 %v3035
  %3338 = vmatprep.subr.bf16.mxu0 %v3038
  %3339 = vmatpush1.bf16.msra.mxu0 %v3037
  %3340 = vmatprep.subr.bf16.mxu0 %v3040
  %3341 = vmatpush1.bf16.msra.mxu0 %v3039
  %3342 = vmatprep.subr.bf16.mxu0 %v3042
  %3343 = vmatpush1.bf16.msra.mxu0 %v3041
  %3344 = vmatprep.subr.bf16.mxu0 %v3044
  %3345 = vmatpush1.bf16.msra.mxu0 %v3043
  %3346 = vmatprep.subr.bf16.mxu0 %v3046
  %3347 = vmatpush1.bf16.msra.mxu0 %v3045
  %3348 = vmatprep.subr.bf16.mxu0 %v3048
  %3349 = vmatpush1.bf16.msra.mxu0 %v3047
  %3350 = vmatprep.mubr.bf16.mxu0 %v3208
  %3351 = vmatmul.mubr.bf16.gmra.mrb[0].mxu0 %v3207
  %v3352 = vpop.f32.mrb[0].mxu0
  %v3353 = vadd.f32 %v3310, %v3352
  %v3354 = vpop.f32.mrb[0].mxu0
  %v3355 = vadd.f32 %v3312, %v3354
  %v3356 = vpop.f32.mrb[0].mxu0
  %v3357 = vadd.f32 %v3314, %v3356
  %v3358 = vpop.f32.mrb[0].mxu0
  %v3359 = vadd.f32 %v3316, %v3358
  %3360 = vdwg.mxu0
  %3361 = vmatprep.subr.bf16.mxu0 %v3050
  %3362 = vmatpush1.bf16.msra.mxu0 %v3049
  %3363 = vmatprep.subr.bf16.mxu0 %v3052
  %3364 = vmatpush1.bf16.msra.mxu0 %v3051
  %3365 = vmatprep.subr.bf16.mxu0 %v3054
  %3366 = vmatpush1.bf16.msra.mxu0 %v3053
  %3367 = vmatprep.subr.bf16.mxu0 %v3056
  %3368 = vmatpush1.bf16.msra.mxu0 %v3055
  %3369 = vmatprep.subr.bf16.mxu0 %v3058
  %3370 = vmatpush1.bf16.msra.mxu0 %v3057
  %3371 = vmatprep.subr.bf16.mxu0 %v3060
  %3372 = vmatpush1.bf16.msra.mxu0 %v3059
  %3373 = vmatprep.subr.bf16.mxu0 %v3062
  %3374 = vmatpush1.bf16.msra.mxu0 %v3061
  %3375 = vmatprep.subr.bf16.mxu0 %v3064
  %3376 = vmatpush1.bf16.msra.mxu0 %v3063
  %3377 = vmatprep.subr.bf16.mxu0 %v3066
  %3378 = vmatpush1.bf16.msra.mxu0 %v3065
  %3379 = vmatprep.subr.bf16.mxu0 %v3068
  %3380 = vmatpush1.bf16.msra.mxu0 %v3067
  %3381 = vmatprep.subr.bf16.mxu0 %v3070
  %3382 = vmatpush1.bf16.msra.mxu0 %v3069
  %3383 = vmatprep.subr.bf16.mxu0 %v3072
  %3384 = vmatpush1.bf16.msra.mxu0 %v3071
  %3385 = vmatprep.subr.bf16.mxu0 %v3074
  %3386 = vmatpush1.bf16.msra.mxu0 %v3073
  %3387 = vmatprep.subr.bf16.mxu0 %v3076
  %3388 = vmatpush1.bf16.msra.mxu0 %v3075
  %3389 = vmatprep.subr.bf16.mxu0 %v3078
  %3390 = vmatpush1.bf16.msra.mxu0 %v3077
  %3391 = vmatprep.subr.bf16.mxu0 %v3080
  %3392 = vmatpush1.bf16.msra.mxu0 %v3079
  %3393 = vmatprep.mubr.bf16.mxu0 %v3210
  %3394 = vmatmul.mubr.bf16.gmra.mrb[0].mxu0 %v3209
  %v3395 = vpop.f32.mrb[0].mxu0
  %v3396 = vadd.f32 %v3353, %v3395
  %v3397 = vpop.f32.mrb[0].mxu0
  %v3398 = vadd.f32 %v3355, %v3397
  %v3399 = vpop.f32.mrb[0].mxu0
  %v3400 = vadd.f32 %v3357, %v3399
  %v3401 = vpop.f32.mrb[0].mxu0
  %v3402 = vadd.f32 %v3359, %v3401
  %3403 = vdwg.mxu0
  %3404 = vmatprep.subr.bf16.mxu0 %v3082
  %3405 = vmatpush1.bf16.msra.mxu0 %v3081
  %3406 = vmatprep.subr.bf16.mxu0 %v3084
  %3407 = vmatpush1.bf16.msra.mxu0 %v3083
  %3408 = vmatprep.subr.bf16.mxu0 %v3086
  %3409 = vmatpush1.bf16.msra.mxu0 %v3085
  %3410 = vmatprep.subr.bf16.mxu0 %v3088
  %3411 = vmatpush1.bf16.msra.mxu0 %v3087
  %3412 = vmatprep.subr.bf16.mxu0 %v3090
  %3413 = vmatpush1.bf16.msra.mxu0 %v3089
  %3414 = vmatprep.subr.bf16.mxu0 %v3092
  %3415 = vmatpush1.bf16.msra.mxu0 %v3091
  %3416 = vmatprep.subr.bf16.mxu0 %v3094
  %3417 = vmatpush1.bf16.msra.mxu0 %v3093
  %3418 = vmatprep.subr.bf16.mxu0 %v3096
  %3419 = vmatpush1.bf16.msra.mxu0 %v3095
  %3420 = vmatprep.subr.bf16.mxu0 %v3098
  %3421 = vmatpush1.bf16.msra.mxu0 %v3097
  %3422 = vmatprep.subr.bf16.mxu0 %v3100
  %3423 = vmatpush1.bf16.msra.mxu0 %v3099
  %3424 = vmatprep.subr.bf16.mxu0 %v3102
  %3425 = vmatpush1.bf16.msra.mxu0 %v3101
  %3426 = vmatprep.subr.bf16.mxu0 %v3104
  %3427 = vmatpush1.bf16.msra.mxu0 %v3103
  %3428 = vmatprep.subr.bf16.mxu0 %v3106
  %3429 = vmatpush1.bf16.msra.mxu0 %v3105
  %3430 = vmatprep.subr.bf16.mxu0 %v3108
  %3431 = vmatpush1.bf16.msra.mxu0 %v3107
  %3432 = vmatprep.subr.bf16.mxu0 %v3110
  %3433 = vmatpush1.bf16.msra.mxu0 %v3109
  %3434 = vmatprep.subr.bf16.mxu0 %v3112
  %3435 = vmatpush1.bf16.msra.mxu0 %v3111
  %3436 = vmatprep.mubr.bf16.mxu0 %v3212
  %3437 = vmatmul.mubr.bf16.gmra.mrb[0].mxu0 %v3211
  %v3438 = vpop.f32.mrb[0].mxu0
  %v3439 = vadd.f32 %v3396, %v3438
  %v3440 = vpop.f32.mrb[0].mxu0
  %v3441 = vadd.f32 %v3398, %v3440
  %v3442 = vpop.f32.mrb[0].mxu0
  %v3443 = vadd.f32 %v3400, %v3442
  %v3444 = vpop.f32.mrb[0].mxu0
  %v3445 = vadd.f32 %v3402, %v3444
  %3446 = vdwg.mxu0
  %3447 = vmatprep.subr.bf16.mxu0 %v3114
  %3448 = vmatpush1.bf16.msra.mxu0 %v3113
  %3449 = vmatprep.subr.bf16.mxu0 %v3116
  %3450 = vmatpush1.bf16.msra.mxu0 %v3115
  %3451 = vmatprep.subr.bf16.mxu0 %v3118
  %3452 = vmatpush1.bf16.msra.mxu0 %v3117
  %3453 = vmatprep.subr.bf16.mxu0 %v3120
  %3454 = vmatpush1.bf16.msra.mxu0 %v3119
  %3455 = vmatprep.subr.bf16.mxu0 %v3122
  %3456 = vmatpush1.bf16.msra.mxu0 %v3121
  %3457 = vmatprep.subr.bf16.mxu0 %v3124
  %3458 = vmatpush1.bf16.msra.mxu0 %v3123
  %3459 = vmatprep.subr.bf16.mxu0 %v3126
  %3460 = vmatpush1.bf16.msra.mxu0 %v3125
  %3461 = vmatprep.subr.bf16.mxu0 %v3128
  %3462 = vmatpush1.bf16.msra.mxu0 %v3127
  %3463 = vmatprep.subr.bf16.mxu0 %v3130
  %3464 = vmatpush1.bf16.msra.mxu0 %v3129
  %3465 = vmatprep.subr.bf16.mxu0 %v3132
  %3466 = vmatpush1.bf16.msra.mxu0 %v3131
  %3467 = vmatprep.subr.bf16.mxu0 %v3134
  %3468 = vmatpush1.bf16.msra.mxu0 %v3133
  %3469 = vmatprep.subr.bf16.mxu0 %v3136
  %3470 = vmatpush1.bf16.msra.mxu0 %v3135
  %3471 = vmatprep.subr.bf16.mxu0 %v3138
  %3472 = vmatpush1.bf16.msra.mxu0 %v3137
  %3473 = vmatprep.subr.bf16.mxu0 %v3140
  %3474 = vmatpush1.bf16.msra.mxu0 %v3139
  %3475 = vmatprep.subr.bf16.mxu0 %v3142
  %3476 = vmatpush1.bf16.msra.mxu0 %v3141
  %3477 = vmatprep.subr.bf16.mxu0 %v3144
  %3478 = vmatpush1.bf16.msra.mxu0 %v3143
  %3479 = vmatprep.mubr.bf16.mxu0 %v3214
  %3480 = vmatmul.mubr.bf16.gmra.mrb[0].mxu0 %v3213
  %v3481 = vpop.f32.mrb[0].mxu0
  %v3482 = vadd.f32 %v3439, %v3481
  %v3483 = vpop.f32.mrb[0].mxu0
  %v3484 = vadd.f32 %v3441, %v3483
  %v3485 = vpop.f32.mrb[0].mxu0
  %v3486 = vadd.f32 %v3443, %v3485
  %v3487 = vpop.f32.mrb[0].mxu0
  %v3488 = vadd.f32 %v3445, %v3487
  %3489 = vdwg.mxu0
  %3490 = vmatprep.subr.bf16.mxu0 %v3146
  %3491 = vmatpush1.bf16.msra.mxu0 %v3145
  %3492 = vmatprep.subr.bf16.mxu0 %v3148
  %3493 = vmatpush1.bf16.msra.mxu0 %v3147
  %3494 = vmatprep.subr.bf16.mxu0 %v3150
  %3495 = vmatpush1.bf16.msra.mxu0 %v3149
  %3496 = vmatprep.subr.bf16.mxu0 %v3152
  %3497 = vmatpush1.bf16.msra.mxu0 %v3151
  %3498 = vmatprep.subr.bf16.mxu0 0
  %3499 = vmatpush1.bf16.msra.mxu0 0
  %3500 = vmatprep.subr.bf16.mxu0 0
  %3501 = vmatpush1.bf16.msra.mxu0 0
  %3502 = vmatprep.subr.bf16.mxu0 0
  %3503 = vmatpush1.bf16.msra.mxu0 0
  %3504 = vmatprep.subr.bf16.mxu0 0
  %3505 = vmatpush1.bf16.msra.mxu0 0
  %3506 = vmatprep.subr.bf16.mxu0 0
  %3507 = vmatpush1.bf16.msra.mxu0 0
  %3508 = vmatprep.subr.bf16.mxu0 0
  %3509 = vmatpush1.bf16.msra.mxu0 0
  %3510 = vmatprep.subr.bf16.mxu0 0
  %3511 = vmatpush1.bf16.msra.mxu0 0
  %3512 = vmatprep.subr.bf16.mxu0 0
  %3513 = vmatpush1.bf16.msra.mxu0 0
  %3514 = vmatprep.subr.bf16.mxu0 0
  %3515 = vmatpush1.bf16.msra.mxu0 0
  %3516 = vmatprep.subr.bf16.mxu0 0
  %3517 = vmatpush1.bf16.msra.mxu0 0
  %3518 = vmatprep.subr.bf16.mxu0 0
  %3519 = vmatpush1.bf16.msra.mxu0 0
  %3520 = vmatprep.subr.bf16.mxu0 0
  %3521 = vmatpush1.bf16.msra.mxu0 0
  %3522 = vmatprep.mubr.bf16.mxu0 0
  %3523 = vmatmul.mubr.bf16.gmra.mrb[0].mxu0 %v3230
  %v3524 = vpop.f32.mrb[0].mxu0
  %v3525 = vadd.f32 %v3482, %v3524
  %v3526 = vpop.f32.mrb[0].mxu0
  %v3527 = vadd.f32 %v3484, %v3526
  %v3528 = vpop.f32.mrb[0].mxu0
  %v3529 = vadd.f32 %v3486, %v3528
  %v3530 = vpop.f32.mrb[0].mxu0
  %v3531 = vadd.f32 %v3488, %v3530
  %3532 = vdwg.mxu0
  %v3533 = vmul.f32 %v3525, 0.33
  %v3534 = vmul.f32 %v3527, 0.33
  %v3535 = vmul.f32 %v3529, 0.33
  %v3536 = vmul.f32 %v3531, 0.33
  %v3537 = vmax.f32 %v3525, %v3533
  %v3538 = vmax.f32 %v3527, %v3534
  %v3539 = vmax.f32 %v3529, %v3535
  %v3540 = vmax.f32 %v3531, %v3536
  %3541 = vst [vmem:[%s14] sm:$0xff] %v3537
  %3542 = vst.msk [vmem:[%s14 + $0x8] sm:$0xff] %vm168, %v3538
  %3543 = vst [vmem:[%s14 + $0x10] sm:$0xff] %v3539
  %3544 = vst.msk [vmem:[%s14 + $0x18] sm:$0xff] %vm168, %v3540
  %s3545 = scalar_lea.vmem %s0, 200
  %v3546 = vld [vmem:[%s3545] sm:$0xff]
  %v3547 = vld [vmem:[%s3545 + $0x8] sm:$0xff]
  %v3548 = vld [vmem:[%s3545 + $0x10] sm:$0xff]
  %v3549 = vld [vmem:[%s3545 + $0x18] sm:$0xff]
  %v3550 = vld [vmem:[%s3545 + $0x20] sm:$0xff]
  %v3551 = vld [vmem:[%s3545 + $0x28] sm:$0xff]
  %v3552 = vld [vmem:[%s3545 + $0x30] sm:$0xff]
  %v3553 = vld [vmem:[%s3545 + $0x38] sm:$0xff]
  %v3554 = vld [vmem:[%s3545 + $0x40] sm:$0xff]
  %v3555 = vld [vmem:[%s3545 + $0x48] sm:$0xff]
  %v3556 = vld [vmem:[%s3545 + $0x50] sm:$0xff]
  %v3557 = vld [vmem:[%s3545 + $0x58] sm:$0xff]
  %v3558 = vld [vmem:[%s3545 + $0x60] sm:$0xff]
  %v3559 = vld [vmem:[%s3545 + $0x68] sm:$0xff]
  %v3560 = vld [vmem:[%s3545 + $0x70] sm:$0xff]
  %v3561 = vld [vmem:[%s3545 + $0x78] sm:$0xff]
  %v3562 = vld [vmem:[%s3545 + $0x80] sm:$0xff]
  %v3563 = vld [vmem:[%s3545 + $0x88] sm:$0xff]
  %v3564 = vld [vmem:[%s3545 + $0x90] sm:$0xff]
  %v3565 = vld [vmem:[%s3545 + $0x98] sm:$0xff]
  %v3566 = vld [vmem:[%s3545 + $0xa0] sm:$0xff]
  %v3567 = vld [vmem:[%s3545 + $0xa8] sm:$0xff]
  %v3568 = vld [vmem:[%s3545 + $0xb0] sm:$0xff]
  %v3569 = vld [vmem:[%s3545 + $0xb8] sm:$0xff]
  %v3570 = vld [vmem:[%s3545 + $0xc0] sm:$0xff]
  %s3571 = scalar_lea.vmem %s1, 200
  %v3572 = vld [vmem:[%s3571] sm:$0xff]
  %v3573 = vld [vmem:[%s3571 + $0x8] sm:$0xff]
  %v3574 = vld [vmem:[%s3571 + $0x10] sm:$0xff]
  %v3575 = vld [vmem:[%s3571 + $0x18] sm:$0xff]
  %v3576 = vld [vmem:[%s3571 + $0x20] sm:$0xff]
  %v3577 = vld [vmem:[%s3571 + $0x28] sm:$0xff]
  %v3578 = vld [vmem:[%s3571 + $0x30] sm:$0xff]
  %v3579 = vld [vmem:[%s3571 + $0x38] sm:$0xff]
  %v3580 = vld [vmem:[%s3571 + $0x40] sm:$0xff]
  %v3581 = vld [vmem:[%s3571 + $0x48] sm:$0xff]
  %v3582 = vld [vmem:[%s3571 + $0x50] sm:$0xff]
  %v3583 = vld [vmem:[%s3571 + $0x58] sm:$0xff]
  %v3584 = vld [vmem:[%s3571 + $0x60] sm:$0xff]
  %v3585 = vld [vmem:[%s3571 + $0x68] sm:$0xff]
  %v3586 = vld [vmem:[%s3571 + $0x70] sm:$0xff]
  %v3587 = vld [vmem:[%s3571 + $0x78] sm:$0xff]
  %v3588 = vld [vmem:[%s3571 + $0x80] sm:$0xff]
  %v3589 = vld [vmem:[%s3571 + $0x88] sm:$0xff]
  %v3590 = vld [vmem:[%s3571 + $0x90] sm:$0xff]
  %v3591 = vld [vmem:[%s3571 + $0x98] sm:$0xff]
  %v3592 = vld [vmem:[%s3571 + $0xa0] sm:$0xff]
  %v3593 = vld [vmem:[%s3571 + $0xa8] sm:$0xff]
  %v3594 = vld [vmem:[%s3571 + $0xb0] sm:$0xff]
  %v3595 = vld [vmem:[%s3571 + $0xb8] sm:$0xff]
  %v3596 = vld [vmem:[%s3571 + $0xc0] sm:$0xff]
  %v3597 = vunpack.c.l.bf16 %v3546
  %v3598 = vunpack.c.h.bf16 %v3546
  %v3599 = vunpack.c.l.bf16 %v3547
  %v3600 = vunpack.c.h.bf16 %v3547
  %v3601 = vunpack.c.l.bf16 %v3548
  %v3602 = vunpack.c.h.bf16 %v3548
  %v3603 = vunpack.c.l.bf16 %v3549
  %v3604 = vunpack.c.h.bf16 %v3549
  %v3605 = vunpack.c.l.bf16 %v3550
  %v3606 = vunpack.c.h.bf16 %v3550
  %v3607 = vunpack.c.l.bf16 %v3551
  %v3608 = vunpack.c.h.bf16 %v3551
  %v3609 = vunpack.c.l.bf16 %v3552
  %v3610 = vunpack.c.h.bf16 %v3552
  %v3611 = vunpack.c.l.bf16 %v3553
  %v3612 = vunpack.c.h.bf16 %v3553
  %v3613 = vunpack.c.l.bf16 %v3554
  %v3614 = vunpack.c.h.bf16 %v3554
  %v3615 = vunpack.c.l.bf16 %v3555
  %v3616 = vunpack.c.h.bf16 %v3555
  %v3617 = vunpack.c.l.bf16 %v3556
  %v3618 = vunpack.c.h.bf16 %v3556
  %v3619 = vunpack.c.l.bf16 %v3557
  %v3620 = vunpack.c.h.bf16 %v3557
  %v3621 = vunpack.c.l.bf16 %v3558
  %v3622 = vunpack.c.h.bf16 %v3558
  %v3623 = vunpack.c.l.bf16 %v3559
  %v3624 = vunpack.c.h.bf16 %v3559
  %v3625 = vunpack.c.l.bf16 %v3560
  %v3626 = vunpack.c.h.bf16 %v3560
  %v3627 = vunpack.c.l.bf16 %v3561
  %v3628 = vunpack.c.h.bf16 %v3561
  %v3629 = vunpack.c.l.bf16 %v3562
  %v3630 = vunpack.c.h.bf16 %v3562
  %v3631 = vunpack.c.l.bf16 %v3563
  %v3632 = vunpack.c.h.bf16 %v3563
  %v3633 = vunpack.c.l.bf16 %v3564
  %v3634 = vunpack.c.h.bf16 %v3564
  %v3635 = vunpack.c.l.bf16 %v3565
  %v3636 = vunpack.c.h.bf16 %v3565
  %v3637 = vunpack.c.l.bf16 %v3566
  %v3638 = vunpack.c.h.bf16 %v3566
  %v3639 = vunpack.c.l.bf16 %v3567
  %v3640 = vunpack.c.h.bf16 %v3567
  %v3641 = vunpack.c.l.bf16 %v3568
  %v3642 = vunpack.c.h.bf16 %v3568
  %v3643 = vunpack.c.l.bf16 %v3569
  %v3644 = vunpack.c.h.bf16 %v3569
  %v3645 = vunpack.c.l.bf16 %v3570
  %v3646 = vunpack.c.h.bf16 %v3570
  %v3647 = vsel %vm168, %v3598, 0.0
  %v3648 = vadd.f32 %v3597, %v3647
  %v3649 = vadd.f32 %v3648, %v3599
  %v3650 = vsel %vm168, %v3600, 0.0
  %v3651 = vadd.f32 %v3649, %v3650
  %v3652 = vadd.f32 %v3651, %v3601
  %v3653 = vsel %vm168, %v3602, 0.0
  %v3654 = vadd.f32 %v3652, %v3653
  %v3655 = vadd.f32 %v3654, %v3603
  %v3656 = vsel %vm168, %v3604, 0.0
  %v3657 = vadd.f32 %v3655, %v3656
  %v3658 = vadd.f32 %v3657, %v3605
  %v3659 = vsel %vm168, %v3606, 0.0
  %v3660 = vadd.f32 %v3658, %v3659
  %v3661 = vadd.f32 %v3660, %v3607
  %v3662 = vsel %vm168, %v3608, 0.0
  %v3663 = vadd.f32 %v3661, %v3662
  %v3664 = vadd.f32 %v3663, %v3609
  %v3665 = vsel %vm168, %v3610, 0.0
  %v3666 = vadd.f32 %v3664, %v3665
  %v3667 = vadd.f32 %v3666, %v3611
  %v3668 = vsel %vm168, %v3612, 0.0
  %v3669 = vadd.f32 %v3667, %v3668
  %v3670 = vadd.f32 %v3669, %v3613
  %v3671 = vsel %vm168, %v3614, 0.0
  %v3672 = vadd.f32 %v3670, %v3671
  %v3673 = vadd.f32 %v3672, %v3615
  %v3674 = vsel %vm168, %v3616, 0.0
  %v3675 = vadd.f32 %v3673, %v3674
  %v3676 = vadd.f32 %v3675, %v3617
  %v3677 = vsel %vm168, %v3618, 0.0
  %v3678 = vadd.f32 %v3676, %v3677
  %v3679 = vadd.f32 %v3678, %v3619
  %v3680 = vsel %vm168, %v3620, 0.0
  %v3681 = vadd.f32 %v3679, %v3680
  %v3682 = vadd.f32 %v3681, %v3621
  %v3683 = vsel %vm168, %v3622, 0.0
  %v3684 = vadd.f32 %v3682, %v3683
  %v3685 = vadd.f32 %v3684, %v3623
  %v3686 = vsel %vm168, %v3624, 0.0
  %v3687 = vadd.f32 %v3685, %v3686
  %v3688 = vadd.f32 %v3687, %v3625
  %v3689 = vsel %vm168, %v3626, 0.0
  %v3690 = vadd.f32 %v3688, %v3689
  %v3691 = vadd.f32 %v3690, %v3627
  %v3692 = vsel %vm168, %v3628, 0.0
  %v3693 = vadd.f32 %v3691, %v3692
  %v3694 = vadd.f32 %v3693, %v3629
  %v3695 = vsel %vm168, %v3630, 0.0
  %v3696 = vadd.f32 %v3694, %v3695
  %v3697 = vadd.f32 %v3696, %v3631
  %v3698 = vsel %vm168, %v3632, 0.0
  %v3699 = vadd.f32 %v3697, %v3698
  %v3700 = vadd.f32 %v3699, %v3633
  %v3701 = vsel %vm168, %v3634, 0.0
  %v3702 = vadd.f32 %v3700, %v3701
  %v3703 = vadd.f32 %v3702, %v3635
  %v3704 = vsel %vm168, %v3636, 0.0
  %v3705 = vadd.f32 %v3703, %v3704
  %v3706 = vadd.f32 %v3705, %v3637
  %v3707 = vsel %vm168, %v3638, 0.0
  %v3708 = vadd.f32 %v3706, %v3707
  %v3709 = vadd.f32 %v3708, %v3639
  %v3710 = vsel %vm168, %v3640, 0.0
  %v3711 = vadd.f32 %v3709, %v3710
  %v3712 = vadd.f32 %v3711, %v3641
  %v3713 = vsel %vm168, %v3642, 0.0
  %v3714 = vadd.f32 %v3712, %v3713
  %v3715 = vadd.f32 %v3714, %v3643
  %v3716 = vsel %vm168, %v3644, 0.0
  %v3717 = vadd.f32 %v3715, %v3716
  %v3718 = vadd.f32 %v3717, %v3645
  %v3719 = vsel %vm168, %v3646, 0.0
  %v3720 = vadd.f32 %v3718, %v3719
  %3721 = vadd.xlane.f32.xlu0 %v3720
  %v3722 = vpop.xlane.xlu0 %3721
  %v3723 = vrot.slane %v3722, 4
  %v3724 = vadd.f32 %v3722, %v3723
  %v3725 = vrot.slane %v3724, 2
  %v3726 = vadd.f32 %v3724, %v3725
  %v3727 = vrot.slane %v3726, 1
  %v3728 = vadd.f32 %v3726, %v3727
  %s3729 = vtos %v3728
  %s3730 = smul.f32 %s3729, 2.5e-05
  %v3731 = vld [vmem:[#allocation2] sm:$0x1]
  %s3732 = vtos %v3731
  %s3733 = smul.f32 %s3730, %s3732
  %s3734 = smax.f32 %s3733, 0.0
  %v3735 = vld [vmem:[%s3] sm:$0x1]
  %v3736 = vstv %s3734
  %v3737 = vmul.f32 %v3736, %v3735
  %v3738 = vld [vmem:[%s4] sm:$0x1]
  %v3739 = vadd.f32 %v3737, %v3738
  %v3740 = vmul.f32 %v3739, 0.029411765
  %v3741 = vsel %vm263, %v3740, -inf
  %3742 = vmax.xlane.f32.xlu0 %v3741
  %v3743 = vpop.xlane.xlu0 %3742
  %v3744 = vrot.slane %v3743, 4
  %v3745 = vmax.f32 %v3743, %v3744
  %v3746 = vrot.slane %v3745, 2
  %v3747 = vmax.f32 %v3745, %v3746
  %v3748 = vrot.slane %v3747, 1
  %v3749 = vmax.f32 %v3747, %v3748
  %s3750 = vtos %v3749
  %v3751 = vstv %s3750
  %v3752 = vsub.f32 %v3740, %v3751
  %v3753 = vmul.f32 %v3752, 1.442695
  %v3754 = vpow.pop %v3753
  %v3755 = vsel %vm263, %v3754, 0.0
  %3756 = vadd.xlane.f32.xlu0 %v3755
  %v3757 = vpop.xlane.xlu0 %3756
  %v3758 = vrot.slane %v3757, 4
  %v3759 = vadd.f32 %v3757, %v3758
  %v3760 = vrot.slane %v3759, 2
  %v3761 = vadd.f32 %v3759, %v3760
  %v3762 = vrot.slane %v3761, 1
  %v3763 = vadd.f32 %v3761, %v3762
  %s3764 = vtos %v3763
  %v3765 = vstv %s3764
  %v3766 = vrcp.pop %v3765
  %v3767 = vmul.f32 %v3754, %v3766
  %v3768 = vld [vmem:[#allocation3] sm:$0x1]
  %s3769 = vtos %v3768
  %s3770 = smul.f32 %s3730, %s3769
  %s3771 = smax.f32 %s3770, 0.0
  %v3772 = vld [vmem:[%s8] sm:$0x1]
  %v3773 = vstv %s3771
  %v3774 = vmul.f32 %v3773, %v3772
  %v3775 = vld [vmem:[%s9] sm:$0x1]
  %v3776 = vadd.f32 %v3774, %v3775
  %v3777 = vmul.f32 %v3776, 0.029411765
  %v3778 = vsel %vm263, %v3777, -inf
  %3779 = vmax.xlane.f32.xlu0 %v3778
  %v3780 = vpop.xlane.xlu0 %3779
  %v3781 = vrot.slane %v3780, 4
  %v3782 = vmax.f32 %v3780, %v3781
  %v3783 = vrot.slane %v3782, 2
  %v3784 = vmax.f32 %v3782, %v3783
  %v3785 = vrot.slane %v3784, 1
  %v3786 = vmax.f32 %v3784, %v3785
  %s3787 = vtos %v3786
  %v3788 = vstv %s3787
  %v3789 = vsub.f32 %v3777, %v3788
  %v3790 = vmul.f32 %v3789, 1.442695
  %v3791 = vpow.pop %v3790
  %v3792 = vsel %vm263, %v3791, 0.0
  %3793 = vadd.xlane.f32.xlu0 %v3792
  %v3794 = vpop.xlane.xlu0 %3793
  %v3795 = vrot.slane %v3794, 4
  %v3796 = vadd.f32 %v3794, %v3795
  %v3797 = vrot.slane %v3796, 2
  %v3798 = vadd.f32 %v3796, %v3797
  %v3799 = vrot.slane %v3798, 1
  %v3800 = vadd.f32 %v3798, %v3799
  %s3801 = vtos %v3800
  %v3802 = vstv %s3801
  %v3803 = vrcp.pop %v3802
  %v3804 = vmul.f32 %v3791, %v3803
  %s3805 = vtos %v3767
  %v3806 = vld [vmem:[%s5] sm:$0xff]
  %v3807 = vld [vmem:[%s5 + $0x8] sm:$0xff]
  %v3808 = vstv %s3805
  %v3809 = vmul.f32 %v3808, %v3806
  %v3810 = vmul.f32 %v3808, %v3807
  %3811 = vrot.lane.b32.xlu0 %v3767, 127
  %v3812 = vpop.permute.xlu0 %3811
  %s3813 = vtos %v3812
  %v3814 = vld [vmem:[%s337] sm:$0xff]
  %v3815 = vld [vmem:[%s337 + $0x8] sm:$0xff]
  %v3816 = vstv %s3813
  %v3817 = vmul.f32 %v3816, %v3814
  %v3818 = vmul.f32 %v3816, %v3815
  %v3819 = vadd.f32 %v3809, %v3817
  %v3820 = vadd.f32 %v3810, %v3818
  %3821 = vrot.lane.b32.xlu0 %v3767, 126
  %v3822 = vpop.permute.xlu0 %3821
  %s3823 = vtos %v3822
  %v3824 = vld [vmem:[%s348] sm:$0xff]
  %v3825 = vld [vmem:[%s348 + $0x8] sm:$0xff]
  %v3826 = vstv %s3823
  %v3827 = vmul.f32 %v3826, %v3824
  %v3828 = vmul.f32 %v3826, %v3825
  %v3829 = vadd.f32 %v3819, %v3827
  %v3830 = vadd.f32 %v3820, %v3828
  %s3831 = vtos %v3804
  %v3832 = vld [vmem:[%s10] sm:$0xff]
  %v3833 = vld [vmem:[%s10 + $0x8] sm:$0xff]
  %v3834 = vstv %s3831
  %v3835 = vmul.f32 %v3834, %v3832
  %v3836 = vmul.f32 %v3834, %v3833
  %3837 = vrot.lane.b32.xlu0 %v3804, 127
  %v3838 = vpop.permute.xlu0 %3837
  %s3839 = vtos %v3838
  %v3840 = vld [vmem:[%s365] sm:$0xff]
  %v3841 = vld [vmem:[%s365 + $0x8] sm:$0xff]
  %v3842 = vstv %s3839
  %v3843 = vmul.f32 %v3842, %v3840
  %v3844 = vmul.f32 %v3842, %v3841
  %v3845 = vadd.f32 %v3835, %v3843
  %v3846 = vadd.f32 %v3836, %v3844
  %3847 = vrot.lane.b32.xlu0 %v3804, 126
  %v3848 = vpop.permute.xlu0 %3847
  %s3849 = vtos %v3848
  %v3850 = vld [vmem:[%s376] sm:$0xff]
  %v3851 = vld [vmem:[%s376 + $0x8] sm:$0xff]
  %v3852 = vstv %s3849
  %v3853 = vmul.f32 %v3852, %v3850
  %v3854 = vmul.f32 %v3852, %v3851
  %v3855 = vadd.f32 %v3845, %v3853
  %v3856 = vadd.f32 %v3846, %v3854
  %v3857 = vld [vmem:[%s6] sm:$0xff]
  %v3858 = vmul.f32 %v3808, %v3857
  %v3859 = vmul.f32 %v3816, %v3857
  %3861 = vrot.lane.b32.xlu0 %v3859, 127
  %v3862 = vpop.permute.xlu0 %3861
  %v3864 = vadd.f32 %v3858, %v3862
  %v3865 = vmul.f32 %v3826, %v3857
  %3867 = vrot.lane.b32.xlu0 %v3865, 126
  %v3868 = vpop.permute.xlu0 %3867
  %v3870 = vadd.f32 %v3864, %v3868
  %v3871 = vld [vmem:[%s11] sm:$0xff]
  %v3872 = vmul.f32 %v3834, %v3871
  %v3873 = vadd.f32 %v3870, %v3872
  %v3874 = vmul.f32 %v3842, %v3871
  %3876 = vrot.lane.b32.xlu0 %v3874, 127
  %v3877 = vpop.permute.xlu0 %3876
  %v3879 = vadd.f32 %v3873, %v3877
  %v3880 = vmul.f32 %v3852, %v3871
  %3882 = vrot.lane.b32.xlu0 %v3880, 126
  %v3883 = vpop.permute.xlu0 %3882
  %v3885 = vadd.f32 %v3879, %v3883
  %v3886 = vpack.c.bf16 %v3829, %v3829
  %v3887 = vpack.c.bf16 %v3830, %v3830
  %v3888 = vpack.c.bf16 %v3855, %v3855
  %v3889 = vpack.c.bf16 %v3856, %v3856
  %v3915 = vunpack.c.l.b16 %v3572
  %v3916 = vunpack.c.h.b16 %v3572
  %v3917 = vunpack.c.l.b16 %v3573
  %v3918 = vunpack.c.h.b16 %v3573
  %v3919 = vunpack.c.l.b16 %v3574
  %v3920 = vunpack.c.h.b16 %v3574
  %v3921 = vunpack.c.l.b16 %v3575
  %v3922 = vunpack.c.h.b16 %v3575
  %v3923 = vunpack.c.l.b16 %v3576
  %v3924 = vunpack.c.h.b16 %v3576
  %v3925 = vunpack.c.l.b16 %v3577
  %v3926 = vunpack.c.h.b16 %v3577
  %v3927 = vunpack.c.l.b16 %v3578
  %v3928 = vunpack.c.h.b16 %v3578
  %v3929 = vunpack.c.l.b16 %v3579
  %v3930 = vunpack.c.h.b16 %v3579
  %v3931 = vunpack.c.l.b16 %v3580
  %v3932 = vunpack.c.h.b16 %v3580
  %v3933 = vunpack.c.l.b16 %v3581
  %v3934 = vunpack.c.h.b16 %v3581
  %v3935 = vunpack.c.l.b16 %v3582
  %v3936 = vunpack.c.h.b16 %v3582
  %v3937 = vunpack.c.l.b16 %v3583
  %v3938 = vunpack.c.h.b16 %v3583
  %v3939 = vunpack.c.l.b16 %v3584
  %v3940 = vunpack.c.h.b16 %v3584
  %v3941 = vunpack.c.l.b16 %v3585
  %v3942 = vunpack.c.h.b16 %v3585
  %v3943 = vunpack.c.l.b16 %v3586
  %v3944 = vunpack.c.h.b16 %v3586
  %v3945 = vunpack.c.l.b16 %v3587
  %v3946 = vunpack.c.h.b16 %v3587
  %v3947 = vunpack.c.l.b16 %v3588
  %v3948 = vunpack.c.h.b16 %v3588
  %v3949 = vunpack.c.l.b16 %v3589
  %v3950 = vunpack.c.h.b16 %v3589
  %v3951 = vunpack.c.l.b16 %v3590
  %v3952 = vunpack.c.h.b16 %v3590
  %v3953 = vunpack.c.l.b16 %v3591
  %v3954 = vunpack.c.h.b16 %v3591
  %v3955 = vunpack.c.l.b16 %v3592
  %v3956 = vunpack.c.h.b16 %v3592
  %v3957 = vunpack.c.l.b16 %v3593
  %v3958 = vunpack.c.h.b16 %v3593
  %v3959 = vunpack.c.l.b16 %v3594
  %v3960 = vunpack.c.h.b16 %v3594
  %v3961 = vunpack.c.l.b16 %v3595
  %v3962 = vunpack.c.h.b16 %v3595
  %v3963 = vunpack.c.l.b16 %v3596
  %v3964 = vunpack.c.h.b16 %v3596
  %v3965 = vpack.c.b16 %v3917, %v3915
  %v3966 = vpack.c.b16 %v3918, %v3916
  %v3967 = vpack.c.b16 %v3921, %v3919
  %v3968 = vpack.c.b16 %v3922, %v3920
  %v3969 = vpack.c.b16 %v3925, %v3923
  %v3970 = vpack.c.b16 %v3926, %v3924
  %v3971 = vpack.c.b16 %v3929, %v3927
  %v3972 = vpack.c.b16 %v3930, %v3928
  %v3973 = vpack.c.b16 %v3933, %v3931
  %v3974 = vpack.c.b16 %v3934, %v3932
  %v3975 = vpack.c.b16 %v3937, %v3935
  %v3976 = vpack.c.b16 %v3938, %v3936
  %v3977 = vpack.c.b16 %v3941, %v3939
  %v3978 = vpack.c.b16 %v3942, %v3940
  %v3979 = vpack.c.b16 %v3945, %v3943
  %v3980 = vpack.c.b16 %v3946, %v3944
  %v3981 = vpack.c.b16 %v3949, %v3947
  %v3982 = vpack.c.b16 %v3950, %v3948
  %v3983 = vpack.c.b16 %v3953, %v3951
  %v3984 = vpack.c.b16 %v3954, %v3952
  %v3985 = vpack.c.b16 %v3957, %v3955
  %v3986 = vpack.c.b16 %v3958, %v3956
  %v3987 = vpack.c.b16 %v3961, %v3959
  %v3988 = vpack.c.b16 %v3962, %v3960
  %v3989 = vpack.c.b16 %v3963, %v3963
  %v3990 = vpack.c.b16 %v3964, %v3964
  %v4016 = vsel %vm168, %v3889, 0
  %v4019 = vsel %vm545, %v3989, 0
  %v4022 = vsel %vm545, %v3990, 0
  %4024 = vmatprep.subr.bf16.mxu0 %v3966
  %4025 = vmatpush1.bf16.msra.mxu0 %v3965
  %4026 = vmatprep.subr.bf16.mxu0 %v3968
  %4027 = vmatpush1.bf16.msra.mxu0 %v3967
  %4028 = vmatprep.subr.bf16.mxu0 %v3970
  %4029 = vmatpush1.bf16.msra.mxu0 %v3969
  %4030 = vmatprep.subr.bf16.mxu0 %v3972
  %4031 = vmatpush1.bf16.msra.mxu0 %v3971
  %4032 = vmatprep.subr.bf16.mxu0 %v3974
  %4033 = vmatpush1.bf16.msra.mxu0 %v3973
  %4034 = vmatprep.subr.bf16.mxu0 %v3976
  %4035 = vmatpush1.bf16.msra.mxu0 %v3975
  %4036 = vmatprep.subr.bf16.mxu0 %v3978
  %4037 = vmatpush1.bf16.msra.mxu0 %v3977
  %4038 = vmatprep.subr.bf16.mxu0 %v3980
  %4039 = vmatpush1.bf16.msra.mxu0 %v3979
  %4040 = vmatprep.subr.bf16.mxu0 %v3982
  %4041 = vmatpush1.bf16.msra.mxu0 %v3981
  %4042 = vmatprep.subr.bf16.mxu0 %v3984
  %4043 = vmatpush1.bf16.msra.mxu0 %v3983
  %4044 = vmatprep.subr.bf16.mxu0 %v3986
  %4045 = vmatpush1.bf16.msra.mxu0 %v3985
  %4046 = vmatprep.subr.bf16.mxu0 %v3988
  %4047 = vmatpush1.bf16.msra.mxu0 %v3987
  %4048 = vmatprep.subr.bf16.mxu0 %v4022
  %4049 = vmatpush1.bf16.msra.mxu0 %v4019
  %4050 = vmatprep.subr.bf16.mxu0 0
  %4051 = vmatpush1.bf16.msra.mxu0 0
  %4052 = vmatprep.subr.bf16.mxu0 0
  %4053 = vmatpush1.bf16.msra.mxu0 0
  %4054 = vmatprep.subr.bf16.mxu0 0
  %4055 = vmatpush1.bf16.msra.mxu0 0
  %4056 = vmatprep.mubr.bf16.mxu0 %v4016
  %4057 = vmatmul.mubr.bf16.gmra.mrb[0].mxu0 %v3888
  %v4058 = vpop.f32.mrb[0].mxu0
  %v4059 = vadd.f32 0.0, %v4058
  %v4060 = vpop.f32.mrb[0].mxu0
  %v4061 = vadd.f32 0.0, %v4060
  %v4062 = vpop.f32.mrb[0].mxu0
  %v4063 = vpop.f32.mrb[0].mxu0
  %4064 = vdwg.mxu0
  %4066 = vset.pattern.permute.xlu0 0
  %4067 = vperm.xlu0 %4066, %v3885
  %v4068 = vpop.permute.xlu0 %4067
  %v4095 = vunpack.c.l.b16 %v3546
  %v4096 = vunpack.c.h.b16 %v3546
  %v4097 = vunpack.c.l.b16 %v3547
  %v4098 = vunpack.c.h.b16 %v3547
  %v4099 = vunpack.c.l.b16 %v3548
  %v4100 = vunpack.c.h.b16 %v3548
  %v4101 = vunpack.c.l.b16 %v3549
  %v4102 = vunpack.c.h.b16 %v3549
  %v4103 = vunpack.c.l.b16 %v3550
  %v4104 = vunpack.c.h.b16 %v3550
  %v4105 = vunpack.c.l.b16 %v3551
  %v4106 = vunpack.c.h.b16 %v3551
  %v4107 = vunpack.c.l.b16 %v3552
  %v4108 = vunpack.c.h.b16 %v3552
  %v4109 = vunpack.c.l.b16 %v3553
  %v4110 = vunpack.c.h.b16 %v3553
  %v4111 = vunpack.c.l.b16 %v3554
  %v4112 = vunpack.c.h.b16 %v3554
  %v4113 = vunpack.c.l.b16 %v3555
  %v4114 = vunpack.c.h.b16 %v3555
  %v4115 = vunpack.c.l.b16 %v3556
  %v4116 = vunpack.c.h.b16 %v3556
  %v4117 = vunpack.c.l.b16 %v3557
  %v4118 = vunpack.c.h.b16 %v3557
  %v4119 = vunpack.c.l.b16 %v3558
  %v4120 = vunpack.c.h.b16 %v3558
  %v4121 = vunpack.c.l.b16 %v3559
  %v4122 = vunpack.c.h.b16 %v3559
  %v4123 = vunpack.c.l.b16 %v3560
  %v4124 = vunpack.c.h.b16 %v3560
  %v4125 = vunpack.c.l.b16 %v3561
  %v4126 = vunpack.c.h.b16 %v3561
  %v4127 = vunpack.c.l.b16 %v3562
  %v4128 = vunpack.c.h.b16 %v3562
  %v4129 = vunpack.c.l.b16 %v3563
  %v4130 = vunpack.c.h.b16 %v3563
  %v4131 = vunpack.c.l.b16 %v3564
  %v4132 = vunpack.c.h.b16 %v3564
  %v4133 = vunpack.c.l.b16 %v3565
  %v4134 = vunpack.c.h.b16 %v3565
  %v4135 = vunpack.c.l.b16 %v3566
  %v4136 = vunpack.c.h.b16 %v3566
  %v4137 = vunpack.c.l.b16 %v3567
  %v4138 = vunpack.c.h.b16 %v3567
  %v4139 = vunpack.c.l.b16 %v3568
  %v4140 = vunpack.c.h.b16 %v3568
  %v4141 = vunpack.c.l.b16 %v3569
  %v4142 = vunpack.c.h.b16 %v3569
  %v4143 = vunpack.c.l.b16 %v3570
  %v4144 = vunpack.c.h.b16 %v3570
  %v4145 = vpack.c.b16 %v4097, %v4095
  %v4146 = vpack.c.b16 %v4098, %v4096
  %v4147 = vpack.c.b16 %v4101, %v4099
  %v4148 = vpack.c.b16 %v4102, %v4100
  %v4149 = vpack.c.b16 %v4105, %v4103
  %v4150 = vpack.c.b16 %v4106, %v4104
  %v4151 = vpack.c.b16 %v4109, %v4107
  %v4152 = vpack.c.b16 %v4110, %v4108
  %v4153 = vpack.c.b16 %v4113, %v4111
  %v4154 = vpack.c.b16 %v4114, %v4112
  %v4155 = vpack.c.b16 %v4117, %v4115
  %v4156 = vpack.c.b16 %v4118, %v4116
  %v4157 = vpack.c.b16 %v4121, %v4119
  %v4158 = vpack.c.b16 %v4122, %v4120
  %v4159 = vpack.c.b16 %v4125, %v4123
  %v4160 = vpack.c.b16 %v4126, %v4124
  %v4161 = vpack.c.b16 %v4129, %v4127
  %v4162 = vpack.c.b16 %v4130, %v4128
  %v4163 = vpack.c.b16 %v4133, %v4131
  %v4164 = vpack.c.b16 %v4134, %v4132
  %v4165 = vpack.c.b16 %v4137, %v4135
  %v4166 = vpack.c.b16 %v4138, %v4136
  %v4167 = vpack.c.b16 %v4141, %v4139
  %v4168 = vpack.c.b16 %v4142, %v4140
  %v4169 = vpack.c.b16 %v4143, %v4143
  %v4170 = vpack.c.b16 %v4144, %v4144
  %v4196 = vsel %vm168, %v3887, 0
  %v4199 = vsel %vm545, %v4169, 0
  %v4202 = vsel %vm545, %v4170, 0
  %4204 = vmatprep.subr.bf16.mxu0 %v4146
  %4205 = vmatpush1.bf16.msra.mxu0 %v4145
  %4206 = vmatprep.subr.bf16.mxu0 %v4148
  %4207 = vmatpush1.bf16.msra.mxu0 %v4147
  %4208 = vmatprep.subr.bf16.mxu0 %v4150
  %4209 = vmatpush1.bf16.msra.mxu0 %v4149
  %4210 = vmatprep.subr.bf16.mxu0 %v4152
  %4211 = vmatpush1.bf16.msra.mxu0 %v4151
  %4212 = vmatprep.subr.bf16.mxu0 %v4154
  %4213 = vmatpush1.bf16.msra.mxu0 %v4153
  %4214 = vmatprep.subr.bf16.mxu0 %v4156
  %4215 = vmatpush1.bf16.msra.mxu0 %v4155
  %4216 = vmatprep.subr.bf16.mxu0 %v4158
  %4217 = vmatpush1.bf16.msra.mxu0 %v4157
  %4218 = vmatprep.subr.bf16.mxu0 %v4160
  %4219 = vmatpush1.bf16.msra.mxu0 %v4159
  %4220 = vmatprep.subr.bf16.mxu0 %v4162
  %4221 = vmatpush1.bf16.msra.mxu0 %v4161
  %4222 = vmatprep.subr.bf16.mxu0 %v4164
  %4223 = vmatpush1.bf16.msra.mxu0 %v4163
  %4224 = vmatprep.subr.bf16.mxu0 %v4166
  %4225 = vmatpush1.bf16.msra.mxu0 %v4165
  %4226 = vmatprep.subr.bf16.mxu0 %v4168
  %4227 = vmatpush1.bf16.msra.mxu0 %v4167
  %4228 = vmatprep.subr.bf16.mxu0 %v4202
  %4229 = vmatpush1.bf16.msra.mxu0 %v4199
  %4230 = vmatprep.subr.bf16.mxu0 0
  %4231 = vmatpush1.bf16.msra.mxu0 0
  %4232 = vmatprep.subr.bf16.mxu0 0
  %4233 = vmatpush1.bf16.msra.mxu0 0
  %4234 = vmatprep.subr.bf16.mxu0 0
  %4235 = vmatpush1.bf16.msra.mxu0 0
  %4236 = vmatprep.mubr.bf16.mxu0 %v4196
  %4237 = vmatmul.mubr.bf16.gmra.mrb[0].mxu0 %v3886
  %v4238 = vpop.f32.mrb[0].mxu0
  %v4239 = vadd.f32 %v4068, %v4238
  %v4240 = vpop.f32.mrb[0].mxu0
  %v4241 = vadd.f32 %v4068, %v4240
  %v4242 = vpop.f32.mrb[0].mxu0
  %v4243 = vpop.f32.mrb[0].mxu0
  %4244 = vdwg.mxu0
  %v4245 = vlaneseq
  %v4246 = vshrl.u32 %v4245, 7
  %v4247 = vsub.s32 0, %v4246
  %v4248 = vrot.slane %v4239, %v4247
  %4250 = vbcast.lane.b32.xlu0 %v4248, 256
  %v4251 = vpop.permute.xlu0 %4250
  %s4253 = sor.u32 256, 8
  %4254 = vbcast.lane.b32.xlu0 %v4248, %s4253
  %v4255 = vpop.permute.xlu0 %4254
  %s4257 = sor.u32 256, 16
  %4258 = vbcast.lane.b32.xlu0 %v4248, %s4257
  %v4259 = vpop.permute.xlu0 %4258
  %s4261 = sor.u32 256, 24
  %4262 = vbcast.lane.b32.xlu0 %v4248, %s4261
  %v4263 = vpop.permute.xlu0 %4262
  %s4265 = sor.u32 256, 32
  %4266 = vbcast.lane.b32.xlu0 %v4248, %s4265
  %v4267 = vpop.permute.xlu0 %4266
  %s4269 = sor.u32 256, 40
  %4270 = vbcast.lane.b32.xlu0 %v4248, %s4269
  %v4271 = vpop.permute.xlu0 %4270
  %s4273 = sor.u32 256, 48
  %4274 = vbcast.lane.b32.xlu0 %v4248, %s4273
  %v4275 = vpop.permute.xlu0 %4274
  %s4277 = sor.u32 256, 56
  %4278 = vbcast.lane.b32.xlu0 %v4248, %s4277
  %v4279 = vpop.permute.xlu0 %4278
  %s4281 = sor.u32 256, 64
  %4282 = vbcast.lane.b32.xlu0 %v4248, %s4281
  %v4283 = vpop.permute.xlu0 %4282
  %s4285 = sor.u32 256, 72
  %4286 = vbcast.lane.b32.xlu0 %v4248, %s4285
  %v4287 = vpop.permute.xlu0 %4286
  %s4289 = sor.u32 256, 80
  %4290 = vbcast.lane.b32.xlu0 %v4248, %s4289
  %v4291 = vpop.permute.xlu0 %4290
  %s4293 = sor.u32 256, 88
  %4294 = vbcast.lane.b32.xlu0 %v4248, %s4293
  %v4295 = vpop.permute.xlu0 %4294
  %s4297 = sor.u32 256, 96
  %4298 = vbcast.lane.b32.xlu0 %v4248, %s4297
  %v4299 = vpop.permute.xlu0 %4298
  %s4301 = sor.u32 256, 104
  %4302 = vbcast.lane.b32.xlu0 %v4248, %s4301
  %v4303 = vpop.permute.xlu0 %4302
  %s4305 = sor.u32 256, 112
  %4306 = vbcast.lane.b32.xlu0 %v4248, %s4305
  %v4307 = vpop.permute.xlu0 %4306
  %s4309 = sor.u32 256, 120
  %4310 = vbcast.lane.b32.xlu0 %v4248, %s4309
  %v4311 = vpop.permute.xlu0 %4310
  %v4312 = vlaneseq
  %v4313 = vshrl.u32 %v4312, 7
  %v4314 = vsub.s32 0, %v4313
  %v4315 = vrot.slane %v4241, %v4314
  %4317 = vbcast.lane.b32.xlu0 %v4315, 256
  %v4318 = vpop.permute.xlu0 %4317
  %s4320 = sor.u32 256, 8
  %4321 = vbcast.lane.b32.xlu0 %v4315, %s4320
  %v4322 = vpop.permute.xlu0 %4321
  %s4324 = sor.u32 256, 16
  %4325 = vbcast.lane.b32.xlu0 %v4315, %s4324
  %v4326 = vpop.permute.xlu0 %4325
  %s4328 = sor.u32 256, 24
  %4329 = vbcast.lane.b32.xlu0 %v4315, %s4328
  %v4330 = vpop.permute.xlu0 %4329
  %s4332 = sor.u32 256, 32
  %4333 = vbcast.lane.b32.xlu0 %v4315, %s4332
  %v4334 = vpop.permute.xlu0 %4333
  %s4336 = sor.u32 256, 40
  %4337 = vbcast.lane.b32.xlu0 %v4315, %s4336
  %v4338 = vpop.permute.xlu0 %4337
  %s4340 = sor.u32 256, 48
  %4341 = vbcast.lane.b32.xlu0 %v4315, %s4340
  %v4342 = vpop.permute.xlu0 %4341
  %s4344 = sor.u32 256, 56
  %4345 = vbcast.lane.b32.xlu0 %v4315, %s4344
  %v4346 = vpop.permute.xlu0 %4345
  %s4348 = sor.u32 256, 64
  %4349 = vbcast.lane.b32.xlu0 %v4315, %s4348
  %v4350 = vpop.permute.xlu0 %4349
  %v4351 = vlaneseq
  %v4352 = vshrl.u32 %v4351, 7
  %v4353 = vsub.s32 1, %v4352
  %v4354 = vrot.slane %v4239, %v4353
  %4356 = vbcast.lane.b32.xlu0 %v4354, 256
  %v4357 = vpop.permute.xlu0 %4356
  %s4359 = sor.u32 256, 8
  %4360 = vbcast.lane.b32.xlu0 %v4354, %s4359
  %v4361 = vpop.permute.xlu0 %4360
  %s4363 = sor.u32 256, 16
  %4364 = vbcast.lane.b32.xlu0 %v4354, %s4363
  %v4365 = vpop.permute.xlu0 %4364
  %s4367 = sor.u32 256, 24
  %4368 = vbcast.lane.b32.xlu0 %v4354, %s4367
  %v4369 = vpop.permute.xlu0 %4368
  %s4371 = sor.u32 256, 32
  %4372 = vbcast.lane.b32.xlu0 %v4354, %s4371
  %v4373 = vpop.permute.xlu0 %4372
  %s4375 = sor.u32 256, 40
  %4376 = vbcast.lane.b32.xlu0 %v4354, %s4375
  %v4377 = vpop.permute.xlu0 %4376
  %s4379 = sor.u32 256, 48
  %4380 = vbcast.lane.b32.xlu0 %v4354, %s4379
  %v4381 = vpop.permute.xlu0 %4380
  %s4383 = sor.u32 256, 56
  %4384 = vbcast.lane.b32.xlu0 %v4354, %s4383
  %v4385 = vpop.permute.xlu0 %4384
  %s4387 = sor.u32 256, 64
  %4388 = vbcast.lane.b32.xlu0 %v4354, %s4387
  %v4389 = vpop.permute.xlu0 %4388
  %s4391 = sor.u32 256, 72
  %4392 = vbcast.lane.b32.xlu0 %v4354, %s4391
  %v4393 = vpop.permute.xlu0 %4392
  %s4395 = sor.u32 256, 80
  %4396 = vbcast.lane.b32.xlu0 %v4354, %s4395
  %v4397 = vpop.permute.xlu0 %4396
  %s4399 = sor.u32 256, 88
  %4400 = vbcast.lane.b32.xlu0 %v4354, %s4399
  %v4401 = vpop.permute.xlu0 %4400
  %s4403 = sor.u32 256, 96
  %4404 = vbcast.lane.b32.xlu0 %v4354, %s4403
  %v4405 = vpop.permute.xlu0 %4404
  %s4407 = sor.u32 256, 104
  %4408 = vbcast.lane.b32.xlu0 %v4354, %s4407
  %v4409 = vpop.permute.xlu0 %4408
  %s4411 = sor.u32 256, 112
  %4412 = vbcast.lane.b32.xlu0 %v4354, %s4411
  %v4413 = vpop.permute.xlu0 %4412
  %s4415 = sor.u32 256, 120
  %4416 = vbcast.lane.b32.xlu0 %v4354, %s4415
  %v4417 = vpop.permute.xlu0 %4416
  %v4418 = vlaneseq
  %v4419 = vshrl.u32 %v4418, 7
  %v4420 = vsub.s32 1, %v4419
  %v4421 = vrot.slane %v4241, %v4420
  %4423 = vbcast.lane.b32.xlu0 %v4421, 256
  %v4424 = vpop.permute.xlu0 %4423
  %s4426 = sor.u32 256, 8
  %4427 = vbcast.lane.b32.xlu0 %v4421, %s4426
  %v4428 = vpop.permute.xlu0 %4427
  %s4430 = sor.u32 256, 16
  %4431 = vbcast.lane.b32.xlu0 %v4421, %s4430
  %v4432 = vpop.permute.xlu0 %4431
  %s4434 = sor.u32 256, 24
  %4435 = vbcast.lane.b32.xlu0 %v4421, %s4434
  %v4436 = vpop.permute.xlu0 %4435
  %s4438 = sor.u32 256, 32
  %4439 = vbcast.lane.b32.xlu0 %v4421, %s4438
  %v4440 = vpop.permute.xlu0 %4439
  %s4442 = sor.u32 256, 40
  %4443 = vbcast.lane.b32.xlu0 %v4421, %s4442
  %v4444 = vpop.permute.xlu0 %4443
  %s4446 = sor.u32 256, 48
  %4447 = vbcast.lane.b32.xlu0 %v4421, %s4446
  %v4448 = vpop.permute.xlu0 %4447
  %s4450 = sor.u32 256, 56
  %4451 = vbcast.lane.b32.xlu0 %v4421, %s4450
  %v4452 = vpop.permute.xlu0 %4451
  %s4454 = sor.u32 256, 64
  %4455 = vbcast.lane.b32.xlu0 %v4421, %s4454
  %v4456 = vpop.permute.xlu0 %4455
  %v4457 = vlaneseq
  %v4458 = vshrl.u32 %v4457, 7
  %v4459 = vsub.s32 2, %v4458
  %v4460 = vrot.slane %v4239, %v4459
  %4462 = vbcast.lane.b32.xlu0 %v4460, 256
  %v4463 = vpop.permute.xlu0 %4462
  %s4465 = sor.u32 256, 8
  %4466 = vbcast.lane.b32.xlu0 %v4460, %s4465
  %v4467 = vpop.permute.xlu0 %4466
  %s4469 = sor.u32 256, 16
  %4470 = vbcast.lane.b32.xlu0 %v4460, %s4469
  %v4471 = vpop.permute.xlu0 %4470
  %s4473 = sor.u32 256, 24
  %4474 = vbcast.lane.b32.xlu0 %v4460, %s4473
  %v4475 = vpop.permute.xlu0 %4474
  %s4477 = sor.u32 256, 32
  %4478 = vbcast.lane.b32.xlu0 %v4460, %s4477
  %v4479 = vpop.permute.xlu0 %4478
  %s4481 = sor.u32 256, 40
  %4482 = vbcast.lane.b32.xlu0 %v4460, %s4481
  %v4483 = vpop.permute.xlu0 %4482
  %s4485 = sor.u32 256, 48
  %4486 = vbcast.lane.b32.xlu0 %v4460, %s4485
  %v4487 = vpop.permute.xlu0 %4486
  %s4489 = sor.u32 256, 56
  %4490 = vbcast.lane.b32.xlu0 %v4460, %s4489
  %v4491 = vpop.permute.xlu0 %4490
  %s4493 = sor.u32 256, 64
  %4494 = vbcast.lane.b32.xlu0 %v4460, %s4493
  %v4495 = vpop.permute.xlu0 %4494
  %s4497 = sor.u32 256, 72
  %4498 = vbcast.lane.b32.xlu0 %v4460, %s4497
  %v4499 = vpop.permute.xlu0 %4498
  %s4501 = sor.u32 256, 80
  %4502 = vbcast.lane.b32.xlu0 %v4460, %s4501
  %v4503 = vpop.permute.xlu0 %4502
  %s4505 = sor.u32 256, 88
  %4506 = vbcast.lane.b32.xlu0 %v4460, %s4505
  %v4507 = vpop.permute.xlu0 %4506
  %s4509 = sor.u32 256, 96
  %4510 = vbcast.lane.b32.xlu0 %v4460, %s4509
  %v4511 = vpop.permute.xlu0 %4510
  %s4513 = sor.u32 256, 104
  %4514 = vbcast.lane.b32.xlu0 %v4460, %s4513
  %v4515 = vpop.permute.xlu0 %4514
  %s4517 = sor.u32 256, 112
  %4518 = vbcast.lane.b32.xlu0 %v4460, %s4517
  %v4519 = vpop.permute.xlu0 %4518
  %s4521 = sor.u32 256, 120
  %4522 = vbcast.lane.b32.xlu0 %v4460, %s4521
  %v4523 = vpop.permute.xlu0 %4522
  %v4524 = vlaneseq
  %v4525 = vshrl.u32 %v4524, 7
  %v4526 = vsub.s32 2, %v4525
  %v4527 = vrot.slane %v4241, %v4526
  %4529 = vbcast.lane.b32.xlu0 %v4527, 256
  %v4530 = vpop.permute.xlu0 %4529
  %s4532 = sor.u32 256, 8
  %4533 = vbcast.lane.b32.xlu0 %v4527, %s4532
  %v4534 = vpop.permute.xlu0 %4533
  %s4536 = sor.u32 256, 16
  %4537 = vbcast.lane.b32.xlu0 %v4527, %s4536
  %v4538 = vpop.permute.xlu0 %4537
  %s4540 = sor.u32 256, 24
  %4541 = vbcast.lane.b32.xlu0 %v4527, %s4540
  %v4542 = vpop.permute.xlu0 %4541
  %s4544 = sor.u32 256, 32
  %4545 = vbcast.lane.b32.xlu0 %v4527, %s4544
  %v4546 = vpop.permute.xlu0 %4545
  %s4548 = sor.u32 256, 40
  %4549 = vbcast.lane.b32.xlu0 %v4527, %s4548
  %v4550 = vpop.permute.xlu0 %4549
  %s4552 = sor.u32 256, 48
  %4553 = vbcast.lane.b32.xlu0 %v4527, %s4552
  %v4554 = vpop.permute.xlu0 %4553
  %s4556 = sor.u32 256, 56
  %4557 = vbcast.lane.b32.xlu0 %v4527, %s4556
  %v4558 = vpop.permute.xlu0 %4557
  %s4560 = sor.u32 256, 64
  %4561 = vbcast.lane.b32.xlu0 %v4527, %s4560
  %v4562 = vpop.permute.xlu0 %4561
  %v4563 = vlaneseq
  %v4564 = vshrl.u32 %v4563, 7
  %v4565 = vsub.s32 3, %v4564
  %v4566 = vrot.slane %v4239, %v4565
  %4568 = vbcast.lane.b32.xlu0 %v4566, 256
  %v4569 = vpop.permute.xlu0 %4568
  %s4571 = sor.u32 256, 8
  %4572 = vbcast.lane.b32.xlu0 %v4566, %s4571
  %v4573 = vpop.permute.xlu0 %4572
  %s4575 = sor.u32 256, 16
  %4576 = vbcast.lane.b32.xlu0 %v4566, %s4575
  %v4577 = vpop.permute.xlu0 %4576
  %s4579 = sor.u32 256, 24
  %4580 = vbcast.lane.b32.xlu0 %v4566, %s4579
  %v4581 = vpop.permute.xlu0 %4580
  %s4583 = sor.u32 256, 32
  %4584 = vbcast.lane.b32.xlu0 %v4566, %s4583
  %v4585 = vpop.permute.xlu0 %4584
  %s4587 = sor.u32 256, 40
  %4588 = vbcast.lane.b32.xlu0 %v4566, %s4587
  %v4589 = vpop.permute.xlu0 %4588
  %s4591 = sor.u32 256, 48
  %4592 = vbcast.lane.b32.xlu0 %v4566, %s4591
  %v4593 = vpop.permute.xlu0 %4592
  %s4595 = sor.u32 256, 56
  %4596 = vbcast.lane.b32.xlu0 %v4566, %s4595
  %v4597 = vpop.permute.xlu0 %4596
  %s4599 = sor.u32 256, 64
  %4600 = vbcast.lane.b32.xlu0 %v4566, %s4599
  %v4601 = vpop.permute.xlu0 %4600
  %s4603 = sor.u32 256, 72
  %4604 = vbcast.lane.b32.xlu0 %v4566, %s4603
  %v4605 = vpop.permute.xlu0 %4604
  %s4607 = sor.u32 256, 80
  %4608 = vbcast.lane.b32.xlu0 %v4566, %s4607
  %v4609 = vpop.permute.xlu0 %4608
  %s4611 = sor.u32 256, 88
  %4612 = vbcast.lane.b32.xlu0 %v4566, %s4611
  %v4613 = vpop.permute.xlu0 %4612
  %s4615 = sor.u32 256, 96
  %4616 = vbcast.lane.b32.xlu0 %v4566, %s4615
  %v4617 = vpop.permute.xlu0 %4616
  %s4619 = sor.u32 256, 104
  %4620 = vbcast.lane.b32.xlu0 %v4566, %s4619
  %v4621 = vpop.permute.xlu0 %4620
  %s4623 = sor.u32 256, 112
  %4624 = vbcast.lane.b32.xlu0 %v4566, %s4623
  %v4625 = vpop.permute.xlu0 %4624
  %s4627 = sor.u32 256, 120
  %4628 = vbcast.lane.b32.xlu0 %v4566, %s4627
  %v4629 = vpop.permute.xlu0 %4628
  %v4630 = vlaneseq
  %v4631 = vshrl.u32 %v4630, 7
  %v4632 = vsub.s32 3, %v4631
  %v4633 = vrot.slane %v4241, %v4632
  %4635 = vbcast.lane.b32.xlu0 %v4633, 256
  %v4636 = vpop.permute.xlu0 %4635
  %s4638 = sor.u32 256, 8
  %4639 = vbcast.lane.b32.xlu0 %v4633, %s4638
  %v4640 = vpop.permute.xlu0 %4639
  %s4642 = sor.u32 256, 16
  %4643 = vbcast.lane.b32.xlu0 %v4633, %s4642
  %v4644 = vpop.permute.xlu0 %4643
  %s4646 = sor.u32 256, 24
  %4647 = vbcast.lane.b32.xlu0 %v4633, %s4646
  %v4648 = vpop.permute.xlu0 %4647
  %s4650 = sor.u32 256, 32
  %4651 = vbcast.lane.b32.xlu0 %v4633, %s4650
  %v4652 = vpop.permute.xlu0 %4651
  %s4654 = sor.u32 256, 40
  %4655 = vbcast.lane.b32.xlu0 %v4633, %s4654
  %v4656 = vpop.permute.xlu0 %4655
  %s4658 = sor.u32 256, 48
  %4659 = vbcast.lane.b32.xlu0 %v4633, %s4658
  %v4660 = vpop.permute.xlu0 %4659
  %s4662 = sor.u32 256, 56
  %4663 = vbcast.lane.b32.xlu0 %v4633, %s4662
  %v4664 = vpop.permute.xlu0 %4663
  %s4666 = sor.u32 256, 64
  %4667 = vbcast.lane.b32.xlu0 %v4633, %s4666
  %v4668 = vpop.permute.xlu0 %4667
  %v4669 = vlaneseq
  %v4670 = vshrl.u32 %v4669, 7
  %v4671 = vsub.s32 4, %v4670
  %v4672 = vrot.slane %v4239, %v4671
  %4674 = vbcast.lane.b32.xlu0 %v4672, 256
  %v4675 = vpop.permute.xlu0 %4674
  %s4677 = sor.u32 256, 8
  %4678 = vbcast.lane.b32.xlu0 %v4672, %s4677
  %v4679 = vpop.permute.xlu0 %4678
  %s4681 = sor.u32 256, 16
  %4682 = vbcast.lane.b32.xlu0 %v4672, %s4681
  %v4683 = vpop.permute.xlu0 %4682
  %s4685 = sor.u32 256, 24
  %4686 = vbcast.lane.b32.xlu0 %v4672, %s4685
  %v4687 = vpop.permute.xlu0 %4686
  %s4689 = sor.u32 256, 32
  %4690 = vbcast.lane.b32.xlu0 %v4672, %s4689
  %v4691 = vpop.permute.xlu0 %4690
  %s4693 = sor.u32 256, 40
  %4694 = vbcast.lane.b32.xlu0 %v4672, %s4693
  %v4695 = vpop.permute.xlu0 %4694
  %s4697 = sor.u32 256, 48
  %4698 = vbcast.lane.b32.xlu0 %v4672, %s4697
  %v4699 = vpop.permute.xlu0 %4698
  %s4701 = sor.u32 256, 56
  %4702 = vbcast.lane.b32.xlu0 %v4672, %s4701
  %v4703 = vpop.permute.xlu0 %4702
  %s4705 = sor.u32 256, 64
  %4706 = vbcast.lane.b32.xlu0 %v4672, %s4705
  %v4707 = vpop.permute.xlu0 %4706
  %s4709 = sor.u32 256, 72
  %4710 = vbcast.lane.b32.xlu0 %v4672, %s4709
  %v4711 = vpop.permute.xlu0 %4710
  %s4713 = sor.u32 256, 80
  %4714 = vbcast.lane.b32.xlu0 %v4672, %s4713
  %v4715 = vpop.permute.xlu0 %4714
  %s4717 = sor.u32 256, 88
  %4718 = vbcast.lane.b32.xlu0 %v4672, %s4717
  %v4719 = vpop.permute.xlu0 %4718
  %s4721 = sor.u32 256, 96
  %4722 = vbcast.lane.b32.xlu0 %v4672, %s4721
  %v4723 = vpop.permute.xlu0 %4722
  %s4725 = sor.u32 256, 104
  %4726 = vbcast.lane.b32.xlu0 %v4672, %s4725
  %v4727 = vpop.permute.xlu0 %4726
  %s4729 = sor.u32 256, 112
  %4730 = vbcast.lane.b32.xlu0 %v4672, %s4729
  %v4731 = vpop.permute.xlu0 %4730
  %s4733 = sor.u32 256, 120
  %4734 = vbcast.lane.b32.xlu0 %v4672, %s4733
  %v4735 = vpop.permute.xlu0 %4734
  %v4736 = vlaneseq
  %v4737 = vshrl.u32 %v4736, 7
  %v4738 = vsub.s32 4, %v4737
  %v4739 = vrot.slane %v4241, %v4738
  %4741 = vbcast.lane.b32.xlu0 %v4739, 256
  %v4742 = vpop.permute.xlu0 %4741
  %s4744 = sor.u32 256, 8
  %4745 = vbcast.lane.b32.xlu0 %v4739, %s4744
  %v4746 = vpop.permute.xlu0 %4745
  %s4748 = sor.u32 256, 16
  %4749 = vbcast.lane.b32.xlu0 %v4739, %s4748
  %v4750 = vpop.permute.xlu0 %4749
  %s4752 = sor.u32 256, 24
  %4753 = vbcast.lane.b32.xlu0 %v4739, %s4752
  %v4754 = vpop.permute.xlu0 %4753
  %s4756 = sor.u32 256, 32
  %4757 = vbcast.lane.b32.xlu0 %v4739, %s4756
  %v4758 = vpop.permute.xlu0 %4757
  %s4760 = sor.u32 256, 40
  %4761 = vbcast.lane.b32.xlu0 %v4739, %s4760
  %v4762 = vpop.permute.xlu0 %4761
  %s4764 = sor.u32 256, 48
  %4765 = vbcast.lane.b32.xlu0 %v4739, %s4764
  %v4766 = vpop.permute.xlu0 %4765
  %s4768 = sor.u32 256, 56
  %4769 = vbcast.lane.b32.xlu0 %v4739, %s4768
  %v4770 = vpop.permute.xlu0 %4769
  %s4772 = sor.u32 256, 64
  %4773 = vbcast.lane.b32.xlu0 %v4739, %s4772
  %v4774 = vpop.permute.xlu0 %4773
  %v4775 = vlaneseq
  %v4776 = vshrl.u32 %v4775, 7
  %v4777 = vsub.s32 5, %v4776
  %v4778 = vrot.slane %v4239, %v4777
  %4780 = vbcast.lane.b32.xlu0 %v4778, 256
  %v4781 = vpop.permute.xlu0 %4780
  %s4783 = sor.u32 256, 8
  %4784 = vbcast.lane.b32.xlu0 %v4778, %s4783
  %v4785 = vpop.permute.xlu0 %4784
  %s4787 = sor.u32 256, 16
  %4788 = vbcast.lane.b32.xlu0 %v4778, %s4787
  %v4789 = vpop.permute.xlu0 %4788
  %s4791 = sor.u32 256, 24
  %4792 = vbcast.lane.b32.xlu0 %v4778, %s4791
  %v4793 = vpop.permute.xlu0 %4792
  %s4795 = sor.u32 256, 32
  %4796 = vbcast.lane.b32.xlu0 %v4778, %s4795
  %v4797 = vpop.permute.xlu0 %4796
  %s4799 = sor.u32 256, 40
  %4800 = vbcast.lane.b32.xlu0 %v4778, %s4799
  %v4801 = vpop.permute.xlu0 %4800
  %s4803 = sor.u32 256, 48
  %4804 = vbcast.lane.b32.xlu0 %v4778, %s4803
  %v4805 = vpop.permute.xlu0 %4804
  %s4807 = sor.u32 256, 56
  %4808 = vbcast.lane.b32.xlu0 %v4778, %s4807
  %v4809 = vpop.permute.xlu0 %4808
  %s4811 = sor.u32 256, 64
  %4812 = vbcast.lane.b32.xlu0 %v4778, %s4811
  %v4813 = vpop.permute.xlu0 %4812
  %s4815 = sor.u32 256, 72
  %4816 = vbcast.lane.b32.xlu0 %v4778, %s4815
  %v4817 = vpop.permute.xlu0 %4816
  %s4819 = sor.u32 256, 80
  %4820 = vbcast.lane.b32.xlu0 %v4778, %s4819
  %v4821 = vpop.permute.xlu0 %4820
  %s4823 = sor.u32 256, 88
  %4824 = vbcast.lane.b32.xlu0 %v4778, %s4823
  %v4825 = vpop.permute.xlu0 %4824
  %s4827 = sor.u32 256, 96
  %4828 = vbcast.lane.b32.xlu0 %v4778, %s4827
  %v4829 = vpop.permute.xlu0 %4828
  %s4831 = sor.u32 256, 104
  %4832 = vbcast.lane.b32.xlu0 %v4778, %s4831
  %v4833 = vpop.permute.xlu0 %4832
  %s4835 = sor.u32 256, 112
  %4836 = vbcast.lane.b32.xlu0 %v4778, %s4835
  %v4837 = vpop.permute.xlu0 %4836
  %s4839 = sor.u32 256, 120
  %4840 = vbcast.lane.b32.xlu0 %v4778, %s4839
  %v4841 = vpop.permute.xlu0 %4840
  %v4842 = vlaneseq
  %v4843 = vshrl.u32 %v4842, 7
  %v4844 = vsub.s32 5, %v4843
  %v4845 = vrot.slane %v4241, %v4844
  %4847 = vbcast.lane.b32.xlu0 %v4845, 256
  %v4848 = vpop.permute.xlu0 %4847
  %s4850 = sor.u32 256, 8
  %4851 = vbcast.lane.b32.xlu0 %v4845, %s4850
  %v4852 = vpop.permute.xlu0 %4851
  %s4854 = sor.u32 256, 16
  %4855 = vbcast.lane.b32.xlu0 %v4845, %s4854
  %v4856 = vpop.permute.xlu0 %4855
  %s4858 = sor.u32 256, 24
  %4859 = vbcast.lane.b32.xlu0 %v4845, %s4858
  %v4860 = vpop.permute.xlu0 %4859
  %s4862 = sor.u32 256, 32
  %4863 = vbcast.lane.b32.xlu0 %v4845, %s4862
  %v4864 = vpop.permute.xlu0 %4863
  %s4866 = sor.u32 256, 40
  %4867 = vbcast.lane.b32.xlu0 %v4845, %s4866
  %v4868 = vpop.permute.xlu0 %4867
  %s4870 = sor.u32 256, 48
  %4871 = vbcast.lane.b32.xlu0 %v4845, %s4870
  %v4872 = vpop.permute.xlu0 %4871
  %s4874 = sor.u32 256, 56
  %4875 = vbcast.lane.b32.xlu0 %v4845, %s4874
  %v4876 = vpop.permute.xlu0 %4875
  %s4878 = sor.u32 256, 64
  %4879 = vbcast.lane.b32.xlu0 %v4845, %s4878
  %v4880 = vpop.permute.xlu0 %4879
  %v4881 = vlaneseq
  %v4882 = vshrl.u32 %v4881, 7
  %v4883 = vsub.s32 6, %v4882
  %v4884 = vrot.slane %v4239, %v4883
  %4886 = vbcast.lane.b32.xlu0 %v4884, 256
  %v4887 = vpop.permute.xlu0 %4886
  %s4889 = sor.u32 256, 8
  %4890 = vbcast.lane.b32.xlu0 %v4884, %s4889
  %v4891 = vpop.permute.xlu0 %4890
  %s4893 = sor.u32 256, 16
  %4894 = vbcast.lane.b32.xlu0 %v4884, %s4893
  %v4895 = vpop.permute.xlu0 %4894
  %s4897 = sor.u32 256, 24
  %4898 = vbcast.lane.b32.xlu0 %v4884, %s4897
  %v4899 = vpop.permute.xlu0 %4898
  %s4901 = sor.u32 256, 32
  %4902 = vbcast.lane.b32.xlu0 %v4884, %s4901
  %v4903 = vpop.permute.xlu0 %4902
  %s4905 = sor.u32 256, 40
  %4906 = vbcast.lane.b32.xlu0 %v4884, %s4905
  %v4907 = vpop.permute.xlu0 %4906
  %s4909 = sor.u32 256, 48
  %4910 = vbcast.lane.b32.xlu0 %v4884, %s4909
  %v4911 = vpop.permute.xlu0 %4910
  %s4913 = sor.u32 256, 56
  %4914 = vbcast.lane.b32.xlu0 %v4884, %s4913
  %v4915 = vpop.permute.xlu0 %4914
  %s4917 = sor.u32 256, 64
  %4918 = vbcast.lane.b32.xlu0 %v4884, %s4917
  %v4919 = vpop.permute.xlu0 %4918
  %s4921 = sor.u32 256, 72
  %4922 = vbcast.lane.b32.xlu0 %v4884, %s4921
  %v4923 = vpop.permute.xlu0 %4922
  %s4925 = sor.u32 256, 80
  %4926 = vbcast.lane.b32.xlu0 %v4884, %s4925
  %v4927 = vpop.permute.xlu0 %4926
  %s4929 = sor.u32 256, 88
  %4930 = vbcast.lane.b32.xlu0 %v4884, %s4929
  %v4931 = vpop.permute.xlu0 %4930
  %s4933 = sor.u32 256, 96
  %4934 = vbcast.lane.b32.xlu0 %v4884, %s4933
  %v4935 = vpop.permute.xlu0 %4934
  %s4937 = sor.u32 256, 104
  %4938 = vbcast.lane.b32.xlu0 %v4884, %s4937
  %v4939 = vpop.permute.xlu0 %4938
  %s4941 = sor.u32 256, 112
  %4942 = vbcast.lane.b32.xlu0 %v4884, %s4941
  %v4943 = vpop.permute.xlu0 %4942
  %s4945 = sor.u32 256, 120
  %4946 = vbcast.lane.b32.xlu0 %v4884, %s4945
  %v4947 = vpop.permute.xlu0 %4946
  %v4948 = vlaneseq
  %v4949 = vshrl.u32 %v4948, 7
  %v4950 = vsub.s32 6, %v4949
  %v4951 = vrot.slane %v4241, %v4950
  %4953 = vbcast.lane.b32.xlu0 %v4951, 256
  %v4954 = vpop.permute.xlu0 %4953
  %s4956 = sor.u32 256, 8
  %4957 = vbcast.lane.b32.xlu0 %v4951, %s4956
  %v4958 = vpop.permute.xlu0 %4957
  %s4960 = sor.u32 256, 16
  %4961 = vbcast.lane.b32.xlu0 %v4951, %s4960
  %v4962 = vpop.permute.xlu0 %4961
  %s4964 = sor.u32 256, 24
  %4965 = vbcast.lane.b32.xlu0 %v4951, %s4964
  %v4966 = vpop.permute.xlu0 %4965
  %s4968 = sor.u32 256, 32
  %4969 = vbcast.lane.b32.xlu0 %v4951, %s4968
  %v4970 = vpop.permute.xlu0 %4969
  %s4972 = sor.u32 256, 40
  %4973 = vbcast.lane.b32.xlu0 %v4951, %s4972
  %v4974 = vpop.permute.xlu0 %4973
  %s4976 = sor.u32 256, 48
  %4977 = vbcast.lane.b32.xlu0 %v4951, %s4976
  %v4978 = vpop.permute.xlu0 %4977
  %s4980 = sor.u32 256, 56
  %4981 = vbcast.lane.b32.xlu0 %v4951, %s4980
  %v4982 = vpop.permute.xlu0 %4981
  %s4984 = sor.u32 256, 64
  %4985 = vbcast.lane.b32.xlu0 %v4951, %s4984
  %v4986 = vpop.permute.xlu0 %4985
  %v4987 = vlaneseq
  %v4988 = vshrl.u32 %v4987, 7
  %v4989 = vsub.s32 7, %v4988
  %v4990 = vrot.slane %v4239, %v4989
  %4992 = vbcast.lane.b32.xlu0 %v4990, 256
  %v4993 = vpop.permute.xlu0 %4992
  %s4995 = sor.u32 256, 8
  %4996 = vbcast.lane.b32.xlu0 %v4990, %s4995
  %v4997 = vpop.permute.xlu0 %4996
  %s4999 = sor.u32 256, 16
  %5000 = vbcast.lane.b32.xlu0 %v4990, %s4999
  %v5001 = vpop.permute.xlu0 %5000
  %s5003 = sor.u32 256, 24
  %5004 = vbcast.lane.b32.xlu0 %v4990, %s5003
  %v5005 = vpop.permute.xlu0 %5004
  %s5007 = sor.u32 256, 32
  %5008 = vbcast.lane.b32.xlu0 %v4990, %s5007
  %v5009 = vpop.permute.xlu0 %5008
  %s5011 = sor.u32 256, 40
  %5012 = vbcast.lane.b32.xlu0 %v4990, %s5011
  %v5013 = vpop.permute.xlu0 %5012
  %s5015 = sor.u32 256, 48
  %5016 = vbcast.lane.b32.xlu0 %v4990, %s5015
  %v5017 = vpop.permute.xlu0 %5016
  %s5019 = sor.u32 256, 56
  %5020 = vbcast.lane.b32.xlu0 %v4990, %s5019
  %v5021 = vpop.permute.xlu0 %5020
  %s5023 = sor.u32 256, 64
  %5024 = vbcast.lane.b32.xlu0 %v4990, %s5023
  %v5025 = vpop.permute.xlu0 %5024
  %s5027 = sor.u32 256, 72
  %5028 = vbcast.lane.b32.xlu0 %v4990, %s5027
  %v5029 = vpop.permute.xlu0 %5028
  %s5031 = sor.u32 256, 80
  %5032 = vbcast.lane.b32.xlu0 %v4990, %s5031
  %v5033 = vpop.permute.xlu0 %5032
  %s5035 = sor.u32 256, 88
  %5036 = vbcast.lane.b32.xlu0 %v4990, %s5035
  %v5037 = vpop.permute.xlu0 %5036
  %s5039 = sor.u32 256, 96
  %5040 = vbcast.lane.b32.xlu0 %v4990, %s5039
  %v5041 = vpop.permute.xlu0 %5040
  %s5043 = sor.u32 256, 104
  %5044 = vbcast.lane.b32.xlu0 %v4990, %s5043
  %v5045 = vpop.permute.xlu0 %5044
  %s5047 = sor.u32 256, 112
  %5048 = vbcast.lane.b32.xlu0 %v4990, %s5047
  %v5049 = vpop.permute.xlu0 %5048
  %s5051 = sor.u32 256, 120
  %5052 = vbcast.lane.b32.xlu0 %v4990, %s5051
  %v5053 = vpop.permute.xlu0 %5052
  %v5054 = vlaneseq
  %v5055 = vshrl.u32 %v5054, 7
  %v5056 = vsub.s32 7, %v5055
  %v5057 = vrot.slane %v4241, %v5056
  %5059 = vbcast.lane.b32.xlu0 %v5057, 256
  %v5060 = vpop.permute.xlu0 %5059
  %s5062 = sor.u32 256, 8
  %5063 = vbcast.lane.b32.xlu0 %v5057, %s5062
  %v5064 = vpop.permute.xlu0 %5063
  %s5066 = sor.u32 256, 16
  %5067 = vbcast.lane.b32.xlu0 %v5057, %s5066
  %v5068 = vpop.permute.xlu0 %5067
  %s5070 = sor.u32 256, 24
  %5071 = vbcast.lane.b32.xlu0 %v5057, %s5070
  %v5072 = vpop.permute.xlu0 %5071
  %s5074 = sor.u32 256, 32
  %5075 = vbcast.lane.b32.xlu0 %v5057, %s5074
  %v5076 = vpop.permute.xlu0 %5075
  %s5078 = sor.u32 256, 40
  %5079 = vbcast.lane.b32.xlu0 %v5057, %s5078
  %v5080 = vpop.permute.xlu0 %5079
  %s5082 = sor.u32 256, 48
  %5083 = vbcast.lane.b32.xlu0 %v5057, %s5082
  %v5084 = vpop.permute.xlu0 %5083
  %s5086 = sor.u32 256, 56
  %5087 = vbcast.lane.b32.xlu0 %v5057, %s5086
  %v5088 = vpop.permute.xlu0 %5087
  %s5090 = sor.u32 256, 64
  %5091 = vbcast.lane.b32.xlu0 %v5057, %s5090
  %v5092 = vpop.permute.xlu0 %5091
  %v5095 = vcombine.low %v4059, %v4061
  %v5096 = vcombine.high %v4059, %v4061
  %v5098 = vunpack.c.l.s4 1966171168
  %v5099 = vunpack.c.0.s8 %v5098
  %v5100 = vlaneseq
  %v5101 = vshrl.u32 %v5100, 7
  %v5102 = vsub.s32 %v5099, %v5101
  %v5103 = vrot.slane %v5095, %v5102
  %v5105 = vunpack.c.l.s4 1966171168
  %v5106 = vunpack.c.0.s8 %v5105
  %v5107 = vlaneseq
  %v5108 = vshrl.u32 %v5107, 7
  %v5109 = vsub.s32 %v5106, %v5108
  %v5110 = vrot.slane %v5096, %v5109
  %v5111 = vcombine.high %v5103, %v5103
  %v5112 = vcombine.high %v5110, %v5110
  %v5114 = vunpack.c.l.s4 1966171168
  %v5115 = vunpack.c.0.s8 %v5114
  %v5116 = vlaneseq
  %v5117 = vshrl.u32 %v5116, 7
  %v5118 = vsub.s32 %v5115, %v5117
  %v5119 = vrot.slane %v5103, %v5118
  %v5121 = vunpack.c.l.s4 1966171168
  %v5122 = vunpack.c.0.s8 %v5121
  %v5123 = vlaneseq
  %v5124 = vshrl.u32 %v5123, 7
  %v5125 = vsub.s32 %v5122, %v5124
  %v5126 = vrot.slane %v5110, %v5125
  %v5128 = vunpack.c.l.s4 1966171168
  %v5129 = vunpack.c.0.s8 %v5128
  %v5130 = vlaneseq
  %v5131 = vshrl.u32 %v5130, 7
  %v5132 = vsub.s32 %v5129, %v5131
  %v5133 = vrot.slane %v5111, %v5132
  %v5135 = vunpack.c.l.s4 1966171168
  %v5136 = vunpack.c.0.s8 %v5135
  %v5137 = vlaneseq
  %v5138 = vshrl.u32 %v5137, 7
  %v5139 = vsub.s32 %v5136, %v5138
  %v5140 = vrot.slane %v5112, %v5139
  %v5141 = vcombine.high %v5119, %v5119
  %v5142 = vcombine.high %v5126, %v5126
  %v5143 = vcombine.high %v5133, %v5133
  %v5144 = vcombine.high %v5140, %v5140
  %v5145 = vlaneseq
  %v5146 = vshrl.u32 %v5145, 7
  %v5147 = vsub.s32 0, %v5146
  %v5148 = vrot.slane %v5119, %v5147
  %v5149 = vlaneseq
  %v5150 = vshrl.u32 %v5149, 7
  %v5151 = vsub.s32 1, %v5150
  %v5152 = vrot.slane %v5119, %v5151
  %v5153 = vlaneseq
  %v5154 = vshrl.u32 %v5153, 7
  %v5155 = vsub.s32 0, %v5154
  %v5156 = vrot.slane %v5133, %v5155
  %v5157 = vlaneseq
  %v5158 = vshrl.u32 %v5157, 7
  %v5159 = vsub.s32 1, %v5158
  %v5160 = vrot.slane %v5133, %v5159
  %v5161 = vlaneseq
  %v5162 = vshrl.u32 %v5161, 7
  %v5163 = vsub.s32 0, %v5162
  %v5164 = vrot.slane %v5141, %v5163
  %v5165 = vlaneseq
  %v5166 = vshrl.u32 %v5165, 7
  %v5167 = vsub.s32 1, %v5166
  %v5168 = vrot.slane %v5141, %v5167
  %v5169 = vlaneseq
  %v5170 = vshrl.u32 %v5169, 7
  %v5171 = vsub.s32 0, %v5170
  %v5172 = vrot.slane %v5143, %v5171
  %v5173 = vlaneseq
  %v5174 = vshrl.u32 %v5173, 7
  %v5175 = vsub.s32 1, %v5174
  %v5176 = vrot.slane %v5143, %v5175
  %v5177 = vlaneseq
  %v5178 = vshrl.u32 %v5177, 7
  %v5179 = vsub.s32 0, %v5178
  %v5180 = vrot.slane %v5126, %v5179
  %v5181 = vlaneseq
  %v5182 = vshrl.u32 %v5181, 7
  %v5183 = vsub.s32 1, %v5182
  %v5184 = vrot.slane %v5126, %v5183
  %v5185 = vlaneseq
  %v5186 = vshrl.u32 %v5185, 7
  %v5187 = vsub.s32 0, %v5186
  %v5188 = vrot.slane %v5140, %v5187
  %v5189 = vlaneseq
  %v5190 = vshrl.u32 %v5189, 7
  %v5191 = vsub.s32 1, %v5190
  %v5192 = vrot.slane %v5140, %v5191
  %v5193 = vlaneseq
  %v5194 = vshrl.u32 %v5193, 7
  %v5195 = vsub.s32 0, %v5194
  %v5196 = vrot.slane %v5142, %v5195
  %v5197 = vlaneseq
  %v5198 = vshrl.u32 %v5197, 7
  %v5199 = vsub.s32 1, %v5198
  %v5200 = vrot.slane %v5142, %v5199
  %v5201 = vlaneseq
  %v5202 = vshrl.u32 %v5201, 7
  %v5203 = vsub.s32 0, %v5202
  %v5204 = vrot.slane %v5144, %v5203
  %v5205 = vlaneseq
  %v5206 = vshrl.u32 %v5205, 7
  %v5207 = vsub.s32 1, %v5206
  %v5208 = vrot.slane %v5144, %v5207
  %v5225 = vadd.f32 %v4251, %v5148
  %v5226 = vadd.f32 %v4251, %v5152
  %v5227 = vadd.f32 %v4255, %v5148
  %v5228 = vadd.f32 %v4255, %v5152
  %v5229 = vadd.f32 %v4259, %v5148
  %v5230 = vadd.f32 %v4259, %v5152
  %v5231 = vadd.f32 %v4263, %v5148
  %v5232 = vadd.f32 %v4263, %v5152
  %v5233 = vadd.f32 %v4267, %v5148
  %v5234 = vadd.f32 %v4267, %v5152
  %v5235 = vadd.f32 %v4271, %v5148
  %v5236 = vadd.f32 %v4271, %v5152
  %v5237 = vadd.f32 %v4275, %v5148
  %v5238 = vadd.f32 %v4275, %v5152
  %v5239 = vadd.f32 %v4279, %v5148
  %v5240 = vadd.f32 %v4279, %v5152
  %v5241 = vadd.f32 %v4283, %v5148
  %v5242 = vadd.f32 %v4283, %v5152
  %v5243 = vadd.f32 %v4287, %v5148
  %v5244 = vadd.f32 %v4287, %v5152
  %v5245 = vadd.f32 %v4291, %v5148
  %v5246 = vadd.f32 %v4291, %v5152
  %v5247 = vadd.f32 %v4295, %v5148
  %v5248 = vadd.f32 %v4295, %v5152
  %v5249 = vadd.f32 %v4299, %v5148
  %v5250 = vadd.f32 %v4299, %v5152
  %v5251 = vadd.f32 %v4303, %v5148
  %v5252 = vadd.f32 %v4303, %v5152
  %v5253 = vadd.f32 %v4307, %v5148
  %v5254 = vadd.f32 %v4307, %v5152
  %v5255 = vadd.f32 %v4311, %v5148
  %v5256 = vadd.f32 %v4311, %v5152
  %v5257 = vadd.f32 %v4318, %v5148
  %v5258 = vadd.f32 %v4318, %v5152
  %v5259 = vadd.f32 %v4322, %v5148
  %v5260 = vadd.f32 %v4322, %v5152
  %v5261 = vadd.f32 %v4326, %v5148
  %v5262 = vadd.f32 %v4326, %v5152
  %v5263 = vadd.f32 %v4330, %v5148
  %v5264 = vadd.f32 %v4330, %v5152
  %v5265 = vadd.f32 %v4334, %v5148
  %v5266 = vadd.f32 %v4334, %v5152
  %v5267 = vadd.f32 %v4338, %v5148
  %v5268 = vadd.f32 %v4338, %v5152
  %v5269 = vadd.f32 %v4342, %v5148
  %v5270 = vadd.f32 %v4342, %v5152
  %v5271 = vadd.f32 %v4346, %v5148
  %v5272 = vadd.f32 %v4346, %v5152
  %v5273 = vadd.f32 %v4350, %v5148
  %v5274 = vadd.f32 %v4350, %v5152
  %v5275 = vadd.f32 %v4357, %v5156
  %v5276 = vadd.f32 %v4357, %v5160
  %v5277 = vadd.f32 %v4361, %v5156
  %v5278 = vadd.f32 %v4361, %v5160
  %v5279 = vadd.f32 %v4365, %v5156
  %v5280 = vadd.f32 %v4365, %v5160
  %v5281 = vadd.f32 %v4369, %v5156
  %v5282 = vadd.f32 %v4369, %v5160
  %v5283 = vadd.f32 %v4373, %v5156
  %v5284 = vadd.f32 %v4373, %v5160
  %v5285 = vadd.f32 %v4377, %v5156
  %v5286 = vadd.f32 %v4377, %v5160
  %v5287 = vadd.f32 %v4381, %v5156
  %v5288 = vadd.f32 %v4381, %v5160
  %v5289 = vadd.f32 %v4385, %v5156
  %v5290 = vadd.f32 %v4385, %v5160
  %v5291 = vadd.f32 %v4389, %v5156
  %v5292 = vadd.f32 %v4389, %v5160
  %v5293 = vadd.f32 %v4393, %v5156
  %v5294 = vadd.f32 %v4393, %v5160
  %v5295 = vadd.f32 %v4397, %v5156
  %v5296 = vadd.f32 %v4397, %v5160
  %v5297 = vadd.f32 %v4401, %v5156
  %v5298 = vadd.f32 %v4401, %v5160
  %v5299 = vadd.f32 %v4405, %v5156
  %v5300 = vadd.f32 %v4405, %v5160
  %v5301 = vadd.f32 %v4409, %v5156
  %v5302 = vadd.f32 %v4409, %v5160
  %v5303 = vadd.f32 %v4413, %v5156
  %v5304 = vadd.f32 %v4413, %v5160
  %v5305 = vadd.f32 %v4417, %v5156
  %v5306 = vadd.f32 %v4417, %v5160
  %v5307 = vadd.f32 %v4424, %v5156
  %v5308 = vadd.f32 %v4424, %v5160
  %v5309 = vadd.f32 %v4428, %v5156
  %v5310 = vadd.f32 %v4428, %v5160
  %v5311 = vadd.f32 %v4432, %v5156
  %v5312 = vadd.f32 %v4432, %v5160
  %v5313 = vadd.f32 %v4436, %v5156
  %v5314 = vadd.f32 %v4436, %v5160
  %v5315 = vadd.f32 %v4440, %v5156
  %v5316 = vadd.f32 %v4440, %v5160
  %v5317 = vadd.f32 %v4444, %v5156
  %v5318 = vadd.f32 %v4444, %v5160
  %v5319 = vadd.f32 %v4448, %v5156
  %v5320 = vadd.f32 %v4448, %v5160
  %v5321 = vadd.f32 %v4452, %v5156
  %v5322 = vadd.f32 %v4452, %v5160
  %v5323 = vadd.f32 %v4456, %v5156
  %v5324 = vadd.f32 %v4456, %v5160
  %v5325 = vadd.f32 %v4463, %v5164
  %v5326 = vadd.f32 %v4463, %v5168
  %v5327 = vadd.f32 %v4467, %v5164
  %v5328 = vadd.f32 %v4467, %v5168
  %v5329 = vadd.f32 %v4471, %v5164
  %v5330 = vadd.f32 %v4471, %v5168
  %v5331 = vadd.f32 %v4475, %v5164
  %v5332 = vadd.f32 %v4475, %v5168
  %v5333 = vadd.f32 %v4479, %v5164
  %v5334 = vadd.f32 %v4479, %v5168
  %v5335 = vadd.f32 %v4483, %v5164
  %v5336 = vadd.f32 %v4483, %v5168
  %v5337 = vadd.f32 %v4487, %v5164
  %v5338 = vadd.f32 %v4487, %v5168
  %v5339 = vadd.f32 %v4491, %v5164
  %v5340 = vadd.f32 %v4491, %v5168
  %v5341 = vadd.f32 %v4495, %v5164
  %v5342 = vadd.f32 %v4495, %v5168
  %v5343 = vadd.f32 %v4499, %v5164
  %v5344 = vadd.f32 %v4499, %v5168
  %v5345 = vadd.f32 %v4503, %v5164
  %v5346 = vadd.f32 %v4503, %v5168
  %v5347 = vadd.f32 %v4507, %v5164
  %v5348 = vadd.f32 %v4507, %v5168
  %v5349 = vadd.f32 %v4511, %v5164
  %v5350 = vadd.f32 %v4511, %v5168
  %v5351 = vadd.f32 %v4515, %v5164
  %v5352 = vadd.f32 %v4515, %v5168
  %v5353 = vadd.f32 %v4519, %v5164
  %v5354 = vadd.f32 %v4519, %v5168
  %v5355 = vadd.f32 %v4523, %v5164
  %v5356 = vadd.f32 %v4523, %v5168
  %v5357 = vadd.f32 %v4530, %v5164
  %v5358 = vadd.f32 %v4530, %v5168
  %v5359 = vadd.f32 %v4534, %v5164
  %v5360 = vadd.f32 %v4534, %v5168
  %v5361 = vadd.f32 %v4538, %v5164
  %v5362 = vadd.f32 %v4538, %v5168
  %v5363 = vadd.f32 %v4542, %v5164
  %v5364 = vadd.f32 %v4542, %v5168
  %v5365 = vadd.f32 %v4546, %v5164
  %v5366 = vadd.f32 %v4546, %v5168
  %v5367 = vadd.f32 %v4550, %v5164
  %v5368 = vadd.f32 %v4550, %v5168
  %v5369 = vadd.f32 %v4554, %v5164
  %v5370 = vadd.f32 %v4554, %v5168
  %v5371 = vadd.f32 %v4558, %v5164
  %v5372 = vadd.f32 %v4558, %v5168
  %v5373 = vadd.f32 %v4562, %v5164
  %v5374 = vadd.f32 %v4562, %v5168
  %v5375 = vadd.f32 %v4569, %v5172
  %v5376 = vadd.f32 %v4569, %v5176
  %v5377 = vadd.f32 %v4573, %v5172
  %v5378 = vadd.f32 %v4573, %v5176
  %v5379 = vadd.f32 %v4577, %v5172
  %v5380 = vadd.f32 %v4577, %v5176
  %v5381 = vadd.f32 %v4581, %v5172
  %v5382 = vadd.f32 %v4581, %v5176
  %v5383 = vadd.f32 %v4585, %v5172
  %v5384 = vadd.f32 %v4585, %v5176
  %v5385 = vadd.f32 %v4589, %v5172
  %v5386 = vadd.f32 %v4589, %v5176
  %v5387 = vadd.f32 %v4593, %v5172
  %v5388 = vadd.f32 %v4593, %v5176
  %v5389 = vadd.f32 %v4597, %v5172
  %v5390 = vadd.f32 %v4597, %v5176
  %v5391 = vadd.f32 %v4601, %v5172
  %v5392 = vadd.f32 %v4601, %v5176
  %v5393 = vadd.f32 %v4605, %v5172
  %v5394 = vadd.f32 %v4605, %v5176
  %v5395 = vadd.f32 %v4609, %v5172
  %v5396 = vadd.f32 %v4609, %v5176
  %v5397 = vadd.f32 %v4613, %v5172
  %v5398 = vadd.f32 %v4613, %v5176
  %v5399 = vadd.f32 %v4617, %v5172
  %v5400 = vadd.f32 %v4617, %v5176
  %v5401 = vadd.f32 %v4621, %v5172
  %v5402 = vadd.f32 %v4621, %v5176
  %v5403 = vadd.f32 %v4625, %v5172
  %v5404 = vadd.f32 %v4625, %v5176
  %v5405 = vadd.f32 %v4629, %v5172
  %v5406 = vadd.f32 %v4629, %v5176
  %v5407 = vadd.f32 %v4636, %v5172
  %v5408 = vadd.f32 %v4636, %v5176
  %v5409 = vadd.f32 %v4640, %v5172
  %v5410 = vadd.f32 %v4640, %v5176
  %v5411 = vadd.f32 %v4644, %v5172
  %v5412 = vadd.f32 %v4644, %v5176
  %v5413 = vadd.f32 %v4648, %v5172
  %v5414 = vadd.f32 %v4648, %v5176
  %v5415 = vadd.f32 %v4652, %v5172
  %v5416 = vadd.f32 %v4652, %v5176
  %v5417 = vadd.f32 %v4656, %v5172
  %v5418 = vadd.f32 %v4656, %v5176
  %v5419 = vadd.f32 %v4660, %v5172
  %v5420 = vadd.f32 %v4660, %v5176
  %v5421 = vadd.f32 %v4664, %v5172
  %v5422 = vadd.f32 %v4664, %v5176
  %v5423 = vadd.f32 %v4668, %v5172
  %v5424 = vadd.f32 %v4668, %v5176
  %v5425 = vadd.f32 %v4675, %v5180
  %v5426 = vadd.f32 %v4675, %v5184
  %v5427 = vadd.f32 %v4679, %v5180
  %v5428 = vadd.f32 %v4679, %v5184
  %v5429 = vadd.f32 %v4683, %v5180
  %v5430 = vadd.f32 %v4683, %v5184
  %v5431 = vadd.f32 %v4687, %v5180
  %v5432 = vadd.f32 %v4687, %v5184
  %v5433 = vadd.f32 %v4691, %v5180
  %v5434 = vadd.f32 %v4691, %v5184
  %v5435 = vadd.f32 %v4695, %v5180
  %v5436 = vadd.f32 %v4695, %v5184
  %v5437 = vadd.f32 %v4699, %v5180
  %v5438 = vadd.f32 %v4699, %v5184
  %v5439 = vadd.f32 %v4703, %v5180
  %v5440 = vadd.f32 %v4703, %v5184
  %v5441 = vadd.f32 %v4707, %v5180
  %v5442 = vadd.f32 %v4707, %v5184
  %v5443 = vadd.f32 %v4711, %v5180
  %v5444 = vadd.f32 %v4711, %v5184
  %v5445 = vadd.f32 %v4715, %v5180
  %v5446 = vadd.f32 %v4715, %v5184
  %v5447 = vadd.f32 %v4719, %v5180
  %v5448 = vadd.f32 %v4719, %v5184
  %v5449 = vadd.f32 %v4723, %v5180
  %v5450 = vadd.f32 %v4723, %v5184
  %v5451 = vadd.f32 %v4727, %v5180
  %v5452 = vadd.f32 %v4727, %v5184
  %v5453 = vadd.f32 %v4731, %v5180
  %v5454 = vadd.f32 %v4731, %v5184
  %v5455 = vadd.f32 %v4735, %v5180
  %v5456 = vadd.f32 %v4735, %v5184
  %v5457 = vadd.f32 %v4742, %v5180
  %v5458 = vadd.f32 %v4742, %v5184
  %v5459 = vadd.f32 %v4746, %v5180
  %v5460 = vadd.f32 %v4746, %v5184
  %v5461 = vadd.f32 %v4750, %v5180
  %v5462 = vadd.f32 %v4750, %v5184
  %v5463 = vadd.f32 %v4754, %v5180
  %v5464 = vadd.f32 %v4754, %v5184
  %v5465 = vadd.f32 %v4758, %v5180
  %v5466 = vadd.f32 %v4758, %v5184
  %v5467 = vadd.f32 %v4762, %v5180
  %v5468 = vadd.f32 %v4762, %v5184
  %v5469 = vadd.f32 %v4766, %v5180
  %v5470 = vadd.f32 %v4766, %v5184
  %v5471 = vadd.f32 %v4770, %v5180
  %v5472 = vadd.f32 %v4770, %v5184
  %v5473 = vadd.f32 %v4774, %v5180
  %v5474 = vadd.f32 %v4774, %v5184
  %v5475 = vadd.f32 %v4781, %v5188
  %v5476 = vadd.f32 %v4781, %v5192
  %v5477 = vadd.f32 %v4785, %v5188
  %v5478 = vadd.f32 %v4785, %v5192
  %v5479 = vadd.f32 %v4789, %v5188
  %v5480 = vadd.f32 %v4789, %v5192
  %v5481 = vadd.f32 %v4793, %v5188
  %v5482 = vadd.f32 %v4793, %v5192
  %v5483 = vadd.f32 %v4797, %v5188
  %v5484 = vadd.f32 %v4797, %v5192
  %v5485 = vadd.f32 %v4801, %v5188
  %v5486 = vadd.f32 %v4801, %v5192
  %v5487 = vadd.f32 %v4805, %v5188
  %v5488 = vadd.f32 %v4805, %v5192
  %v5489 = vadd.f32 %v4809, %v5188
  %v5490 = vadd.f32 %v4809, %v5192
  %v5491 = vadd.f32 %v4813, %v5188
  %v5492 = vadd.f32 %v4813, %v5192
  %v5493 = vadd.f32 %v4817, %v5188
  %v5494 = vadd.f32 %v4817, %v5192
  %v5495 = vadd.f32 %v4821, %v5188
  %v5496 = vadd.f32 %v4821, %v5192
  %v5497 = vadd.f32 %v4825, %v5188
  %v5498 = vadd.f32 %v4825, %v5192
  %v5499 = vadd.f32 %v4829, %v5188
  %v5500 = vadd.f32 %v4829, %v5192
  %v5501 = vadd.f32 %v4833, %v5188
  %v5502 = vadd.f32 %v4833, %v5192
  %v5503 = vadd.f32 %v4837, %v5188
  %v5504 = vadd.f32 %v4837, %v5192
  %v5505 = vadd.f32 %v4841, %v5188
  %v5506 = vadd.f32 %v4841, %v5192
  %v5507 = vadd.f32 %v4848, %v5188
  %v5508 = vadd.f32 %v4848, %v5192
  %v5509 = vadd.f32 %v4852, %v5188
  %v5510 = vadd.f32 %v4852, %v5192
  %v5511 = vadd.f32 %v4856, %v5188
  %v5512 = vadd.f32 %v4856, %v5192
  %v5513 = vadd.f32 %v4860, %v5188
  %v5514 = vadd.f32 %v4860, %v5192
  %v5515 = vadd.f32 %v4864, %v5188
  %v5516 = vadd.f32 %v4864, %v5192
  %v5517 = vadd.f32 %v4868, %v5188
  %v5518 = vadd.f32 %v4868, %v5192
  %v5519 = vadd.f32 %v4872, %v5188
  %v5520 = vadd.f32 %v4872, %v5192
  %v5521 = vadd.f32 %v4876, %v5188
  %v5522 = vadd.f32 %v4876, %v5192
  %v5523 = vadd.f32 %v4880, %v5188
  %v5524 = vadd.f32 %v4880, %v5192
  %v5525 = vadd.f32 %v4887, %v5196
  %v5526 = vadd.f32 %v4887, %v5200
  %v5527 = vadd.f32 %v4891, %v5196
  %v5528 = vadd.f32 %v4891, %v5200
  %v5529 = vadd.f32 %v4895, %v5196
  %v5530 = vadd.f32 %v4895, %v5200
  %v5531 = vadd.f32 %v4899, %v5196
  %v5532 = vadd.f32 %v4899, %v5200
  %v5533 = vadd.f32 %v4903, %v5196
  %v5534 = vadd.f32 %v4903, %v5200
  %v5535 = vadd.f32 %v4907, %v5196
  %v5536 = vadd.f32 %v4907, %v5200
  %v5537 = vadd.f32 %v4911, %v5196
  %v5538 = vadd.f32 %v4911, %v5200
  %v5539 = vadd.f32 %v4915, %v5196
  %v5540 = vadd.f32 %v4915, %v5200
  %v5541 = vadd.f32 %v4919, %v5196
  %v5542 = vadd.f32 %v4919, %v5200
  %v5543 = vadd.f32 %v4923, %v5196
  %v5544 = vadd.f32 %v4923, %v5200
  %v5545 = vadd.f32 %v4927, %v5196
  %v5546 = vadd.f32 %v4927, %v5200
  %v5547 = vadd.f32 %v4931, %v5196
  %v5548 = vadd.f32 %v4931, %v5200
  %v5549 = vadd.f32 %v4935, %v5196
  %v5550 = vadd.f32 %v4935, %v5200
  %v5551 = vadd.f32 %v4939, %v5196
  %v5552 = vadd.f32 %v4939, %v5200
  %v5553 = vadd.f32 %v4943, %v5196
  %v5554 = vadd.f32 %v4943, %v5200
  %v5555 = vadd.f32 %v4947, %v5196
  %v5556 = vadd.f32 %v4947, %v5200
  %v5557 = vadd.f32 %v4954, %v5196
  %v5558 = vadd.f32 %v4954, %v5200
  %v5559 = vadd.f32 %v4958, %v5196
  %v5560 = vadd.f32 %v4958, %v5200
  %v5561 = vadd.f32 %v4962, %v5196
  %v5562 = vadd.f32 %v4962, %v5200
  %v5563 = vadd.f32 %v4966, %v5196
  %v5564 = vadd.f32 %v4966, %v5200
  %v5565 = vadd.f32 %v4970, %v5196
  %v5566 = vadd.f32 %v4970, %v5200
  %v5567 = vadd.f32 %v4974, %v5196
  %v5568 = vadd.f32 %v4974, %v5200
  %v5569 = vadd.f32 %v4978, %v5196
  %v5570 = vadd.f32 %v4978, %v5200
  %v5571 = vadd.f32 %v4982, %v5196
  %v5572 = vadd.f32 %v4982, %v5200
  %v5573 = vadd.f32 %v4986, %v5196
  %v5574 = vadd.f32 %v4986, %v5200
  %v5575 = vadd.f32 %v4993, %v5204
  %v5576 = vadd.f32 %v4993, %v5208
  %v5577 = vadd.f32 %v4997, %v5204
  %v5578 = vadd.f32 %v4997, %v5208
  %v5579 = vadd.f32 %v5001, %v5204
  %v5580 = vadd.f32 %v5001, %v5208
  %v5581 = vadd.f32 %v5005, %v5204
  %v5582 = vadd.f32 %v5005, %v5208
  %v5583 = vadd.f32 %v5009, %v5204
  %v5584 = vadd.f32 %v5009, %v5208
  %v5585 = vadd.f32 %v5013, %v5204
  %v5586 = vadd.f32 %v5013, %v5208
  %v5587 = vadd.f32 %v5017, %v5204
  %v5588 = vadd.f32 %v5017, %v5208
  %v5589 = vadd.f32 %v5021, %v5204
  %v5590 = vadd.f32 %v5021, %v5208
  %v5591 = vadd.f32 %v5025, %v5204
  %v5592 = vadd.f32 %v5025, %v5208
  %v5593 = vadd.f32 %v5029, %v5204
  %v5594 = vadd.f32 %v5029, %v5208
  %v5595 = vadd.f32 %v5033, %v5204
  %v5596 = vadd.f32 %v5033, %v5208
  %v5597 = vadd.f32 %v5037, %v5204
  %v5598 = vadd.f32 %v5037, %v5208
  %v5599 = vadd.f32 %v5041, %v5204
  %v5600 = vadd.f32 %v5041, %v5208
  %v5601 = vadd.f32 %v5045, %v5204
  %v5602 = vadd.f32 %v5045, %v5208
  %v5603 = vadd.f32 %v5049, %v5204
  %v5604 = vadd.f32 %v5049, %v5208
  %v5605 = vadd.f32 %v5053, %v5204
  %v5606 = vadd.f32 %v5053, %v5208
  %v5607 = vadd.f32 %v5060, %v5204
  %v5608 = vadd.f32 %v5060, %v5208
  %v5609 = vadd.f32 %v5064, %v5204
  %v5610 = vadd.f32 %v5064, %v5208
  %v5611 = vadd.f32 %v5068, %v5204
  %v5612 = vadd.f32 %v5068, %v5208
  %v5613 = vadd.f32 %v5072, %v5204
  %v5614 = vadd.f32 %v5072, %v5208
  %v5615 = vadd.f32 %v5076, %v5204
  %v5616 = vadd.f32 %v5076, %v5208
  %v5617 = vadd.f32 %v5080, %v5204
  %v5618 = vadd.f32 %v5080, %v5208
  %v5619 = vadd.f32 %v5084, %v5204
  %v5620 = vadd.f32 %v5084, %v5208
  %v5621 = vadd.f32 %v5088, %v5204
  %v5622 = vadd.f32 %v5088, %v5208
  %v5623 = vadd.f32 %v5092, %v5204
  %v5624 = vadd.f32 %v5092, %v5208
  %v5625 = vmul.f32 %v5225, 0.33
  %v5626 = vmul.f32 %v5226, 0.33
  %v5627 = vmul.f32 %v5227, 0.33
  %v5628 = vmul.f32 %v5228, 0.33
  %v5629 = vmul.f32 %v5229, 0.33
  %v5630 = vmul.f32 %v5230, 0.33
  %v5631 = vmul.f32 %v5231, 0.33
  %v5632 = vmul.f32 %v5232, 0.33
  %v5633 = vmul.f32 %v5233, 0.33
  %v5634 = vmul.f32 %v5234, 0.33
  %v5635 = vmul.f32 %v5235, 0.33
  %v5636 = vmul.f32 %v5236, 0.33
  %v5637 = vmul.f32 %v5237, 0.33
  %v5638 = vmul.f32 %v5238, 0.33
  %v5639 = vmul.f32 %v5239, 0.33
  %v5640 = vmul.f32 %v5240, 0.33
  %v5641 = vmul.f32 %v5241, 0.33
  %v5642 = vmul.f32 %v5242, 0.33
  %v5643 = vmul.f32 %v5243, 0.33
  %v5644 = vmul.f32 %v5244, 0.33
  %v5645 = vmul.f32 %v5245, 0.33
  %v5646 = vmul.f32 %v5246, 0.33
  %v5647 = vmul.f32 %v5247, 0.33
  %v5648 = vmul.f32 %v5248, 0.33
  %v5649 = vmul.f32 %v5249, 0.33
  %v5650 = vmul.f32 %v5250, 0.33
  %v5651 = vmul.f32 %v5251, 0.33
  %v5652 = vmul.f32 %v5252, 0.33
  %v5653 = vmul.f32 %v5253, 0.33
  %v5654 = vmul.f32 %v5254, 0.33
  %v5655 = vmul.f32 %v5255, 0.33
  %v5656 = vmul.f32 %v5256, 0.33
  %v5657 = vmul.f32 %v5257, 0.33
  %v5658 = vmul.f32 %v5258, 0.33
  %v5659 = vmul.f32 %v5259, 0.33
  %v5660 = vmul.f32 %v5260, 0.33
  %v5661 = vmul.f32 %v5261, 0.33
  %v5662 = vmul.f32 %v5262, 0.33
  %v5663 = vmul.f32 %v5263, 0.33
  %v5664 = vmul.f32 %v5264, 0.33
  %v5665 = vmul.f32 %v5265, 0.33
  %v5666 = vmul.f32 %v5266, 0.33
  %v5667 = vmul.f32 %v5267, 0.33
  %v5668 = vmul.f32 %v5268, 0.33
  %v5669 = vmul.f32 %v5269, 0.33
  %v5670 = vmul.f32 %v5270, 0.33
  %v5671 = vmul.f32 %v5271, 0.33
  %v5672 = vmul.f32 %v5272, 0.33
  %v5673 = vmul.f32 %v5273, 0.33
  %v5674 = vmul.f32 %v5274, 0.33
  %v5675 = vmul.f32 %v5275, 0.33
  %v5676 = vmul.f32 %v5276, 0.33
  %v5677 = vmul.f32 %v5277, 0.33
  %v5678 = vmul.f32 %v5278, 0.33
  %v5679 = vmul.f32 %v5279, 0.33
  %v5680 = vmul.f32 %v5280, 0.33
  %v5681 = vmul.f32 %v5281, 0.33
  %v5682 = vmul.f32 %v5282, 0.33
  %v5683 = vmul.f32 %v5283, 0.33
  %v5684 = vmul.f32 %v5284, 0.33
  %v5685 = vmul.f32 %v5285, 0.33
  %v5686 = vmul.f32 %v5286, 0.33
  %v5687 = vmul.f32 %v5287, 0.33
  %v5688 = vmul.f32 %v5288, 0.33
  %v5689 = vmul.f32 %v5289, 0.33
  %v5690 = vmul.f32 %v5290, 0.33
  %v5691 = vmul.f32 %v5291, 0.33
  %v5692 = vmul.f32 %v5292, 0.33
  %v5693 = vmul.f32 %v5293, 0.33
  %v5694 = vmul.f32 %v5294, 0.33
  %v5695 = vmul.f32 %v5295, 0.33
  %v5696 = vmul.f32 %v5296, 0.33
  %v5697 = vmul.f32 %v5297, 0.33
  %v5698 = vmul.f32 %v5298, 0.33
  %v5699 = vmul.f32 %v5299, 0.33
  %v5700 = vmul.f32 %v5300, 0.33
  %v5701 = vmul.f32 %v5301, 0.33
  %v5702 = vmul.f32 %v5302, 0.33
  %v5703 = vmul.f32 %v5303, 0.33
  %v5704 = vmul.f32 %v5304, 0.33
  %v5705 = vmul.f32 %v5305, 0.33
  %v5706 = vmul.f32 %v5306, 0.33
  %v5707 = vmul.f32 %v5307, 0.33
  %v5708 = vmul.f32 %v5308, 0.33
  %v5709 = vmul.f32 %v5309, 0.33
  %v5710 = vmul.f32 %v5310, 0.33
  %v5711 = vmul.f32 %v5311, 0.33
  %v5712 = vmul.f32 %v5312, 0.33
  %v5713 = vmul.f32 %v5313, 0.33
  %v5714 = vmul.f32 %v5314, 0.33
  %v5715 = vmul.f32 %v5315, 0.33
  %v5716 = vmul.f32 %v5316, 0.33
  %v5717 = vmul.f32 %v5317, 0.33
  %v5718 = vmul.f32 %v5318, 0.33
  %v5719 = vmul.f32 %v5319, 0.33
  %v5720 = vmul.f32 %v5320, 0.33
  %v5721 = vmul.f32 %v5321, 0.33
  %v5722 = vmul.f32 %v5322, 0.33
  %v5723 = vmul.f32 %v5323, 0.33
  %v5724 = vmul.f32 %v5324, 0.33
  %v5725 = vmul.f32 %v5325, 0.33
  %v5726 = vmul.f32 %v5326, 0.33
  %v5727 = vmul.f32 %v5327, 0.33
  %v5728 = vmul.f32 %v5328, 0.33
  %v5729 = vmul.f32 %v5329, 0.33
  %v5730 = vmul.f32 %v5330, 0.33
  %v5731 = vmul.f32 %v5331, 0.33
  %v5732 = vmul.f32 %v5332, 0.33
  %v5733 = vmul.f32 %v5333, 0.33
  %v5734 = vmul.f32 %v5334, 0.33
  %v5735 = vmul.f32 %v5335, 0.33
  %v5736 = vmul.f32 %v5336, 0.33
  %v5737 = vmul.f32 %v5337, 0.33
  %v5738 = vmul.f32 %v5338, 0.33
  %v5739 = vmul.f32 %v5339, 0.33
  %v5740 = vmul.f32 %v5340, 0.33
  %v5741 = vmul.f32 %v5341, 0.33
  %v5742 = vmul.f32 %v5342, 0.33
  %v5743 = vmul.f32 %v5343, 0.33
  %v5744 = vmul.f32 %v5344, 0.33
  %v5745 = vmul.f32 %v5345, 0.33
  %v5746 = vmul.f32 %v5346, 0.33
  %v5747 = vmul.f32 %v5347, 0.33
  %v5748 = vmul.f32 %v5348, 0.33
  %v5749 = vmul.f32 %v5349, 0.33
  %v5750 = vmul.f32 %v5350, 0.33
  %v5751 = vmul.f32 %v5351, 0.33
  %v5752 = vmul.f32 %v5352, 0.33
  %v5753 = vmul.f32 %v5353, 0.33
  %v5754 = vmul.f32 %v5354, 0.33
  %v5755 = vmul.f32 %v5355, 0.33
  %v5756 = vmul.f32 %v5356, 0.33
  %v5757 = vmul.f32 %v5357, 0.33
  %v5758 = vmul.f32 %v5358, 0.33
  %v5759 = vmul.f32 %v5359, 0.33
  %v5760 = vmul.f32 %v5360, 0.33
  %v5761 = vmul.f32 %v5361, 0.33
  %v5762 = vmul.f32 %v5362, 0.33
  %v5763 = vmul.f32 %v5363, 0.33
  %v5764 = vmul.f32 %v5364, 0.33
  %v5765 = vmul.f32 %v5365, 0.33
  %v5766 = vmul.f32 %v5366, 0.33
  %v5767 = vmul.f32 %v5367, 0.33
  %v5768 = vmul.f32 %v5368, 0.33
  %v5769 = vmul.f32 %v5369, 0.33
  %v5770 = vmul.f32 %v5370, 0.33
  %v5771 = vmul.f32 %v5371, 0.33
  %v5772 = vmul.f32 %v5372, 0.33
  %v5773 = vmul.f32 %v5373, 0.33
  %v5774 = vmul.f32 %v5374, 0.33
  %v5775 = vmul.f32 %v5375, 0.33
  %v5776 = vmul.f32 %v5376, 0.33
  %v5777 = vmul.f32 %v5377, 0.33
  %v5778 = vmul.f32 %v5378, 0.33
  %v5779 = vmul.f32 %v5379, 0.33
  %v5780 = vmul.f32 %v5380, 0.33
  %v5781 = vmul.f32 %v5381, 0.33
  %v5782 = vmul.f32 %v5382, 0.33
  %v5783 = vmul.f32 %v5383, 0.33
  %v5784 = vmul.f32 %v5384, 0.33
  %v5785 = vmul.f32 %v5385, 0.33
  %v5786 = vmul.f32 %v5386, 0.33
  %v5787 = vmul.f32 %v5387, 0.33
  %v5788 = vmul.f32 %v5388, 0.33
  %v5789 = vmul.f32 %v5389, 0.33
  %v5790 = vmul.f32 %v5390, 0.33
  %v5791 = vmul.f32 %v5391, 0.33
  %v5792 = vmul.f32 %v5392, 0.33
  %v5793 = vmul.f32 %v5393, 0.33
  %v5794 = vmul.f32 %v5394, 0.33
  %v5795 = vmul.f32 %v5395, 0.33
  %v5796 = vmul.f32 %v5396, 0.33
  %v5797 = vmul.f32 %v5397, 0.33
  %v5798 = vmul.f32 %v5398, 0.33
  %v5799 = vmul.f32 %v5399, 0.33
  %v5800 = vmul.f32 %v5400, 0.33
  %v5801 = vmul.f32 %v5401, 0.33
  %v5802 = vmul.f32 %v5402, 0.33
  %v5803 = vmul.f32 %v5403, 0.33
  %v5804 = vmul.f32 %v5404, 0.33
  %v5805 = vmul.f32 %v5405, 0.33
  %v5806 = vmul.f32 %v5406, 0.33
  %v5807 = vmul.f32 %v5407, 0.33
  %v5808 = vmul.f32 %v5408, 0.33
  %v5809 = vmul.f32 %v5409, 0.33
  %v5810 = vmul.f32 %v5410, 0.33
  %v5811 = vmul.f32 %v5411, 0.33
  %v5812 = vmul.f32 %v5412, 0.33
  %v5813 = vmul.f32 %v5413, 0.33
  %v5814 = vmul.f32 %v5414, 0.33
  %v5815 = vmul.f32 %v5415, 0.33
  %v5816 = vmul.f32 %v5416, 0.33
  %v5817 = vmul.f32 %v5417, 0.33
  %v5818 = vmul.f32 %v5418, 0.33
  %v5819 = vmul.f32 %v5419, 0.33
  %v5820 = vmul.f32 %v5420, 0.33
  %v5821 = vmul.f32 %v5421, 0.33
  %v5822 = vmul.f32 %v5422, 0.33
  %v5823 = vmul.f32 %v5423, 0.33
  %v5824 = vmul.f32 %v5424, 0.33
  %v5825 = vmul.f32 %v5425, 0.33
  %v5826 = vmul.f32 %v5426, 0.33
  %v5827 = vmul.f32 %v5427, 0.33
  %v5828 = vmul.f32 %v5428, 0.33
  %v5829 = vmul.f32 %v5429, 0.33
  %v5830 = vmul.f32 %v5430, 0.33
  %v5831 = vmul.f32 %v5431, 0.33
  %v5832 = vmul.f32 %v5432, 0.33
  %v5833 = vmul.f32 %v5433, 0.33
  %v5834 = vmul.f32 %v5434, 0.33
  %v5835 = vmul.f32 %v5435, 0.33
  %v5836 = vmul.f32 %v5436, 0.33
  %v5837 = vmul.f32 %v5437, 0.33
  %v5838 = vmul.f32 %v5438, 0.33
  %v5839 = vmul.f32 %v5439, 0.33
  %v5840 = vmul.f32 %v5440, 0.33
  %v5841 = vmul.f32 %v5441, 0.33
  %v5842 = vmul.f32 %v5442, 0.33
  %v5843 = vmul.f32 %v5443, 0.33
  %v5844 = vmul.f32 %v5444, 0.33
  %v5845 = vmul.f32 %v5445, 0.33
  %v5846 = vmul.f32 %v5446, 0.33
  %v5847 = vmul.f32 %v5447, 0.33
  %v5848 = vmul.f32 %v5448, 0.33
  %v5849 = vmul.f32 %v5449, 0.33
  %v5850 = vmul.f32 %v5450, 0.33
  %v5851 = vmul.f32 %v5451, 0.33
  %v5852 = vmul.f32 %v5452, 0.33
  %v5853 = vmul.f32 %v5453, 0.33
  %v5854 = vmul.f32 %v5454, 0.33
  %v5855 = vmul.f32 %v5455, 0.33
  %v5856 = vmul.f32 %v5456, 0.33
  %v5857 = vmul.f32 %v5457, 0.33
  %v5858 = vmul.f32 %v5458, 0.33
  %v5859 = vmul.f32 %v5459, 0.33
  %v5860 = vmul.f32 %v5460, 0.33
  %v5861 = vmul.f32 %v5461, 0.33
  %v5862 = vmul.f32 %v5462, 0.33
  %v5863 = vmul.f32 %v5463, 0.33
  %v5864 = vmul.f32 %v5464, 0.33
  %v5865 = vmul.f32 %v5465, 0.33
  %v5866 = vmul.f32 %v5466, 0.33
  %v5867 = vmul.f32 %v5467, 0.33
  %v5868 = vmul.f32 %v5468, 0.33
  %v5869 = vmul.f32 %v5469, 0.33
  %v5870 = vmul.f32 %v5470, 0.33
  %v5871 = vmul.f32 %v5471, 0.33
  %v5872 = vmul.f32 %v5472, 0.33
  %v5873 = vmul.f32 %v5473, 0.33
  %v5874 = vmul.f32 %v5474, 0.33
  %v5875 = vmul.f32 %v5475, 0.33
  %v5876 = vmul.f32 %v5476, 0.33
  %v5877 = vmul.f32 %v5477, 0.33
  %v5878 = vmul.f32 %v5478, 0.33
  %v5879 = vmul.f32 %v5479, 0.33
  %v5880 = vmul.f32 %v5480, 0.33
  %v5881 = vmul.f32 %v5481, 0.33
  %v5882 = vmul.f32 %v5482, 0.33
  %v5883 = vmul.f32 %v5483, 0.33
  %v5884 = vmul.f32 %v5484, 0.33
  %v5885 = vmul.f32 %v5485, 0.33
  %v5886 = vmul.f32 %v5486, 0.33
  %v5887 = vmul.f32 %v5487, 0.33
  %v5888 = vmul.f32 %v5488, 0.33
  %v5889 = vmul.f32 %v5489, 0.33
  %v5890 = vmul.f32 %v5490, 0.33
  %v5891 = vmul.f32 %v5491, 0.33
  %v5892 = vmul.f32 %v5492, 0.33
  %v5893 = vmul.f32 %v5493, 0.33
  %v5894 = vmul.f32 %v5494, 0.33
  %v5895 = vmul.f32 %v5495, 0.33
  %v5896 = vmul.f32 %v5496, 0.33
  %v5897 = vmul.f32 %v5497, 0.33
  %v5898 = vmul.f32 %v5498, 0.33
  %v5899 = vmul.f32 %v5499, 0.33
  %v5900 = vmul.f32 %v5500, 0.33
  %v5901 = vmul.f32 %v5501, 0.33
  %v5902 = vmul.f32 %v5502, 0.33
  %v5903 = vmul.f32 %v5503, 0.33
  %v5904 = vmul.f32 %v5504, 0.33
  %v5905 = vmul.f32 %v5505, 0.33
  %v5906 = vmul.f32 %v5506, 0.33
  %v5907 = vmul.f32 %v5507, 0.33
  %v5908 = vmul.f32 %v5508, 0.33
  %v5909 = vmul.f32 %v5509, 0.33
  %v5910 = vmul.f32 %v5510, 0.33
  %v5911 = vmul.f32 %v5511, 0.33
  %v5912 = vmul.f32 %v5512, 0.33
  %v5913 = vmul.f32 %v5513, 0.33
  %v5914 = vmul.f32 %v5514, 0.33
  %v5915 = vmul.f32 %v5515, 0.33
  %v5916 = vmul.f32 %v5516, 0.33
  %v5917 = vmul.f32 %v5517, 0.33
  %v5918 = vmul.f32 %v5518, 0.33
  %v5919 = vmul.f32 %v5519, 0.33
  %v5920 = vmul.f32 %v5520, 0.33
  %v5921 = vmul.f32 %v5521, 0.33
  %v5922 = vmul.f32 %v5522, 0.33
  %v5923 = vmul.f32 %v5523, 0.33
  %v5924 = vmul.f32 %v5524, 0.33
  %v5925 = vmul.f32 %v5525, 0.33
  %v5926 = vmul.f32 %v5526, 0.33
  %v5927 = vmul.f32 %v5527, 0.33
  %v5928 = vmul.f32 %v5528, 0.33
  %v5929 = vmul.f32 %v5529, 0.33
  %v5930 = vmul.f32 %v5530, 0.33
  %v5931 = vmul.f32 %v5531, 0.33
  %v5932 = vmul.f32 %v5532, 0.33
  %v5933 = vmul.f32 %v5533, 0.33
  %v5934 = vmul.f32 %v5534, 0.33
  %v5935 = vmul.f32 %v5535, 0.33
  %v5936 = vmul.f32 %v5536, 0.33
  %v5937 = vmul.f32 %v5537, 0.33
  %v5938 = vmul.f32 %v5538, 0.33
  %v5939 = vmul.f32 %v5539, 0.33
  %v5940 = vmul.f32 %v5540, 0.33
  %v5941 = vmul.f32 %v5541, 0.33
  %v5942 = vmul.f32 %v5542, 0.33
  %v5943 = vmul.f32 %v5543, 0.33
  %v5944 = vmul.f32 %v5544, 0.33
  %v5945 = vmul.f32 %v5545, 0.33
  %v5946 = vmul.f32 %v5546, 0.33
  %v5947 = vmul.f32 %v5547, 0.33
  %v5948 = vmul.f32 %v5548, 0.33
  %v5949 = vmul.f32 %v5549, 0.33
  %v5950 = vmul.f32 %v5550, 0.33
  %v5951 = vmul.f32 %v5551, 0.33
  %v5952 = vmul.f32 %v5552, 0.33
  %v5953 = vmul.f32 %v5553, 0.33
  %v5954 = vmul.f32 %v5554, 0.33
  %v5955 = vmul.f32 %v5555, 0.33
  %v5956 = vmul.f32 %v5556, 0.33
  %v5957 = vmul.f32 %v5557, 0.33
  %v5958 = vmul.f32 %v5558, 0.33
  %v5959 = vmul.f32 %v5559, 0.33
  %v5960 = vmul.f32 %v5560, 0.33
  %v5961 = vmul.f32 %v5561, 0.33
  %v5962 = vmul.f32 %v5562, 0.33
  %v5963 = vmul.f32 %v5563, 0.33
  %v5964 = vmul.f32 %v5564, 0.33
  %v5965 = vmul.f32 %v5565, 0.33
  %v5966 = vmul.f32 %v5566, 0.33
  %v5967 = vmul.f32 %v5567, 0.33
  %v5968 = vmul.f32 %v5568, 0.33
  %v5969 = vmul.f32 %v5569, 0.33
  %v5970 = vmul.f32 %v5570, 0.33
  %v5971 = vmul.f32 %v5571, 0.33
  %v5972 = vmul.f32 %v5572, 0.33
  %v5973 = vmul.f32 %v5573, 0.33
  %v5974 = vmul.f32 %v5574, 0.33
  %v5975 = vmul.f32 %v5575, 0.33
  %v5976 = vmul.f32 %v5576, 0.33
  %v5977 = vmul.f32 %v5577, 0.33
  %v5978 = vmul.f32 %v5578, 0.33
  %v5979 = vmul.f32 %v5579, 0.33
  %v5980 = vmul.f32 %v5580, 0.33
  %v5981 = vmul.f32 %v5581, 0.33
  %v5982 = vmul.f32 %v5582, 0.33
  %v5983 = vmul.f32 %v5583, 0.33
  %v5984 = vmul.f32 %v5584, 0.33
  %v5985 = vmul.f32 %v5585, 0.33
  %v5986 = vmul.f32 %v5586, 0.33
  %v5987 = vmul.f32 %v5587, 0.33
  %v5988 = vmul.f32 %v5588, 0.33
  %v5989 = vmul.f32 %v5589, 0.33
  %v5990 = vmul.f32 %v5590, 0.33
  %v5991 = vmul.f32 %v5591, 0.33
  %v5992 = vmul.f32 %v5592, 0.33
  %v5993 = vmul.f32 %v5593, 0.33
  %v5994 = vmul.f32 %v5594, 0.33
  %v5995 = vmul.f32 %v5595, 0.33
  %v5996 = vmul.f32 %v5596, 0.33
  %v5997 = vmul.f32 %v5597, 0.33
  %v5998 = vmul.f32 %v5598, 0.33
  %v5999 = vmul.f32 %v5599, 0.33
  %v6000 = vmul.f32 %v5600, 0.33
  %v6001 = vmul.f32 %v5601, 0.33
  %v6002 = vmul.f32 %v5602, 0.33
  %v6003 = vmul.f32 %v5603, 0.33
  %v6004 = vmul.f32 %v5604, 0.33
  %v6005 = vmul.f32 %v5605, 0.33
  %v6006 = vmul.f32 %v5606, 0.33
  %v6007 = vmul.f32 %v5607, 0.33
  %v6008 = vmul.f32 %v5608, 0.33
  %v6009 = vmul.f32 %v5609, 0.33
  %v6010 = vmul.f32 %v5610, 0.33
  %v6011 = vmul.f32 %v5611, 0.33
  %v6012 = vmul.f32 %v5612, 0.33
  %v6013 = vmul.f32 %v5613, 0.33
  %v6014 = vmul.f32 %v5614, 0.33
  %v6015 = vmul.f32 %v5615, 0.33
  %v6016 = vmul.f32 %v5616, 0.33
  %v6017 = vmul.f32 %v5617, 0.33
  %v6018 = vmul.f32 %v5618, 0.33
  %v6019 = vmul.f32 %v5619, 0.33
  %v6020 = vmul.f32 %v5620, 0.33
  %v6021 = vmul.f32 %v5621, 0.33
  %v6022 = vmul.f32 %v5622, 0.33
  %v6023 = vmul.f32 %v5623, 0.33
  %v6024 = vmul.f32 %v5624, 0.33
  %v6025 = vmax.f32 %v5225, %v5625
  %v6026 = vmax.f32 %v5226, %v5626
  %v6027 = vmax.f32 %v5227, %v5627
  %v6028 = vmax.f32 %v5228, %v5628
  %v6029 = vmax.f32 %v5229, %v5629
  %v6030 = vmax.f32 %v5230, %v5630
  %v6031 = vmax.f32 %v5231, %v5631
  %v6032 = vmax.f32 %v5232, %v5632
  %v6033 = vmax.f32 %v5233, %v5633
  %v6034 = vmax.f32 %v5234, %v5634
  %v6035 = vmax.f32 %v5235, %v5635
  %v6036 = vmax.f32 %v5236, %v5636
  %v6037 = vmax.f32 %v5237, %v5637
  %v6038 = vmax.f32 %v5238, %v5638
  %v6039 = vmax.f32 %v5239, %v5639
  %v6040 = vmax.f32 %v5240, %v5640
  %v6041 = vmax.f32 %v5241, %v5641
  %v6042 = vmax.f32 %v5242, %v5642
  %v6043 = vmax.f32 %v5243, %v5643
  %v6044 = vmax.f32 %v5244, %v5644
  %v6045 = vmax.f32 %v5245, %v5645
  %v6046 = vmax.f32 %v5246, %v5646
  %v6047 = vmax.f32 %v5247, %v5647
  %v6048 = vmax.f32 %v5248, %v5648
  %v6049 = vmax.f32 %v5249, %v5649
  %v6050 = vmax.f32 %v5250, %v5650
  %v6051 = vmax.f32 %v5251, %v5651
  %v6052 = vmax.f32 %v5252, %v5652
  %v6053 = vmax.f32 %v5253, %v5653
  %v6054 = vmax.f32 %v5254, %v5654
  %v6055 = vmax.f32 %v5255, %v5655
  %v6056 = vmax.f32 %v5256, %v5656
  %v6057 = vmax.f32 %v5257, %v5657
  %v6058 = vmax.f32 %v5258, %v5658
  %v6059 = vmax.f32 %v5259, %v5659
  %v6060 = vmax.f32 %v5260, %v5660
  %v6061 = vmax.f32 %v5261, %v5661
  %v6062 = vmax.f32 %v5262, %v5662
  %v6063 = vmax.f32 %v5263, %v5663
  %v6064 = vmax.f32 %v5264, %v5664
  %v6065 = vmax.f32 %v5265, %v5665
  %v6066 = vmax.f32 %v5266, %v5666
  %v6067 = vmax.f32 %v5267, %v5667
  %v6068 = vmax.f32 %v5268, %v5668
  %v6069 = vmax.f32 %v5269, %v5669
  %v6070 = vmax.f32 %v5270, %v5670
  %v6071 = vmax.f32 %v5271, %v5671
  %v6072 = vmax.f32 %v5272, %v5672
  %v6073 = vmax.f32 %v5273, %v5673
  %v6074 = vmax.f32 %v5274, %v5674
  %v6075 = vmax.f32 %v5275, %v5675
  %v6076 = vmax.f32 %v5276, %v5676
  %v6077 = vmax.f32 %v5277, %v5677
  %v6078 = vmax.f32 %v5278, %v5678
  %v6079 = vmax.f32 %v5279, %v5679
  %v6080 = vmax.f32 %v5280, %v5680
  %v6081 = vmax.f32 %v5281, %v5681
  %v6082 = vmax.f32 %v5282, %v5682
  %v6083 = vmax.f32 %v5283, %v5683
  %v6084 = vmax.f32 %v5284, %v5684
  %v6085 = vmax.f32 %v5285, %v5685
  %v6086 = vmax.f32 %v5286, %v5686
  %v6087 = vmax.f32 %v5287, %v5687
  %v6088 = vmax.f32 %v5288, %v5688
  %v6089 = vmax.f32 %v5289, %v5689
  %v6090 = vmax.f32 %v5290, %v5690
  %v6091 = vmax.f32 %v5291, %v5691
  %v6092 = vmax.f32 %v5292, %v5692
  %v6093 = vmax.f32 %v5293, %v5693
  %v6094 = vmax.f32 %v5294, %v5694
  %v6095 = vmax.f32 %v5295, %v5695
  %v6096 = vmax.f32 %v5296, %v5696
  %v6097 = vmax.f32 %v5297, %v5697
  %v6098 = vmax.f32 %v5298, %v5698
  %v6099 = vmax.f32 %v5299, %v5699
  %v6100 = vmax.f32 %v5300, %v5700
  %v6101 = vmax.f32 %v5301, %v5701
  %v6102 = vmax.f32 %v5302, %v5702
  %v6103 = vmax.f32 %v5303, %v5703
  %v6104 = vmax.f32 %v5304, %v5704
  %v6105 = vmax.f32 %v5305, %v5705
  %v6106 = vmax.f32 %v5306, %v5706
  %v6107 = vmax.f32 %v5307, %v5707
  %v6108 = vmax.f32 %v5308, %v5708
  %v6109 = vmax.f32 %v5309, %v5709
  %v6110 = vmax.f32 %v5310, %v5710
  %v6111 = vmax.f32 %v5311, %v5711
  %v6112 = vmax.f32 %v5312, %v5712
  %v6113 = vmax.f32 %v5313, %v5713
  %v6114 = vmax.f32 %v5314, %v5714
  %v6115 = vmax.f32 %v5315, %v5715
  %v6116 = vmax.f32 %v5316, %v5716
  %v6117 = vmax.f32 %v5317, %v5717
  %v6118 = vmax.f32 %v5318, %v5718
  %v6119 = vmax.f32 %v5319, %v5719
  %v6120 = vmax.f32 %v5320, %v5720
  %v6121 = vmax.f32 %v5321, %v5721
  %v6122 = vmax.f32 %v5322, %v5722
  %v6123 = vmax.f32 %v5323, %v5723
  %v6124 = vmax.f32 %v5324, %v5724
  %v6125 = vmax.f32 %v5325, %v5725
  %v6126 = vmax.f32 %v5326, %v5726
  %v6127 = vmax.f32 %v5327, %v5727
  %v6128 = vmax.f32 %v5328, %v5728
  %v6129 = vmax.f32 %v5329, %v5729
  %v6130 = vmax.f32 %v5330, %v5730
  %v6131 = vmax.f32 %v5331, %v5731
  %v6132 = vmax.f32 %v5332, %v5732
  %v6133 = vmax.f32 %v5333, %v5733
  %v6134 = vmax.f32 %v5334, %v5734
  %v6135 = vmax.f32 %v5335, %v5735
  %v6136 = vmax.f32 %v5336, %v5736
  %v6137 = vmax.f32 %v5337, %v5737
  %v6138 = vmax.f32 %v5338, %v5738
  %v6139 = vmax.f32 %v5339, %v5739
  %v6140 = vmax.f32 %v5340, %v5740
  %v6141 = vmax.f32 %v5341, %v5741
  %v6142 = vmax.f32 %v5342, %v5742
  %v6143 = vmax.f32 %v5343, %v5743
  %v6144 = vmax.f32 %v5344, %v5744
  %v6145 = vmax.f32 %v5345, %v5745
  %v6146 = vmax.f32 %v5346, %v5746
  %v6147 = vmax.f32 %v5347, %v5747
  %v6148 = vmax.f32 %v5348, %v5748
  %v6149 = vmax.f32 %v5349, %v5749
  %v6150 = vmax.f32 %v5350, %v5750
  %v6151 = vmax.f32 %v5351, %v5751
  %v6152 = vmax.f32 %v5352, %v5752
  %v6153 = vmax.f32 %v5353, %v5753
  %v6154 = vmax.f32 %v5354, %v5754
  %v6155 = vmax.f32 %v5355, %v5755
  %v6156 = vmax.f32 %v5356, %v5756
  %v6157 = vmax.f32 %v5357, %v5757
  %v6158 = vmax.f32 %v5358, %v5758
  %v6159 = vmax.f32 %v5359, %v5759
  %v6160 = vmax.f32 %v5360, %v5760
  %v6161 = vmax.f32 %v5361, %v5761
  %v6162 = vmax.f32 %v5362, %v5762
  %v6163 = vmax.f32 %v5363, %v5763
  %v6164 = vmax.f32 %v5364, %v5764
  %v6165 = vmax.f32 %v5365, %v5765
  %v6166 = vmax.f32 %v5366, %v5766
  %v6167 = vmax.f32 %v5367, %v5767
  %v6168 = vmax.f32 %v5368, %v5768
  %v6169 = vmax.f32 %v5369, %v5769
  %v6170 = vmax.f32 %v5370, %v5770
  %v6171 = vmax.f32 %v5371, %v5771
  %v6172 = vmax.f32 %v5372, %v5772
  %v6173 = vmax.f32 %v5373, %v5773
  %v6174 = vmax.f32 %v5374, %v5774
  %v6175 = vmax.f32 %v5375, %v5775
  %v6176 = vmax.f32 %v5376, %v5776
  %v6177 = vmax.f32 %v5377, %v5777
  %v6178 = vmax.f32 %v5378, %v5778
  %v6179 = vmax.f32 %v5379, %v5779
  %v6180 = vmax.f32 %v5380, %v5780
  %v6181 = vmax.f32 %v5381, %v5781
  %v6182 = vmax.f32 %v5382, %v5782
  %v6183 = vmax.f32 %v5383, %v5783
  %v6184 = vmax.f32 %v5384, %v5784
  %v6185 = vmax.f32 %v5385, %v5785
  %v6186 = vmax.f32 %v5386, %v5786
  %v6187 = vmax.f32 %v5387, %v5787
  %v6188 = vmax.f32 %v5388, %v5788
  %v6189 = vmax.f32 %v5389, %v5789
  %v6190 = vmax.f32 %v5390, %v5790
  %v6191 = vmax.f32 %v5391, %v5791
  %v6192 = vmax.f32 %v5392, %v5792
  %v6193 = vmax.f32 %v5393, %v5793
  %v6194 = vmax.f32 %v5394, %v5794
  %v6195 = vmax.f32 %v5395, %v5795
  %v6196 = vmax.f32 %v5396, %v5796
  %v6197 = vmax.f32 %v5397, %v5797
  %v6198 = vmax.f32 %v5398, %v5798
  %v6199 = vmax.f32 %v5399, %v5799
  %v6200 = vmax.f32 %v5400, %v5800
  %v6201 = vmax.f32 %v5401, %v5801
  %v6202 = vmax.f32 %v5402, %v5802
  %v6203 = vmax.f32 %v5403, %v5803
  %v6204 = vmax.f32 %v5404, %v5804
  %v6205 = vmax.f32 %v5405, %v5805
  %v6206 = vmax.f32 %v5406, %v5806
  %v6207 = vmax.f32 %v5407, %v5807
  %v6208 = vmax.f32 %v5408, %v5808
  %v6209 = vmax.f32 %v5409, %v5809
  %v6210 = vmax.f32 %v5410, %v5810
  %v6211 = vmax.f32 %v5411, %v5811
  %v6212 = vmax.f32 %v5412, %v5812
  %v6213 = vmax.f32 %v5413, %v5813
  %v6214 = vmax.f32 %v5414, %v5814
  %v6215 = vmax.f32 %v5415, %v5815
  %v6216 = vmax.f32 %v5416, %v5816
  %v6217 = vmax.f32 %v5417, %v5817
  %v6218 = vmax.f32 %v5418, %v5818
  %v6219 = vmax.f32 %v5419, %v5819
  %v6220 = vmax.f32 %v5420, %v5820
  %v6221 = vmax.f32 %v5421, %v5821
  %v6222 = vmax.f32 %v5422, %v5822
  %v6223 = vmax.f32 %v5423, %v5823
  %v6224 = vmax.f32 %v5424, %v5824
  %v6225 = vmax.f32 %v5425, %v5825
  %v6226 = vmax.f32 %v5426, %v5826
  %v6227 = vmax.f32 %v5427, %v5827
  %v6228 = vmax.f32 %v5428, %v5828
  %v6229 = vmax.f32 %v5429, %v5829
  %v6230 = vmax.f32 %v5430, %v5830
  %v6231 = vmax.f32 %v5431, %v5831
  %v6232 = vmax.f32 %v5432, %v5832
  %v6233 = vmax.f32 %v5433, %v5833
  %v6234 = vmax.f32 %v5434, %v5834
  %v6235 = vmax.f32 %v5435, %v5835
  %v6236 = vmax.f32 %v5436, %v5836
  %v6237 = vmax.f32 %v5437, %v5837
  %v6238 = vmax.f32 %v5438, %v5838
  %v6239 = vmax.f32 %v5439, %v5839
  %v6240 = vmax.f32 %v5440, %v5840
  %v6241 = vmax.f32 %v5441, %v5841
  %v6242 = vmax.f32 %v5442, %v5842
  %v6243 = vmax.f32 %v5443, %v5843
  %v6244 = vmax.f32 %v5444, %v5844
  %v6245 = vmax.f32 %v5445, %v5845
  %v6246 = vmax.f32 %v5446, %v5846
  %v6247 = vmax.f32 %v5447, %v5847
  %v6248 = vmax.f32 %v5448, %v5848
  %v6249 = vmax.f32 %v5449, %v5849
  %v6250 = vmax.f32 %v5450, %v5850
  %v6251 = vmax.f32 %v5451, %v5851
  %v6252 = vmax.f32 %v5452, %v5852
  %v6253 = vmax.f32 %v5453, %v5853
  %v6254 = vmax.f32 %v5454, %v5854
  %v6255 = vmax.f32 %v5455, %v5855
  %v6256 = vmax.f32 %v5456, %v5856
  %v6257 = vmax.f32 %v5457, %v5857
  %v6258 = vmax.f32 %v5458, %v5858
  %v6259 = vmax.f32 %v5459, %v5859
  %v6260 = vmax.f32 %v5460, %v5860
  %v6261 = vmax.f32 %v5461, %v5861
  %v6262 = vmax.f32 %v5462, %v5862
  %v6263 = vmax.f32 %v5463, %v5863
  %v6264 = vmax.f32 %v5464, %v5864
  %v6265 = vmax.f32 %v5465, %v5865
  %v6266 = vmax.f32 %v5466, %v5866
  %v6267 = vmax.f32 %v5467, %v5867
  %v6268 = vmax.f32 %v5468, %v5868
  %v6269 = vmax.f32 %v5469, %v5869
  %v6270 = vmax.f32 %v5470, %v5870
  %v6271 = vmax.f32 %v5471, %v5871
  %v6272 = vmax.f32 %v5472, %v5872
  %v6273 = vmax.f32 %v5473, %v5873
  %v6274 = vmax.f32 %v5474, %v5874
  %v6275 = vmax.f32 %v5475, %v5875
  %v6276 = vmax.f32 %v5476, %v5876
  %v6277 = vmax.f32 %v5477, %v5877
  %v6278 = vmax.f32 %v5478, %v5878
  %v6279 = vmax.f32 %v5479, %v5879
  %v6280 = vmax.f32 %v5480, %v5880
  %v6281 = vmax.f32 %v5481, %v5881
  %v6282 = vmax.f32 %v5482, %v5882
  %v6283 = vmax.f32 %v5483, %v5883
  %v6284 = vmax.f32 %v5484, %v5884
  %v6285 = vmax.f32 %v5485, %v5885
  %v6286 = vmax.f32 %v5486, %v5886
  %v6287 = vmax.f32 %v5487, %v5887
  %v6288 = vmax.f32 %v5488, %v5888
  %v6289 = vmax.f32 %v5489, %v5889
  %v6290 = vmax.f32 %v5490, %v5890
  %v6291 = vmax.f32 %v5491, %v5891
  %v6292 = vmax.f32 %v5492, %v5892
  %v6293 = vmax.f32 %v5493, %v5893
  %v6294 = vmax.f32 %v5494, %v5894
  %v6295 = vmax.f32 %v5495, %v5895
  %v6296 = vmax.f32 %v5496, %v5896
  %v6297 = vmax.f32 %v5497, %v5897
  %v6298 = vmax.f32 %v5498, %v5898
  %v6299 = vmax.f32 %v5499, %v5899
  %v6300 = vmax.f32 %v5500, %v5900
  %v6301 = vmax.f32 %v5501, %v5901
  %v6302 = vmax.f32 %v5502, %v5902
  %v6303 = vmax.f32 %v5503, %v5903
  %v6304 = vmax.f32 %v5504, %v5904
  %v6305 = vmax.f32 %v5505, %v5905
  %v6306 = vmax.f32 %v5506, %v5906
  %v6307 = vmax.f32 %v5507, %v5907
  %v6308 = vmax.f32 %v5508, %v5908
  %v6309 = vmax.f32 %v5509, %v5909
  %v6310 = vmax.f32 %v5510, %v5910
  %v6311 = vmax.f32 %v5511, %v5911
  %v6312 = vmax.f32 %v5512, %v5912
  %v6313 = vmax.f32 %v5513, %v5913
  %v6314 = vmax.f32 %v5514, %v5914
  %v6315 = vmax.f32 %v5515, %v5915
  %v6316 = vmax.f32 %v5516, %v5916
  %v6317 = vmax.f32 %v5517, %v5917
  %v6318 = vmax.f32 %v5518, %v5918
  %v6319 = vmax.f32 %v5519, %v5919
  %v6320 = vmax.f32 %v5520, %v5920
  %v6321 = vmax.f32 %v5521, %v5921
  %v6322 = vmax.f32 %v5522, %v5922
  %v6323 = vmax.f32 %v5523, %v5923
  %v6324 = vmax.f32 %v5524, %v5924
  %v6325 = vmax.f32 %v5525, %v5925
  %v6326 = vmax.f32 %v5526, %v5926
  %v6327 = vmax.f32 %v5527, %v5927
  %v6328 = vmax.f32 %v5528, %v5928
  %v6329 = vmax.f32 %v5529, %v5929
  %v6330 = vmax.f32 %v5530, %v5930
  %v6331 = vmax.f32 %v5531, %v5931
  %v6332 = vmax.f32 %v5532, %v5932
  %v6333 = vmax.f32 %v5533, %v5933
  %v6334 = vmax.f32 %v5534, %v5934
  %v6335 = vmax.f32 %v5535, %v5935
  %v6336 = vmax.f32 %v5536, %v5936
  %v6337 = vmax.f32 %v5537, %v5937
  %v6338 = vmax.f32 %v5538, %v5938
  %v6339 = vmax.f32 %v5539, %v5939
  %v6340 = vmax.f32 %v5540, %v5940
  %v6341 = vmax.f32 %v5541, %v5941
  %v6342 = vmax.f32 %v5542, %v5942
  %v6343 = vmax.f32 %v5543, %v5943
  %v6344 = vmax.f32 %v5544, %v5944
  %v6345 = vmax.f32 %v5545, %v5945
  %v6346 = vmax.f32 %v5546, %v5946
  %v6347 = vmax.f32 %v5547, %v5947
  %v6348 = vmax.f32 %v5548, %v5948
  %v6349 = vmax.f32 %v5549, %v5949
  %v6350 = vmax.f32 %v5550, %v5950
  %v6351 = vmax.f32 %v5551, %v5951
  %v6352 = vmax.f32 %v5552, %v5952
  %v6353 = vmax.f32 %v5553, %v5953
  %v6354 = vmax.f32 %v5554, %v5954
  %v6355 = vmax.f32 %v5555, %v5955
  %v6356 = vmax.f32 %v5556, %v5956
  %v6357 = vmax.f32 %v5557, %v5957
  %v6358 = vmax.f32 %v5558, %v5958
  %v6359 = vmax.f32 %v5559, %v5959
  %v6360 = vmax.f32 %v5560, %v5960
  %v6361 = vmax.f32 %v5561, %v5961
  %v6362 = vmax.f32 %v5562, %v5962
  %v6363 = vmax.f32 %v5563, %v5963
  %v6364 = vmax.f32 %v5564, %v5964
  %v6365 = vmax.f32 %v5565, %v5965
  %v6366 = vmax.f32 %v5566, %v5966
  %v6367 = vmax.f32 %v5567, %v5967
  %v6368 = vmax.f32 %v5568, %v5968
  %v6369 = vmax.f32 %v5569, %v5969
  %v6370 = vmax.f32 %v5570, %v5970
  %v6371 = vmax.f32 %v5571, %v5971
  %v6372 = vmax.f32 %v5572, %v5972
  %v6373 = vmax.f32 %v5573, %v5973
  %v6374 = vmax.f32 %v5574, %v5974
  %v6375 = vmax.f32 %v5575, %v5975
  %v6376 = vmax.f32 %v5576, %v5976
  %v6377 = vmax.f32 %v5577, %v5977
  %v6378 = vmax.f32 %v5578, %v5978
  %v6379 = vmax.f32 %v5579, %v5979
  %v6380 = vmax.f32 %v5580, %v5980
  %v6381 = vmax.f32 %v5581, %v5981
  %v6382 = vmax.f32 %v5582, %v5982
  %v6383 = vmax.f32 %v5583, %v5983
  %v6384 = vmax.f32 %v5584, %v5984
  %v6385 = vmax.f32 %v5585, %v5985
  %v6386 = vmax.f32 %v5586, %v5986
  %v6387 = vmax.f32 %v5587, %v5987
  %v6388 = vmax.f32 %v5588, %v5988
  %v6389 = vmax.f32 %v5589, %v5989
  %v6390 = vmax.f32 %v5590, %v5990
  %v6391 = vmax.f32 %v5591, %v5991
  %v6392 = vmax.f32 %v5592, %v5992
  %v6393 = vmax.f32 %v5593, %v5993
  %v6394 = vmax.f32 %v5594, %v5994
  %v6395 = vmax.f32 %v5595, %v5995
  %v6396 = vmax.f32 %v5596, %v5996
  %v6397 = vmax.f32 %v5597, %v5997
  %v6398 = vmax.f32 %v5598, %v5998
  %v6399 = vmax.f32 %v5599, %v5999
  %v6400 = vmax.f32 %v5600, %v6000
  %v6401 = vmax.f32 %v5601, %v6001
  %v6402 = vmax.f32 %v5602, %v6002
  %v6403 = vmax.f32 %v5603, %v6003
  %v6404 = vmax.f32 %v5604, %v6004
  %v6405 = vmax.f32 %v5605, %v6005
  %v6406 = vmax.f32 %v5606, %v6006
  %v6407 = vmax.f32 %v5607, %v6007
  %v6408 = vmax.f32 %v5608, %v6008
  %v6409 = vmax.f32 %v5609, %v6009
  %v6410 = vmax.f32 %v5610, %v6010
  %v6411 = vmax.f32 %v5611, %v6011
  %v6412 = vmax.f32 %v5612, %v6012
  %v6413 = vmax.f32 %v5613, %v6013
  %v6414 = vmax.f32 %v5614, %v6014
  %v6415 = vmax.f32 %v5615, %v6015
  %v6416 = vmax.f32 %v5616, %v6016
  %v6417 = vmax.f32 %v5617, %v6017
  %v6418 = vmax.f32 %v5618, %v6018
  %v6419 = vmax.f32 %v5619, %v6019
  %v6420 = vmax.f32 %v5620, %v6020
  %v6421 = vmax.f32 %v5621, %v6021
  %v6422 = vmax.f32 %v5622, %v6022
  %v6423 = vmax.f32 %v5623, %v6023
  %v6424 = vmax.f32 %v5624, %v6024
  %v6425 = vpack.c.bf16 %v6027, %v6025
  %v6426 = vpack.c.bf16 %v6028, %v6026
  %v6427 = vpack.c.bf16 %v6031, %v6029
  %v6428 = vpack.c.bf16 %v6032, %v6030
  %v6429 = vpack.c.bf16 %v6035, %v6033
  %v6430 = vpack.c.bf16 %v6036, %v6034
  %v6431 = vpack.c.bf16 %v6039, %v6037
  %v6432 = vpack.c.bf16 %v6040, %v6038
  %v6433 = vpack.c.bf16 %v6043, %v6041
  %v6434 = vpack.c.bf16 %v6044, %v6042
  %v6435 = vpack.c.bf16 %v6047, %v6045
  %v6436 = vpack.c.bf16 %v6048, %v6046
  %v6437 = vpack.c.bf16 %v6051, %v6049
  %v6438 = vpack.c.bf16 %v6052, %v6050
  %v6439 = vpack.c.bf16 %v6055, %v6053
  %v6440 = vpack.c.bf16 %v6056, %v6054
  %v6441 = vpack.c.bf16 %v6059, %v6057
  %v6442 = vpack.c.bf16 %v6060, %v6058
  %v6443 = vpack.c.bf16 %v6063, %v6061
  %v6444 = vpack.c.bf16 %v6064, %v6062
  %v6445 = vpack.c.bf16 %v6067, %v6065
  %v6446 = vpack.c.bf16 %v6068, %v6066
  %v6447 = vpack.c.bf16 %v6071, %v6069
  %v6448 = vpack.c.bf16 %v6072, %v6070
  %v6449 = vpack.c.bf16 %v6075, %v6073
  %v6450 = vpack.c.bf16 %v6076, %v6074
  %v6451 = vpack.c.bf16 %v6079, %v6077
  %v6452 = vpack.c.bf16 %v6080, %v6078
  %v6453 = vpack.c.bf16 %v6083, %v6081
  %v6454 = vpack.c.bf16 %v6084, %v6082
  %v6455 = vpack.c.bf16 %v6087, %v6085
  %v6456 = vpack.c.bf16 %v6088, %v6086
  %v6457 = vpack.c.bf16 %v6091, %v6089
  %v6458 = vpack.c.bf16 %v6092, %v6090
  %v6459 = vpack.c.bf16 %v6095, %v6093
  %v6460 = vpack.c.bf16 %v6096, %v6094
  %v6461 = vpack.c.bf16 %v6099, %v6097
  %v6462 = vpack.c.bf16 %v6100, %v6098
  %v6463 = vpack.c.bf16 %v6103, %v6101
  %v6464 = vpack.c.bf16 %v6104, %v6102
  %v6465 = vpack.c.bf16 %v6107, %v6105
  %v6466 = vpack.c.bf16 %v6108, %v6106
  %v6467 = vpack.c.bf16 %v6111, %v6109
  %v6468 = vpack.c.bf16 %v6112, %v6110
  %v6469 = vpack.c.bf16 %v6115, %v6113
  %v6470 = vpack.c.bf16 %v6116, %v6114
  %v6471 = vpack.c.bf16 %v6119, %v6117
  %v6472 = vpack.c.bf16 %v6120, %v6118
  %v6473 = vpack.c.bf16 %v6123, %v6121
  %v6474 = vpack.c.bf16 %v6124, %v6122
  %v6475 = vpack.c.bf16 %v6127, %v6125
  %v6476 = vpack.c.bf16 %v6128, %v6126
  %v6477 = vpack.c.bf16 %v6131, %v6129
  %v6478 = vpack.c.bf16 %v6132, %v6130
  %v6479 = vpack.c.bf16 %v6135, %v6133
  %v6480 = vpack.c.bf16 %v6136, %v6134
  %v6481 = vpack.c.bf16 %v6139, %v6137
  %v6482 = vpack.c.bf16 %v6140, %v6138
  %v6483 = vpack.c.bf16 %v6143, %v6141
  %v6484 = vpack.c.bf16 %v6144, %v6142
  %v6485 = vpack.c.bf16 %v6147, %v6145
  %v6486 = vpack.c.bf16 %v6148, %v6146
  %v6487 = vpack.c.bf16 %v6151, %v6149
  %v6488 = vpack.c.bf16 %v6152, %v6150
  %v6489 = vpack.c.bf16 %v6155, %v6153
  %v6490 = vpack.c.bf16 %v6156, %v6154
  %v6491 = vpack.c.bf16 %v6159, %v6157
  %v6492 = vpack.c.bf16 %v6160, %v6158
  %v6493 = vpack.c.bf16 %v6163, %v6161
  %v6494 = vpack.c.bf16 %v6164, %v6162
  %v6495 = vpack.c.bf16 %v6167, %v6165
  %v6496 = vpack.c.bf16 %v6168, %v6166
  %v6497 = vpack.c.bf16 %v6171, %v6169
  %v6498 = vpack.c.bf16 %v6172, %v6170
  %v6499 = vpack.c.bf16 %v6175, %v6173
  %v6500 = vpack.c.bf16 %v6176, %v6174
  %v6501 = vpack.c.bf16 %v6179, %v6177
  %v6502 = vpack.c.bf16 %v6180, %v6178
  %v6503 = vpack.c.bf16 %v6183, %v6181
  %v6504 = vpack.c.bf16 %v6184, %v6182
  %v6505 = vpack.c.bf16 %v6187, %v6185
  %v6506 = vpack.c.bf16 %v6188, %v6186
  %v6507 = vpack.c.bf16 %v6191, %v6189
  %v6508 = vpack.c.bf16 %v6192, %v6190
  %v6509 = vpack.c.bf16 %v6195, %v6193
  %v6510 = vpack.c.bf16 %v6196, %v6194
  %v6511 = vpack.c.bf16 %v6199, %v6197
  %v6512 = vpack.c.bf16 %v6200, %v6198
  %v6513 = vpack.c.bf16 %v6203, %v6201
  %v6514 = vpack.c.bf16 %v6204, %v6202
  %v6515 = vpack.c.bf16 %v6207, %v6205
  %v6516 = vpack.c.bf16 %v6208, %v6206
  %v6517 = vpack.c.bf16 %v6211, %v6209
  %v6518 = vpack.c.bf16 %v6212, %v6210
  %v6519 = vpack.c.bf16 %v6215, %v6213
  %v6520 = vpack.c.bf16 %v6216, %v6214
  %v6521 = vpack.c.bf16 %v6219, %v6217
  %v6522 = vpack.c.bf16 %v6220, %v6218
  %v6523 = vpack.c.bf16 %v6223, %v6221
  %v6524 = vpack.c.bf16 %v6224, %v6222
  %v6525 = vpack.c.bf16 %v6227, %v6225
  %v6526 = vpack.c.bf16 %v6228, %v6226
  %v6527 = vpack.c.bf16 %v6231, %v6229
  %v6528 = vpack.c.bf16 %v6232, %v6230
  %v6529 = vpack.c.bf16 %v6235, %v6233
  %v6530 = vpack.c.bf16 %v6236, %v6234
  %v6531 = vpack.c.bf16 %v6239, %v6237
  %v6532 = vpack.c.bf16 %v6240, %v6238
  %v6533 = vpack.c.bf16 %v6243, %v6241
  %v6534 = vpack.c.bf16 %v6244, %v6242
  %v6535 = vpack.c.bf16 %v6247, %v6245
  %v6536 = vpack.c.bf16 %v6248, %v6246
  %v6537 = vpack.c.bf16 %v6251, %v6249
  %v6538 = vpack.c.bf16 %v6252, %v6250
  %v6539 = vpack.c.bf16 %v6255, %v6253
  %v6540 = vpack.c.bf16 %v6256, %v6254
  %v6541 = vpack.c.bf16 %v6259, %v6257
  %v6542 = vpack.c.bf16 %v6260, %v6258
  %v6543 = vpack.c.bf16 %v6263, %v6261
  %v6544 = vpack.c.bf16 %v6264, %v6262
  %v6545 = vpack.c.bf16 %v6267, %v6265
  %v6546 = vpack.c.bf16 %v6268, %v6266
  %v6547 = vpack.c.bf16 %v6271, %v6269
  %v6548 = vpack.c.bf16 %v6272, %v6270
  %v6549 = vpack.c.bf16 %v6275, %v6273
  %v6550 = vpack.c.bf16 %v6276, %v6274
  %v6551 = vpack.c.bf16 %v6279, %v6277
  %v6552 = vpack.c.bf16 %v6280, %v6278
  %v6553 = vpack.c.bf16 %v6283, %v6281
  %v6554 = vpack.c.bf16 %v6284, %v6282
  %v6555 = vpack.c.bf16 %v6287, %v6285
  %v6556 = vpack.c.bf16 %v6288, %v6286
  %v6557 = vpack.c.bf16 %v6291, %v6289
  %v6558 = vpack.c.bf16 %v6292, %v6290
  %v6559 = vpack.c.bf16 %v6295, %v6293
  %v6560 = vpack.c.bf16 %v6296, %v6294
  %v6561 = vpack.c.bf16 %v6299, %v6297
  %v6562 = vpack.c.bf16 %v6300, %v6298
  %v6563 = vpack.c.bf16 %v6303, %v6301
  %v6564 = vpack.c.bf16 %v6304, %v6302
  %v6565 = vpack.c.bf16 %v6307, %v6305
  %v6566 = vpack.c.bf16 %v6308, %v6306
  %v6567 = vpack.c.bf16 %v6311, %v6309
  %v6568 = vpack.c.bf16 %v6312, %v6310
  %v6569 = vpack.c.bf16 %v6315, %v6313
  %v6570 = vpack.c.bf16 %v6316, %v6314
  %v6571 = vpack.c.bf16 %v6319, %v6317
  %v6572 = vpack.c.bf16 %v6320, %v6318
  %v6573 = vpack.c.bf16 %v6323, %v6321
  %v6574 = vpack.c.bf16 %v6324, %v6322
  %v6575 = vpack.c.bf16 %v6327, %v6325
  %v6576 = vpack.c.bf16 %v6328, %v6326
  %v6577 = vpack.c.bf16 %v6331, %v6329
  %v6578 = vpack.c.bf16 %v6332, %v6330
  %v6579 = vpack.c.bf16 %v6335, %v6333
  %v6580 = vpack.c.bf16 %v6336, %v6334
  %v6581 = vpack.c.bf16 %v6339, %v6337
  %v6582 = vpack.c.bf16 %v6340, %v6338
  %v6583 = vpack.c.bf16 %v6343, %v6341
  %v6584 = vpack.c.bf16 %v6344, %v6342
  %v6585 = vpack.c.bf16 %v6347, %v6345
  %v6586 = vpack.c.bf16 %v6348, %v6346
  %v6587 = vpack.c.bf16 %v6351, %v6349
  %v6588 = vpack.c.bf16 %v6352, %v6350
  %v6589 = vpack.c.bf16 %v6355, %v6353
  %v6590 = vpack.c.bf16 %v6356, %v6354
  %v6591 = vpack.c.bf16 %v6359, %v6357
  %v6592 = vpack.c.bf16 %v6360, %v6358
  %v6593 = vpack.c.bf16 %v6363, %v6361
  %v6594 = vpack.c.bf16 %v6364, %v6362
  %v6595 = vpack.c.bf16 %v6367, %v6365
  %v6596 = vpack.c.bf16 %v6368, %v6366
  %v6597 = vpack.c.bf16 %v6371, %v6369
  %v6598 = vpack.c.bf16 %v6372, %v6370
  %v6599 = vpack.c.bf16 %v6375, %v6373
  %v6600 = vpack.c.bf16 %v6376, %v6374
  %v6601 = vpack.c.bf16 %v6379, %v6377
  %v6602 = vpack.c.bf16 %v6380, %v6378
  %v6603 = vpack.c.bf16 %v6383, %v6381
  %v6604 = vpack.c.bf16 %v6384, %v6382
  %v6605 = vpack.c.bf16 %v6387, %v6385
  %v6606 = vpack.c.bf16 %v6388, %v6386
  %v6607 = vpack.c.bf16 %v6391, %v6389
  %v6608 = vpack.c.bf16 %v6392, %v6390
  %v6609 = vpack.c.bf16 %v6395, %v6393
  %v6610 = vpack.c.bf16 %v6396, %v6394
  %v6611 = vpack.c.bf16 %v6399, %v6397
  %v6612 = vpack.c.bf16 %v6400, %v6398
  %v6613 = vpack.c.bf16 %v6403, %v6401
  %v6614 = vpack.c.bf16 %v6404, %v6402
  %v6615 = vpack.c.bf16 %v6407, %v6405
  %v6616 = vpack.c.bf16 %v6408, %v6406
  %v6617 = vpack.c.bf16 %v6411, %v6409
  %v6618 = vpack.c.bf16 %v6412, %v6410
  %v6619 = vpack.c.bf16 %v6415, %v6413
  %v6620 = vpack.c.bf16 %v6416, %v6414
  %v6621 = vpack.c.bf16 %v6419, %v6417
  %v6622 = vpack.c.bf16 %v6420, %v6418
  %v6623 = vpack.c.bf16 %v6423, %v6421
  %v6624 = vpack.c.bf16 %v6424, %v6422
  %6625 = vmatprep.subr.bf16.mxu0 %v6426
  %6626 = vmatpush1.bf16.msra.mxu0 %v6425
  %6627 = vmatprep.subr.bf16.mxu0 %v6428
  %6628 = vmatpush1.bf16.msra.mxu0 %v6427
  %6629 = vmatprep.subr.bf16.mxu0 %v6430
  %6630 = vmatpush1.bf16.msra.mxu0 %v6429
  %6631 = vmatprep.subr.bf16.mxu0 %v6432
  %6632 = vmatpush1.bf16.msra.mxu0 %v6431
  %6633 = vmatprep.subr.bf16.mxu0 %v6434
  %6634 = vmatpush1.bf16.msra.mxu0 %v6433
  %6635 = vmatprep.subr.bf16.mxu0 %v6436
  %6636 = vmatpush1.bf16.msra.mxu0 %v6435
  %6637 = vmatprep.subr.bf16.mxu0 %v6438
  %6638 = vmatpush1.bf16.msra.mxu0 %v6437
  %6639 = vmatprep.subr.bf16.mxu0 %v6440
  %6640 = vmatpush1.bf16.msra.mxu0 %v6439
  %6641 = vmatprep.subr.bf16.mxu0 %v6442
  %6642 = vmatpush1.bf16.msra.mxu0 %v6441
  %6643 = vmatprep.subr.bf16.mxu0 %v6444
  %6644 = vmatpush1.bf16.msra.mxu0 %v6443
  %6645 = vmatprep.subr.bf16.mxu0 %v6446
  %6646 = vmatpush1.bf16.msra.mxu0 %v6445
  %6647 = vmatprep.subr.bf16.mxu0 %v6448
  %6648 = vmatpush1.bf16.msra.mxu0 %v6447
  %6649 = vmatprep.subr.bf16.mxu0 %v6450
  %6650 = vmatpush1.bf16.msra.mxu0 %v6449
  %6651 = vmatprep.subr.bf16.mxu0 %v6452
  %6652 = vmatpush1.bf16.msra.mxu0 %v6451
  %6653 = vmatprep.subr.bf16.mxu0 %v6454
  %6654 = vmatpush1.bf16.msra.mxu0 %v6453
  %6655 = vmatprep.subr.bf16.mxu0 %v6456
  %6656 = vmatpush1.bf16.msra.mxu0 %v6455
  %6657 = vmatprep.mubr.bf16.mxu0 %v3204
  %6658 = vmatmul.mubr.bf16.gmra.mrb[0].mxu0 %v3203
  %v6659 = vpop.f32.mrb[0].mxu0
  %v6660 = vadd.f32 %v3156, %v6659
  %v6661 = vpop.f32.mrb[0].mxu0
  %v6662 = vadd.f32 %v3156, %v6661
  %v6663 = vpop.f32.mrb[0].mxu0
  %v6664 = vadd.f32 %v3161, %v6663
  %v6665 = vpop.f32.mrb[0].mxu0
  %v6666 = vadd.f32 %v3161, %v6665
  %6667 = vdwg.mxu0
  %6668 = vmatprep.subr.bf16.mxu0 %v6458
  %6669 = vmatpush1.bf16.msra.mxu0 %v6457
  %6670 = vmatprep.subr.bf16.mxu0 %v6460
  %6671 = vmatpush1.bf16.msra.mxu0 %v6459
  %6672 = vmatprep.subr.bf16.mxu0 %v6462
  %6673 = vmatpush1.bf16.msra.mxu0 %v6461
  %6674 = vmatprep.subr.bf16.mxu0 %v6464
  %6675 = vmatpush1.bf16.msra.mxu0 %v6463
  %6676 = vmatprep.subr.bf16.mxu0 %v6466
  %6677 = vmatpush1.bf16.msra.mxu0 %v6465
  %6678 = vmatprep.subr.bf16.mxu0 %v6468
  %6679 = vmatpush1.bf16.msra.mxu0 %v6467
  %6680 = vmatprep.subr.bf16.mxu0 %v6470
  %6681 = vmatpush1.bf16.msra.mxu0 %v6469
  %6682 = vmatprep.subr.bf16.mxu0 %v6472
  %6683 = vmatpush1.bf16.msra.mxu0 %v6471
  %6684 = vmatprep.subr.bf16.mxu0 %v6474
  %6685 = vmatpush1.bf16.msra.mxu0 %v6473
  %6686 = vmatprep.subr.bf16.mxu0 %v6476
  %6687 = vmatpush1.bf16.msra.mxu0 %v6475
  %6688 = vmatprep.subr.bf16.mxu0 %v6478
  %6689 = vmatpush1.bf16.msra.mxu0 %v6477
  %6690 = vmatprep.subr.bf16.mxu0 %v6480
  %6691 = vmatpush1.bf16.msra.mxu0 %v6479
  %6692 = vmatprep.subr.bf16.mxu0 %v6482
  %6693 = vmatpush1.bf16.msra.mxu0 %v6481
  %6694 = vmatprep.subr.bf16.mxu0 %v6484
  %6695 = vmatpush1.bf16.msra.mxu0 %v6483
  %6696 = vmatprep.subr.bf16.mxu0 %v6486
  %6697 = vmatpush1.bf16.msra.mxu0 %v6485
  %6698 = vmatprep.subr.bf16.mxu0 %v6488
  %6699 = vmatpush1.bf16.msra.mxu0 %v6487
  %6700 = vmatprep.mubr.bf16.mxu0 %v3206
  %6701 = vmatmul.mubr.bf16.gmra.mrb[0].mxu0 %v3205
  %v6702 = vpop.f32.mrb[0].mxu0
  %v6703 = vadd.f32 %v6660, %v6702
  %v6704 = vpop.f32.mrb[0].mxu0
  %v6705 = vadd.f32 %v6662, %v6704
  %v6706 = vpop.f32.mrb[0].mxu0
  %v6707 = vadd.f32 %v6664, %v6706
  %v6708 = vpop.f32.mrb[0].mxu0
  %v6709 = vadd.f32 %v6666, %v6708
  %6710 = vdwg.mxu0
  %6711 = vmatprep.subr.bf16.mxu0 %v6490
  %6712 = vmatpush1.bf16.msra.mxu0 %v6489
  %6713 = vmatprep.subr.bf16.mxu0 %v6492
  %6714 = vmatpush1.bf16.msra.mxu0 %v6491
  %6715 = vmatprep.subr.bf16.mxu0 %v6494
  %6716 = vmatpush1.bf16.msra.mxu0 %v6493
  %6717 = vmatprep.subr.bf16.mxu0 %v6496
  %6718 = vmatpush1.bf16.msra.mxu0 %v6495
  %6719 = vmatprep.subr.bf16.mxu0 %v6498
  %6720 = vmatpush1.bf16.msra.mxu0 %v6497
  %6721 = vmatprep.subr.bf16.mxu0 %v6500
  %6722 = vmatpush1.bf16.msra.mxu0 %v6499
  %6723 = vmatprep.subr.bf16.mxu0 %v6502
  %6724 = vmatpush1.bf16.msra.mxu0 %v6501
  %6725 = vmatprep.subr.bf16.mxu0 %v6504
  %6726 = vmatpush1.bf16.msra.mxu0 %v6503
  %6727 = vmatprep.subr.bf16.mxu0 %v6506
  %6728 = vmatpush1.bf16.msra.mxu0 %v6505
  %6729 = vmatprep.subr.bf16.mxu0 %v6508
  %6730 = vmatpush1.bf16.msra.mxu0 %v6507
  %6731 = vmatprep.subr.bf16.mxu0 %v6510
  %6732 = vmatpush1.bf16.msra.mxu0 %v6509
  %6733 = vmatprep.subr.bf16.mxu0 %v6512
  %6734 = vmatpush1.bf16.msra.mxu0 %v6511
  %6735 = vmatprep.subr.bf16.mxu0 %v6514
  %6736 = vmatpush1.bf16.msra.mxu0 %v6513
  %6737 = vmatprep.subr.bf16.mxu0 %v6516
  %6738 = vmatpush1.bf16.msra.mxu0 %v6515
  %6739 = vmatprep.subr.bf16.mxu0 %v6518
  %6740 = vmatpush1.bf16.msra.mxu0 %v6517
  %6741 = vmatprep.subr.bf16.mxu0 %v6520
  %6742 = vmatpush1.bf16.msra.mxu0 %v6519
  %6743 = vmatprep.mubr.bf16.mxu0 %v3208
  %6744 = vmatmul.mubr.bf16.gmra.mrb[0].mxu0 %v3207
  %v6745 = vpop.f32.mrb[0].mxu0
  %v6746 = vadd.f32 %v6703, %v6745
  %v6747 = vpop.f32.mrb[0].mxu0
  %v6748 = vadd.f32 %v6705, %v6747
  %v6749 = vpop.f32.mrb[0].mxu0
  %v6750 = vadd.f32 %v6707, %v6749
  %v6751 = vpop.f32.mrb[0].mxu0
  %v6752 = vadd.f32 %v6709, %v6751
  %6753 = vdwg.mxu0
  %6754 = vmatprep.subr.bf16.mxu0 %v6522
  %6755 = vmatpush1.bf16.msra.mxu0 %v6521
  %6756 = vmatprep.subr.bf16.mxu0 %v6524
  %6757 = vmatpush1.bf16.msra.mxu0 %v6523
  %6758 = vmatprep.subr.bf16.mxu0 %v6526
  %6759 = vmatpush1.bf16.msra.mxu0 %v6525
  %6760 = vmatprep.subr.bf16.mxu0 %v6528
  %6761 = vmatpush1.bf16.msra.mxu0 %v6527
  %6762 = vmatprep.subr.bf16.mxu0 %v6530
  %6763 = vmatpush1.bf16.msra.mxu0 %v6529
  %6764 = vmatprep.subr.bf16.mxu0 %v6532
  %6765 = vmatpush1.bf16.msra.mxu0 %v6531
  %6766 = vmatprep.subr.bf16.mxu0 %v6534
  %6767 = vmatpush1.bf16.msra.mxu0 %v6533
  %6768 = vmatprep.subr.bf16.mxu0 %v6536
  %6769 = vmatpush1.bf16.msra.mxu0 %v6535
  %6770 = vmatprep.subr.bf16.mxu0 %v6538
  %6771 = vmatpush1.bf16.msra.mxu0 %v6537
  %6772 = vmatprep.subr.bf16.mxu0 %v6540
  %6773 = vmatpush1.bf16.msra.mxu0 %v6539
  %6774 = vmatprep.subr.bf16.mxu0 %v6542
  %6775 = vmatpush1.bf16.msra.mxu0 %v6541
  %6776 = vmatprep.subr.bf16.mxu0 %v6544
  %6777 = vmatpush1.bf16.msra.mxu0 %v6543
  %6778 = vmatprep.subr.bf16.mxu0 %v6546
  %6779 = vmatpush1.bf16.msra.mxu0 %v6545
  %6780 = vmatprep.subr.bf16.mxu0 %v6548
  %6781 = vmatpush1.bf16.msra.mxu0 %v6547
  %6782 = vmatprep.subr.bf16.mxu0 %v6550
  %6783 = vmatpush1.bf16.msra.mxu0 %v6549
  %6784 = vmatprep.subr.bf16.mxu0 %v6552
  %6785 = vmatpush1.bf16.msra.mxu0 %v6551
  %6786 = vmatprep.mubr.bf16.mxu0 %v3210
  %6787 = vmatmul.mubr.bf16.gmra.mrb[0].mxu0 %v3209
  %v6788 = vpop.f32.mrb[0].mxu0
  %v6789 = vadd.f32 %v6746, %v6788
  %v6790 = vpop.f32.mrb[0].mxu0
  %v6791 = vadd.f32 %v6748, %v6790
  %v6792 = vpop.f32.mrb[0].mxu0
  %v6793 = vadd.f32 %v6750, %v6792
  %v6794 = vpop.f32.mrb[0].mxu0
  %v6795 = vadd.f32 %v6752, %v6794
  %6796 = vdwg.mxu0
  %6797 = vmatprep.subr.bf16.mxu0 %v6554
  %6798 = vmatpush1.bf16.msra.mxu0 %v6553
  %6799 = vmatprep.subr.bf16.mxu0 %v6556
  %6800 = vmatpush1.bf16.msra.mxu0 %v6555
  %6801 = vmatprep.subr.bf16.mxu0 %v6558
  %6802 = vmatpush1.bf16.msra.mxu0 %v6557
  %6803 = vmatprep.subr.bf16.mxu0 %v6560
  %6804 = vmatpush1.bf16.msra.mxu0 %v6559
  %6805 = vmatprep.subr.bf16.mxu0 %v6562
  %6806 = vmatpush1.bf16.msra.mxu0 %v6561
  %6807 = vmatprep.subr.bf16.mxu0 %v6564
  %6808 = vmatpush1.bf16.msra.mxu0 %v6563
  %6809 = vmatprep.subr.bf16.mxu0 %v6566
  %6810 = vmatpush1.bf16.msra.mxu0 %v6565
  %6811 = vmatprep.subr.bf16.mxu0 %v6568
  %6812 = vmatpush1.bf16.msra.mxu0 %v6567
  %6813 = vmatprep.subr.bf16.mxu0 %v6570
  %6814 = vmatpush1.bf16.msra.mxu0 %v6569
  %6815 = vmatprep.subr.bf16.mxu0 %v6572
  %6816 = vmatpush1.bf16.msra.mxu0 %v6571
  %6817 = vmatprep.subr.bf16.mxu0 %v6574
  %6818 = vmatpush1.bf16.msra.mxu0 %v6573
  %6819 = vmatprep.subr.bf16.mxu0 %v6576
  %6820 = vmatpush1.bf16.msra.mxu0 %v6575
  %6821 = vmatprep.subr.bf16.mxu0 %v6578
  %6822 = vmatpush1.bf16.msra.mxu0 %v6577
  %6823 = vmatprep.subr.bf16.mxu0 %v6580
  %6824 = vmatpush1.bf16.msra.mxu0 %v6579
  %6825 = vmatprep.subr.bf16.mxu0 %v6582
  %6826 = vmatpush1.bf16.msra.mxu0 %v6581
  %6827 = vmatprep.subr.bf16.mxu0 %v6584
  %6828 = vmatpush1.bf16.msra.mxu0 %v6583
  %6829 = vmatprep.mubr.bf16.mxu0 %v3212
  %6830 = vmatmul.mubr.bf16.gmra.mrb[0].mxu0 %v3211
  %v6831 = vpop.f32.mrb[0].mxu0
  %v6832 = vadd.f32 %v6789, %v6831
  %v6833 = vpop.f32.mrb[0].mxu0
  %v6834 = vadd.f32 %v6791, %v6833
  %v6835 = vpop.f32.mrb[0].mxu0
  %v6836 = vadd.f32 %v6793, %v6835
  %v6837 = vpop.f32.mrb[0].mxu0
  %v6838 = vadd.f32 %v6795, %v6837
  %6839 = vdwg.mxu0
  %6840 = vmatprep.subr.bf16.mxu0 %v6586
  %6841 = vmatpush1.bf16.msra.mxu0 %v6585
  %6842 = vmatprep.subr.bf16.mxu0 %v6588
  %6843 = vmatpush1.bf16.msra.mxu0 %v6587
  %6844 = vmatprep.subr.bf16.mxu0 %v6590
  %6845 = vmatpush1.bf16.msra.mxu0 %v6589
  %6846 = vmatprep.subr.bf16.mxu0 %v6592
  %6847 = vmatpush1.bf16.msra.mxu0 %v6591
  %6848 = vmatprep.subr.bf16.mxu0 %v6594
  %6849 = vmatpush1.bf16.msra.mxu0 %v6593
  %6850 = vmatprep.subr.bf16.mxu0 %v6596
  %6851 = vmatpush1.bf16.msra.mxu0 %v6595
  %6852 = vmatprep.subr.bf16.mxu0 %v6598
  %6853 = vmatpush1.bf16.msra.mxu0 %v6597
  %6854 = vmatprep.subr.bf16.mxu0 %v6600
  %6855 = vmatpush1.bf16.msra.mxu0 %v6599
  %6856 = vmatprep.subr.bf16.mxu0 %v6602
  %6857 = vmatpush1.bf16.msra.mxu0 %v6601
  %6858 = vmatprep.subr.bf16.mxu0 %v6604
  %6859 = vmatpush1.bf16.msra.mxu0 %v6603
  %6860 = vmatprep.subr.bf16.mxu0 %v6606
  %6861 = vmatpush1.bf16.msra.mxu0 %v6605
  %6862 = vmatprep.subr.bf16.mxu0 %v6608
  %6863 = vmatpush1.bf16.msra.mxu0 %v6607
  %6864 = vmatprep.subr.bf16.mxu0 %v6610
  %6865 = vmatpush1.bf16.msra.mxu0 %v6609
  %6866 = vmatprep.subr.bf16.mxu0 %v6612
  %6867 = vmatpush1.bf16.msra.mxu0 %v6611
  %6868 = vmatprep.subr.bf16.mxu0 %v6614
  %6869 = vmatpush1.bf16.msra.mxu0 %v6613
  %6870 = vmatprep.subr.bf16.mxu0 %v6616
  %6871 = vmatpush1.bf16.msra.mxu0 %v6615
  %6872 = vmatprep.mubr.bf16.mxu0 %v3214
  %6873 = vmatmul.mubr.bf16.gmra.mrb[0].mxu0 %v3213
  %v6874 = vpop.f32.mrb[0].mxu0
  %v6875 = vadd.f32 %v6832, %v6874
  %v6876 = vpop.f32.mrb[0].mxu0
  %v6877 = vadd.f32 %v6834, %v6876
  %v6878 = vpop.f32.mrb[0].mxu0
  %v6879 = vadd.f32 %v6836, %v6878
  %v6880 = vpop.f32.mrb[0].mxu0
  %v6881 = vadd.f32 %v6838, %v6880
  %6882 = vdwg.mxu0
  %6883 = vmatprep.subr.bf16.mxu0 %v6618
  %6884 = vmatpush1.bf16.msra.mxu0 %v6617
  %6885 = vmatprep.subr.bf16.mxu0 %v6620
  %6886 = vmatpush1.bf16.msra.mxu0 %v6619
  %6887 = vmatprep.subr.bf16.mxu0 %v6622
  %6888 = vmatpush1.bf16.msra.mxu0 %v6621
  %6889 = vmatprep.subr.bf16.mxu0 %v6624
  %6890 = vmatpush1.bf16.msra.mxu0 %v6623
  %6891 = vmatprep.subr.bf16.mxu0 0
  %6892 = vmatpush1.bf16.msra.mxu0 0
  %6893 = vmatprep.subr.bf16.mxu0 0
  %6894 = vmatpush1.bf16.msra.mxu0 0
  %6895 = vmatprep.subr.bf16.mxu0 0
  %6896 = vmatpush1.bf16.msra.mxu0 0
  %6897 = vmatprep.subr.bf16.mxu0 0
  %6898 = vmatpush1.bf16.msra.mxu0 0
  %6899 = vmatprep.subr.bf16.mxu0 0
  %6900 = vmatpush1.bf16.msra.mxu0 0
  %6901 = vmatprep.subr.bf16.mxu0 0
  %6902 = vmatpush1.bf16.msra.mxu0 0
  %6903 = vmatprep.subr.bf16.mxu0 0
  %6904 = vmatpush1.bf16.msra.mxu0 0
  %6905 = vmatprep.subr.bf16.mxu0 0
  %6906 = vmatpush1.bf16.msra.mxu0 0
  %6907 = vmatprep.subr.bf16.mxu0 0
  %6908 = vmatpush1.bf16.msra.mxu0 0
  %6909 = vmatprep.subr.bf16.mxu0 0
  %6910 = vmatpush1.bf16.msra.mxu0 0
  %6911 = vmatprep.subr.bf16.mxu0 0
  %6912 = vmatpush1.bf16.msra.mxu0 0
  %6913 = vmatprep.subr.bf16.mxu0 0
  %6914 = vmatpush1.bf16.msra.mxu0 0
  %6915 = vmatprep.mubr.bf16.mxu0 0
  %6916 = vmatmul.mubr.bf16.gmra.mrb[0].mxu0 %v3230
  %v6917 = vpop.f32.mrb[0].mxu0
  %v6918 = vadd.f32 %v6875, %v6917
  %v6919 = vpop.f32.mrb[0].mxu0
  %v6920 = vadd.f32 %v6877, %v6919
  %v6921 = vpop.f32.mrb[0].mxu0
  %v6922 = vadd.f32 %v6879, %v6921
  %v6923 = vpop.f32.mrb[0].mxu0
  %v6924 = vadd.f32 %v6881, %v6923
  %6925 = vdwg.mxu0
  %v6926 = vmul.f32 %v6918, 0.33
  %v6927 = vmul.f32 %v6920, 0.33
  %v6928 = vmul.f32 %v6922, 0.33
  %v6929 = vmul.f32 %v6924, 0.33
  %v6930 = vmax.f32 %v6918, %v6926
  %v6931 = vmax.f32 %v6920, %v6927
  %v6932 = vmax.f32 %v6922, %v6928
  %v6933 = vmax.f32 %v6924, %v6929
  %s6934 = scalar_lea.vmem %s14, 32
  %6935 = vst [vmem:[%s6934] sm:$0xff] %v6930
  %6936 = vst.msk [vmem:[%s6934 + $0x8] sm:$0xff] %vm168, %v6931
  %6937 = vst [vmem:[%s6934 + $0x10] sm:$0xff] %v6932
  %6938 = vst.msk [vmem:[%s6934 + $0x18] sm:$0xff] %vm168, %v6933
  // Predicated region
  $region58: #{brain_cnn_forward.1} parent=0 // pred_check
    _
  $region59: #{brain_cnn_forward.1} parent=0 // pred_check_branch
    %6940 = sbr.rel (0) target = $region61
  $region60: #{brain_cnn_forward.1} parent=0 // pred_region
    _
  $region61: #{brain_cnn_forward.1} parent=0 // pred_fallthru
    _
  // Predicated region
  $region62: #{brain_cnn_forward.1} parent=0 // pred_check
    _
  $region63: #{brain_cnn_forward.1} parent=0 // pred_check_branch
    %6942 = sbr.rel (0) target = $region65
  $region64: #{brain_cnn_forward.1} parent=0 // pred_region
    _
  $region65: #{brain_cnn_forward.1} parent=0 // pred_fallthru
    _

</llo_original>
